<compile_context>
chip_gen: v5e
topology: v5e:2x2
jax: 0.10.0
libtpu: 0.0.40
codegen_flags: <defaults>
</compile_context>

<pallas_src>
import numpy as np
import jax
import jax.numpy as jnp
from jax.experimental import pallas as pl
from jax.experimental.pallas import tpu as pltpu

L = 15        # sequence length (fixed by Linear(82, .): 16+13+11+1 = 41 per branch)
A = 21        # one-hot alphabet size
AA = 9        # alpha alphabet size (onehot2alphabet matrix is (21, 9))
NC = 64       # conv output channels per branch
ALLW = 82     # concatenated conv width: (16 + 13 + 11 + 1) * 2
ZDIM = 15     # fc_mu / fc_log_var output dim (== L)
ZP = 16       # ZDIM padded to a multiple of 8 for clean in-kernel relayouts
NH = 8        # decoder fc hidden width (Linear(1, 8))
NM1 = 16      # first 1x1 conv output channels
F32 = jnp.float32
BF16 = jnp.bfloat16

try:  # chip-adaptive tiling / VMEM budget (v5e/v6e: 128 MiB VMEM, v7x: 64 MiB)
    _VMEM_CAP = int(pltpu.get_tpu_info().vmem_capacity_bytes)
except Exception:  # no TPU visible at import time, or older API
    _VMEM_CAP = 64 * 1024 * 1024
TB_MAX = 128 if _VMEM_CAP >= (100 << 20) else 64
VMEM_LIMIT = int(min(96 << 20, _VMEM_CAP * 3 // 4))

# PyTorch torch.cat order: onehot k=2,3,5,15 then alpha k=2,3,5,15.
# (name, in-height, kernel-width, width-padding, output-column offset, is_alpha)
_CONV_DEFS = (
    ('oh2', A, 2, 1, 0, False), ('oh3', A, 3, 0, 16, False),
    ('oh5', A, 5, 0, 29, False), ('oh15', A, 15, 0, 40, False),
    ('al2', AA, 2, 1, 41, True), ('al3', AA, 3, 0, 57, True),
    ('al5', AA, 5, 0, 70, True), ('al15', AA, 15, 0, 81, True),
)

_BUFFERED1_OK = None


def _buffered1_supported():
    """Probe once whether pipeline_mode=pl.Buffered(1) (single-buffered
    replicated weights) is supported; otherwise fall back to default specs."""
    global _BUFFERED1_OK
    if _BUFFERED1_OK is None:
        try:
            spec = pl.BlockSpec((8, 128), lambda i: (0, 0),
                                pipeline_mode=pl.Buffered(buffer_count=1))

            def _probe(x_ref, o_ref):
                o_ref[...] = x_ref[...] + 1.0

            out = pl.pallas_call(
                _probe,
                grid=(1,),
                in_specs=[spec],
                out_specs=pl.BlockSpec((8, 128), lambda i: (0, 0)),
                out_shape=jax.ShapeDtypeStruct((8, 128), F32),
            )(jnp.zeros((8, 128), F32))
            jax.block_until_ready(out)
            _BUFFERED1_OK = True
        except Exception:
            _BUFFERED1_OK = False
    return _BUFFERED1_OK


def _rep_spec(x, single_buffer):
    """Whole-array, grid-invariant BlockSpec for replicated weights."""
    nd = x.ndim
    index_map = lambda i, _nd=nd: (0,) * _nd
    if single_buffer:
        return pl.BlockSpec(x.shape, index_map,
                            pipeline_mode=pl.Buffered(buffer_count=1))
    return pl.BlockSpec(x.shape, index_map)


# ---------------------------------------------------------------------------
# Kernel A: fused encoder conv bank (Toeplitz) + one_hot->alpha projection.
# ---------------------------------------------------------------------------
def _conv_kernel(x_ref, bigw_ref, cbias_ref, allconv_ref, alpha_ref):
    # One bf16 MXU matmul covers all 8 full-height convs plus the alpha columns.
    big = jnp.dot(x_ref[...], bigw_ref[...], preferred_element_type=F32)  # (tb, 5383)
    allconv_ref[...] = (big[:, :NC * ALLW] + cbias_ref[...]).astype(allconv_ref.dtype)
    alpha_ref[...] = big[:, NC * ALLW:]


# ---------------------------------------------------------------------------
# Kernel B: fc_mu/fc_log_var (merged heads) + reparameterization + decoder.
# fc heads run on (sample, channel) rows; the decoder runs tile-wide on
# (sample, position) rows (channel on lanes) — no per-sample loops.
# ---------------------------------------------------------------------------
def _mlp_decoder_kernel(rows_ref, eps_ref,
                        fw1, fb1, fw2, fb2, fw3, fb3,
                        w1rep, b1rep, g1, ky1, by1, k2, by2, k3, by3,
                        mulv_ref, xrec_ref):
    tb = eps_ref.shape[0]

    # fc_mu / fc_log_var (merged + block-diagonal), rows = (sample, channel)
    h = jnp.dot(rows_ref[...], fw1[...], preferred_element_type=F32) + fb1[...]
    h = jnp.maximum(h, 0.0).astype(BF16)
    h = jnp.dot(h, fw2[...], preferred_element_type=F32) + fb2[...]
    h = jnp.maximum(h, 0.0).astype(BF16)
    mulv = jnp.dot(h, fw3[...], preferred_element_type=F32) + fb3[...]      # (R, 32)
    mulv_ref[...] = mulv

    # reparameterize, then relayout z to (sample, position) rows for the decoder
    mu = mulv[:, :ZP]                                                       # (R, 16)
    std = jnp.exp(0.5 * mulv[:, ZP:])                                       # (R, 16)
    mu_t = jnp.swapaxes(mu.reshape(tb, NC, ZP), 1, 2)                       # (tb, 16, 64)
    std_t = jnp.swapaxes(std.reshape(tb, NC, ZP), 1, 2)
    z = (mu_t + eps_ref[...] * std_t).reshape(tb * ZP, NC)                  # (Rd, 64)

    # decoder fc Linear(1,8)+ReLU: hidden replicated along lanes (j-major, c-minor)
    arep = jnp.maximum(jnp.tile(z, (1, NH)) * w1rep[...] + b1rep[...], 0.0)  # (Rd, 512)
    # exact channel contraction of the hidden activations with conv1 weights
    a1 = jnp.dot(arep.astype(BF16), g1[...], preferred_element_type=F32)     # (Rd, 128)
    # fused Linear(8,21) + Conv2d(64,16,1x1) (+ folded biases), then the rest
    y = jnp.dot(a1.astype(BF16), ky1[...], preferred_element_type=F32) + by1[...]
    y = jnp.maximum(y, 0.0)                                                  # (Rd, 336)
    y = jnp.dot(y.astype(BF16), k2[...], preferred_element_type=F32) + by2[...]
    y = jnp.maximum(y, 0.0)                                                  # (Rd, 84)
    y = jnp.dot(y.astype(BF16), k3[...], preferred_element_type=F32) + by3[...]
    xrec_ref[...] = jax.nn.sigmoid(y)                                        # (Rd, 21)


# ---------------------------------------------------------------------------
# Wrapper: tiling, padding, free HBM-level relayout between the two calls.
# ---------------------------------------------------------------------------
def _round_up(n, m):
    return ((n + m - 1) // m) * m


def _choose_tb(B, tb_max):
    """Batch tile: <= tb_max, multiple of 8, >=2 grid steps when the batch
    allows (v7x megacore), preferring divisors of the padded batch."""
    bp8 = _round_up(max(B, 1), 8)
    tb = min(tb_max, bp8)
    if bp8 >= 16 and bp8 <= tb:                 # would collapse to one grid step
        tb = _round_up((bp8 + 1) // 2, 8)
    for cand in range(tb, 7, -8):               # largest divisor of bp8 that is
        if bp8 % cand == 0:                     # not much smaller than target
            if cand * 4 >= tb:
                tb = cand
            break
    return tb


def vae_forward(one_hot, params, eps):
    """Returns (one_hot, x_recon, mu, log_var, alpha) like VAE.forward."""
    B = one_hot.shape[0]
    assert one_hot.shape[1:] == (L, A), one_hot.shape
    assert eps.shape == (B, NC, ZDIM), eps.shape

    tb = _choose_tb(B, TB_MAX)
    bp = _round_up(B, tb)
    grid = (bp // tb,)
    pad = bp - B

    x = one_hot.reshape(B, L * A).astype(BF16)
    if pad:
        x = jnp.pad(x, ((0, pad), (0, 0)))
    epsT = jnp.transpose(eps.astype(F32), (0, 2, 1))                 # (B, 15, 64)
    epsT = jnp.pad(epsT, ((0, pad), (0, ZP - ZDIM), (0, 0)))         # (bp, 16, 64)

    buf1 = _buffered1_supported()
    rep = lambda a: _rep_spec(a, buf1)
    cparams = pltpu.CompilerParams(dimension_semantics=("parallel",),
                                   vmem_limit_bytes=VMEM_LIMIT)

    # --- kernel A: fused conv bank + alpha projection -------------------------
    allconv, alpha_flat = pl.pallas_call(
        _conv_kernel,
        grid=grid,
        in_specs=[pl.BlockSpec((tb, L * A), lambda i: (i, 0)),
                  rep(params['bigw']), rep(params['cbias'])],
        out_specs=(pl.BlockSpec((tb, NC * ALLW), lambda i: (i, 0)),
                   pl.BlockSpec((tb, L * AA), lambda i: (i, 0))),
        out_shape=(jax.ShapeDtypeStruct((bp, NC * ALLW), BF16),
                   jax.ShapeDtypeStruct((bp, L * AA), F32)),
        compiler_params=cparams,
    )(x, params['bigw'], params['cbias'])

    # Free HBM-level relayout: (bp, 64*82) -> (bp*64, 82), one row per (sample, channel).
    rows = allconv.reshape(bp * NC, ALLW)

    wnames = ('fw1', 'fb1', 'fw2', 'fb2', 'fw3', 'fb3',
              'w1rep', 'b1rep', 'g1', 'ky1', 'by1', 'k2', 'by2', 'k3', 'by3')
    wlist = [params[k] for k in wnames]

    # --- kernel B: fc heads + reparameterization + decoder --------------------
    mulv, xrec = pl.pallas_call(
        _mlp_decoder_kernel,
        grid=grid,
        in_specs=[pl.BlockSpec((tb * NC, ALLW), lambda i: (i, 0)),
                  pl.BlockSpec((tb, ZP, NC), lambda i: (i, 0, 0))]
                 + [rep(w) for w in wlist],
        out_specs=(pl.BlockSpec((tb * NC, 2 * ZP), lambda i: (i, 0)),
                   pl.BlockSpec((tb * ZP, A), lambda i: (i, 0))),
        out_shape=(jax.ShapeDtypeStruct((bp * NC, 2 * ZP), F32),
                   jax.ShapeDtypeStruct((bp * ZP, A), F32)),
        compiler_params=cparams,
    )(rows, epsT, *wlist)

    mulv = mulv.reshape(bp, NC, 2 * ZP)[:B]
    mu = mulv[:, :, :ZDIM]
    log_var = mulv[:, :, ZP:ZP + ZDIM]
    alpha = alpha_flat[:B].reshape(B, L, AA)
    x_recon = xrec.reshape(bp, ZP, A)[:B, :ZDIM, :]
    return one_hot, x_recon, mu, log_var, alpha


# ---------------------------------------------------------------------------
# Parameter init: raw module-style weights + host-side fused/kron matrices.
# ---------------------------------------------------------------------------
def init_params(key):
    ks = iter(jax.random.split(key, 64))

    def nrm(shape, scale=0.1):
        return np.asarray(jax.random.normal(next(ks), shape, dtype=F32)) * np.float32(scale)

    # TODO(synk): the real matrix lives in dicts/onehot2alphabet_matrix.txt; a
    # deterministic synthetic 0/1 (21, 9) matrix is used instead of file I/O.
    o2a = np.asarray(jax.random.uniform(next(ks), (A, AA)) < 0.3).astype(np.float32)

    raw = {'o2a': jnp.asarray(o2a), 'conv_w': {}, 'conv_b': {}}

    # encoder conv bank, Toeplitz-expanded; alpha projection columns appended
    bigw3 = np.zeros((L * A, NC, ALLW), np.float32)
    cbias2 = np.zeros((NC, ALLW), np.float32)
    for name, h, kw, padw, off, is_alpha in _CONV_DEFS:
        w = nrm((NC, h, kw))            # Conv2d(1, 64, (h, kw)) weight
        b = nrm((NC,), 0.01)
        raw['conv_w'][name] = jnp.asarray(w)
        raw['conv_b'][name] = jnp.asarray(b)
        wout = L + 2 * padw - kw + 1
        # fold the one_hot -> alpha projection into the alpha-branch weights
        weff = np.einsum('ord,ar->oad', w, o2a) if is_alpha else w     # (64, 21, kw)
        for wpos in range(wout):
            for d in range(kw):
                ll = wpos + d - padw
                if 0 <= ll < L:
                    bigw3[ll * A:(ll + 1) * A, :, off + wpos] += weff[:, :, d].T
        cbias2[:, off:off + wout] = b[:, None]

    o2ablk = np.kron(np.eye(L, dtype=np.float32), o2a)                 # (315, 135)
    bigcomb = np.concatenate([bigw3.reshape(L * A, NC * ALLW), o2ablk], axis=1)

    p = {'raw': raw}
    p['bigw'] = jnp.asarray(bigcomb, dtype=BF16)                       # (315, 5383)
    p['cbias'] = jnp.asarray(cbias2.reshape(1, NC * ALLW))             # (1, 5248) f32

    # fc_mu / fc_log_var: merged first layer + block-diagonal layers 2 and 3
    def blockdiag(a, b):
        out = np.zeros((a.shape[0] + b.shape[0], a.shape[1] + b.shape[1]), np.float32)
        out[:a.shape[0], :a.shape[1]] = a
        out[a.shape[0]:, a.shape[1]:] = b
        return out

    mu_w = [nrm((ALLW, 128)), nrm((128, 32)), nrm((32, ZDIM))]
    mu_b = [nrm((128,), 0.01), nrm((32,), 0.01), nrm((ZDIM,), 0.01)]
    lv_w = [nrm((ALLW, 128)), nrm((128, 32)), nrm((32, ZDIM))]
    lv_b = [nrm((128,), 0.01), nrm((32,), 0.01), nrm((ZDIM,), 0.01)]
    raw['mu_w'] = [jnp.asarray(v) for v in mu_w]
    raw['mu_b'] = [jnp.asarray(v) for v in mu_b]
    raw['lv_w'] = [jnp.asarray(v) for v in lv_w]
    raw['lv_b'] = [jnp.asarray(v) for v in lv_b]

    p['fw1'] = jnp.asarray(np.concatenate([mu_w[0], lv_w[0]], axis=1), BF16)   # (82, 256)
    p['fb1'] = jnp.asarray(np.concatenate([mu_b[0], lv_b[0]])[None, :])        # (1, 256)
    p['fw2'] = jnp.asarray(blockdiag(mu_w[1], lv_w[1]), BF16)                  # (256, 64)
    p['fb2'] = jnp.asarray(np.concatenate([mu_b[1], lv_b[1]])[None, :])        # (1, 64)
    fw3p = np.zeros((64, 2 * ZP), np.float32)       # padded to 32 cols (15 mu | 15 lv)
    fw3p[:32, :ZDIM] = mu_w[2]
    fw3p[32:, ZP:ZP + ZDIM] = lv_w[2]
    fb3p = np.zeros((2 * ZP,), np.float32)
    fb3p[:ZDIM] = mu_b[2]
    fb3p[ZP:ZP + ZDIM] = lv_b[2]
    p['fw3'] = jnp.asarray(fw3p, BF16)                                         # (64, 32)
    p['fb3'] = jnp.asarray(fb3p[None, :])                                      # (1, 32)

    # decoder raw weights
    dw1, db1 = nrm((NH,)), nrm((NH,), 0.01)          # Linear(1, 8)
    dw2, db2 = nrm((NH, A)), nrm((A,), 0.01)         # Linear(8, 21)
    raw['dw1'], raw['db1'] = jnp.asarray(dw1), jnp.asarray(db1)
    raw['dw2'], raw['db2'] = jnp.asarray(dw2), jnp.asarray(db2)
    c1, d1 = nrm((NM1, NC)), nrm((NM1,), 0.01)       # Conv2d(64, 16, 1x1)
    c2, d2 = nrm((4, NM1)), nrm((4,), 0.01)          # Conv2d(16, 4, 1x1)
    c3, d3 = nrm((1, 4)), nrm((1,), 0.01)            # Conv2d(4, 1, 1x1)
    raw['c1'], raw['d1'] = jnp.asarray(c1), jnp.asarray(d1)
    raw['c2'], raw['d2'] = jnp.asarray(c2), jnp.asarray(d2)
    raw['c3'], raw['d3'] = jnp.asarray(c3), jnp.asarray(d3)

    # decoder fc replication (z tiled 8x along lanes, lane index = j*64 + c)
    p['w1rep'] = jnp.asarray(np.repeat(dw1, NC)[None, :])              # (1, 512)
    p['b1rep'] = jnp.asarray(np.repeat(db1, NC)[None, :])              # (1, 512)

    # A1[r, m*8+j] = sum_c C1[m,c] * arep[r, j*64+c]
    g1 = np.zeros((NH * NC, NM1 * NH), np.float32)
    for j in range(NH):
        g1[j * NC:(j + 1) * NC, j::NH] = c1.T
    p['g1'] = jnp.asarray(g1, BF16)                                    # (512, 128)

    # y1[r, m*21+a] = sum_j A1[r, m*8+j]*dw2[j,a] + sum_c(C1[m,c])*db2[a] + d1[m]
    p['ky1'] = jnp.asarray(np.kron(np.eye(NM1, dtype=np.float32), dw2), BF16)  # (128, 336)
    by1 = (c1.sum(axis=1)[:, None] * db2[None, :] + d1[:, None]).reshape(1, NM1 * A)
    p['by1'] = jnp.asarray(by1)                                        # (1, 336)

    p['k2'] = jnp.asarray(np.kron(c2.T, np.eye(A, dtype=np.float32)), BF16)    # (336, 84)
    p['by2'] = jnp.asarray(np.repeat(d2, A)[None, :])                  # (1, 84)
    p['k3'] = jnp.asarray(np.kron(c3.T, np.eye(A, dtype=np.float32)), BF16)    # (84, 21)
    p['by3'] = jnp.asarray(np.repeat(d3, A)[None, :])                  # (1, 21)
    return p


# ---------------------------------------------------------------------------
# Pure-JAX reference (mirrors the PyTorch module) for validation.
# ---------------------------------------------------------------------------
def reference_forward(one_hot, raw, eps):
    o2a = raw['o2a']
    alpha = jnp.einsum('bla,ar->blr', one_hot, o2a)                    # (B, 15, 9)
    ohT = jnp.transpose(one_hot, (0, 2, 1))                            # (B, 21, 15)
    alT = jnp.transpose(alpha, (0, 2, 1))                              # (B, 9, 15)

    def conv_fh(x, w, b, padw):
        if padw:
            x = jnp.pad(x, ((0, 0), (0, 0), (padw, padw)))
        kw = w.shape[-1]
        wout = x.shape[-1] - kw + 1
        out = jnp.stack([jnp.einsum('ohd,bhd->bo', w, x[:, :, s:s + kw])
                         for s in range(wout)], axis=-1)
        return out + b[None, :, None]

    convs = []
    for name, _h, _kw, padw, _off, is_alpha in _CONV_DEFS:
        x = alT if is_alpha else ohT
        convs.append(conv_fh(x, raw['conv_w'][name], raw['conv_b'][name], padw))
    all_conv = jnp.concatenate(convs, axis=-1)                         # (B, 64, 82)

    def mlp(x, ws, bs):
        h = jax.nn.relu(x @ ws[0] + bs[0])
        h = jax.nn.relu(h @ ws[1] + bs[1])
        return h @ ws[2] + bs[2]

    mu = mlp(all_conv, raw['mu_w'], raw['mu_b'])                       # (B, 64, 15)
    log_var = mlp(all_conv, raw['lv_w'], raw['lv_b'])
    z = mu + eps * jnp.exp(0.5 * log_var)

    a = jax.nn.relu(z[..., None] * raw['dw1'] + raw['db1'])            # (B, 64, 15, 8)
    x1 = a @ raw['dw2'] + raw['db2']                                   # (B, 64, 15, 21)
    y = jax.nn.relu(jnp.einsum('mo,bolc->bmlc', raw['c1'], x1) + raw['d1'][:, None, None])
    y = jax.nn.relu(jnp.einsum('pm,bmlc->bplc', raw['c2'], y) + raw['d2'][:, None, None])
    y = jnp.einsum('qp,bplc->bqlc', raw['c3'], y) + raw['d3'][:, None, None]
    x_recon = jax.nn.sigmoid(y[:, 0])                                  # (B, 15, 21)
    return x_recon, mu, log_var, alpha


if __name__ == "__main__":
    B = 2
    k_in, k_eps = jax.random.split(jax.random.PRNGKey(0))

    # x_list: B one-hot sequences, each (L, 21); torch.stack -> (B, L, 21).
    classes = jax.random.randint(k_in, (B, L), 0, A)
    one_hot = jax.nn.one_hot(classes, A, dtype=F32)
    # eps plays the role of torch.randn_like(std) in reparameterize().
    eps = jax.random.normal(k_eps, (B, NC, ZDIM), dtype=F32)

    params = init_params(jax.random.PRNGKey(42))

    fwd = jax.jit(vae_forward)
    outs = jax.block_until_ready(fwd(one_hot, params, eps))
    oh_out, x_recon, mu, log_var, alpha = outs

    assert oh_out.shape == (B, L, A)
    assert x_recon.shape == (B, L, A)
    assert mu.shape == (B, NC, ZDIM)
    assert log_var.shape == (B, NC, ZDIM)
    assert alpha.shape == (B, L, AA)
    for t in (x_recon, mu, log_var, alpha):
        assert bool(jnp.all(jnp.isfinite(t)))

    # validate the fused bf16 kernels against a pure-JAX f32 port of the module
    ref_xr, ref_mu, ref_lv, ref_alpha = reference_forward(one_hot, params['raw'], eps)
    tol = {'x_recon': 2.5e-2, 'mu': 2.5e-2, 'log_var': 2.5e-2, 'alpha': 1e-3}
    for got, want, name in ((x_recon, ref_xr, 'x_recon'), (mu, ref_mu, 'mu'),
                            (log_var, ref_lv, 'log_var'), (alpha, ref_alpha, 'alpha')):
        err = float(jnp.max(jnp.abs(got - want)))
        assert err < tol[name], (name, err)

    print("KERNEL_OK")
</pallas_src>

<mosaic_0001>
module attributes {stable_mosaic.version = 11 : i64} {
  func.func @_conv_kernel(%arg0: i32, %arg1: memref<8x315xbf16, #tpu.memory_space<vmem>>, %arg2: memref<315x5383xbf16, #tpu.memory_space<vmem>>, %arg3: memref<1x5248xf32, #tpu.memory_space<vmem>>, %arg4: memref<8x5248xbf16, #tpu.memory_space<vmem>>, %arg5: memref<8x135xf32, #tpu.memory_space<vmem>>) attributes {dimension_semantics = [#tpu.dimension_semantics<parallel>], iteration_bounds = array<i64: 1>, scalar_prefetch = 0 : i64, scratch_operands = 0 : i64, tpu.core_type = #tpu.core_type<tc>, window_params = [{transform_indices = @transform_0, window_bounds = array<i64: 8, 315>}, {pipeline_mode = #tpu.pipeline_mode<synchronous>, transform_indices = @transform_1, window_bounds = array<i64: 315, 5383>}, {pipeline_mode = #tpu.pipeline_mode<synchronous>, transform_indices = @transform_2, window_bounds = array<i64: 1, 5248>}, {transform_indices = @transform_3, window_bounds = array<i64: 8, 5248>}, {transform_indices = @transform_4, window_bounds = array<i64: 8, 135>}]} {
    %c0 = arith.constant 0 : index
    %c0_0 = arith.constant 0 : index
    %0 = vector.load %arg1[%c0, %c0_0] : memref<8x315xbf16, #tpu.memory_space<vmem>>, vector<8x315xbf16>
    %c0_1 = arith.constant 0 : index
    %c0_2 = arith.constant 0 : index
    %1 = vector.load %arg2[%c0_1, %c0_2] : memref<315x5383xbf16, #tpu.memory_space<vmem>>, vector<315x5383xbf16>
    %cst = arith.constant dense<0.000000e+00> : vector<8x5383xf32>
    %2 = tpu.matmul %0, %1, %cst {dimension_numbers = #tpu.dot_dimension_numbers<[1], [0], [0], [1], [0, 0, 1, 1], [], []>} : vector<8x315xbf16>, vector<315x5383xbf16>, vector<8x5383xf32> -> vector<8x5383xf32>
    %3 = vector.extract_strided_slice %2 {offsets = [0, 0], sizes = [8, 5248], strides = [1, 1]} : vector<8x5383xf32> to vector<8x5248xf32>
    %c0_3 = arith.constant 0 : index
    %c0_4 = arith.constant 0 : index
    %4 = vector.load %arg3[%c0_3, %c0_4] : memref<1x5248xf32, #tpu.memory_space<vmem>>, vector<1x5248xf32>
    %5 = vector.broadcast %4 : vector<1x5248xf32> to vector<8x5248xf32>
    %6 = arith.addf %3, %5 : vector<8x5248xf32>
    %7 = arith.truncf %6 : vector<8x5248xf32> to vector<8x5248xbf16>
    %c0_5 = arith.constant 0 : index
    %c0_6 = arith.constant 0 : index
    %8 = vector.load %arg4[%c0_5, %c0_6] : memref<8x5248xbf16, #tpu.memory_space<vmem>>, vector<8x5248xbf16>
    tpu.vector_store %arg4[%c0_5, %c0_6], %7 {strides = array<i32>} : memref<8x5248xbf16, #tpu.memory_space<vmem>>, vector<8x5248xbf16>,
    %9 = vector.extract_strided_slice %2 {offsets = [0, 5248], sizes = [8, 135], strides = [1, 1]} : vector<8x5383xf32> to vector<8x135xf32>
    %c0_7 = arith.constant 0 : index
    %c0_8 = arith.constant 0 : index
    %10 = vector.load %arg5[%c0_7, %c0_8] : memref<8x135xf32, #tpu.memory_space<vmem>>, vector<8x135xf32>
    tpu.vector_store %arg5[%c0_7, %c0_8], %9 {strides = array<i32>} : memref<8x135xf32, #tpu.memory_space<vmem>>, vector<8x135xf32>,
    return
  }
  func.func @transform_0(%arg0: i32) -> (i32, i32) {
    %c0_i32 = arith.constant 0 : i32
    %c0_i32_0 = arith.constant 0 : i32
    return %arg0, %c0_i32 : i32, i32
  }
  func.func @transform_1(%arg0: i32) -> (i32, i32) {
    %c0_i32 = arith.constant 0 : i32
    %c0_i32_0 = arith.constant 0 : i32
    %c0_i32_1 = arith.constant 0 : i32
    return %c0_i32, %c0_i32_0 : i32, i32
  }
  func.func @transform_2(%arg0: i32) -> (i32, i32) {
    %c0_i32 = arith.constant 0 : i32
    %c0_i32_0 = arith.constant 0 : i32
    %c0_i32_1 = arith.constant 0 : i32
    return %c0_i32, %c0_i32_0 : i32, i32
  }
  func.func @transform_3(%arg0: i32) -> (i32, i32) {
    %c0_i32 = arith.constant 0 : i32
    %c0_i32_0 = arith.constant 0 : i32
    return %arg0, %c0_i32 : i32, i32
  }
  func.func @transform_4(%arg0: i32) -> (i32, i32) {
    %c0_i32 = arith.constant 0 : i32
    %c0_i32_0 = arith.constant 0 : i32
    return %arg0, %c0_i32 : i32, i32
  }
}

module attributes {stable_mosaic.version = 11 : i64} {
  func.func @_mlp_decoder_kernel(%arg0: i32, %arg1: memref<512x82xbf16, #tpu.memory_space<vmem>>, %arg2: memref<8x16x64xf32, #tpu.memory_space<vmem>>, %arg3: memref<82x256xbf16, #tpu.memory_space<vmem>>, %arg4: memref<1x256xf32, #tpu.memory_space<vmem>>, %arg5: memref<256x64xbf16, #tpu.memory_space<vmem>>, %arg6: memref<1x64xf32, #tpu.memory_space<vmem>>, %arg7: memref<64x32xbf16, #tpu.memory_space<vmem>>, %arg8: memref<1x32xf32, #tpu.memory_space<vmem>>, %arg9: memref<1x512xf32, #tpu.memory_space<vmem>>, %arg10: memref<1x512xf32, #tpu.memory_space<vmem>>, %arg11: memref<512x128xbf16, #tpu.memory_space<vmem>>, %arg12: memref<128x336xbf16, #tpu.memory_space<vmem>>, %arg13: memref<1x336xf32, #tpu.memory_space<vmem>>, %arg14: memref<336x84xbf16, #tpu.memory_space<vmem>>, %arg15: memref<1x84xf32, #tpu.memory_space<vmem>>, %arg16: memref<84x21xbf16, #tpu.memory_space<vmem>>, %arg17: memref<1x21xf32, #tpu.memory_space<vmem>>, %arg18: memref<512x32xf32, #tpu.memory_space<vmem>>, %arg19: memref<128x21xf32, #tpu.memory_space<vmem>>) attributes {dimension_semantics = [#tpu.dimension_semantics<parallel>], iteration_bounds = array<i64: 1>, scalar_prefetch = 0 : i64, scratch_operands = 0 : i64, tpu.core_type = #tpu.core_type<tc>, window_params = [{transform_indices = @transform_0, window_bounds = array<i64: 512, 82>}, {transform_indices = @transform_1, window_bounds = array<i64: 8, 16, 64>}, {pipeline_mode = #tpu.pipeline_mode<synchronous>, transform_indices = @transform_2, window_bounds = array<i64: 82, 256>}, {pipeline_mode = #tpu.pipeline_mode<synchronous>, transform_indices = @transform_3, window_bounds = array<i64: 1, 256>}, {pipeline_mode = #tpu.pipeline_mode<synchronous>, transform_indices = @transform_4, window_bounds = array<i64: 256, 64>}, {pipeline_mode = #tpu.pipeline_mode<synchronous>, transform_indices = @transform_5, window_bounds = array<i64: 1, 64>}, {pipeline_mode = #tpu.pipeline_mode<synchronous>, transform_indices = @transform_6, window_bounds = array<i64: 64, 32>}, {pipeline_mode = #tpu.pipeline_mode<synchronous>, transform_indices = @transform_7, window_bounds = array<i64: 1, 32>}, {pipeline_mode = #tpu.pipeline_mode<synchronous>, transform_indices = @transform_8, window_bounds = array<i64: 1, 512>}, {pipeline_mode = #tpu.pipeline_mode<synchronous>, transform_indices = @transform_9, window_bounds = array<i64: 1, 512>}, {pipeline_mode = #tpu.pipeline_mode<synchronous>, transform_indices = @transform_10, window_bounds = array<i64: 512, 128>}, {pipeline_mode = #tpu.pipeline_mode<synchronous>, transform_indices = @transform_11, window_bounds = array<i64: 128, 336>}, {pipeline_mode = #tpu.pipeline_mode<synchronous>, transform_indices = @transform_12, window_bounds = array<i64: 1, 336>}, {pipeline_mode = #tpu.pipeline_mode<synchronous>, transform_indices = @transform_13, window_bounds = array<i64: 336, 84>}, {pipeline_mode = #tpu.pipeline_mode<synchronous>, transform_indices = @transform_14, window_bounds = array<i64: 1, 84>}, {pipeline_mode = #tpu.pipeline_mode<synchronous>, transform_indices = @transform_15, window_bounds = array<i64: 84, 21>}, {pipeline_mode = #tpu.pipeline_mode<synchronous>, transform_indices = @transform_16, window_bounds = array<i64: 1, 21>}, {transform_indices = @transform_17, window_bounds = array<i64: 512, 32>}, {transform_indices = @transform_18, window_bounds = array<i64: 128, 21>}]} {
    %c0 = arith.constant 0 : index
    %c0_0 = arith.constant 0 : index
    %0 = vector.load %arg1[%c0, %c0_0] : memref<512x82xbf16, #tpu.memory_space<vmem>>, vector<512x82xbf16>
    %c0_1 = arith.constant 0 : index
    %c0_2 = arith.constant 0 : index
    %1 = vector.load %arg3[%c0_1, %c0_2] : memref<82x256xbf16, #tpu.memory_space<vmem>>, vector<82x256xbf16>
    %cst = arith.constant dense<0.000000e+00> : vector<512x256xf32>
    %2 = tpu.matmul %0, %1, %cst {dimension_numbers = #tpu.dot_dimension_numbers<[1], [0], [0], [1], [0, 0, 1, 1], [], []>} : vector<512x82xbf16>, vector<82x256xbf16>, vector<512x256xf32> -> vector<512x256xf32>
    %c0_3 = arith.constant 0 : index
    %c0_4 = arith.constant 0 : index
    %3 = vector.load %arg4[%c0_3, %c0_4] : memref<1x256xf32, #tpu.memory_space<vmem>>, vector<1x256xf32>
    %4 = vector.broadcast %3 : vector<1x256xf32> to vector<512x256xf32>
    %5 = arith.addf %2, %4 : vector<512x256xf32>
    %cst_5 = arith.constant 0.000000e+00 : f32
    %6 = vector.broadcast %cst_5 : f32 to vector<512x256xf32>
    %7 = arith.maximumf %5, %6 : vector<512x256xf32>
    %8 = arith.truncf %7 : vector<512x256xf32> to vector<512x256xbf16>
    %c0_6 = arith.constant 0 : index
    %c0_7 = arith.constant 0 : index
    %9 = vector.load %arg5[%c0_6, %c0_7] : memref<256x64xbf16, #tpu.memory_space<vmem>>, vector<256x64xbf16>
    %cst_8 = arith.constant dense<0.000000e+00> : vector<512x64xf32>
    %10 = tpu.matmul %8, %9, %cst_8 {dimension_numbers = #tpu.dot_dimension_numbers<[1], [0], [0], [1], [0, 0, 1, 1], [], []>} : vector<512x256xbf16>, vector<256x64xbf16>, vector<512x64xf32> -> vector<512x64xf32>
    %c0_9 = arith.constant 0 : index
    %c0_10 = arith.constant 0 : index
    %11 = vector.load %arg6[%c0_9, %c0_10] : memref<1x64xf32, #tpu.memory_space<vmem>>, vector<1x64xf32>
    %12 = vector.broadcast %11 : vector<1x64xf32> to vector<512x64xf32>
    %13 = arith.addf %10, %12 : vector<512x64xf32>
    %cst_11 = arith.constant 0.000000e+00 : f32
    %14 = vector.broadcast %cst_11 : f32 to vector<512x64xf32>
    %15 = arith.maximumf %13, %14 : vector<512x64xf32>
    %16 = arith.truncf %15 : vector<512x64xf32> to vector<512x64xbf16>
    %c0_12 = arith.constant 0 : index
    %c0_13 = arith.constant 0 : index
    %17 = vector.load %arg7[%c0_12, %c0_13] : memref<64x32xbf16, #tpu.memory_space<vmem>>, vector<64x32xbf16>
    %cst_14 = arith.constant dense<0.000000e+00> : vector<512x32xf32>
    %18 = tpu.matmul %16, %17, %cst_14 {dimension_numbers = #tpu.dot_dimension_numbers<[1], [0], [0], [1], [0, 0, 1, 1], [], []>} : vector<512x64xbf16>, vector<64x32xbf16>, vector<512x32xf32> -> vector<512x32xf32>
    %c0_15 = arith.constant 0 : index
    %c0_16 = arith.constant 0 : index
    %19 = vector.load %arg8[%c0_15, %c0_16] : memref<1x32xf32, #tpu.memory_space<vmem>>, vector<1x32xf32>
    %20 = vector.broadcast %19 : vector<1x32xf32> to vector<512x32xf32>
    %21 = arith.addf %18, %20 : vector<512x32xf32>
    %c0_17 = arith.constant 0 : index
    %c0_18 = arith.constant 0 : index
    %22 = vector.load %arg18[%c0_17, %c0_18] : memref<512x32xf32, #tpu.memory_space<vmem>>, vector<512x32xf32>
    tpu.vector_store %arg18[%c0_17, %c0_18], %21 {strides = array<i32>} : memref<512x32xf32, #tpu.memory_space<vmem>>, vector<512x32xf32>,
    %23 = vector.extract_strided_slice %21 {offsets = [0, 0], sizes = [512, 16], strides = [1, 1]} : vector<512x32xf32> to vector<512x16xf32>
    %24 = vector.extract_strided_slice %21 {offsets = [0, 16], sizes = [512, 16], strides = [1, 1]} : vector<512x32xf32> to vector<512x16xf32>
    %cst_19 = arith.constant 5.000000e-01 : f32
    %25 = vector.broadcast %cst_19 : f32 to vector<512x16xf32>
    %26 = arith.mulf %25, %24 : vector<512x16xf32>
    %27 = math.exp %26 : vector<512x16xf32>
    %28 = vector.shape_cast %23 : vector<512x16xf32> to vector<8x64x16xf32>
    %29 = tpu.transpose %28, [0, 2, 1] : vector<8x64x16xf32> -> vector<8x16x64xf32>
    %30 = vector.shape_cast %27 : vector<512x16xf32> to vector<8x64x16xf32>
    %31 = tpu.transpose %30, [0, 2, 1] : vector<8x64x16xf32> -> vector<8x16x64xf32>
    %c0_20 = arith.constant 0 : index
    %c0_21 = arith.constant 0 : index
    %c0_22 = arith.constant 0 : index
    %32 = vector.load %arg2[%c0_20, %c0_21, %c0_22] : memref<8x16x64xf32, #tpu.memory_space<vmem>>, vector<8x16x64xf32>
    %33 = arith.mulf %32, %31 : vector<8x16x64xf32>
    %34 = arith.addf %29, %33 : vector<8x16x64xf32>
    %35 = vector.shape_cast %34 : vector<8x16x64xf32> to vector<128x64xf32>
    %36 = tpu.concatenate %35, %35, %35, %35, %35, %35, %35, %35 in 1 : vector<128x64xf32>, vector<128x64xf32>, vector<128x64xf32>, vector<128x64xf32>, vector<128x64xf32>, vector<128x64xf32>, vector<128x64xf32>, vector<128x64xf32> -> vector<128x512xf32>
    %c0_23 = arith.constant 0 : index
    %c0_24 = arith.constant 0 : index
    %37 = vector.load %arg9[%c0_23, %c0_24] : memref<1x512xf32, #tpu.memory_space<vmem>>, vector<1x512xf32>
    %38 = vector.broadcast %37 : vector<1x512xf32> to vector<128x512xf32>
    %39 = arith.mulf %36, %38 : vector<128x512xf32>
    %c0_25 = arith.constant 0 : index
    %c0_26 = arith.constant 0 : index
    %40 = vector.load %arg10[%c0_25, %c0_26] : memref<1x512xf32, #tpu.memory_space<vmem>>, vector<1x512xf32>
    %41 = vector.broadcast %40 : vector<1x512xf32> to vector<128x512xf32>
    %42 = arith.addf %39, %41 : vector<128x512xf32>
    %cst_27 = arith.constant 0.000000e+00 : f32
    %43 = vector.broadcast %cst_27 : f32 to vector<128x512xf32>
    %44 = arith.maximumf %42, %43 : vector<128x512xf32>
    %45 = arith.truncf %44 : vector<128x512xf32> to vector<128x512xbf16>
    %c0_28 = arith.constant 0 : index
    %c0_29 = arith.constant 0 : index
    %46 = vector.load %arg11[%c0_28, %c0_29] : memref<512x128xbf16, #tpu.memory_space<vmem>>, vector<512x128xbf16>
    %cst_30 = arith.constant dense<0.000000e+00> : vector<128x128xf32>
    %47 = tpu.matmul %45, %46, %cst_30 {dimension_numbers = #tpu.dot_dimension_numbers<[1], [0], [0], [1], [0, 0, 1, 1], [], []>} : vector<128x512xbf16>, vector<512x128xbf16>, vector<128x128xf32> -> vector<128x128xf32>
    %48 = arith.truncf %47 : vector<128x128xf32> to vector<128x128xbf16>
    %c0_31 = arith.constant 0 : index
    %c0_32 = arith.constant 0 : index
    %49 = vector.load %arg12[%c0_31, %c0_32] : memref<128x336xbf16, #tpu.memory_space<vmem>>, vector<128x336xbf16>
    %cst_33 = arith.constant dense<0.000000e+00> : vector<128x336xf32>
    %50 = tpu.matmul %48, %49, %cst_33 {dimension_numbers = #tpu.dot_dimension_numbers<[1], [0], [0], [1], [0, 0, 1, 1], [], []>} : vector<128x128xbf16>, vector<128x336xbf16>, vector<128x336xf32> -> vector<128x336xf32>
    %c0_34 = arith.constant 0 : index
    %c0_35 = arith.constant 0 : index
    %51 = vector.load %arg13[%c0_34, %c0_35] : memref<1x336xf32, #tpu.memory_space<vmem>>, vector<1x336xf32>
    %52 = vector.broadcast %51 : vector<1x336xf32> to vector<128x336xf32>
    %53 = arith.addf %50, %52 : vector<128x336xf32>
    %cst_36 = arith.constant 0.000000e+00 : f32
    %54 = vector.broadcast %cst_36 : f32 to vector<128x336xf32>
    %55 = arith.maximumf %53, %54 : vector<128x336xf32>
    %56 = arith.truncf %55 : vector<128x336xf32> to vector<128x336xbf16>
    %c0_37 = arith.constant 0 : index
    %c0_38 = arith.constant 0 : index
    %57 = vector.load %arg14[%c0_37, %c0_38] : memref<336x84xbf16, #tpu.memory_space<vmem>>, vector<336x84xbf16>
    %cst_39 = arith.constant dense<0.000000e+00> : vector<128x84xf32>
    %58 = tpu.matmul %56, %57, %cst_39 {dimension_numbers = #tpu.dot_dimension_numbers<[1], [0], [0], [1], [0, 0, 1, 1], [], []>} : vector<128x336xbf16>, vector<336x84xbf16>, vector<128x84xf32> -> vector<128x84xf32>
    %c0_40 = arith.constant 0 : index
    %c0_41 = arith.constant 0 : index
    %59 = vector.load %arg15[%c0_40, %c0_41] : memref<1x84xf32, #tpu.memory_space<vmem>>, vector<1x84xf32>
    %60 = vector.broadcast %59 : vector<1x84xf32> to vector<128x84xf32>
    %61 = arith.addf %58, %60 : vector<128x84xf32>
    %cst_42 = arith.constant 0.000000e+00 : f32
    %62 = vector.broadcast %cst_42 : f32 to vector<128x84xf32>
    %63 = arith.maximumf %61, %62 : vector<128x84xf32>
    %64 = arith.truncf %63 : vector<128x84xf32> to vector<128x84xbf16>
    %c0_43 = arith.constant 0 : index
    %c0_44 = arith.constant 0 : index
    %65 = vector.load %arg16[%c0_43, %c0_44] : memref<84x21xbf16, #tpu.memory_space<vmem>>, vector<84x21xbf16>
    %cst_45 = arith.constant dense<0.000000e+00> : vector<128x21xf32>
    %66 = tpu.matmul %64, %65, %cst_45 {dimension_numbers = #tpu.dot_dimension_numbers<[1], [0], [0], [1], [0, 0, 1, 1], [], []>} : vector<128x84xbf16>, vector<84x21xbf16>, vector<128x21xf32> -> vector<128x21xf32>
    %c0_46 = arith.constant 0 : index
    %c0_47 = arith.constant 0 : index
    %67 = vector.load %arg17[%c0_46, %c0_47] : memref<1x21xf32, #tpu.memory_space<vmem>>, vector<1x21xf32>
    %68 = vector.broadcast %67 : vector<1x21xf32> to vector<128x21xf32>
    %69 = arith.addf %66, %68 : vector<128x21xf32>
    %70 = arith.negf %69 : vector<128x21xf32>
    %71 = math.exp %70 : vector<128x21xf32>
    %cst_48 = arith.constant 1.000000e+00 : f32
    %72 = vector.broadcast %cst_48 : f32 to vector<128x21xf32>
    %73 = arith.addf %72, %71 : vector<128x21xf32>
    %74 = arith.divf %72, %73 : vector<128x21xf32>
    %c0_49 = arith.constant 0 : index
    %c0_50 = arith.constant 0 : index
    %75 = vector.load %arg19[%c0_49, %c0_50] : memref<128x21xf32, #tpu.memory_space<vmem>>, vector<128x21xf32>
    tpu.vector_store %arg19[%c0_49, %c0_50], %74 {strides = array<i32>} : memref<128x21xf32, #tpu.memory_space<vmem>>, vector<128x21xf32>,
    return
  }
  func.func @transform_0(%arg0: i32) -> (i32, i32) {
    %c0_i32 = arith.constant 0 : i32
    %c0_i32_0 = arith.constant 0 : i32
    return %arg0, %c0_i32 : i32, i32
  }
  func.func @transform_1(%arg0: i32) -> (i32, i32, i32) {
    %c0_i32 = arith.constant 0 : i32
    %c0_i32_0 = arith.constant 0 : i32
    %c0_i32_1 = arith.constant 0 : i32
    return %arg0, %c0_i32, %c0_i32_0 : i32, i32, i32
  }
  func.func @transform_2(%arg0: i32) -> (i32, i32) {
    %c0_i32 = arith.constant 0 : i32
    %c0_i32_0 = arith.constant 0 : i32
    %c0_i32_1 = arith.constant 0 : i32
    return %c0_i32, %c0_i32_0 : i32, i32
  }
  func.func @transform_3(%arg0: i32) -> (i32, i32) {
    %c0_i32 = arith.constant 0 : i32
    %c0_i32_0 = arith.constant 0 : i32
    %c0_i32_1 = arith.constant 0 : i32
    return %c0_i32, %c0_i32_0 : i32, i32
  }
  func.func @transform_4(%arg0: i32) -> (i32, i32) {
    %c0_i32 = arith.constant 0 : i32
    %c0_i32_0 = arith.constant 0 : i32
    %c0_i32_1 = arith.constant 0 : i32
    return %c0_i32, %c0_i32_0 : i32, i32
  }
  func.func @transform_5(%arg0: i32) -> (i32, i32) {
    %c0_i32 = arith.constant 0 : i32
    %c0_i32_0 = arith.constant 0 : i32
    %c0_i32_1 = arith.constant 0 : i32
    return %c0_i32, %c0_i32_0 : i32, i32
  }
  func.func @transform_6(%arg0: i32) -> (i32, i32) {
    %c0_i32 = arith.constant 0 : i32
    %c0_i32_0 = arith.constant 0 : i32
    %c0_i32_1 = arith.constant 0 : i32
    return %c0_i32, %c0_i32_0 : i32, i32
  }
  func.func @transform_7(%arg0: i32) -> (i32, i32) {
    %c0_i32 = arith.constant 0 : i32
    %c0_i32_0 = arith.constant 0 : i32
    %c0_i32_1 = arith.constant 0 : i32
    return %c0_i32, %c0_i32_0 : i32, i32
  }
  func.func @transform_8(%arg0: i32) -> (i32, i32) {
    %c0_i32 = arith.constant 0 : i32
    %c0_i32_0 = arith.constant 0 : i32
    %c0_i32_1 = arith.constant 0 : i32
    return %c0_i32, %c0_i32_0 : i32, i32
  }
  func.func @transform_9(%arg0: i32) -> (i32, i32) {
    %c0_i32 = arith.constant 0 : i32
    %c0_i32_0 = arith.constant 0 : i32
    %c0_i32_1 = arith.constant 0 : i32
    return %c0_i32, %c0_i32_0 : i32, i32
  }
  func.func @transform_10(%arg0: i32) -> (i32, i32) {
    %c0_i32 = arith.constant 0 : i32
    %c0_i32_0 = arith.constant 0 : i32
    %c0_i32_1 = arith.constant 0 : i32
    return %c0_i32, %c0_i32_0 : i32, i32
  }
  func.func @transform_11(%arg0: i32) -> (i32, i32) {
    %c0_i32 = arith.constant 0 : i32
    %c0_i32_0 = arith.constant 0 : i32
    %c0_i32_1 = arith.constant 0 : i32
    return %c0_i32, %c0_i32_0 : i32, i32
  }
  func.func @transform_12(%arg0: i32) -> (i32, i32) {
    %c0_i32 = arith.constant 0 : i32
    %c0_i32_0 = arith.constant 0 : i32
    %c0_i32_1 = arith.constant 0 : i32
    return %c0_i32, %c0_i32_0 : i32, i32
  }
  func.func @transform_13(%arg0: i32) -> (i32, i32) {
    %c0_i32 = arith.constant 0 : i32
    %c0_i32_0 = arith.constant 0 : i32
    %c0_i32_1 = arith.constant 0 : i32
    return %c0_i32, %c0_i32_0 : i32, i32
  }
  func.func @transform_14(%arg0: i32) -> (i32, i32) {
    %c0_i32 = arith.constant 0 : i32
    %c0_i32_0 = arith.constant 0 : i32
    %c0_i32_1 = arith.constant 0 : i32
    return %c0_i32, %c0_i32_0 : i32, i32
  }
  func.func @transform_15(%arg0: i32) -> (i32, i32) {
    %c0_i32 = arith.constant 0 : i32
    %c0_i32_0 = arith.constant 0 : i32
    %c0_i32_1 = arith.constant 0 : i32
    return %c0_i32, %c0_i32_0 : i32, i32
  }
  func.func @transform_16(%arg0: i32) -> (i32, i32) {
    %c0_i32 = arith.constant 0 : i32
    %c0_i32_0 = arith.constant 0 : i32
    %c0_i32_1 = arith.constant 0 : i32
    return %c0_i32, %c0_i32_0 : i32, i32
  }
  func.func @transform_17(%arg0: i32) -> (i32, i32) {
    %c0_i32 = arith.constant 0 : i32
    %c0_i32_0 = arith.constant 0 : i32
    return %arg0, %c0_i32 : i32, i32
  }
  func.func @transform_18(%arg0: i32) -> (i32, i32) {
    %c0_i32 = arith.constant 0 : i32
    %c0_i32_0 = arith.constant 0 : i32
    return %arg0, %c0_i32 : i32, i32
  }
}

</mosaic_0001>

<llo_original>
// kernel: vae_forward.3
$region0: #{vae_forward.3}
  #allocation0 [shape = 'u32[]', space=smem, size = 0x4, offset = 0x4, fixed_abs, tag = 'smem constant byte address 0x4 - core index']
  #allocation1 [shape = 'u32[72,128]{1,0:T(1,128)}', space=vmem, size = 0x9000, scoped, tag = 'internal scratch']
  %s0 = inlined_call_operand.vmem [shape: bf16[512,82], index: 0, kind: input, shape index: {}]
  %s1 = inlined_call_operand.vmem [shape: f32[8,16,64], index: 1, kind: input, shape index: {}]
  %s2 = inlined_call_operand.hbm [shape: bf16[82,256], index: 2, kind: input, shape index: {}]
  %s3 = inlined_call_operand.hbm [shape: f32[1,256], index: 3, kind: input, shape index: {}]
  %s4 = inlined_call_operand.vmem [shape: bf16[256,64], index: 4, kind: input, shape index: {}]
  %s5 = inlined_call_operand.hbm [shape: f32[1,64], index: 5, kind: input, shape index: {}]
  %s6 = inlined_call_operand.vmem [shape: bf16[64,32], index: 6, kind: input, shape index: {}]
  %s7 = inlined_call_operand.hbm [shape: f32[1,32], index: 7, kind: input, shape index: {}]
  %s8 = inlined_call_operand.hbm [shape: f32[1,512], index: 8, kind: input, shape index: {}]
  %s9 = inlined_call_operand.hbm [shape: f32[1,512], index: 9, kind: input, shape index: {}]
  %s10 = inlined_call_operand.hbm [shape: bf16[512,128], index: 10, kind: input, shape index: {}]
  %s11 = inlined_call_operand.vmem [shape: bf16[128,336], index: 11, kind: input, shape index: {}]
  %s12 = inlined_call_operand.hbm [shape: f32[1,336], index: 12, kind: input, shape index: {}]
  %s13 = inlined_call_operand.vmem [shape: bf16[336,84], index: 13, kind: input, shape index: {}]
  %s14 = inlined_call_operand.hbm [shape: f32[1,84], index: 14, kind: input, shape index: {}]
  %s15 = inlined_call_operand.vmem [shape: bf16[84,21], index: 15, kind: input, shape index: {}]
  %s16 = inlined_call_operand.hbm [shape: f32[1,21], index: 16, kind: input, shape index: {}]
  %s17 = inlined_call_operand.vmem [shape: f32[512,32], index: 17, kind: output, shape index: {0}]
  %s18 = inlined_call_operand.vmem [shape: f32[128,21], index: 18, kind: output, shape index: {1}]
  %19 = xla_tuple %s17, %s18
  %s20 = sld [smem:[#allocation0]]
  $region126: #{vae_forward.3} parent=0
    _
  %s22 = ssub.s32 1, %s20
  %s23 = scalar_select 0, %s22, %s20
  $region1: #{vae_forward.3} parent=0
    #allocation2 [shape = 'u8[45056]{0}', space=vmem, size = 0xb000, scoped, tag = 'input window, operand 2, single buffered']
    #allocation3 [shape = 's32[1]{0}', space=sflag, size = 0x4, scoped, tag = 'scoped memory for vae_forward.3']
    #allocation4 [shape = 'u8[1024]{0}', space=vmem, size = 0x400, scoped, tag = 'input window, operand 3, single buffered']
    #allocation5 [shape = 's32[1]{0}', space=sflag, size = 0x4, scoped, tag = 'scoped memory for vae_forward.3']
    #allocation6 [shape = 'u8[512]{0}', space=vmem, size = 0x400, scoped, tag = 'input window, operand 5, single buffered']
    #allocation7 [shape = 'u8[512]{0}', space=vmem, size = 0x400, scoped, tag = 'input window, operand 7, single buffered']
    #allocation8 [shape = 's32[1]{0}', space=sflag, size = 0x4, scoped, tag = 'scoped memory for vae_forward.3']
    #allocation9 [shape = 'u8[2048]{0}', space=vmem, size = 0x800, scoped, tag = 'input window, operand 8, single buffered']
    #allocation10 [shape = 'u8[2048]{0}', space=vmem, size = 0x800, scoped, tag = 'input window, operand 9, single buffered']
    #allocation11 [shape = 's32[1]{0}', space=sflag, size = 0x4, scoped, tag = 'scoped memory for vae_forward.3']
    #allocation12 [shape = 'u8[131072]{0}', space=vmem, size = 0x20000, scoped, tag = 'input window, operand 10, single buffered']
    #allocation13 [shape = 'u8[1536]{0}', space=vmem, size = 0x800, scoped, tag = 'input window, operand 12, single buffered']
    #allocation14 [shape = 's32[1]{0}', space=sflag, size = 0x4, scoped, tag = 'scoped memory for vae_forward.3']
    #allocation15 [shape = 'u8[512]{0}', space=vmem, size = 0x400, scoped, tag = 'input window, operand 14, single buffered']
    #allocation16 [shape = 'u8[512]{0}', space=vmem, size = 0x400, scoped, tag = 'input window, operand 16, single buffered']
    #allocation17 [shape = 's32[1]{0}', space=sflag, size = 0x4, scoped, tag = 'scoped memory for vae_forward.3']
    %24 = vsyncpa [#allocation3], 0
    %25 = vsyncpa [#allocation5], 0
    %26 = vsyncpa [#allocation8], 0
    %27 = vsyncpa [#allocation11], 0
    %28 = vsyncpa [#allocation14], 0
    %29 = vsyncpa [#allocation17], 0
    // Predicated region
    $region2: #{vae_forward.3} parent=1 // pred_check
      _
    $region3: #{vae_forward.3} parent=1 // pred_check_branch
      %31 = sbr.rel (0) target = $region5
    $region4: #{vae_forward.3} parent=1 // pred_region
      _
    $region5: #{vae_forward.3} parent=1 // pred_fallthru
      _
    // Predicated region
    $region6: #{vae_forward.3} parent=1 // pred_check
      _
    $region7: #{vae_forward.3} parent=1 // pred_check_branch
      %33 = sbr.rel (0) target = $region9
    $region8: #{vae_forward.3} parent=1 // pred_region
      _
    $region9: #{vae_forward.3} parent=1 // pred_fallthru
      _
    // Predicated region
    $region10: #{vae_forward.3} parent=1 // pred_check
      _
    $region11: #{vae_forward.3} parent=1 // pred_check_branch
      %35 = sbr.rel (0) target = $region13
    $region12: #{vae_forward.3} parent=1 // pred_region
      %37 = vsyncadd [#allocation3], 0
      %s38 = sshll.u32 %s2, 4
      %s39 = int_to_ptr.hbm [resolvable:$true] %s38
      %s40 = sshll.u32 [#allocation2], 4
      %s41 = int_to_ptr.vmem [resolvable:$true] %s40
      %46 = dma.hbm_to_vmem [thread:$0]  %s39, 1408, %s41, [#allocation3], 128, 128, 8
    $region13: #{vae_forward.3} parent=1 // pred_fallthru
      _
    // Predicated region
    $region14: #{vae_forward.3} parent=1 // pred_check
      _
    $region15: #{vae_forward.3} parent=1 // pred_check_branch
      %48 = sbr.rel (0) target = $region17
    $region16: #{vae_forward.3} parent=1 // pred_region
      %50 = vsyncadd [#allocation5], 0
      %s52 = sshll.u32 %s3, 4
      %s53 = int_to_ptr.hbm [resolvable:$true] %s52
      %s54 = sshll.u32 [#allocation4], 4
      %s55 = int_to_ptr.vmem [resolvable:$true] %s54
      %57 = dma.hbm_to_vmem [thread:$0]  %s53, 32, %s55, [#allocation5]
    $region17: #{vae_forward.3} parent=1 // pred_fallthru
      _
    // Predicated region
    $region18: #{vae_forward.3} parent=1 // pred_check
      _
    $region19: #{vae_forward.3} parent=1 // pred_check_branch
      %59 = sbr.rel (0) target = $region21
    $region20: #{vae_forward.3} parent=1 // pred_region
      _
    $region21: #{vae_forward.3} parent=1 // pred_fallthru
      _
    // Predicated region
    $region22: #{vae_forward.3} parent=1 // pred_check
      _
    $region23: #{vae_forward.3} parent=1 // pred_check_branch
      %61 = sbr.rel (0) target = $region25
    $region24: #{vae_forward.3} parent=1 // pred_region
      %63 = vsyncadd [#allocation5], 0
      %s65 = sshll.u32 %s5, 4
      %s66 = int_to_ptr.hbm [resolvable:$true] %s65
      %s67 = sshll.u32 [#allocation6], 4
      %s68 = int_to_ptr.vmem [resolvable:$true] %s67
      %70 = dma.hbm_to_vmem [thread:$0]  %s66, 16, %s68, [#allocation5]
    $region25: #{vae_forward.3} parent=1 // pred_fallthru
      _
    // Predicated region
    $region26: #{vae_forward.3} parent=1 // pred_check
      _
    $region27: #{vae_forward.3} parent=1 // pred_check_branch
      %72 = sbr.rel (0) target = $region29
    $region28: #{vae_forward.3} parent=1 // pred_region
      _
    $region29: #{vae_forward.3} parent=1 // pred_fallthru
      _
    // Predicated region
    $region30: #{vae_forward.3} parent=1 // pred_check
      _
    $region31: #{vae_forward.3} parent=1 // pred_check_branch
      %74 = sbr.rel (0) target = $region33
    $region32: #{vae_forward.3} parent=1 // pred_region
      %76 = vsyncadd [#allocation8], 0
      %s78 = sshll.u32 %s7, 4
      %s79 = int_to_ptr.hbm [resolvable:$true] %s78
      %s80 = sshll.u32 [#allocation7], 4
      %s81 = int_to_ptr.vmem [resolvable:$true] %s80
      %83 = dma.hbm_to_vmem [thread:$0]  %s79, 16, %s81, [#allocation8]
    $region33: #{vae_forward.3} parent=1 // pred_fallthru
      _
    // Predicated region
    $region34: #{vae_forward.3} parent=1 // pred_check
      _
    $region35: #{vae_forward.3} parent=1 // pred_check_branch
      %85 = sbr.rel (0) target = $region37
    $region36: #{vae_forward.3} parent=1 // pred_region
      %87 = vsyncadd [#allocation8], 0
      %s89 = sshll.u32 %s8, 4
      %s90 = int_to_ptr.hbm [resolvable:$true] %s89
      %s91 = sshll.u32 [#allocation9], 4
      %s92 = int_to_ptr.vmem [resolvable:$true] %s91
      %94 = dma.hbm_to_vmem [thread:$0]  %s90, 64, %s92, [#allocation8]
    $region37: #{vae_forward.3} parent=1 // pred_fallthru
      _
    // Predicated region
    $region38: #{vae_forward.3} parent=1 // pred_check
      _
    $region39: #{vae_forward.3} parent=1 // pred_check_branch
      %96 = sbr.rel (0) target = $region41
    $region40: #{vae_forward.3} parent=1 // pred_region
      %98 = vsyncadd [#allocation11], 0
      %s100 = sshll.u32 %s9, 4
      %s101 = int_to_ptr.hbm [resolvable:$true] %s100
      %s102 = sshll.u32 [#allocation10], 4
      %s103 = int_to_ptr.vmem [resolvable:$true] %s102
      %105 = dma.hbm_to_vmem [thread:$0]  %s101, 64, %s103, [#allocation11]
    $region41: #{vae_forward.3} parent=1 // pred_fallthru
      _
    // Predicated region
    $region42: #{vae_forward.3} parent=1 // pred_check
      _
    $region43: #{vae_forward.3} parent=1 // pred_check_branch
      %107 = sbr.rel (0) target = $region45
    $region44: #{vae_forward.3} parent=1 // pred_region
      %109 = vsyncadd [#allocation11], 0
      %s110 = sshll.u32 %s10, 4
      %s111 = int_to_ptr.hbm [resolvable:$true] %s110
      %s112 = sshll.u32 [#allocation12], 4
      %s113 = int_to_ptr.vmem [resolvable:$true] %s112
      %118 = dma.hbm_to_vmem [thread:$0]  %s111, 4096, %s113, [#allocation11], 64, 64, 4
    $region45: #{vae_forward.3} parent=1 // pred_fallthru
      _
    // Predicated region
    $region46: #{vae_forward.3} parent=1 // pred_check
      _
    $region47: #{vae_forward.3} parent=1 // pred_check_branch
      %120 = sbr.rel (0) target = $region49
    $region48: #{vae_forward.3} parent=1 // pred_region
      _
    $region49: #{vae_forward.3} parent=1 // pred_fallthru
      _
    // Predicated region
    $region50: #{vae_forward.3} parent=1 // pred_check
      _
    $region51: #{vae_forward.3} parent=1 // pred_check_branch
      %122 = sbr.rel (0) target = $region53
    $region52: #{vae_forward.3} parent=1 // pred_region
      %124 = vsyncadd [#allocation14], 0
      %s126 = sshll.u32 %s12, 4
      %s127 = int_to_ptr.hbm [resolvable:$true] %s126
      %s128 = sshll.u32 [#allocation13], 4
      %s129 = int_to_ptr.vmem [resolvable:$true] %s128
      %131 = dma.hbm_to_vmem [thread:$0]  %s127, 48, %s129, [#allocation14]
    $region53: #{vae_forward.3} parent=1 // pred_fallthru
      _
    // Predicated region
    $region54: #{vae_forward.3} parent=1 // pred_check
      _
    $region55: #{vae_forward.3} parent=1 // pred_check_branch
      %133 = sbr.rel (0) target = $region57
    $region56: #{vae_forward.3} parent=1 // pred_region
      _
    $region57: #{vae_forward.3} parent=1 // pred_fallthru
      _
    // Predicated region
    $region58: #{vae_forward.3} parent=1 // pred_check
      _
    $region59: #{vae_forward.3} parent=1 // pred_check_branch
      %135 = sbr.rel (0) target = $region61
    $region60: #{vae_forward.3} parent=1 // pred_region
      %137 = vsyncadd [#allocation14], 0
      %s139 = sshll.u32 %s14, 4
      %s140 = int_to_ptr.hbm [resolvable:$true] %s139
      %s141 = sshll.u32 [#allocation15], 4
      %s142 = int_to_ptr.vmem [resolvable:$true] %s141
      %144 = dma.hbm_to_vmem [thread:$0]  %s140, 16, %s142, [#allocation14]
    $region61: #{vae_forward.3} parent=1 // pred_fallthru
      _
    // Predicated region
    $region62: #{vae_forward.3} parent=1 // pred_check
      _
    $region63: #{vae_forward.3} parent=1 // pred_check_branch
      %146 = sbr.rel (0) target = $region65
    $region64: #{vae_forward.3} parent=1 // pred_region
      _
    $region65: #{vae_forward.3} parent=1 // pred_fallthru
      _
    // Predicated region
    $region66: #{vae_forward.3} parent=1 // pred_check
      _
    $region67: #{vae_forward.3} parent=1 // pred_check_branch
      %148 = sbr.rel (0) target = $region69
    $region68: #{vae_forward.3} parent=1 // pred_region
      %150 = vsyncadd [#allocation17], 0
      %s152 = sshll.u32 %s16, 4
      %s153 = int_to_ptr.hbm [resolvable:$true] %s152
      %s154 = sshll.u32 [#allocation16], 4
      %s155 = int_to_ptr.vmem [resolvable:$true] %s154
      %157 = dma.hbm_to_vmem [thread:$0]  %s153, 16, %s155, [#allocation17]
    $region69: #{vae_forward.3} parent=1 // pred_fallthru
      _
    // Predicated region
    $region70: #{vae_forward.3} parent=1 // pred_check
      _
    $region71: #{vae_forward.3} parent=1 // pred_check_branch
      %159 = sbr.rel (0) target = $region73
    $region72: #{vae_forward.3} parent=1 // pred_region
      %161 = dma.done [#allocation3], 1408
    $region73: #{vae_forward.3} parent=1 // pred_fallthru
      _
    // Predicated region
    $region74: #{vae_forward.3} parent=1 // pred_check
      _
    $region75: #{vae_forward.3} parent=1 // pred_check_branch
      %163 = sbr.rel (0) target = $region77
    $region76: #{vae_forward.3} parent=1 // pred_region
      %165 = dma.done [#allocation5], 32
    $region77: #{vae_forward.3} parent=1 // pred_fallthru
      _
    // Predicated region
    $region78: #{vae_forward.3} parent=1 // pred_check
      _
    $region79: #{vae_forward.3} parent=1 // pred_check_branch
      %167 = sbr.rel (0) target = $region81
    $region80: #{vae_forward.3} parent=1 // pred_region
      %169 = dma.done [#allocation5], 16
    $region81: #{vae_forward.3} parent=1 // pred_fallthru
      _
    // Predicated region
    $region82: #{vae_forward.3} parent=1 // pred_check
      _
    $region83: #{vae_forward.3} parent=1 // pred_check_branch
      %171 = sbr.rel (0) target = $region85
    $region84: #{vae_forward.3} parent=1 // pred_region
      %173 = dma.done [#allocation8], 16
    $region85: #{vae_forward.3} parent=1 // pred_fallthru
      _
    // Predicated region
    $region86: #{vae_forward.3} parent=1 // pred_check
      _
    $region87: #{vae_forward.3} parent=1 // pred_check_branch
      %175 = sbr.rel (0) target = $region89
    $region88: #{vae_forward.3} parent=1 // pred_region
      %177 = dma.done [#allocation8], 64
    $region89: #{vae_forward.3} parent=1 // pred_fallthru
      _
    // Predicated region
    $region90: #{vae_forward.3} parent=1 // pred_check
      _
    $region91: #{vae_forward.3} parent=1 // pred_check_branch
      %179 = sbr.rel (0) target = $region93
    $region92: #{vae_forward.3} parent=1 // pred_region
      %181 = dma.done [#allocation11], 64
    $region93: #{vae_forward.3} parent=1 // pred_fallthru
      _
    // Predicated region
    $region94: #{vae_forward.3} parent=1 // pred_check
      _
    $region95: #{vae_forward.3} parent=1 // pred_check_branch
      %183 = sbr.rel (0) target = $region97
    $region96: #{vae_forward.3} parent=1 // pred_region
      %185 = dma.done [#allocation11], 4096
    $region97: #{vae_forward.3} parent=1 // pred_fallthru
      _
    // Predicated region
    $region98: #{vae_forward.3} parent=1 // pred_check
      _
    $region99: #{vae_forward.3} parent=1 // pred_check_branch
      %187 = sbr.rel (0) target = $region101
    $region100: #{vae_forward.3} parent=1 // pred_region
      %189 = dma.done [#allocation14], 48
    $region101: #{vae_forward.3} parent=1 // pred_fallthru
      _
    // Predicated region
    $region102: #{vae_forward.3} parent=1 // pred_check
      _
    $region103: #{vae_forward.3} parent=1 // pred_check_branch
      %191 = sbr.rel (0) target = $region105
    $region104: #{vae_forward.3} parent=1 // pred_region
      %193 = dma.done [#allocation14], 16
    $region105: #{vae_forward.3} parent=1 // pred_fallthru
      _
    // Predicated region
    $region106: #{vae_forward.3} parent=1 // pred_check
      _
    $region107: #{vae_forward.3} parent=1 // pred_check_branch
      %195 = sbr.rel (0) target = $region109
    $region108: #{vae_forward.3} parent=1 // pred_region
      %197 = dma.done [#allocation17], 16
    $region109: #{vae_forward.3} parent=1 // pred_fallthru
      _
    %v199 = vld [vmem:[%s0] sm:$0xf]
    %v200 = vld [vmem:[%s0 + $0x4] sm:$0xf]
    %v201 = vld [vmem:[%s0 + $0x8] sm:$0xf]
    %v202 = vld [vmem:[%s0 + $0xc] sm:$0xf]
    %v203 = vld [vmem:[%s0 + $0x10] sm:$0xf]
    %v204 = vld [vmem:[%s0 + $0x14] sm:$0xf]
    %v205 = vld [vmem:[%s0 + $0x18] sm:$0xf]
    %v206 = vld [vmem:[%s0 + $0x1c] sm:$0xf]
    %v207 = vld [vmem:[%s0 + $0x20] sm:$0xf]
    %v208 = vld [vmem:[%s0 + $0x24] sm:$0xf]
    %v209 = vld [vmem:[%s0 + $0x28] sm:$0xf]
    %v210 = vld [vmem:[%s0 + $0x2c] sm:$0xf]
    %v211 = vld [vmem:[%s0 + $0x30] sm:$0xf]
    %v212 = vld [vmem:[%s0 + $0x34] sm:$0xf]
    %v213 = vld [vmem:[%s0 + $0x38] sm:$0xf]
    %v214 = vld [vmem:[%s0 + $0x3c] sm:$0xf]
    %v215 = vld [vmem:[%s0 + $0x40] sm:$0xf]
    %v216 = vld [vmem:[%s0 + $0x44] sm:$0xf]
    %v217 = vld [vmem:[%s0 + $0x48] sm:$0xf]
    %v218 = vld [vmem:[%s0 + $0x4c] sm:$0xf]
    %v219 = vld [vmem:[%s0 + $0x50] sm:$0xf]
    %v220 = vld [vmem:[%s0 + $0x54] sm:$0xf]
    %v221 = vld [vmem:[%s0 + $0x58] sm:$0xf]
    %v222 = vld [vmem:[%s0 + $0x5c] sm:$0xf]
    %v223 = vld [vmem:[%s0 + $0x60] sm:$0xf]
    %v224 = vld [vmem:[%s0 + $0x64] sm:$0xf]
    %v225 = vld [vmem:[%s0 + $0x68] sm:$0xf]
    %v226 = vld [vmem:[%s0 + $0x6c] sm:$0xf]
    %v227 = vld [vmem:[%s0 + $0x70] sm:$0xf]
    %v228 = vld [vmem:[%s0 + $0x74] sm:$0xf]
    %v229 = vld [vmem:[%s0 + $0x78] sm:$0xf]
    %v230 = vld [vmem:[%s0 + $0x7c] sm:$0xf]
    %v231 = vld [vmem:[%s0 + $0x80] sm:$0xf]
    %v232 = vld [vmem:[%s0 + $0x84] sm:$0xf]
    %v233 = vld [vmem:[%s0 + $0x88] sm:$0xf]
    %v234 = vld [vmem:[%s0 + $0x8c] sm:$0xf]
    %v235 = vld [vmem:[%s0 + $0x90] sm:$0xf]
    %v236 = vld [vmem:[%s0 + $0x94] sm:$0xf]
    %v237 = vld [vmem:[%s0 + $0x98] sm:$0xf]
    %v238 = vld [vmem:[%s0 + $0x9c] sm:$0xf]
    %v239 = vld [vmem:[%s0 + $0xa0] sm:$0xf]
    %v240 = vld [vmem:[%s0 + $0xa4] sm:$0xf]
    %v241 = vld [vmem:[%s0 + $0xa8] sm:$0xf]
    %v242 = vld [vmem:[%s0 + $0xac] sm:$0xf]
    %v243 = vld [vmem:[%s0 + $0xb0] sm:$0xf]
    %v244 = vld [vmem:[%s0 + $0xb4] sm:$0xf]
    %v245 = vld [vmem:[%s0 + $0xb8] sm:$0xf]
    %v246 = vld [vmem:[%s0 + $0xbc] sm:$0xf]
    %v247 = vld [vmem:[%s0 + $0xc0] sm:$0xf]
    %v248 = vld [vmem:[%s0 + $0xc4] sm:$0xf]
    %v249 = vld [vmem:[%s0 + $0xc8] sm:$0xf]
    %v250 = vld [vmem:[%s0 + $0xcc] sm:$0xf]
    %v251 = vld [vmem:[%s0 + $0xd0] sm:$0xf]
    %v252 = vld [vmem:[%s0 + $0xd4] sm:$0xf]
    %v253 = vld [vmem:[%s0 + $0xd8] sm:$0xf]
    %v254 = vld [vmem:[%s0 + $0xdc] sm:$0xf]
    %v255 = vld [vmem:[%s0 + $0xe0] sm:$0xf]
    %v256 = vld [vmem:[%s0 + $0xe4] sm:$0xf]
    %v257 = vld [vmem:[%s0 + $0xe8] sm:$0xf]
    %v258 = vld [vmem:[%s0 + $0xec] sm:$0xf]
    %v259 = vld [vmem:[%s0 + $0xf0] sm:$0xf]
    %v260 = vld [vmem:[%s0 + $0xf4] sm:$0xf]
    %v261 = vld [vmem:[%s0 + $0xf8] sm:$0xf]
    %v262 = vld [vmem:[%s0 + $0xfc] sm:$0xf]
    %v263 = vld [vmem:[#allocation2] sm:$0xff]
    %v264 = vld [vmem:[#allocation2 + $0x8] sm:$0xff]
    %v265 = vld [vmem:[#allocation2 + $0x10] sm:$0xff]
    %v266 = vld [vmem:[#allocation2 + $0x18] sm:$0xff]
    %v267 = vld [vmem:[#allocation2 + $0x20] sm:$0xff]
    %v268 = vld [vmem:[#allocation2 + $0x28] sm:$0xff]
    %v269 = vld [vmem:[#allocation2 + $0x30] sm:$0xff]
    %v270 = vld [vmem:[#allocation2 + $0x38] sm:$0xff]
    %v271 = vld [vmem:[#allocation2 + $0x40] sm:$0xff]
    %v272 = vld [vmem:[#allocation2 + $0x48] sm:$0xff]
    %v273 = vld [vmem:[#allocation2 + $0x50] sm:$0x11]
    %v274 = vld [vmem:[#allocation4] sm:$0x3]
    %v276 = vperm.slane %v274, 0
    %v277 = vperm.slane %v274, 1
    %v344 = vunpack.c.l.b16 %v199
    %v345 = vunpack.c.l.b16 %v200
    %v346 = vunpack.c.l.b16 %v201
    %v347 = vunpack.c.l.b16 %v202
    %v348 = vunpack.c.l.b16 %v203
    %v349 = vunpack.c.l.b16 %v204
    %v350 = vunpack.c.l.b16 %v205
    %v351 = vunpack.c.l.b16 %v206
    %v352 = vunpack.c.l.b16 %v207
    %v353 = vunpack.c.l.b16 %v208
    %v354 = vunpack.c.l.b16 %v209
    %v355 = vunpack.c.l.b16 %v210
    %v356 = vunpack.c.l.b16 %v211
    %v357 = vunpack.c.l.b16 %v212
    %v358 = vunpack.c.l.b16 %v213
    %v359 = vunpack.c.l.b16 %v214
    %v360 = vunpack.c.l.b16 %v215
    %v361 = vunpack.c.l.b16 %v216
    %v362 = vunpack.c.l.b16 %v217
    %v363 = vunpack.c.l.b16 %v218
    %v364 = vunpack.c.l.b16 %v219
    %v365 = vunpack.c.l.b16 %v220
    %v366 = vunpack.c.l.b16 %v221
    %v367 = vunpack.c.l.b16 %v222
    %v368 = vunpack.c.l.b16 %v223
    %v369 = vunpack.c.l.b16 %v224
    %v370 = vunpack.c.l.b16 %v225
    %v371 = vunpack.c.l.b16 %v226
    %v372 = vunpack.c.l.b16 %v227
    %v373 = vunpack.c.l.b16 %v228
    %v374 = vunpack.c.l.b16 %v229
    %v375 = vunpack.c.l.b16 %v230
    %v376 = vunpack.c.l.b16 %v231
    %v377 = vunpack.c.l.b16 %v232
    %v378 = vunpack.c.l.b16 %v233
    %v379 = vunpack.c.l.b16 %v234
    %v380 = vunpack.c.l.b16 %v235
    %v381 = vunpack.c.l.b16 %v236
    %v382 = vunpack.c.l.b16 %v237
    %v383 = vunpack.c.l.b16 %v238
    %v384 = vunpack.c.l.b16 %v239
    %v385 = vunpack.c.l.b16 %v240
    %v386 = vunpack.c.l.b16 %v241
    %v387 = vunpack.c.l.b16 %v242
    %v388 = vunpack.c.l.b16 %v243
    %v389 = vunpack.c.l.b16 %v244
    %v390 = vunpack.c.l.b16 %v245
    %v391 = vunpack.c.l.b16 %v246
    %v392 = vunpack.c.l.b16 %v247
    %v393 = vunpack.c.l.b16 %v248
    %v394 = vunpack.c.l.b16 %v249
    %v395 = vunpack.c.l.b16 %v250
    %v396 = vunpack.c.l.b16 %v251
    %v397 = vunpack.c.l.b16 %v252
    %v398 = vunpack.c.l.b16 %v253
    %v399 = vunpack.c.l.b16 %v254
    %v400 = vunpack.c.l.b16 %v255
    %v401 = vunpack.c.l.b16 %v256
    %v402 = vunpack.c.l.b16 %v257
    %v403 = vunpack.c.l.b16 %v258
    %v404 = vunpack.c.l.b16 %v259
    %v405 = vunpack.c.l.b16 %v260
    %v406 = vunpack.c.l.b16 %v261
    %v407 = vunpack.c.l.b16 %v262
    %v408 = vpack.c.b16 %v345, %v344
    %v409 = vpack.c.b16 %v347, %v346
    %v410 = vpack.c.b16 %v349, %v348
    %v411 = vpack.c.b16 %v351, %v350
    %v412 = vpack.c.b16 %v353, %v352
    %v413 = vpack.c.b16 %v355, %v354
    %v414 = vpack.c.b16 %v357, %v356
    %v415 = vpack.c.b16 %v359, %v358
    %v416 = vpack.c.b16 %v361, %v360
    %v417 = vpack.c.b16 %v363, %v362
    %v418 = vpack.c.b16 %v365, %v364
    %v419 = vpack.c.b16 %v367, %v366
    %v420 = vpack.c.b16 %v369, %v368
    %v421 = vpack.c.b16 %v371, %v370
    %v422 = vpack.c.b16 %v373, %v372
    %v423 = vpack.c.b16 %v375, %v374
    %v424 = vpack.c.b16 %v377, %v376
    %v425 = vpack.c.b16 %v379, %v378
    %v426 = vpack.c.b16 %v381, %v380
    %v427 = vpack.c.b16 %v383, %v382
    %v428 = vpack.c.b16 %v385, %v384
    %v429 = vpack.c.b16 %v387, %v386
    %v430 = vpack.c.b16 %v389, %v388
    %v431 = vpack.c.b16 %v391, %v390
    %v432 = vpack.c.b16 %v393, %v392
    %v433 = vpack.c.b16 %v395, %v394
    %v434 = vpack.c.b16 %v397, %v396
    %v435 = vpack.c.b16 %v399, %v398
    %v436 = vpack.c.b16 %v401, %v400
    %v437 = vpack.c.b16 %v403, %v402
    %v438 = vpack.c.b16 %v405, %v404
    %v439 = vpack.c.b16 %v407, %v406
    %v451 = vunpack.c.l.b16 %v263
    %v452 = vunpack.c.h.b16 %v263
    %v453 = vunpack.c.l.b16 %v264
    %v454 = vunpack.c.h.b16 %v264
    %v455 = vunpack.c.l.b16 %v265
    %v456 = vunpack.c.h.b16 %v265
    %v457 = vunpack.c.l.b16 %v266
    %v458 = vunpack.c.h.b16 %v266
    %v459 = vunpack.c.l.b16 %v267
    %v460 = vunpack.c.h.b16 %v267
    %v461 = vunpack.c.l.b16 %v268
    %v462 = vunpack.c.h.b16 %v268
    %v463 = vunpack.c.l.b16 %v269
    %v464 = vunpack.c.h.b16 %v269
    %v465 = vunpack.c.l.b16 %v270
    %v466 = vunpack.c.h.b16 %v270
    %v467 = vunpack.c.l.b16 %v271
    %v468 = vunpack.c.h.b16 %v271
    %v469 = vunpack.c.l.b16 %v272
    %v470 = vunpack.c.h.b16 %v272
    %v471 = vunpack.c.l.b16 %v273
    %v472 = vunpack.c.h.b16 %v273
    %v473 = vpack.c.b16 %v453, %v451
    %v474 = vpack.c.b16 %v454, %v452
    %v475 = vpack.c.b16 %v457, %v455
    %v476 = vpack.c.b16 %v458, %v456
    %v477 = vpack.c.b16 %v461, %v459
    %v478 = vpack.c.b16 %v462, %v460
    %v479 = vpack.c.b16 %v465, %v463
    %v480 = vpack.c.b16 %v466, %v464
    %v481 = vpack.c.b16 %v469, %v467
    %v482 = vpack.c.b16 %v470, %v468
    %v483 = vpack.c.b16 %v471, %v471
    %v484 = vpack.c.b16 %v472, %v472
    %vm495 = vcmask 670720
    %v497 = vsel %vm495, %v408, 0
    %v500 = vsel %vm495, %v409, 0
    %v503 = vsel %vm495, %v410, 0
    %v506 = vsel %vm495, %v411, 0
    %v509 = vsel %vm495, %v412, 0
    %v512 = vsel %vm495, %v413, 0
    %v515 = vsel %vm495, %v414, 0
    %v518 = vsel %vm495, %v415, 0
    %v521 = vsel %vm495, %v416, 0
    %v524 = vsel %vm495, %v417, 0
    %v527 = vsel %vm495, %v418, 0
    %v530 = vsel %vm495, %v419, 0
    %v533 = vsel %vm495, %v420, 0
    %v536 = vsel %vm495, %v421, 0
    %v539 = vsel %vm495, %v422, 0
    %v542 = vsel %vm495, %v423, 0
    %v545 = vsel %vm495, %v424, 0
    %v548 = vsel %vm495, %v425, 0
    %v551 = vsel %vm495, %v426, 0
    %v554 = vsel %vm495, %v427, 0
    %v557 = vsel %vm495, %v428, 0
    %v560 = vsel %vm495, %v429, 0
    %v563 = vsel %vm495, %v430, 0
    %v566 = vsel %vm495, %v431, 0
    %v569 = vsel %vm495, %v432, 0
    %v572 = vsel %vm495, %v433, 0
    %v575 = vsel %vm495, %v434, 0
    %v578 = vsel %vm495, %v435, 0
    %v581 = vsel %vm495, %v436, 0
    %v584 = vsel %vm495, %v437, 0
    %v587 = vsel %vm495, %v438, 0
    %v590 = vsel %vm495, %v439, 0
    %vm592 = vcmask 1040384
    %v594 = vsel %vm592, %v483, 0
    %v597 = vsel %vm592, %v484, 0
    %599 = vmatpush.bf16.msra.mxu0 0
    %600 = vmatpush.bf16.msra.mxu0 0
    %601 = vmatpush.bf16.msra.mxu0 %v594
    %602 = vmatpush.bf16.msra.mxu0 %v481
    %603 = vmatpush.bf16.msra.mxu0 %v479
    %604 = vmatpush.bf16.msra.mxu0 %v477
    %605 = vmatpush.bf16.msra.mxu0 %v475
    %606 = vmatpush.bf16.msra.mxu0 %v473
    %607 = vmatmul.bf16.gmra.mxu0 %v497
    %v608 = vpop.f32.mrf.mxu0
    %v609 = vadd.f32 %v276, %v608
    %v610 = vpop.f32.mrf.mxu0
    %v611 = vadd.f32 %v276, %v610
    %612 = vmatmul.bf16.gmra.mxu0 %v500
    %v613 = vpop.f32.mrf.mxu0
    %v614 = vadd.f32 %v276, %v613
    %v615 = vpop.f32.mrf.mxu0
    %v616 = vadd.f32 %v276, %v615
    %617 = vmatmul.bf16.gmra.mxu0 %v503
    %v618 = vpop.f32.mrf.mxu0
    %v619 = vadd.f32 %v276, %v618
    %v620 = vpop.f32.mrf.mxu0
    %v621 = vadd.f32 %v276, %v620
    %622 = vmatmul.bf16.gmra.mxu0 %v506
    %v623 = vpop.f32.mrf.mxu0
    %v624 = vadd.f32 %v276, %v623
    %v625 = vpop.f32.mrf.mxu0
    %v626 = vadd.f32 %v276, %v625
    %627 = vmatmul.bf16.gmra.mxu0 %v509
    %v628 = vpop.f32.mrf.mxu0
    %v629 = vadd.f32 %v276, %v628
    %v630 = vpop.f32.mrf.mxu0
    %v631 = vadd.f32 %v276, %v630
    %632 = vmatmul.bf16.gmra.mxu0 %v512
    %v633 = vpop.f32.mrf.mxu0
    %v634 = vadd.f32 %v276, %v633
    %v635 = vpop.f32.mrf.mxu0
    %v636 = vadd.f32 %v276, %v635
    %637 = vmatmul.bf16.gmra.mxu0 %v515
    %v638 = vpop.f32.mrf.mxu0
    %v639 = vadd.f32 %v276, %v638
    %v640 = vpop.f32.mrf.mxu0
    %v641 = vadd.f32 %v276, %v640
    %642 = vmatmul.bf16.gmra.mxu0 %v518
    %v643 = vpop.f32.mrf.mxu0
    %v644 = vadd.f32 %v276, %v643
    %v645 = vpop.f32.mrf.mxu0
    %v646 = vadd.f32 %v276, %v645
    %647 = vmatmul.bf16.gmra.mxu0 %v521
    %v648 = vpop.f32.mrf.mxu0
    %v649 = vadd.f32 %v276, %v648
    %v650 = vpop.f32.mrf.mxu0
    %v651 = vadd.f32 %v276, %v650
    %652 = vmatmul.bf16.gmra.mxu0 %v524
    %v653 = vpop.f32.mrf.mxu0
    %v654 = vadd.f32 %v276, %v653
    %v655 = vpop.f32.mrf.mxu0
    %v656 = vadd.f32 %v276, %v655
    %657 = vmatmul.bf16.gmra.mxu0 %v527
    %v658 = vpop.f32.mrf.mxu0
    %v659 = vadd.f32 %v276, %v658
    %v660 = vpop.f32.mrf.mxu0
    %v661 = vadd.f32 %v276, %v660
    %662 = vmatmul.bf16.gmra.mxu0 %v530
    %v663 = vpop.f32.mrf.mxu0
    %v664 = vadd.f32 %v276, %v663
    %v665 = vpop.f32.mrf.mxu0
    %v666 = vadd.f32 %v276, %v665
    %667 = vmatmul.bf16.gmra.mxu0 %v533
    %v668 = vpop.f32.mrf.mxu0
    %v669 = vadd.f32 %v276, %v668
    %v670 = vpop.f32.mrf.mxu0
    %v671 = vadd.f32 %v276, %v670
    %672 = vmatmul.bf16.gmra.mxu0 %v536
    %v673 = vpop.f32.mrf.mxu0
    %v674 = vadd.f32 %v276, %v673
    %v675 = vpop.f32.mrf.mxu0
    %v676 = vadd.f32 %v276, %v675
    %677 = vmatmul.bf16.gmra.mxu0 %v539
    %v678 = vpop.f32.mrf.mxu0
    %v679 = vadd.f32 %v276, %v678
    %v680 = vpop.f32.mrf.mxu0
    %v681 = vadd.f32 %v276, %v680
    %682 = vmatmul.bf16.gmra.mxu0 %v542
    %v683 = vpop.f32.mrf.mxu0
    %v684 = vadd.f32 %v276, %v683
    %v685 = vpop.f32.mrf.mxu0
    %v686 = vadd.f32 %v276, %v685
    %687 = vmatmul.bf16.gmra.mxu0 %v545
    %v688 = vpop.f32.mrf.mxu0
    %v689 = vadd.f32 %v276, %v688
    %v690 = vpop.f32.mrf.mxu0
    %v691 = vadd.f32 %v276, %v690
    %692 = vmatmul.bf16.gmra.mxu0 %v548
    %v693 = vpop.f32.mrf.mxu0
    %v694 = vadd.f32 %v276, %v693
    %v695 = vpop.f32.mrf.mxu0
    %v696 = vadd.f32 %v276, %v695
    %697 = vmatmul.bf16.gmra.mxu0 %v551
    %v698 = vpop.f32.mrf.mxu0
    %v699 = vadd.f32 %v276, %v698
    %v700 = vpop.f32.mrf.mxu0
    %v701 = vadd.f32 %v276, %v700
    %702 = vmatmul.bf16.gmra.mxu0 %v554
    %v703 = vpop.f32.mrf.mxu0
    %v704 = vadd.f32 %v276, %v703
    %v705 = vpop.f32.mrf.mxu0
    %v706 = vadd.f32 %v276, %v705
    %707 = vmatmul.bf16.gmra.mxu0 %v557
    %v708 = vpop.f32.mrf.mxu0
    %v709 = vadd.f32 %v276, %v708
    %v710 = vpop.f32.mrf.mxu0
    %v711 = vadd.f32 %v276, %v710
    %712 = vmatmul.bf16.gmra.mxu0 %v560
    %v713 = vpop.f32.mrf.mxu0
    %v714 = vadd.f32 %v276, %v713
    %v715 = vpop.f32.mrf.mxu0
    %v716 = vadd.f32 %v276, %v715
    %717 = vmatmul.bf16.gmra.mxu0 %v563
    %v718 = vpop.f32.mrf.mxu0
    %v719 = vadd.f32 %v276, %v718
    %v720 = vpop.f32.mrf.mxu0
    %v721 = vadd.f32 %v276, %v720
    %722 = vmatmul.bf16.gmra.mxu0 %v566
    %v723 = vpop.f32.mrf.mxu0
    %v724 = vadd.f32 %v276, %v723
    %v725 = vpop.f32.mrf.mxu0
    %v726 = vadd.f32 %v276, %v725
    %727 = vmatmul.bf16.gmra.mxu0 %v569
    %v728 = vpop.f32.mrf.mxu0
    %v729 = vadd.f32 %v276, %v728
    %v730 = vpop.f32.mrf.mxu0
    %v731 = vadd.f32 %v276, %v730
    %732 = vmatmul.bf16.gmra.mxu0 %v572
    %v733 = vpop.f32.mrf.mxu0
    %v734 = vadd.f32 %v276, %v733
    %v735 = vpop.f32.mrf.mxu0
    %v736 = vadd.f32 %v276, %v735
    %737 = vmatmul.bf16.gmra.mxu0 %v575
    %v738 = vpop.f32.mrf.mxu0
    %v739 = vadd.f32 %v276, %v738
    %v740 = vpop.f32.mrf.mxu0
    %v741 = vadd.f32 %v276, %v740
    %742 = vmatmul.bf16.gmra.mxu0 %v578
    %v743 = vpop.f32.mrf.mxu0
    %v744 = vadd.f32 %v276, %v743
    %v745 = vpop.f32.mrf.mxu0
    %v746 = vadd.f32 %v276, %v745
    %747 = vmatmul.bf16.gmra.mxu0 %v581
    %v748 = vpop.f32.mrf.mxu0
    %v749 = vadd.f32 %v276, %v748
    %v750 = vpop.f32.mrf.mxu0
    %v751 = vadd.f32 %v276, %v750
    %752 = vmatmul.bf16.gmra.mxu0 %v584
    %v753 = vpop.f32.mrf.mxu0
    %v754 = vadd.f32 %v276, %v753
    %v755 = vpop.f32.mrf.mxu0
    %v756 = vadd.f32 %v276, %v755
    %757 = vmatmul.bf16.gmra.mxu0 %v587
    %v758 = vpop.f32.mrf.mxu0
    %v759 = vadd.f32 %v276, %v758
    %v760 = vpop.f32.mrf.mxu0
    %v761 = vadd.f32 %v276, %v760
    %762 = vmatmul.bf16.gmra.mxu0 %v590
    %v763 = vpop.f32.mrf.mxu0
    %v764 = vadd.f32 %v276, %v763
    %v765 = vpop.f32.mrf.mxu0
    %v766 = vadd.f32 %v276, %v765
    %767 = vdwg.mxu0
    %768 = vmatpush.bf16.msra.mxu0 0
    %769 = vmatpush.bf16.msra.mxu0 0
    %770 = vmatpush.bf16.msra.mxu0 %v597
    %771 = vmatpush.bf16.msra.mxu0 %v482
    %772 = vmatpush.bf16.msra.mxu0 %v480
    %773 = vmatpush.bf16.msra.mxu0 %v478
    %774 = vmatpush.bf16.msra.mxu0 %v476
    %775 = vmatpush.bf16.msra.mxu0 %v474
    %776 = vmatmul.bf16.gmra.mxu0 %v497
    %v777 = vpop.f32.mrf.mxu0
    %v778 = vadd.f32 %v277, %v777
    %v779 = vpop.f32.mrf.mxu0
    %v780 = vadd.f32 %v277, %v779
    %781 = vmatmul.bf16.gmra.mxu0 %v500
    %v782 = vpop.f32.mrf.mxu0
    %v783 = vadd.f32 %v277, %v782
    %v784 = vpop.f32.mrf.mxu0
    %v785 = vadd.f32 %v277, %v784
    %786 = vmatmul.bf16.gmra.mxu0 %v503
    %v787 = vpop.f32.mrf.mxu0
    %v788 = vadd.f32 %v277, %v787
    %v789 = vpop.f32.mrf.mxu0
    %v790 = vadd.f32 %v277, %v789
    %791 = vmatmul.bf16.gmra.mxu0 %v506
    %v792 = vpop.f32.mrf.mxu0
    %v793 = vadd.f32 %v277, %v792
    %v794 = vpop.f32.mrf.mxu0
    %v795 = vadd.f32 %v277, %v794
    %796 = vmatmul.bf16.gmra.mxu0 %v509
    %v797 = vpop.f32.mrf.mxu0
    %v798 = vadd.f32 %v277, %v797
    %v799 = vpop.f32.mrf.mxu0
    %v800 = vadd.f32 %v277, %v799
    %801 = vmatmul.bf16.gmra.mxu0 %v512
    %v802 = vpop.f32.mrf.mxu0
    %v803 = vadd.f32 %v277, %v802
    %v804 = vpop.f32.mrf.mxu0
    %v805 = vadd.f32 %v277, %v804
    %806 = vmatmul.bf16.gmra.mxu0 %v515
    %v807 = vpop.f32.mrf.mxu0
    %v808 = vadd.f32 %v277, %v807
    %v809 = vpop.f32.mrf.mxu0
    %v810 = vadd.f32 %v277, %v809
    %811 = vmatmul.bf16.gmra.mxu0 %v518
    %v812 = vpop.f32.mrf.mxu0
    %v813 = vadd.f32 %v277, %v812
    %v814 = vpop.f32.mrf.mxu0
    %v815 = vadd.f32 %v277, %v814
    %816 = vmatmul.bf16.gmra.mxu0 %v521
    %v817 = vpop.f32.mrf.mxu0
    %v818 = vadd.f32 %v277, %v817
    %v819 = vpop.f32.mrf.mxu0
    %v820 = vadd.f32 %v277, %v819
    %821 = vmatmul.bf16.gmra.mxu0 %v524
    %v822 = vpop.f32.mrf.mxu0
    %v823 = vadd.f32 %v277, %v822
    %v824 = vpop.f32.mrf.mxu0
    %v825 = vadd.f32 %v277, %v824
    %826 = vmatmul.bf16.gmra.mxu0 %v527
    %v827 = vpop.f32.mrf.mxu0
    %v828 = vadd.f32 %v277, %v827
    %v829 = vpop.f32.mrf.mxu0
    %v830 = vadd.f32 %v277, %v829
    %831 = vmatmul.bf16.gmra.mxu0 %v530
    %v832 = vpop.f32.mrf.mxu0
    %v833 = vadd.f32 %v277, %v832
    %v834 = vpop.f32.mrf.mxu0
    %v835 = vadd.f32 %v277, %v834
    %836 = vmatmul.bf16.gmra.mxu0 %v533
    %v837 = vpop.f32.mrf.mxu0
    %v838 = vadd.f32 %v277, %v837
    %v839 = vpop.f32.mrf.mxu0
    %v840 = vadd.f32 %v277, %v839
    %841 = vmatmul.bf16.gmra.mxu0 %v536
    %v842 = vpop.f32.mrf.mxu0
    %v843 = vadd.f32 %v277, %v842
    %v844 = vpop.f32.mrf.mxu0
    %v845 = vadd.f32 %v277, %v844
    %846 = vmatmul.bf16.gmra.mxu0 %v539
    %v847 = vpop.f32.mrf.mxu0
    %v848 = vadd.f32 %v277, %v847
    %v849 = vpop.f32.mrf.mxu0
    %v850 = vadd.f32 %v277, %v849
    %851 = vmatmul.bf16.gmra.mxu0 %v542
    %v852 = vpop.f32.mrf.mxu0
    %v853 = vadd.f32 %v277, %v852
    %v854 = vpop.f32.mrf.mxu0
    %v855 = vadd.f32 %v277, %v854
    %856 = vmatmul.bf16.gmra.mxu0 %v545
    %v857 = vpop.f32.mrf.mxu0
    %v858 = vadd.f32 %v277, %v857
    %v859 = vpop.f32.mrf.mxu0
    %v860 = vadd.f32 %v277, %v859
    %861 = vmatmul.bf16.gmra.mxu0 %v548
    %v862 = vpop.f32.mrf.mxu0
    %v863 = vadd.f32 %v277, %v862
    %v864 = vpop.f32.mrf.mxu0
    %v865 = vadd.f32 %v277, %v864
    %866 = vmatmul.bf16.gmra.mxu0 %v551
    %v867 = vpop.f32.mrf.mxu0
    %v868 = vadd.f32 %v277, %v867
    %v869 = vpop.f32.mrf.mxu0
    %v870 = vadd.f32 %v277, %v869
    %871 = vmatmul.bf16.gmra.mxu0 %v554
    %v872 = vpop.f32.mrf.mxu0
    %v873 = vadd.f32 %v277, %v872
    %v874 = vpop.f32.mrf.mxu0
    %v875 = vadd.f32 %v277, %v874
    %876 = vmatmul.bf16.gmra.mxu0 %v557
    %v877 = vpop.f32.mrf.mxu0
    %v878 = vadd.f32 %v277, %v877
    %v879 = vpop.f32.mrf.mxu0
    %v880 = vadd.f32 %v277, %v879
    %881 = vmatmul.bf16.gmra.mxu0 %v560
    %v882 = vpop.f32.mrf.mxu0
    %v883 = vadd.f32 %v277, %v882
    %v884 = vpop.f32.mrf.mxu0
    %v885 = vadd.f32 %v277, %v884
    %886 = vmatmul.bf16.gmra.mxu0 %v563
    %v887 = vpop.f32.mrf.mxu0
    %v888 = vadd.f32 %v277, %v887
    %v889 = vpop.f32.mrf.mxu0
    %v890 = vadd.f32 %v277, %v889
    %891 = vmatmul.bf16.gmra.mxu0 %v566
    %v892 = vpop.f32.mrf.mxu0
    %v893 = vadd.f32 %v277, %v892
    %v894 = vpop.f32.mrf.mxu0
    %v895 = vadd.f32 %v277, %v894
    %896 = vmatmul.bf16.gmra.mxu0 %v569
    %v897 = vpop.f32.mrf.mxu0
    %v898 = vadd.f32 %v277, %v897
    %v899 = vpop.f32.mrf.mxu0
    %v900 = vadd.f32 %v277, %v899
    %901 = vmatmul.bf16.gmra.mxu0 %v572
    %v902 = vpop.f32.mrf.mxu0
    %v903 = vadd.f32 %v277, %v902
    %v904 = vpop.f32.mrf.mxu0
    %v905 = vadd.f32 %v277, %v904
    %906 = vmatmul.bf16.gmra.mxu0 %v575
    %v907 = vpop.f32.mrf.mxu0
    %v908 = vadd.f32 %v277, %v907
    %v909 = vpop.f32.mrf.mxu0
    %v910 = vadd.f32 %v277, %v909
    %911 = vmatmul.bf16.gmra.mxu0 %v578
    %v912 = vpop.f32.mrf.mxu0
    %v913 = vadd.f32 %v277, %v912
    %v914 = vpop.f32.mrf.mxu0
    %v915 = vadd.f32 %v277, %v914
    %916 = vmatmul.bf16.gmra.mxu0 %v581
    %v917 = vpop.f32.mrf.mxu0
    %v918 = vadd.f32 %v277, %v917
    %v919 = vpop.f32.mrf.mxu0
    %v920 = vadd.f32 %v277, %v919
    %921 = vmatmul.bf16.gmra.mxu0 %v584
    %v922 = vpop.f32.mrf.mxu0
    %v923 = vadd.f32 %v277, %v922
    %v924 = vpop.f32.mrf.mxu0
    %v925 = vadd.f32 %v277, %v924
    %926 = vmatmul.bf16.gmra.mxu0 %v587
    %v927 = vpop.f32.mrf.mxu0
    %v928 = vadd.f32 %v277, %v927
    %v929 = vpop.f32.mrf.mxu0
    %v930 = vadd.f32 %v277, %v929
    %931 = vmatmul.bf16.gmra.mxu0 %v590
    %v932 = vpop.f32.mrf.mxu0
    %v933 = vadd.f32 %v277, %v932
    %v934 = vpop.f32.mrf.mxu0
    %v935 = vadd.f32 %v277, %v934
    %936 = vdwg.mxu0
    %v937 = vmax.f32 %v609, 0.0
    %v938 = vmax.f32 %v778, 0.0
    %v939 = vmax.f32 %v611, 0.0
    %v940 = vmax.f32 %v780, 0.0
    %v941 = vmax.f32 %v614, 0.0
    %v942 = vmax.f32 %v783, 0.0
    %v943 = vmax.f32 %v616, 0.0
    %v944 = vmax.f32 %v785, 0.0
    %v945 = vmax.f32 %v619, 0.0
    %v946 = vmax.f32 %v788, 0.0
    %v947 = vmax.f32 %v621, 0.0
    %v948 = vmax.f32 %v790, 0.0
    %v949 = vmax.f32 %v624, 0.0
    %v950 = vmax.f32 %v793, 0.0
    %v951 = vmax.f32 %v626, 0.0
    %v952 = vmax.f32 %v795, 0.0
    %v953 = vmax.f32 %v629, 0.0
    %v954 = vmax.f32 %v798, 0.0
    %v955 = vmax.f32 %v631, 0.0
    %v956 = vmax.f32 %v800, 0.0
    %v957 = vmax.f32 %v634, 0.0
    %v958 = vmax.f32 %v803, 0.0
    %v959 = vmax.f32 %v636, 0.0
    %v960 = vmax.f32 %v805, 0.0
    %v961 = vmax.f32 %v639, 0.0
    %v962 = vmax.f32 %v808, 0.0
    %v963 = vmax.f32 %v641, 0.0
    %v964 = vmax.f32 %v810, 0.0
    %v965 = vmax.f32 %v644, 0.0
    %v966 = vmax.f32 %v813, 0.0
    %v967 = vmax.f32 %v646, 0.0
    %v968 = vmax.f32 %v815, 0.0
    %v969 = vmax.f32 %v649, 0.0
    %v970 = vmax.f32 %v818, 0.0
    %v971 = vmax.f32 %v651, 0.0
    %v972 = vmax.f32 %v820, 0.0
    %v973 = vmax.f32 %v654, 0.0
    %v974 = vmax.f32 %v823, 0.0
    %v975 = vmax.f32 %v656, 0.0
    %v976 = vmax.f32 %v825, 0.0
    %v977 = vmax.f32 %v659, 0.0
    %v978 = vmax.f32 %v828, 0.0
    %v979 = vmax.f32 %v661, 0.0
    %v980 = vmax.f32 %v830, 0.0
    %v981 = vmax.f32 %v664, 0.0
    %v982 = vmax.f32 %v833, 0.0
    %v983 = vmax.f32 %v666, 0.0
    %v984 = vmax.f32 %v835, 0.0
    %v985 = vmax.f32 %v669, 0.0
    %v986 = vmax.f32 %v838, 0.0
    %v987 = vmax.f32 %v671, 0.0
    %v988 = vmax.f32 %v840, 0.0
    %v989 = vmax.f32 %v674, 0.0
    %v990 = vmax.f32 %v843, 0.0
    %v991 = vmax.f32 %v676, 0.0
    %v992 = vmax.f32 %v845, 0.0
    %v993 = vmax.f32 %v679, 0.0
    %v994 = vmax.f32 %v848, 0.0
    %v995 = vmax.f32 %v681, 0.0
    %v996 = vmax.f32 %v850, 0.0
    %v997 = vmax.f32 %v684, 0.0
    %v998 = vmax.f32 %v853, 0.0
    %v999 = vmax.f32 %v686, 0.0
    %v1000 = vmax.f32 %v855, 0.0
    %v1001 = vmax.f32 %v689, 0.0
    %v1002 = vmax.f32 %v858, 0.0
    %v1003 = vmax.f32 %v691, 0.0
    %v1004 = vmax.f32 %v860, 0.0
    %v1005 = vmax.f32 %v694, 0.0
    %v1006 = vmax.f32 %v863, 0.0
    %v1007 = vmax.f32 %v696, 0.0
    %v1008 = vmax.f32 %v865, 0.0
    %v1009 = vmax.f32 %v699, 0.0
    %v1010 = vmax.f32 %v868, 0.0
    %v1011 = vmax.f32 %v701, 0.0
    %v1012 = vmax.f32 %v870, 0.0
    %v1013 = vmax.f32 %v704, 0.0
    %v1014 = vmax.f32 %v873, 0.0
    %v1015 = vmax.f32 %v706, 0.0
    %v1016 = vmax.f32 %v875, 0.0
    %v1017 = vmax.f32 %v709, 0.0
    %v1018 = vmax.f32 %v878, 0.0
    %v1019 = vmax.f32 %v711, 0.0
    %v1020 = vmax.f32 %v880, 0.0
    %v1021 = vmax.f32 %v714, 0.0
    %v1022 = vmax.f32 %v883, 0.0
    %v1023 = vmax.f32 %v716, 0.0
    %v1024 = vmax.f32 %v885, 0.0
    %v1025 = vmax.f32 %v719, 0.0
    %v1026 = vmax.f32 %v888, 0.0
    %v1027 = vmax.f32 %v721, 0.0
    %v1028 = vmax.f32 %v890, 0.0
    %v1029 = vmax.f32 %v724, 0.0
    %v1030 = vmax.f32 %v893, 0.0
    %v1031 = vmax.f32 %v726, 0.0
    %v1032 = vmax.f32 %v895, 0.0
    %v1033 = vmax.f32 %v729, 0.0
    %v1034 = vmax.f32 %v898, 0.0
    %v1035 = vmax.f32 %v731, 0.0
    %v1036 = vmax.f32 %v900, 0.0
    %v1037 = vmax.f32 %v734, 0.0
    %v1038 = vmax.f32 %v903, 0.0
    %v1039 = vmax.f32 %v736, 0.0
    %v1040 = vmax.f32 %v905, 0.0
    %v1041 = vmax.f32 %v739, 0.0
    %v1042 = vmax.f32 %v908, 0.0
    %v1043 = vmax.f32 %v741, 0.0
    %v1044 = vmax.f32 %v910, 0.0
    %v1045 = vmax.f32 %v744, 0.0
    %v1046 = vmax.f32 %v913, 0.0
    %v1047 = vmax.f32 %v746, 0.0
    %v1048 = vmax.f32 %v915, 0.0
    %v1049 = vmax.f32 %v749, 0.0
    %v1050 = vmax.f32 %v918, 0.0
    %v1051 = vmax.f32 %v751, 0.0
    %v1052 = vmax.f32 %v920, 0.0
    %v1053 = vmax.f32 %v754, 0.0
    %v1054 = vmax.f32 %v923, 0.0
    %v1055 = vmax.f32 %v756, 0.0
    %v1056 = vmax.f32 %v925, 0.0
    %v1057 = vmax.f32 %v759, 0.0
    %v1058 = vmax.f32 %v928, 0.0
    %v1059 = vmax.f32 %v761, 0.0
    %v1060 = vmax.f32 %v930, 0.0
    %v1061 = vmax.f32 %v764, 0.0
    %v1062 = vmax.f32 %v933, 0.0
    %v1063 = vmax.f32 %v766, 0.0
    %v1064 = vmax.f32 %v935, 0.0
    %v1065 = vpack.c.bf16 %v939, %v937
    %v1066 = vpack.c.bf16 %v940, %v938
    %v1067 = vpack.c.bf16 %v943, %v941
    %v1068 = vpack.c.bf16 %v944, %v942
    %v1069 = vpack.c.bf16 %v947, %v945
    %v1070 = vpack.c.bf16 %v948, %v946
    %v1071 = vpack.c.bf16 %v951, %v949
    %v1072 = vpack.c.bf16 %v952, %v950
    %v1073 = vpack.c.bf16 %v955, %v953
    %v1074 = vpack.c.bf16 %v956, %v954
    %v1075 = vpack.c.bf16 %v959, %v957
    %v1076 = vpack.c.bf16 %v960, %v958
    %v1077 = vpack.c.bf16 %v963, %v961
    %v1078 = vpack.c.bf16 %v964, %v962
    %v1079 = vpack.c.bf16 %v967, %v965
    %v1080 = vpack.c.bf16 %v968, %v966
    %v1081 = vpack.c.bf16 %v971, %v969
    %v1082 = vpack.c.bf16 %v972, %v970
    %v1083 = vpack.c.bf16 %v975, %v973
    %v1084 = vpack.c.bf16 %v976, %v974
    %v1085 = vpack.c.bf16 %v979, %v977
    %v1086 = vpack.c.bf16 %v980, %v978
    %v1087 = vpack.c.bf16 %v983, %v981
    %v1088 = vpack.c.bf16 %v984, %v982
    %v1089 = vpack.c.bf16 %v987, %v985
    %v1090 = vpack.c.bf16 %v988, %v986
    %v1091 = vpack.c.bf16 %v991, %v989
    %v1092 = vpack.c.bf16 %v992, %v990
    %v1093 = vpack.c.bf16 %v995, %v993
    %v1094 = vpack.c.bf16 %v996, %v994
    %v1095 = vpack.c.bf16 %v999, %v997
    %v1096 = vpack.c.bf16 %v1000, %v998
    %v1097 = vpack.c.bf16 %v1003, %v1001
    %v1098 = vpack.c.bf16 %v1004, %v1002
    %v1099 = vpack.c.bf16 %v1007, %v1005
    %v1100 = vpack.c.bf16 %v1008, %v1006
    %v1101 = vpack.c.bf16 %v1011, %v1009
    %v1102 = vpack.c.bf16 %v1012, %v1010
    %v1103 = vpack.c.bf16 %v1015, %v1013
    %v1104 = vpack.c.bf16 %v1016, %v1014
    %v1105 = vpack.c.bf16 %v1019, %v1017
    %v1106 = vpack.c.bf16 %v1020, %v1018
    %v1107 = vpack.c.bf16 %v1023, %v1021
    %v1108 = vpack.c.bf16 %v1024, %v1022
    %v1109 = vpack.c.bf16 %v1027, %v1025
    %v1110 = vpack.c.bf16 %v1028, %v1026
    %v1111 = vpack.c.bf16 %v1031, %v1029
    %v1112 = vpack.c.bf16 %v1032, %v1030
    %v1113 = vpack.c.bf16 %v1035, %v1033
    %v1114 = vpack.c.bf16 %v1036, %v1034
    %v1115 = vpack.c.bf16 %v1039, %v1037
    %v1116 = vpack.c.bf16 %v1040, %v1038
    %v1117 = vpack.c.bf16 %v1043, %v1041
    %v1118 = vpack.c.bf16 %v1044, %v1042
    %v1119 = vpack.c.bf16 %v1047, %v1045
    %v1120 = vpack.c.bf16 %v1048, %v1046
    %v1121 = vpack.c.bf16 %v1051, %v1049
    %v1122 = vpack.c.bf16 %v1052, %v1050
    %v1123 = vpack.c.bf16 %v1055, %v1053
    %v1124 = vpack.c.bf16 %v1056, %v1054
    %v1125 = vpack.c.bf16 %v1059, %v1057
    %v1126 = vpack.c.bf16 %v1060, %v1058
    %v1127 = vpack.c.bf16 %v1063, %v1061
    %v1128 = vpack.c.bf16 %v1064, %v1062
    %v1129 = vld [vmem:[%s4] sm:$0xf]
    %v1130 = vld [vmem:[%s4 + $0x4] sm:$0xf]
    %v1131 = vld [vmem:[%s4 + $0x8] sm:$0xf]
    %v1132 = vld [vmem:[%s4 + $0xc] sm:$0xf]
    %v1133 = vld [vmem:[%s4 + $0x10] sm:$0xf]
    %v1134 = vld [vmem:[%s4 + $0x14] sm:$0xf]
    %v1135 = vld [vmem:[%s4 + $0x18] sm:$0xf]
    %v1136 = vld [vmem:[%s4 + $0x1c] sm:$0xf]
    %v1137 = vld [vmem:[%s4 + $0x20] sm:$0xf]
    %v1138 = vld [vmem:[%s4 + $0x24] sm:$0xf]
    %v1139 = vld [vmem:[%s4 + $0x28] sm:$0xf]
    %v1140 = vld [vmem:[%s4 + $0x2c] sm:$0xf]
    %v1141 = vld [vmem:[%s4 + $0x30] sm:$0xf]
    %v1142 = vld [vmem:[%s4 + $0x34] sm:$0xf]
    %v1143 = vld [vmem:[%s4 + $0x38] sm:$0xf]
    %v1144 = vld [vmem:[%s4 + $0x3c] sm:$0xf]
    %v1145 = vld [vmem:[%s4 + $0x40] sm:$0xf]
    %v1146 = vld [vmem:[%s4 + $0x44] sm:$0xf]
    %v1147 = vld [vmem:[%s4 + $0x48] sm:$0xf]
    %v1148 = vld [vmem:[%s4 + $0x4c] sm:$0xf]
    %v1149 = vld [vmem:[%s4 + $0x50] sm:$0xf]
    %v1150 = vld [vmem:[%s4 + $0x54] sm:$0xf]
    %v1151 = vld [vmem:[%s4 + $0x58] sm:$0xf]
    %v1152 = vld [vmem:[%s4 + $0x5c] sm:$0xf]
    %v1153 = vld [vmem:[%s4 + $0x60] sm:$0xf]
    %v1154 = vld [vmem:[%s4 + $0x64] sm:$0xf]
    %v1155 = vld [vmem:[%s4 + $0x68] sm:$0xf]
    %v1156 = vld [vmem:[%s4 + $0x6c] sm:$0xf]
    %v1157 = vld [vmem:[%s4 + $0x70] sm:$0xf]
    %v1158 = vld [vmem:[%s4 + $0x74] sm:$0xf]
    %v1159 = vld [vmem:[%s4 + $0x78] sm:$0xf]
    %v1160 = vld [vmem:[%s4 + $0x7c] sm:$0xf]
    %v1161 = vld [vmem:[#allocation6] sm:$0x1]
    %v1163 = vperm.slane %v1161, 0
    %v1197 = vunpack.c.l.b16 %v1129
    %v1198 = vunpack.c.l.b16 %v1130
    %v1199 = vunpack.c.l.b16 %v1131
    %v1200 = vunpack.c.l.b16 %v1132
    %v1201 = vunpack.c.l.b16 %v1133
    %v1202 = vunpack.c.l.b16 %v1134
    %v1203 = vunpack.c.l.b16 %v1135
    %v1204 = vunpack.c.l.b16 %v1136
    %v1205 = vunpack.c.l.b16 %v1137
    %v1206 = vunpack.c.l.b16 %v1138
    %v1207 = vunpack.c.l.b16 %v1139
    %v1208 = vunpack.c.l.b16 %v1140
    %v1209 = vunpack.c.l.b16 %v1141
    %v1210 = vunpack.c.l.b16 %v1142
    %v1211 = vunpack.c.l.b16 %v1143
    %v1212 = vunpack.c.l.b16 %v1144
    %v1213 = vunpack.c.l.b16 %v1145
    %v1214 = vunpack.c.l.b16 %v1146
    %v1215 = vunpack.c.l.b16 %v1147
    %v1216 = vunpack.c.l.b16 %v1148
    %v1217 = vunpack.c.l.b16 %v1149
    %v1218 = vunpack.c.l.b16 %v1150
    %v1219 = vunpack.c.l.b16 %v1151
    %v1220 = vunpack.c.l.b16 %v1152
    %v1221 = vunpack.c.l.b16 %v1153
    %v1222 = vunpack.c.l.b16 %v1154
    %v1223 = vunpack.c.l.b16 %v1155
    %v1224 = vunpack.c.l.b16 %v1156
    %v1225 = vunpack.c.l.b16 %v1157
    %v1226 = vunpack.c.l.b16 %v1158
    %v1227 = vunpack.c.l.b16 %v1159
    %v1228 = vunpack.c.l.b16 %v1160
    %v1229 = vpack.c.b16 %v1198, %v1197
    %v1230 = vpack.c.b16 %v1200, %v1199
    %v1231 = vpack.c.b16 %v1202, %v1201
    %v1232 = vpack.c.b16 %v1204, %v1203
    %v1233 = vpack.c.b16 %v1206, %v1205
    %v1234 = vpack.c.b16 %v1208, %v1207
    %v1235 = vpack.c.b16 %v1210, %v1209
    %v1236 = vpack.c.b16 %v1212, %v1211
    %v1237 = vpack.c.b16 %v1214, %v1213
    %v1238 = vpack.c.b16 %v1216, %v1215
    %v1239 = vpack.c.b16 %v1218, %v1217
    %v1240 = vpack.c.b16 %v1220, %v1219
    %v1241 = vpack.c.b16 %v1222, %v1221
    %v1242 = vpack.c.b16 %v1224, %v1223
    %v1243 = vpack.c.b16 %v1226, %v1225
    %v1244 = vpack.c.b16 %v1228, %v1227
    %1261 = vmatpush.bf16.msra.mxu0 %v1236
    %1262 = vmatpush.bf16.msra.mxu0 %v1235
    %1263 = vmatpush.bf16.msra.mxu0 %v1234
    %1264 = vmatpush.bf16.msra.mxu0 %v1233
    %1265 = vmatpush.bf16.msra.mxu0 %v1232
    %1266 = vmatpush.bf16.msra.mxu0 %v1231
    %1267 = vmatpush.bf16.msra.mxu0 %v1230
    %1268 = vmatpush.bf16.msra.mxu0 %v1229
    %1269 = vmatmul.bf16.gmra.mxu0 %v1065
    %v1270 = vpop.f32.mrf.mxu0
    %v1271 = vadd.f32 %v1163, %v1270
    %v1272 = vpop.f32.mrf.mxu0
    %v1273 = vadd.f32 %v1163, %v1272
    %1274 = vmatmul.bf16.gmra.mxu0 %v1067
    %v1275 = vpop.f32.mrf.mxu0
    %v1276 = vadd.f32 %v1163, %v1275
    %v1277 = vpop.f32.mrf.mxu0
    %v1278 = vadd.f32 %v1163, %v1277
    %1279 = vmatmul.bf16.gmra.mxu0 %v1069
    %v1280 = vpop.f32.mrf.mxu0
    %v1281 = vadd.f32 %v1163, %v1280
    %v1282 = vpop.f32.mrf.mxu0
    %v1283 = vadd.f32 %v1163, %v1282
    %1284 = vmatmul.bf16.gmra.mxu0 %v1071
    %v1285 = vpop.f32.mrf.mxu0
    %v1286 = vadd.f32 %v1163, %v1285
    %v1287 = vpop.f32.mrf.mxu0
    %v1288 = vadd.f32 %v1163, %v1287
    %1289 = vmatmul.bf16.gmra.mxu0 %v1073
    %v1290 = vpop.f32.mrf.mxu0
    %v1291 = vadd.f32 %v1163, %v1290
    %v1292 = vpop.f32.mrf.mxu0
    %v1293 = vadd.f32 %v1163, %v1292
    %1294 = vmatmul.bf16.gmra.mxu0 %v1075
    %v1295 = vpop.f32.mrf.mxu0
    %v1296 = vadd.f32 %v1163, %v1295
    %v1297 = vpop.f32.mrf.mxu0
    %v1298 = vadd.f32 %v1163, %v1297
    %1299 = vmatmul.bf16.gmra.mxu0 %v1077
    %v1300 = vpop.f32.mrf.mxu0
    %v1301 = vadd.f32 %v1163, %v1300
    %v1302 = vpop.f32.mrf.mxu0
    %v1303 = vadd.f32 %v1163, %v1302
    %1304 = vmatmul.bf16.gmra.mxu0 %v1079
    %v1305 = vpop.f32.mrf.mxu0
    %v1306 = vadd.f32 %v1163, %v1305
    %v1307 = vpop.f32.mrf.mxu0
    %v1308 = vadd.f32 %v1163, %v1307
    %1309 = vmatmul.bf16.gmra.mxu0 %v1081
    %v1310 = vpop.f32.mrf.mxu0
    %v1311 = vadd.f32 %v1163, %v1310
    %v1312 = vpop.f32.mrf.mxu0
    %v1313 = vadd.f32 %v1163, %v1312
    %1314 = vmatmul.bf16.gmra.mxu0 %v1083
    %v1315 = vpop.f32.mrf.mxu0
    %v1316 = vadd.f32 %v1163, %v1315
    %v1317 = vpop.f32.mrf.mxu0
    %v1318 = vadd.f32 %v1163, %v1317
    %1319 = vmatmul.bf16.gmra.mxu0 %v1085
    %v1320 = vpop.f32.mrf.mxu0
    %v1321 = vadd.f32 %v1163, %v1320
    %v1322 = vpop.f32.mrf.mxu0
    %v1323 = vadd.f32 %v1163, %v1322
    %1324 = vmatmul.bf16.gmra.mxu0 %v1087
    %v1325 = vpop.f32.mrf.mxu0
    %v1326 = vadd.f32 %v1163, %v1325
    %v1327 = vpop.f32.mrf.mxu0
    %v1328 = vadd.f32 %v1163, %v1327
    %1329 = vmatmul.bf16.gmra.mxu0 %v1089
    %v1330 = vpop.f32.mrf.mxu0
    %v1331 = vadd.f32 %v1163, %v1330
    %v1332 = vpop.f32.mrf.mxu0
    %v1333 = vadd.f32 %v1163, %v1332
    %1334 = vmatmul.bf16.gmra.mxu0 %v1091
    %v1335 = vpop.f32.mrf.mxu0
    %v1336 = vadd.f32 %v1163, %v1335
    %v1337 = vpop.f32.mrf.mxu0
    %v1338 = vadd.f32 %v1163, %v1337
    %1339 = vmatmul.bf16.gmra.mxu0 %v1093
    %v1340 = vpop.f32.mrf.mxu0
    %v1341 = vadd.f32 %v1163, %v1340
    %v1342 = vpop.f32.mrf.mxu0
    %v1343 = vadd.f32 %v1163, %v1342
    %1344 = vmatmul.bf16.gmra.mxu0 %v1095
    %v1345 = vpop.f32.mrf.mxu0
    %v1346 = vadd.f32 %v1163, %v1345
    %v1347 = vpop.f32.mrf.mxu0
    %v1348 = vadd.f32 %v1163, %v1347
    %1349 = vmatmul.bf16.gmra.mxu0 %v1097
    %v1350 = vpop.f32.mrf.mxu0
    %v1351 = vadd.f32 %v1163, %v1350
    %v1352 = vpop.f32.mrf.mxu0
    %v1353 = vadd.f32 %v1163, %v1352
    %1354 = vmatmul.bf16.gmra.mxu0 %v1099
    %v1355 = vpop.f32.mrf.mxu0
    %v1356 = vadd.f32 %v1163, %v1355
    %v1357 = vpop.f32.mrf.mxu0
    %v1358 = vadd.f32 %v1163, %v1357
    %1359 = vmatmul.bf16.gmra.mxu0 %v1101
    %v1360 = vpop.f32.mrf.mxu0
    %v1361 = vadd.f32 %v1163, %v1360
    %v1362 = vpop.f32.mrf.mxu0
    %v1363 = vadd.f32 %v1163, %v1362
    %1364 = vmatmul.bf16.gmra.mxu0 %v1103
    %v1365 = vpop.f32.mrf.mxu0
    %v1366 = vadd.f32 %v1163, %v1365
    %v1367 = vpop.f32.mrf.mxu0
    %v1368 = vadd.f32 %v1163, %v1367
    %1369 = vmatmul.bf16.gmra.mxu0 %v1105
    %v1370 = vpop.f32.mrf.mxu0
    %v1371 = vadd.f32 %v1163, %v1370
    %v1372 = vpop.f32.mrf.mxu0
    %v1373 = vadd.f32 %v1163, %v1372
    %1374 = vmatmul.bf16.gmra.mxu0 %v1107
    %v1375 = vpop.f32.mrf.mxu0
    %v1376 = vadd.f32 %v1163, %v1375
    %v1377 = vpop.f32.mrf.mxu0
    %v1378 = vadd.f32 %v1163, %v1377
    %1379 = vmatmul.bf16.gmra.mxu0 %v1109
    %v1380 = vpop.f32.mrf.mxu0
    %v1381 = vadd.f32 %v1163, %v1380
    %v1382 = vpop.f32.mrf.mxu0
    %v1383 = vadd.f32 %v1163, %v1382
    %1384 = vmatmul.bf16.gmra.mxu0 %v1111
    %v1385 = vpop.f32.mrf.mxu0
    %v1386 = vadd.f32 %v1163, %v1385
    %v1387 = vpop.f32.mrf.mxu0
    %v1388 = vadd.f32 %v1163, %v1387
    %1389 = vmatmul.bf16.gmra.mxu0 %v1113
    %v1390 = vpop.f32.mrf.mxu0
    %v1391 = vadd.f32 %v1163, %v1390
    %v1392 = vpop.f32.mrf.mxu0
    %v1393 = vadd.f32 %v1163, %v1392
    %1394 = vmatmul.bf16.gmra.mxu0 %v1115
    %v1395 = vpop.f32.mrf.mxu0
    %v1396 = vadd.f32 %v1163, %v1395
    %v1397 = vpop.f32.mrf.mxu0
    %v1398 = vadd.f32 %v1163, %v1397
    %1399 = vmatmul.bf16.gmra.mxu0 %v1117
    %v1400 = vpop.f32.mrf.mxu0
    %v1401 = vadd.f32 %v1163, %v1400
    %v1402 = vpop.f32.mrf.mxu0
    %v1403 = vadd.f32 %v1163, %v1402
    %1404 = vmatmul.bf16.gmra.mxu0 %v1119
    %v1405 = vpop.f32.mrf.mxu0
    %v1406 = vadd.f32 %v1163, %v1405
    %v1407 = vpop.f32.mrf.mxu0
    %v1408 = vadd.f32 %v1163, %v1407
    %1409 = vmatmul.bf16.gmra.mxu0 %v1121
    %v1410 = vpop.f32.mrf.mxu0
    %v1411 = vadd.f32 %v1163, %v1410
    %v1412 = vpop.f32.mrf.mxu0
    %v1413 = vadd.f32 %v1163, %v1412
    %1414 = vmatmul.bf16.gmra.mxu0 %v1123
    %v1415 = vpop.f32.mrf.mxu0
    %v1416 = vadd.f32 %v1163, %v1415
    %v1417 = vpop.f32.mrf.mxu0
    %v1418 = vadd.f32 %v1163, %v1417
    %1419 = vmatmul.bf16.gmra.mxu0 %v1125
    %v1420 = vpop.f32.mrf.mxu0
    %v1421 = vadd.f32 %v1163, %v1420
    %v1422 = vpop.f32.mrf.mxu0
    %v1423 = vadd.f32 %v1163, %v1422
    %1424 = vmatmul.bf16.gmra.mxu0 %v1127
    %v1425 = vpop.f32.mrf.mxu0
    %v1426 = vadd.f32 %v1163, %v1425
    %v1427 = vpop.f32.mrf.mxu0
    %v1428 = vadd.f32 %v1163, %v1427
    %1429 = vdwg.mxu0
    %1430 = vmatpush.bf16.msra.mxu0 %v1244
    %1431 = vmatpush.bf16.msra.mxu0 %v1243
    %1432 = vmatpush.bf16.msra.mxu0 %v1242
    %1433 = vmatpush.bf16.msra.mxu0 %v1241
    %1434 = vmatpush.bf16.msra.mxu0 %v1240
    %1435 = vmatpush.bf16.msra.mxu0 %v1239
    %1436 = vmatpush.bf16.msra.mxu0 %v1238
    %1437 = vmatpush.bf16.msra.mxu0 %v1237
    %1438 = vmatmul.bf16.gmra.mxu0 %v1066
    %v1439 = vpop.f32.mrf.mxu0
    %v1440 = vadd.f32 %v1271, %v1439
    %v1441 = vpop.f32.mrf.mxu0
    %v1442 = vadd.f32 %v1273, %v1441
    %1443 = vmatmul.bf16.gmra.mxu0 %v1068
    %v1444 = vpop.f32.mrf.mxu0
    %v1445 = vadd.f32 %v1276, %v1444
    %v1446 = vpop.f32.mrf.mxu0
    %v1447 = vadd.f32 %v1278, %v1446
    %1448 = vmatmul.bf16.gmra.mxu0 %v1070
    %v1449 = vpop.f32.mrf.mxu0
    %v1450 = vadd.f32 %v1281, %v1449
    %v1451 = vpop.f32.mrf.mxu0
    %v1452 = vadd.f32 %v1283, %v1451
    %1453 = vmatmul.bf16.gmra.mxu0 %v1072
    %v1454 = vpop.f32.mrf.mxu0
    %v1455 = vadd.f32 %v1286, %v1454
    %v1456 = vpop.f32.mrf.mxu0
    %v1457 = vadd.f32 %v1288, %v1456
    %1458 = vmatmul.bf16.gmra.mxu0 %v1074
    %v1459 = vpop.f32.mrf.mxu0
    %v1460 = vadd.f32 %v1291, %v1459
    %v1461 = vpop.f32.mrf.mxu0
    %v1462 = vadd.f32 %v1293, %v1461
    %1463 = vmatmul.bf16.gmra.mxu0 %v1076
    %v1464 = vpop.f32.mrf.mxu0
    %v1465 = vadd.f32 %v1296, %v1464
    %v1466 = vpop.f32.mrf.mxu0
    %v1467 = vadd.f32 %v1298, %v1466
    %1468 = vmatmul.bf16.gmra.mxu0 %v1078
    %v1469 = vpop.f32.mrf.mxu0
    %v1470 = vadd.f32 %v1301, %v1469
    %v1471 = vpop.f32.mrf.mxu0
    %v1472 = vadd.f32 %v1303, %v1471
    %1473 = vmatmul.bf16.gmra.mxu0 %v1080
    %v1474 = vpop.f32.mrf.mxu0
    %v1475 = vadd.f32 %v1306, %v1474
    %v1476 = vpop.f32.mrf.mxu0
    %v1477 = vadd.f32 %v1308, %v1476
    %1478 = vmatmul.bf16.gmra.mxu0 %v1082
    %v1479 = vpop.f32.mrf.mxu0
    %v1480 = vadd.f32 %v1311, %v1479
    %v1481 = vpop.f32.mrf.mxu0
    %v1482 = vadd.f32 %v1313, %v1481
    %1483 = vmatmul.bf16.gmra.mxu0 %v1084
    %v1484 = vpop.f32.mrf.mxu0
    %v1485 = vadd.f32 %v1316, %v1484
    %v1486 = vpop.f32.mrf.mxu0
    %v1487 = vadd.f32 %v1318, %v1486
    %1488 = vmatmul.bf16.gmra.mxu0 %v1086
    %v1489 = vpop.f32.mrf.mxu0
    %v1490 = vadd.f32 %v1321, %v1489
    %v1491 = vpop.f32.mrf.mxu0
    %v1492 = vadd.f32 %v1323, %v1491
    %1493 = vmatmul.bf16.gmra.mxu0 %v1088
    %v1494 = vpop.f32.mrf.mxu0
    %v1495 = vadd.f32 %v1326, %v1494
    %v1496 = vpop.f32.mrf.mxu0
    %v1497 = vadd.f32 %v1328, %v1496
    %1498 = vmatmul.bf16.gmra.mxu0 %v1090
    %v1499 = vpop.f32.mrf.mxu0
    %v1500 = vadd.f32 %v1331, %v1499
    %v1501 = vpop.f32.mrf.mxu0
    %v1502 = vadd.f32 %v1333, %v1501
    %1503 = vmatmul.bf16.gmra.mxu0 %v1092
    %v1504 = vpop.f32.mrf.mxu0
    %v1505 = vadd.f32 %v1336, %v1504
    %v1506 = vpop.f32.mrf.mxu0
    %v1507 = vadd.f32 %v1338, %v1506
    %1508 = vmatmul.bf16.gmra.mxu0 %v1094
    %v1509 = vpop.f32.mrf.mxu0
    %v1510 = vadd.f32 %v1341, %v1509
    %v1511 = vpop.f32.mrf.mxu0
    %v1512 = vadd.f32 %v1343, %v1511
    %1513 = vmatmul.bf16.gmra.mxu0 %v1096
    %v1514 = vpop.f32.mrf.mxu0
    %v1515 = vadd.f32 %v1346, %v1514
    %v1516 = vpop.f32.mrf.mxu0
    %v1517 = vadd.f32 %v1348, %v1516
    %1518 = vmatmul.bf16.gmra.mxu0 %v1098
    %v1519 = vpop.f32.mrf.mxu0
    %v1520 = vadd.f32 %v1351, %v1519
    %v1521 = vpop.f32.mrf.mxu0
    %v1522 = vadd.f32 %v1353, %v1521
    %1523 = vmatmul.bf16.gmra.mxu0 %v1100
    %v1524 = vpop.f32.mrf.mxu0
    %v1525 = vadd.f32 %v1356, %v1524
    %v1526 = vpop.f32.mrf.mxu0
    %v1527 = vadd.f32 %v1358, %v1526
    %1528 = vmatmul.bf16.gmra.mxu0 %v1102
    %v1529 = vpop.f32.mrf.mxu0
    %v1530 = vadd.f32 %v1361, %v1529
    %v1531 = vpop.f32.mrf.mxu0
    %v1532 = vadd.f32 %v1363, %v1531
    %1533 = vmatmul.bf16.gmra.mxu0 %v1104
    %v1534 = vpop.f32.mrf.mxu0
    %v1535 = vadd.f32 %v1366, %v1534
    %v1536 = vpop.f32.mrf.mxu0
    %v1537 = vadd.f32 %v1368, %v1536
    %1538 = vmatmul.bf16.gmra.mxu0 %v1106
    %v1539 = vpop.f32.mrf.mxu0
    %v1540 = vadd.f32 %v1371, %v1539
    %v1541 = vpop.f32.mrf.mxu0
    %v1542 = vadd.f32 %v1373, %v1541
    %1543 = vmatmul.bf16.gmra.mxu0 %v1108
    %v1544 = vpop.f32.mrf.mxu0
    %v1545 = vadd.f32 %v1376, %v1544
    %v1546 = vpop.f32.mrf.mxu0
    %v1547 = vadd.f32 %v1378, %v1546
    %1548 = vmatmul.bf16.gmra.mxu0 %v1110
    %v1549 = vpop.f32.mrf.mxu0
    %v1550 = vadd.f32 %v1381, %v1549
    %v1551 = vpop.f32.mrf.mxu0
    %v1552 = vadd.f32 %v1383, %v1551
    %1553 = vmatmul.bf16.gmra.mxu0 %v1112
    %v1554 = vpop.f32.mrf.mxu0
    %v1555 = vadd.f32 %v1386, %v1554
    %v1556 = vpop.f32.mrf.mxu0
    %v1557 = vadd.f32 %v1388, %v1556
    %1558 = vmatmul.bf16.gmra.mxu0 %v1114
    %v1559 = vpop.f32.mrf.mxu0
    %v1560 = vadd.f32 %v1391, %v1559
    %v1561 = vpop.f32.mrf.mxu0
    %v1562 = vadd.f32 %v1393, %v1561
    %1563 = vmatmul.bf16.gmra.mxu0 %v1116
    %v1564 = vpop.f32.mrf.mxu0
    %v1565 = vadd.f32 %v1396, %v1564
    %v1566 = vpop.f32.mrf.mxu0
    %v1567 = vadd.f32 %v1398, %v1566
    %1568 = vmatmul.bf16.gmra.mxu0 %v1118
    %v1569 = vpop.f32.mrf.mxu0
    %v1570 = vadd.f32 %v1401, %v1569
    %v1571 = vpop.f32.mrf.mxu0
    %v1572 = vadd.f32 %v1403, %v1571
    %1573 = vmatmul.bf16.gmra.mxu0 %v1120
    %v1574 = vpop.f32.mrf.mxu0
    %v1575 = vadd.f32 %v1406, %v1574
    %v1576 = vpop.f32.mrf.mxu0
    %v1577 = vadd.f32 %v1408, %v1576
    %1578 = vmatmul.bf16.gmra.mxu0 %v1122
    %v1579 = vpop.f32.mrf.mxu0
    %v1580 = vadd.f32 %v1411, %v1579
    %v1581 = vpop.f32.mrf.mxu0
    %v1582 = vadd.f32 %v1413, %v1581
    %1583 = vmatmul.bf16.gmra.mxu0 %v1124
    %v1584 = vpop.f32.mrf.mxu0
    %v1585 = vadd.f32 %v1416, %v1584
    %v1586 = vpop.f32.mrf.mxu0
    %v1587 = vadd.f32 %v1418, %v1586
    %1588 = vmatmul.bf16.gmra.mxu0 %v1126
    %v1589 = vpop.f32.mrf.mxu0
    %v1590 = vadd.f32 %v1421, %v1589
    %v1591 = vpop.f32.mrf.mxu0
    %v1592 = vadd.f32 %v1423, %v1591
    %1593 = vmatmul.bf16.gmra.mxu0 %v1128
    %v1594 = vpop.f32.mrf.mxu0
    %v1595 = vadd.f32 %v1426, %v1594
    %v1596 = vpop.f32.mrf.mxu0
    %v1597 = vadd.f32 %v1428, %v1596
    %1598 = vdwg.mxu0
    %v1599 = vmax.f32 %v1440, 0.0
    %v1600 = vmax.f32 %v1442, 0.0
    %v1601 = vmax.f32 %v1445, 0.0
    %v1602 = vmax.f32 %v1447, 0.0
    %v1603 = vmax.f32 %v1450, 0.0
    %v1604 = vmax.f32 %v1452, 0.0
    %v1605 = vmax.f32 %v1455, 0.0
    %v1606 = vmax.f32 %v1457, 0.0
    %v1607 = vmax.f32 %v1460, 0.0
    %v1608 = vmax.f32 %v1462, 0.0
    %v1609 = vmax.f32 %v1465, 0.0
    %v1610 = vmax.f32 %v1467, 0.0
    %v1611 = vmax.f32 %v1470, 0.0
    %v1612 = vmax.f32 %v1472, 0.0
    %v1613 = vmax.f32 %v1475, 0.0
    %v1614 = vmax.f32 %v1477, 0.0
    %v1615 = vmax.f32 %v1480, 0.0
    %v1616 = vmax.f32 %v1482, 0.0
    %v1617 = vmax.f32 %v1485, 0.0
    %v1618 = vmax.f32 %v1487, 0.0
    %v1619 = vmax.f32 %v1490, 0.0
    %v1620 = vmax.f32 %v1492, 0.0
    %v1621 = vmax.f32 %v1495, 0.0
    %v1622 = vmax.f32 %v1497, 0.0
    %v1623 = vmax.f32 %v1500, 0.0
    %v1624 = vmax.f32 %v1502, 0.0
    %v1625 = vmax.f32 %v1505, 0.0
    %v1626 = vmax.f32 %v1507, 0.0
    %v1627 = vmax.f32 %v1510, 0.0
    %v1628 = vmax.f32 %v1512, 0.0
    %v1629 = vmax.f32 %v1515, 0.0
    %v1630 = vmax.f32 %v1517, 0.0
    %v1631 = vmax.f32 %v1520, 0.0
    %v1632 = vmax.f32 %v1522, 0.0
    %v1633 = vmax.f32 %v1525, 0.0
    %v1634 = vmax.f32 %v1527, 0.0
    %v1635 = vmax.f32 %v1530, 0.0
    %v1636 = vmax.f32 %v1532, 0.0
    %v1637 = vmax.f32 %v1535, 0.0
    %v1638 = vmax.f32 %v1537, 0.0
    %v1639 = vmax.f32 %v1540, 0.0
    %v1640 = vmax.f32 %v1542, 0.0
    %v1641 = vmax.f32 %v1545, 0.0
    %v1642 = vmax.f32 %v1547, 0.0
    %v1643 = vmax.f32 %v1550, 0.0
    %v1644 = vmax.f32 %v1552, 0.0
    %v1645 = vmax.f32 %v1555, 0.0
    %v1646 = vmax.f32 %v1557, 0.0
    %v1647 = vmax.f32 %v1560, 0.0
    %v1648 = vmax.f32 %v1562, 0.0
    %v1649 = vmax.f32 %v1565, 0.0
    %v1650 = vmax.f32 %v1567, 0.0
    %v1651 = vmax.f32 %v1570, 0.0
    %v1652 = vmax.f32 %v1572, 0.0
    %v1653 = vmax.f32 %v1575, 0.0
    %v1654 = vmax.f32 %v1577, 0.0
    %v1655 = vmax.f32 %v1580, 0.0
    %v1656 = vmax.f32 %v1582, 0.0
    %v1657 = vmax.f32 %v1585, 0.0
    %v1658 = vmax.f32 %v1587, 0.0
    %v1659 = vmax.f32 %v1590, 0.0
    %v1660 = vmax.f32 %v1592, 0.0
    %v1661 = vmax.f32 %v1595, 0.0
    %v1662 = vmax.f32 %v1597, 0.0
    %v1663 = vpack.c.bf16 %v1600, %v1599
    %v1664 = vpack.c.bf16 %v1602, %v1601
    %v1665 = vpack.c.bf16 %v1604, %v1603
    %v1666 = vpack.c.bf16 %v1606, %v1605
    %v1667 = vpack.c.bf16 %v1608, %v1607
    %v1668 = vpack.c.bf16 %v1610, %v1609
    %v1669 = vpack.c.bf16 %v1612, %v1611
    %v1670 = vpack.c.bf16 %v1614, %v1613
    %v1671 = vpack.c.bf16 %v1616, %v1615
    %v1672 = vpack.c.bf16 %v1618, %v1617
    %v1673 = vpack.c.bf16 %v1620, %v1619
    %v1674 = vpack.c.bf16 %v1622, %v1621
    %v1675 = vpack.c.bf16 %v1624, %v1623
    %v1676 = vpack.c.bf16 %v1626, %v1625
    %v1677 = vpack.c.bf16 %v1628, %v1627
    %v1678 = vpack.c.bf16 %v1630, %v1629
    %v1679 = vpack.c.bf16 %v1632, %v1631
    %v1680 = vpack.c.bf16 %v1634, %v1633
    %v1681 = vpack.c.bf16 %v1636, %v1635
    %v1682 = vpack.c.bf16 %v1638, %v1637
    %v1683 = vpack.c.bf16 %v1640, %v1639
    %v1684 = vpack.c.bf16 %v1642, %v1641
    %v1685 = vpack.c.bf16 %v1644, %v1643
    %v1686 = vpack.c.bf16 %v1646, %v1645
    %v1687 = vpack.c.bf16 %v1648, %v1647
    %v1688 = vpack.c.bf16 %v1650, %v1649
    %v1689 = vpack.c.bf16 %v1652, %v1651
    %v1690 = vpack.c.bf16 %v1654, %v1653
    %v1691 = vpack.c.bf16 %v1656, %v1655
    %v1692 = vpack.c.bf16 %v1658, %v1657
    %v1693 = vpack.c.bf16 %v1660, %v1659
    %v1694 = vpack.c.bf16 %v1662, %v1661
    %v1695 = vld [vmem:[%s6] sm:$0xf]
    %v1696 = vld [vmem:[%s6 + $0x4] sm:$0xf]
    %v1697 = vld [vmem:[%s6 + $0x8] sm:$0xf]
    %v1698 = vld [vmem:[%s6 + $0xc] sm:$0xf]
    %v1699 = vld [vmem:[%s6 + $0x10] sm:$0xf]
    %v1700 = vld [vmem:[%s6 + $0x14] sm:$0xf]
    %v1701 = vld [vmem:[%s6 + $0x18] sm:$0xf]
    %v1702 = vld [vmem:[%s6 + $0x1c] sm:$0xf]
    %v1703 = vld [vmem:[#allocation7] sm:$0x1]
    %v1705 = vperm.slane %v1703, 0
    %v1715 = vunpack.c.l.b16 %v1695
    %v1716 = vunpack.c.l.b16 %v1696
    %v1717 = vunpack.c.l.b16 %v1697
    %v1718 = vunpack.c.l.b16 %v1698
    %v1719 = vunpack.c.l.b16 %v1699
    %v1720 = vunpack.c.l.b16 %v1700
    %v1721 = vunpack.c.l.b16 %v1701
    %v1722 = vunpack.c.l.b16 %v1702
    %v1723 = vpack.c.b16 %v1716, %v1715
    %v1724 = vpack.c.b16 %v1718, %v1717
    %v1725 = vpack.c.b16 %v1720, %v1719
    %v1726 = vpack.c.b16 %v1722, %v1721
    %vm1731 = vcmask 523264
    %v1733 = vsel %vm1731, %v1663, 0
    %v1736 = vsel %vm1731, %v1664, 0
    %v1739 = vsel %vm1731, %v1665, 0
    %v1742 = vsel %vm1731, %v1666, 0
    %v1745 = vsel %vm1731, %v1667, 0
    %v1748 = vsel %vm1731, %v1668, 0
    %v1751 = vsel %vm1731, %v1669, 0
    %v1754 = vsel %vm1731, %v1670, 0
    %v1757 = vsel %vm1731, %v1671, 0
    %v1760 = vsel %vm1731, %v1672, 0
    %v1763 = vsel %vm1731, %v1673, 0
    %v1766 = vsel %vm1731, %v1674, 0
    %v1769 = vsel %vm1731, %v1675, 0
    %v1772 = vsel %vm1731, %v1676, 0
    %v1775 = vsel %vm1731, %v1677, 0
    %v1778 = vsel %vm1731, %v1678, 0
    %v1781 = vsel %vm1731, %v1679, 0
    %v1784 = vsel %vm1731, %v1680, 0
    %v1787 = vsel %vm1731, %v1681, 0
    %v1790 = vsel %vm1731, %v1682, 0
    %v1793 = vsel %vm1731, %v1683, 0
    %v1796 = vsel %vm1731, %v1684, 0
    %v1799 = vsel %vm1731, %v1685, 0
    %v1802 = vsel %vm1731, %v1686, 0
    %v1805 = vsel %vm1731, %v1687, 0
    %v1808 = vsel %vm1731, %v1688, 0
    %v1811 = vsel %vm1731, %v1689, 0
    %v1814 = vsel %vm1731, %v1690, 0
    %v1817 = vsel %vm1731, %v1691, 0
    %v1820 = vsel %vm1731, %v1692, 0
    %v1823 = vsel %vm1731, %v1693, 0
    %v1826 = vsel %vm1731, %v1694, 0
    %1828 = vmatpush.bf16.msra.mxu0 0
    %1829 = vmatpush.bf16.msra.mxu0 0
    %1830 = vmatpush.bf16.msra.mxu0 0
    %1831 = vmatpush.bf16.msra.mxu0 0
    %1832 = vmatpush.bf16.msra.mxu0 %v1726
    %1833 = vmatpush.bf16.msra.mxu0 %v1725
    %1834 = vmatpush.bf16.msra.mxu0 %v1724
    %1835 = vmatpush.bf16.msra.mxu0 %v1723
    %1836 = vmatmul.bf16.gmra.mxu0 %v1733
    %v1837 = vpop.f32.mrf.mxu0
    %v1838 = vadd.f32 %v1705, %v1837
    %v1839 = vpop.f32.mrf.mxu0
    %v1840 = vadd.f32 %v1705, %v1839
    %1841 = vmatmul.bf16.gmra.mxu0 %v1736
    %v1842 = vpop.f32.mrf.mxu0
    %v1843 = vadd.f32 %v1705, %v1842
    %v1844 = vpop.f32.mrf.mxu0
    %v1845 = vadd.f32 %v1705, %v1844
    %1846 = vmatmul.bf16.gmra.mxu0 %v1739
    %v1847 = vpop.f32.mrf.mxu0
    %v1848 = vadd.f32 %v1705, %v1847
    %v1849 = vpop.f32.mrf.mxu0
    %v1850 = vadd.f32 %v1705, %v1849
    %1851 = vmatmul.bf16.gmra.mxu0 %v1742
    %v1852 = vpop.f32.mrf.mxu0
    %v1853 = vadd.f32 %v1705, %v1852
    %v1854 = vpop.f32.mrf.mxu0
    %v1855 = vadd.f32 %v1705, %v1854
    %1856 = vmatmul.bf16.gmra.mxu0 %v1745
    %v1857 = vpop.f32.mrf.mxu0
    %v1858 = vadd.f32 %v1705, %v1857
    %v1859 = vpop.f32.mrf.mxu0
    %v1860 = vadd.f32 %v1705, %v1859
    %1861 = vmatmul.bf16.gmra.mxu0 %v1748
    %v1862 = vpop.f32.mrf.mxu0
    %v1863 = vadd.f32 %v1705, %v1862
    %v1864 = vpop.f32.mrf.mxu0
    %v1865 = vadd.f32 %v1705, %v1864
    %1866 = vmatmul.bf16.gmra.mxu0 %v1751
    %v1867 = vpop.f32.mrf.mxu0
    %v1868 = vadd.f32 %v1705, %v1867
    %v1869 = vpop.f32.mrf.mxu0
    %v1870 = vadd.f32 %v1705, %v1869
    %1871 = vmatmul.bf16.gmra.mxu0 %v1754
    %v1872 = vpop.f32.mrf.mxu0
    %v1873 = vadd.f32 %v1705, %v1872
    %v1874 = vpop.f32.mrf.mxu0
    %v1875 = vadd.f32 %v1705, %v1874
    %1876 = vmatmul.bf16.gmra.mxu0 %v1757
    %v1877 = vpop.f32.mrf.mxu0
    %v1878 = vadd.f32 %v1705, %v1877
    %v1879 = vpop.f32.mrf.mxu0
    %v1880 = vadd.f32 %v1705, %v1879
    %1881 = vmatmul.bf16.gmra.mxu0 %v1760
    %v1882 = vpop.f32.mrf.mxu0
    %v1883 = vadd.f32 %v1705, %v1882
    %v1884 = vpop.f32.mrf.mxu0
    %v1885 = vadd.f32 %v1705, %v1884
    %1886 = vmatmul.bf16.gmra.mxu0 %v1763
    %v1887 = vpop.f32.mrf.mxu0
    %v1888 = vadd.f32 %v1705, %v1887
    %v1889 = vpop.f32.mrf.mxu0
    %v1890 = vadd.f32 %v1705, %v1889
    %1891 = vmatmul.bf16.gmra.mxu0 %v1766
    %v1892 = vpop.f32.mrf.mxu0
    %v1893 = vadd.f32 %v1705, %v1892
    %v1894 = vpop.f32.mrf.mxu0
    %v1895 = vadd.f32 %v1705, %v1894
    %1896 = vmatmul.bf16.gmra.mxu0 %v1769
    %v1897 = vpop.f32.mrf.mxu0
    %v1898 = vadd.f32 %v1705, %v1897
    %v1899 = vpop.f32.mrf.mxu0
    %v1900 = vadd.f32 %v1705, %v1899
    %1901 = vmatmul.bf16.gmra.mxu0 %v1772
    %v1902 = vpop.f32.mrf.mxu0
    %v1903 = vadd.f32 %v1705, %v1902
    %v1904 = vpop.f32.mrf.mxu0
    %v1905 = vadd.f32 %v1705, %v1904
    %1906 = vmatmul.bf16.gmra.mxu0 %v1775
    %v1907 = vpop.f32.mrf.mxu0
    %v1908 = vadd.f32 %v1705, %v1907
    %v1909 = vpop.f32.mrf.mxu0
    %v1910 = vadd.f32 %v1705, %v1909
    %1911 = vmatmul.bf16.gmra.mxu0 %v1778
    %v1912 = vpop.f32.mrf.mxu0
    %v1913 = vadd.f32 %v1705, %v1912
    %v1914 = vpop.f32.mrf.mxu0
    %v1915 = vadd.f32 %v1705, %v1914
    %1916 = vmatmul.bf16.gmra.mxu0 %v1781
    %v1917 = vpop.f32.mrf.mxu0
    %v1918 = vadd.f32 %v1705, %v1917
    %v1919 = vpop.f32.mrf.mxu0
    %v1920 = vadd.f32 %v1705, %v1919
    %1921 = vmatmul.bf16.gmra.mxu0 %v1784
    %v1922 = vpop.f32.mrf.mxu0
    %v1923 = vadd.f32 %v1705, %v1922
    %v1924 = vpop.f32.mrf.mxu0
    %v1925 = vadd.f32 %v1705, %v1924
    %1926 = vmatmul.bf16.gmra.mxu0 %v1787
    %v1927 = vpop.f32.mrf.mxu0
    %v1928 = vadd.f32 %v1705, %v1927
    %v1929 = vpop.f32.mrf.mxu0
    %v1930 = vadd.f32 %v1705, %v1929
    %1931 = vmatmul.bf16.gmra.mxu0 %v1790
    %v1932 = vpop.f32.mrf.mxu0
    %v1933 = vadd.f32 %v1705, %v1932
    %v1934 = vpop.f32.mrf.mxu0
    %v1935 = vadd.f32 %v1705, %v1934
    %1936 = vmatmul.bf16.gmra.mxu0 %v1793
    %v1937 = vpop.f32.mrf.mxu0
    %v1938 = vadd.f32 %v1705, %v1937
    %v1939 = vpop.f32.mrf.mxu0
    %v1940 = vadd.f32 %v1705, %v1939
    %1941 = vmatmul.bf16.gmra.mxu0 %v1796
    %v1942 = vpop.f32.mrf.mxu0
    %v1943 = vadd.f32 %v1705, %v1942
    %v1944 = vpop.f32.mrf.mxu0
    %v1945 = vadd.f32 %v1705, %v1944
    %1946 = vmatmul.bf16.gmra.mxu0 %v1799
    %v1947 = vpop.f32.mrf.mxu0
    %v1948 = vadd.f32 %v1705, %v1947
    %v1949 = vpop.f32.mrf.mxu0
    %v1950 = vadd.f32 %v1705, %v1949
    %1951 = vmatmul.bf16.gmra.mxu0 %v1802
    %v1952 = vpop.f32.mrf.mxu0
    %v1953 = vadd.f32 %v1705, %v1952
    %v1954 = vpop.f32.mrf.mxu0
    %v1955 = vadd.f32 %v1705, %v1954
    %1956 = vmatmul.bf16.gmra.mxu0 %v1805
    %v1957 = vpop.f32.mrf.mxu0
    %v1958 = vadd.f32 %v1705, %v1957
    %v1959 = vpop.f32.mrf.mxu0
    %v1960 = vadd.f32 %v1705, %v1959
    %1961 = vmatmul.bf16.gmra.mxu0 %v1808
    %v1962 = vpop.f32.mrf.mxu0
    %v1963 = vadd.f32 %v1705, %v1962
    %v1964 = vpop.f32.mrf.mxu0
    %v1965 = vadd.f32 %v1705, %v1964
    %1966 = vmatmul.bf16.gmra.mxu0 %v1811
    %v1967 = vpop.f32.mrf.mxu0
    %v1968 = vadd.f32 %v1705, %v1967
    %v1969 = vpop.f32.mrf.mxu0
    %v1970 = vadd.f32 %v1705, %v1969
    %1971 = vmatmul.bf16.gmra.mxu0 %v1814
    %v1972 = vpop.f32.mrf.mxu0
    %v1973 = vadd.f32 %v1705, %v1972
    %v1974 = vpop.f32.mrf.mxu0
    %v1975 = vadd.f32 %v1705, %v1974
    %1976 = vmatmul.bf16.gmra.mxu0 %v1817
    %v1977 = vpop.f32.mrf.mxu0
    %v1978 = vadd.f32 %v1705, %v1977
    %v1979 = vpop.f32.mrf.mxu0
    %v1980 = vadd.f32 %v1705, %v1979
    %1981 = vmatmul.bf16.gmra.mxu0 %v1820
    %v1982 = vpop.f32.mrf.mxu0
    %v1983 = vadd.f32 %v1705, %v1982
    %v1984 = vpop.f32.mrf.mxu0
    %v1985 = vadd.f32 %v1705, %v1984
    %1986 = vmatmul.bf16.gmra.mxu0 %v1823
    %v1987 = vpop.f32.mrf.mxu0
    %v1988 = vadd.f32 %v1705, %v1987
    %v1989 = vpop.f32.mrf.mxu0
    %v1990 = vadd.f32 %v1705, %v1989
    %1991 = vmatmul.bf16.gmra.mxu0 %v1826
    %v1992 = vpop.f32.mrf.mxu0
    %v1993 = vadd.f32 %v1705, %v1992
    %v1994 = vpop.f32.mrf.mxu0
    %v1995 = vadd.f32 %v1705, %v1994
    %1996 = vdwg.mxu0
    %vm1997 = vcmask 261120
    %1998 = vst.msk [vmem:[%s17] sm:$0xff] %vm1997, %v1838
    %1999 = vst.msk [vmem:[%s17 + $0x8] sm:$0xff] %vm1997, %v1840
    %2000 = vst.msk [vmem:[%s17 + $0x10] sm:$0xff] %vm1997, %v1843
    %2001 = vst.msk [vmem:[%s17 + $0x18] sm:$0xff] %vm1997, %v1845
    %2002 = vst.msk [vmem:[%s17 + $0x20] sm:$0xff] %vm1997, %v1848
    %2003 = vst.msk [vmem:[%s17 + $0x28] sm:$0xff] %vm1997, %v1850
    %2004 = vst.msk [vmem:[%s17 + $0x30] sm:$0xff] %vm1997, %v1853
    %2005 = vst.msk [vmem:[%s17 + $0x38] sm:$0xff] %vm1997, %v1855
    %2006 = vst.msk [vmem:[%s17 + $0x40] sm:$0xff] %vm1997, %v1858
    %2007 = vst.msk [vmem:[%s17 + $0x48] sm:$0xff] %vm1997, %v1860
    %2008 = vst.msk [vmem:[%s17 + $0x50] sm:$0xff] %vm1997, %v1863
    %2009 = vst.msk [vmem:[%s17 + $0x58] sm:$0xff] %vm1997, %v1865
    %2010 = vst.msk [vmem:[%s17 + $0x60] sm:$0xff] %vm1997, %v1868
    %2011 = vst.msk [vmem:[%s17 + $0x68] sm:$0xff] %vm1997, %v1870
    %2012 = vst.msk [vmem:[%s17 + $0x70] sm:$0xff] %vm1997, %v1873
    %2013 = vst.msk [vmem:[%s17 + $0x78] sm:$0xff] %vm1997, %v1875
    %2014 = vst.msk [vmem:[%s17 + $0x80] sm:$0xff] %vm1997, %v1878
    %2015 = vst.msk [vmem:[%s17 + $0x88] sm:$0xff] %vm1997, %v1880
    %2016 = vst.msk [vmem:[%s17 + $0x90] sm:$0xff] %vm1997, %v1883
    %2017 = vst.msk [vmem:[%s17 + $0x98] sm:$0xff] %vm1997, %v1885
    %2018 = vst.msk [vmem:[%s17 + $0xa0] sm:$0xff] %vm1997, %v1888
    %2019 = vst.msk [vmem:[%s17 + $0xa8] sm:$0xff] %vm1997, %v1890
    %2020 = vst.msk [vmem:[%s17 + $0xb0] sm:$0xff] %vm1997, %v1893
    %2021 = vst.msk [vmem:[%s17 + $0xb8] sm:$0xff] %vm1997, %v1895
    %2022 = vst.msk [vmem:[%s17 + $0xc0] sm:$0xff] %vm1997, %v1898
    %2023 = vst.msk [vmem:[%s17 + $0xc8] sm:$0xff] %vm1997, %v1900
    %2024 = vst.msk [vmem:[%s17 + $0xd0] sm:$0xff] %vm1997, %v1903
    %2025 = vst.msk [vmem:[%s17 + $0xd8] sm:$0xff] %vm1997, %v1905
    %2026 = vst.msk [vmem:[%s17 + $0xe0] sm:$0xff] %vm1997, %v1908
    %2027 = vst.msk [vmem:[%s17 + $0xe8] sm:$0xff] %vm1997, %v1910
    %2028 = vst.msk [vmem:[%s17 + $0xf0] sm:$0xff] %vm1997, %v1913
    %2029 = vst.msk [vmem:[%s17 + $0xf8] sm:$0xff] %vm1997, %v1915
    %2030 = vst.msk [vmem:[%s17 + $0x100] sm:$0xff] %vm1997, %v1918
    %2031 = vst.msk [vmem:[%s17 + $0x108] sm:$0xff] %vm1997, %v1920
    %2032 = vst.msk [vmem:[%s17 + $0x110] sm:$0xff] %vm1997, %v1923
    %2033 = vst.msk [vmem:[%s17 + $0x118] sm:$0xff] %vm1997, %v1925
    %2034 = vst.msk [vmem:[%s17 + $0x120] sm:$0xff] %vm1997, %v1928
    %2035 = vst.msk [vmem:[%s17 + $0x128] sm:$0xff] %vm1997, %v1930
    %2036 = vst.msk [vmem:[%s17 + $0x130] sm:$0xff] %vm1997, %v1933
    %2037 = vst.msk [vmem:[%s17 + $0x138] sm:$0xff] %vm1997, %v1935
    %2038 = vst.msk [vmem:[%s17 + $0x140] sm:$0xff] %vm1997, %v1938
    %2039 = vst.msk [vmem:[%s17 + $0x148] sm:$0xff] %vm1997, %v1940
    %2040 = vst.msk [vmem:[%s17 + $0x150] sm:$0xff] %vm1997, %v1943
    %2041 = vst.msk [vmem:[%s17 + $0x158] sm:$0xff] %vm1997, %v1945
    %2042 = vst.msk [vmem:[%s17 + $0x160] sm:$0xff] %vm1997, %v1948
    %2043 = vst.msk [vmem:[%s17 + $0x168] sm:$0xff] %vm1997, %v1950
    %2044 = vst.msk [vmem:[%s17 + $0x170] sm:$0xff] %vm1997, %v1953
    %2045 = vst.msk [vmem:[%s17 + $0x178] sm:$0xff] %vm1997, %v1955
    %2046 = vst.msk [vmem:[%s17 + $0x180] sm:$0xff] %vm1997, %v1958
    %2047 = vst.msk [vmem:[%s17 + $0x188] sm:$0xff] %vm1997, %v1960
    %2048 = vst.msk [vmem:[%s17 + $0x190] sm:$0xff] %vm1997, %v1963
    %2049 = vst.msk [vmem:[%s17 + $0x198] sm:$0xff] %vm1997, %v1965
    %2050 = vst.msk [vmem:[%s17 + $0x1a0] sm:$0xff] %vm1997, %v1968
    %2051 = vst.msk [vmem:[%s17 + $0x1a8] sm:$0xff] %vm1997, %v1970
    %2052 = vst.msk [vmem:[%s17 + $0x1b0] sm:$0xff] %vm1997, %v1973
    %2053 = vst.msk [vmem:[%s17 + $0x1b8] sm:$0xff] %vm1997, %v1975
    %2054 = vst.msk [vmem:[%s17 + $0x1c0] sm:$0xff] %vm1997, %v1978
    %2055 = vst.msk [vmem:[%s17 + $0x1c8] sm:$0xff] %vm1997, %v1980
    %2056 = vst.msk [vmem:[%s17 + $0x1d0] sm:$0xff] %vm1997, %v1983
    %2057 = vst.msk [vmem:[%s17 + $0x1d8] sm:$0xff] %vm1997, %v1985
    %2058 = vst.msk [vmem:[%s17 + $0x1e0] sm:$0xff] %vm1997, %v1988
    %2059 = vst.msk [vmem:[%s17 + $0x1e8] sm:$0xff] %vm1997, %v1990
    %2060 = vst.msk [vmem:[%s17 + $0x1f0] sm:$0xff] %vm1997, %v1993
    %2061 = vst.msk [vmem:[%s17 + $0x1f8] sm:$0xff] %vm1997, %v1995
    %v2062 = vmul.f32 %v1838, 0.5
    %v2063 = vmul.f32 %v1840, 0.5
    %v2064 = vmul.f32 %v1843, 0.5
    %v2065 = vmul.f32 %v1845, 0.5
    %v2066 = vmul.f32 %v1848, 0.5
    %v2067 = vmul.f32 %v1850, 0.5
    %v2068 = vmul.f32 %v1853, 0.5
    %v2069 = vmul.f32 %v1855, 0.5
    %v2070 = vmul.f32 %v1858, 0.5
    %v2071 = vmul.f32 %v1860, 0.5
    %v2072 = vmul.f32 %v1863, 0.5
    %v2073 = vmul.f32 %v1865, 0.5
    %v2074 = vmul.f32 %v1868, 0.5
    %v2075 = vmul.f32 %v1870, 0.5
    %v2076 = vmul.f32 %v1873, 0.5
    %v2077 = vmul.f32 %v1875, 0.5
    %v2078 = vmul.f32 %v1878, 0.5
    %v2079 = vmul.f32 %v1880, 0.5
    %v2080 = vmul.f32 %v1883, 0.5
    %v2081 = vmul.f32 %v1885, 0.5
    %v2082 = vmul.f32 %v1888, 0.5
    %v2083 = vmul.f32 %v1890, 0.5
    %v2084 = vmul.f32 %v1893, 0.5
    %v2085 = vmul.f32 %v1895, 0.5
    %v2086 = vmul.f32 %v1898, 0.5
    %v2087 = vmul.f32 %v1900, 0.5
    %v2088 = vmul.f32 %v1903, 0.5
    %v2089 = vmul.f32 %v1905, 0.5
    %v2090 = vmul.f32 %v1908, 0.5
    %v2091 = vmul.f32 %v1910, 0.5
    %v2092 = vmul.f32 %v1913, 0.5
    %v2093 = vmul.f32 %v1915, 0.5
    %v2094 = vmul.f32 %v1918, 0.5
    %v2095 = vmul.f32 %v1920, 0.5
    %v2096 = vmul.f32 %v1923, 0.5
    %v2097 = vmul.f32 %v1925, 0.5
    %v2098 = vmul.f32 %v1928, 0.5
    %v2099 = vmul.f32 %v1930, 0.5
    %v2100 = vmul.f32 %v1933, 0.5
    %v2101 = vmul.f32 %v1935, 0.5
    %v2102 = vmul.f32 %v1938, 0.5
    %v2103 = vmul.f32 %v1940, 0.5
    %v2104 = vmul.f32 %v1943, 0.5
    %v2105 = vmul.f32 %v1945, 0.5
    %v2106 = vmul.f32 %v1948, 0.5
    %v2107 = vmul.f32 %v1950, 0.5
    %v2108 = vmul.f32 %v1953, 0.5
    %v2109 = vmul.f32 %v1955, 0.5
    %v2110 = vmul.f32 %v1958, 0.5
    %v2111 = vmul.f32 %v1960, 0.5
    %v2112 = vmul.f32 %v1963, 0.5
    %v2113 = vmul.f32 %v1965, 0.5
    %v2114 = vmul.f32 %v1968, 0.5
    %v2115 = vmul.f32 %v1970, 0.5
    %v2116 = vmul.f32 %v1973, 0.5
    %v2117 = vmul.f32 %v1975, 0.5
    %v2118 = vmul.f32 %v1978, 0.5
    %v2119 = vmul.f32 %v1980, 0.5
    %v2120 = vmul.f32 %v1983, 0.5
    %v2121 = vmul.f32 %v1985, 0.5
    %v2122 = vmul.f32 %v1988, 0.5
    %v2123 = vmul.f32 %v1990, 0.5
    %v2124 = vmul.f32 %v1993, 0.5
    %v2125 = vmul.f32 %v1995, 0.5
    %v2126 = vmul.f32 %v2062, 1.442695
    %v2127 = vpow.pop %v2126
    %v2128 = vmul.f32 %v2063, 1.442695
    %v2129 = vpow.pop %v2128
    %v2130 = vmul.f32 %v2064, 1.442695
    %v2131 = vpow.pop %v2130
    %v2132 = vmul.f32 %v2065, 1.442695
    %v2133 = vpow.pop %v2132
    %v2134 = vmul.f32 %v2066, 1.442695
    %v2135 = vpow.pop %v2134
    %v2136 = vmul.f32 %v2067, 1.442695
    %v2137 = vpow.pop %v2136
    %v2138 = vmul.f32 %v2068, 1.442695
    %v2139 = vpow.pop %v2138
    %v2140 = vmul.f32 %v2069, 1.442695
    %v2141 = vpow.pop %v2140
    %v2142 = vmul.f32 %v2070, 1.442695
    %v2143 = vpow.pop %v2142
    %v2144 = vmul.f32 %v2071, 1.442695
    %v2145 = vpow.pop %v2144
    %v2146 = vmul.f32 %v2072, 1.442695
    %v2147 = vpow.pop %v2146
    %v2148 = vmul.f32 %v2073, 1.442695
    %v2149 = vpow.pop %v2148
    %v2150 = vmul.f32 %v2074, 1.442695
    %v2151 = vpow.pop %v2150
    %v2152 = vmul.f32 %v2075, 1.442695
    %v2153 = vpow.pop %v2152
    %v2154 = vmul.f32 %v2076, 1.442695
    %v2155 = vpow.pop %v2154
    %v2156 = vmul.f32 %v2077, 1.442695
    %v2157 = vpow.pop %v2156
    %v2158 = vmul.f32 %v2078, 1.442695
    %v2159 = vpow.pop %v2158
    %v2160 = vmul.f32 %v2079, 1.442695
    %v2161 = vpow.pop %v2160
    %v2162 = vmul.f32 %v2080, 1.442695
    %v2163 = vpow.pop %v2162
    %v2164 = vmul.f32 %v2081, 1.442695
    %v2165 = vpow.pop %v2164
    %v2166 = vmul.f32 %v2082, 1.442695
    %v2167 = vpow.pop %v2166
    %v2168 = vmul.f32 %v2083, 1.442695
    %v2169 = vpow.pop %v2168
    %v2170 = vmul.f32 %v2084, 1.442695
    %v2171 = vpow.pop %v2170
    %v2172 = vmul.f32 %v2085, 1.442695
    %v2173 = vpow.pop %v2172
    %v2174 = vmul.f32 %v2086, 1.442695
    %v2175 = vpow.pop %v2174
    %v2176 = vmul.f32 %v2087, 1.442695
    %v2177 = vpow.pop %v2176
    %v2178 = vmul.f32 %v2088, 1.442695
    %v2179 = vpow.pop %v2178
    %v2180 = vmul.f32 %v2089, 1.442695
    %v2181 = vpow.pop %v2180
    %v2182 = vmul.f32 %v2090, 1.442695
    %v2183 = vpow.pop %v2182
    %v2184 = vmul.f32 %v2091, 1.442695
    %v2185 = vpow.pop %v2184
    %v2186 = vmul.f32 %v2092, 1.442695
    %v2187 = vpow.pop %v2186
    %v2188 = vmul.f32 %v2093, 1.442695
    %v2189 = vpow.pop %v2188
    %v2190 = vmul.f32 %v2094, 1.442695
    %v2191 = vpow.pop %v2190
    %v2192 = vmul.f32 %v2095, 1.442695
    %v2193 = vpow.pop %v2192
    %v2194 = vmul.f32 %v2096, 1.442695
    %v2195 = vpow.pop %v2194
    %v2196 = vmul.f32 %v2097, 1.442695
    %v2197 = vpow.pop %v2196
    %v2198 = vmul.f32 %v2098, 1.442695
    %v2199 = vpow.pop %v2198
    %v2200 = vmul.f32 %v2099, 1.442695
    %v2201 = vpow.pop %v2200
    %v2202 = vmul.f32 %v2100, 1.442695
    %v2203 = vpow.pop %v2202
    %v2204 = vmul.f32 %v2101, 1.442695
    %v2205 = vpow.pop %v2204
    %v2206 = vmul.f32 %v2102, 1.442695
    %v2207 = vpow.pop %v2206
    %v2208 = vmul.f32 %v2103, 1.442695
    %v2209 = vpow.pop %v2208
    %v2210 = vmul.f32 %v2104, 1.442695
    %v2211 = vpow.pop %v2210
    %v2212 = vmul.f32 %v2105, 1.442695
    %v2213 = vpow.pop %v2212
    %v2214 = vmul.f32 %v2106, 1.442695
    %v2215 = vpow.pop %v2214
    %v2216 = vmul.f32 %v2107, 1.442695
    %v2217 = vpow.pop %v2216
    %v2218 = vmul.f32 %v2108, 1.442695
    %v2219 = vpow.pop %v2218
    %v2220 = vmul.f32 %v2109, 1.442695
    %v2221 = vpow.pop %v2220
    %v2222 = vmul.f32 %v2110, 1.442695
    %v2223 = vpow.pop %v2222
    %v2224 = vmul.f32 %v2111, 1.442695
    %v2225 = vpow.pop %v2224
    %v2226 = vmul.f32 %v2112, 1.442695
    %v2227 = vpow.pop %v2226
    %v2228 = vmul.f32 %v2113, 1.442695
    %v2229 = vpow.pop %v2228
    %v2230 = vmul.f32 %v2114, 1.442695
    %v2231 = vpow.pop %v2230
    %v2232 = vmul.f32 %v2115, 1.442695
    %v2233 = vpow.pop %v2232
    %v2234 = vmul.f32 %v2116, 1.442695
    %v2235 = vpow.pop %v2234
    %v2236 = vmul.f32 %v2117, 1.442695
    %v2237 = vpow.pop %v2236
    %v2238 = vmul.f32 %v2118, 1.442695
    %v2239 = vpow.pop %v2238
    %v2240 = vmul.f32 %v2119, 1.442695
    %v2241 = vpow.pop %v2240
    %v2242 = vmul.f32 %v2120, 1.442695
    %v2243 = vpow.pop %v2242
    %v2244 = vmul.f32 %v2121, 1.442695
    %v2245 = vpow.pop %v2244
    %v2246 = vmul.f32 %v2122, 1.442695
    %v2247 = vpow.pop %v2246
    %v2248 = vmul.f32 %v2123, 1.442695
    %v2249 = vpow.pop %v2248
    %v2250 = vmul.f32 %v2124, 1.442695
    %v2251 = vpow.pop %v2250
    %v2252 = vmul.f32 %v2125, 1.442695
    %v2253 = vpow.pop %v2252
    %2254 = vxpose.xlu0.b32.start [1/16] %v1838, 128
    %2255 = vxpose.xlu0.b32.cont [2/16] %v1840, 128
    %2256 = vxpose.xlu0.b32.cont [3/16] %v1843, 128
    %2257 = vxpose.xlu0.b32.cont [4/16] %v1845, 128
    %2258 = vxpose.xlu0.b32.cont [5/16] %v1848, 128
    %2259 = vxpose.xlu0.b32.cont [6/16] %v1850, 128
    %2260 = vxpose.xlu0.b32.cont [7/16] %v1853, 128
    %2261 = vxpose.xlu0.b32.cont [8/16] %v1855, 128
    %2262 = vxpose.xlu0.b32.cont [9/16] 0.0, 128
    %2263 = vxpose.xlu0.b32.cont [10/16] 0.0, 128
    %2264 = vxpose.xlu0.b32.cont [11/16] 0.0, 128
    %2265 = vxpose.xlu0.b32.cont [12/16] 0.0, 128
    %2266 = vxpose.xlu0.b32.cont [13/16] 0.0, 128
    %2267 = vxpose.xlu0.b32.cont [14/16] 0.0, 128
    %2268 = vxpose.xlu0.b32.cont [15/16] 0.0, 128
    %2269 = vxpose.xlu0.b32.end [16/16] 0.0, 128
    %v2270 = vpop.trf.xlu0
    %v2271 = vpop.trf.xlu0
    %v2272 = vpop.trf.xlu0
    %v2273 = vpop.trf.xlu0
    %v2274 = vpop.trf.xlu0
    %v2275 = vpop.trf.xlu0
    %v2276 = vpop.trf.xlu0
    %v2277 = vpop.trf.xlu0
    %v2278 = vpop.trf.xlu0
    %v2279 = vpop.trf.xlu0
    %v2280 = vpop.trf.xlu0
    %v2281 = vpop.trf.xlu0
    %v2282 = vpop.trf.xlu0
    %v2283 = vpop.trf.xlu0
    %v2284 = vpop.trf.xlu0
    %v2285 = vpop.trf.xlu0
    %2286 = vxpose.xlu0.b32.start [1/16] %v1858, 128
    %2287 = vxpose.xlu0.b32.cont [2/16] %v1860, 128
    %2288 = vxpose.xlu0.b32.cont [3/16] %v1863, 128
    %2289 = vxpose.xlu0.b32.cont [4/16] %v1865, 128
    %2290 = vxpose.xlu0.b32.cont [5/16] %v1868, 128
    %2291 = vxpose.xlu0.b32.cont [6/16] %v1870, 128
    %2292 = vxpose.xlu0.b32.cont [7/16] %v1873, 128
    %2293 = vxpose.xlu0.b32.cont [8/16] %v1875, 128
    %2294 = vxpose.xlu0.b32.cont [9/16] 0.0, 128
    %2295 = vxpose.xlu0.b32.cont [10/16] 0.0, 128
    %2296 = vxpose.xlu0.b32.cont [11/16] 0.0, 128
    %2297 = vxpose.xlu0.b32.cont [12/16] 0.0, 128
    %2298 = vxpose.xlu0.b32.cont [13/16] 0.0, 128
    %2299 = vxpose.xlu0.b32.cont [14/16] 0.0, 128
    %2300 = vxpose.xlu0.b32.cont [15/16] 0.0, 128
    %2301 = vxpose.xlu0.b32.end [16/16] 0.0, 128
    %v2302 = vpop.trf.xlu0
    %v2303 = vpop.trf.xlu0
    %v2304 = vpop.trf.xlu0
    %v2305 = vpop.trf.xlu0
    %v2306 = vpop.trf.xlu0
    %v2307 = vpop.trf.xlu0
    %v2308 = vpop.trf.xlu0
    %v2309 = vpop.trf.xlu0
    %v2310 = vpop.trf.xlu0
    %v2311 = vpop.trf.xlu0
    %v2312 = vpop.trf.xlu0
    %v2313 = vpop.trf.xlu0
    %v2314 = vpop.trf.xlu0
    %v2315 = vpop.trf.xlu0
    %v2316 = vpop.trf.xlu0
    %v2317 = vpop.trf.xlu0
    %2318 = vxpose.xlu0.b32.start [1/16] %v1878, 128
    %2319 = vxpose.xlu0.b32.cont [2/16] %v1880, 128
    %2320 = vxpose.xlu0.b32.cont [3/16] %v1883, 128
    %2321 = vxpose.xlu0.b32.cont [4/16] %v1885, 128
    %2322 = vxpose.xlu0.b32.cont [5/16] %v1888, 128
    %2323 = vxpose.xlu0.b32.cont [6/16] %v1890, 128
    %2324 = vxpose.xlu0.b32.cont [7/16] %v1893, 128
    %2325 = vxpose.xlu0.b32.cont [8/16] %v1895, 128
    %2326 = vxpose.xlu0.b32.cont [9/16] 0.0, 128
    %2327 = vxpose.xlu0.b32.cont [10/16] 0.0, 128
    %2328 = vxpose.xlu0.b32.cont [11/16] 0.0, 128
    %2329 = vxpose.xlu0.b32.cont [12/16] 0.0, 128
    %2330 = vxpose.xlu0.b32.cont [13/16] 0.0, 128
    %2331 = vxpose.xlu0.b32.cont [14/16] 0.0, 128
    %2332 = vxpose.xlu0.b32.cont [15/16] 0.0, 128
    %2333 = vxpose.xlu0.b32.end [16/16] 0.0, 128
    %v2334 = vpop.trf.xlu0
    %v2335 = vpop.trf.xlu0
    %v2336 = vpop.trf.xlu0
    %v2337 = vpop.trf.xlu0
    %v2338 = vpop.trf.xlu0
    %v2339 = vpop.trf.xlu0
    %v2340 = vpop.trf.xlu0
    %v2341 = vpop.trf.xlu0
    %v2342 = vpop.trf.xlu0
    %v2343 = vpop.trf.xlu0
    %v2344 = vpop.trf.xlu0
    %v2345 = vpop.trf.xlu0
    %v2346 = vpop.trf.xlu0
    %v2347 = vpop.trf.xlu0
    %v2348 = vpop.trf.xlu0
    %v2349 = vpop.trf.xlu0
    %2350 = vxpose.xlu0.b32.start [1/16] %v1898, 128
    %2351 = vxpose.xlu0.b32.cont [2/16] %v1900, 128
    %2352 = vxpose.xlu0.b32.cont [3/16] %v1903, 128
    %2353 = vxpose.xlu0.b32.cont [4/16] %v1905, 128
    %2354 = vxpose.xlu0.b32.cont [5/16] %v1908, 128
    %2355 = vxpose.xlu0.b32.cont [6/16] %v1910, 128
    %2356 = vxpose.xlu0.b32.cont [7/16] %v1913, 128
    %2357 = vxpose.xlu0.b32.cont [8/16] %v1915, 128
    %2358 = vxpose.xlu0.b32.cont [9/16] 0.0, 128
    %2359 = vxpose.xlu0.b32.cont [10/16] 0.0, 128
    %2360 = vxpose.xlu0.b32.cont [11/16] 0.0, 128
    %2361 = vxpose.xlu0.b32.cont [12/16] 0.0, 128
    %2362 = vxpose.xlu0.b32.cont [13/16] 0.0, 128
    %2363 = vxpose.xlu0.b32.cont [14/16] 0.0, 128
    %2364 = vxpose.xlu0.b32.cont [15/16] 0.0, 128
    %2365 = vxpose.xlu0.b32.end [16/16] 0.0, 128
    %v2366 = vpop.trf.xlu0
    %v2367 = vpop.trf.xlu0
    %v2368 = vpop.trf.xlu0
    %v2369 = vpop.trf.xlu0
    %v2370 = vpop.trf.xlu0
    %v2371 = vpop.trf.xlu0
    %v2372 = vpop.trf.xlu0
    %v2373 = vpop.trf.xlu0
    %v2374 = vpop.trf.xlu0
    %v2375 = vpop.trf.xlu0
    %v2376 = vpop.trf.xlu0
    %v2377 = vpop.trf.xlu0
    %v2378 = vpop.trf.xlu0
    %v2379 = vpop.trf.xlu0
    %v2380 = vpop.trf.xlu0
    %v2381 = vpop.trf.xlu0
    %2382 = vxpose.xlu0.b32.start [1/16] %v1918, 128
    %2383 = vxpose.xlu0.b32.cont [2/16] %v1920, 128
    %2384 = vxpose.xlu0.b32.cont [3/16] %v1923, 128
    %2385 = vxpose.xlu0.b32.cont [4/16] %v1925, 128
    %2386 = vxpose.xlu0.b32.cont [5/16] %v1928, 128
    %2387 = vxpose.xlu0.b32.cont [6/16] %v1930, 128
    %2388 = vxpose.xlu0.b32.cont [7/16] %v1933, 128
    %2389 = vxpose.xlu0.b32.cont [8/16] %v1935, 128
    %2390 = vxpose.xlu0.b32.cont [9/16] 0.0, 128
    %2391 = vxpose.xlu0.b32.cont [10/16] 0.0, 128
    %2392 = vxpose.xlu0.b32.cont [11/16] 0.0, 128
    %2393 = vxpose.xlu0.b32.cont [12/16] 0.0, 128
    %2394 = vxpose.xlu0.b32.cont [13/16] 0.0, 128
    %2395 = vxpose.xlu0.b32.cont [14/16] 0.0, 128
    %2396 = vxpose.xlu0.b32.cont [15/16] 0.0, 128
    %2397 = vxpose.xlu0.b32.end [16/16] 0.0, 128
    %v2398 = vpop.trf.xlu0
    %v2399 = vpop.trf.xlu0
    %v2400 = vpop.trf.xlu0
    %v2401 = vpop.trf.xlu0
    %v2402 = vpop.trf.xlu0
    %v2403 = vpop.trf.xlu0
    %v2404 = vpop.trf.xlu0
    %v2405 = vpop.trf.xlu0
    %v2406 = vpop.trf.xlu0
    %v2407 = vpop.trf.xlu0
    %v2408 = vpop.trf.xlu0
    %v2409 = vpop.trf.xlu0
    %v2410 = vpop.trf.xlu0
    %v2411 = vpop.trf.xlu0
    %v2412 = vpop.trf.xlu0
    %v2413 = vpop.trf.xlu0
    %2414 = vxpose.xlu0.b32.start [1/16] %v1938, 128
    %2415 = vxpose.xlu0.b32.cont [2/16] %v1940, 128
    %2416 = vxpose.xlu0.b32.cont [3/16] %v1943, 128
    %2417 = vxpose.xlu0.b32.cont [4/16] %v1945, 128
    %2418 = vxpose.xlu0.b32.cont [5/16] %v1948, 128
    %2419 = vxpose.xlu0.b32.cont [6/16] %v1950, 128
    %2420 = vxpose.xlu0.b32.cont [7/16] %v1953, 128
    %2421 = vxpose.xlu0.b32.cont [8/16] %v1955, 128
    %2422 = vxpose.xlu0.b32.cont [9/16] 0.0, 128
    %2423 = vxpose.xlu0.b32.cont [10/16] 0.0, 128
    %2424 = vxpose.xlu0.b32.cont [11/16] 0.0, 128
    %2425 = vxpose.xlu0.b32.cont [12/16] 0.0, 128
    %2426 = vxpose.xlu0.b32.cont [13/16] 0.0, 128
    %2427 = vxpose.xlu0.b32.cont [14/16] 0.0, 128
    %2428 = vxpose.xlu0.b32.cont [15/16] 0.0, 128
    %2429 = vxpose.xlu0.b32.end [16/16] 0.0, 128
    %v2430 = vpop.trf.xlu0
    %v2431 = vpop.trf.xlu0
    %v2432 = vpop.trf.xlu0
    %v2433 = vpop.trf.xlu0
    %v2434 = vpop.trf.xlu0
    %v2435 = vpop.trf.xlu0
    %v2436 = vpop.trf.xlu0
    %v2437 = vpop.trf.xlu0
    %v2438 = vpop.trf.xlu0
    %v2439 = vpop.trf.xlu0
    %v2440 = vpop.trf.xlu0
    %v2441 = vpop.trf.xlu0
    %v2442 = vpop.trf.xlu0
    %v2443 = vpop.trf.xlu0
    %v2444 = vpop.trf.xlu0
    %v2445 = vpop.trf.xlu0
    %2446 = vxpose.xlu0.b32.start [1/16] %v1958, 128
    %2447 = vxpose.xlu0.b32.cont [2/16] %v1960, 128
    %2448 = vxpose.xlu0.b32.cont [3/16] %v1963, 128
    %2449 = vxpose.xlu0.b32.cont [4/16] %v1965, 128
    %2450 = vxpose.xlu0.b32.cont [5/16] %v1968, 128
    %2451 = vxpose.xlu0.b32.cont [6/16] %v1970, 128
    %2452 = vxpose.xlu0.b32.cont [7/16] %v1973, 128
    %2453 = vxpose.xlu0.b32.cont [8/16] %v1975, 128
    %2454 = vxpose.xlu0.b32.cont [9/16] 0.0, 128
    %2455 = vxpose.xlu0.b32.cont [10/16] 0.0, 128
    %2456 = vxpose.xlu0.b32.cont [11/16] 0.0, 128
    %2457 = vxpose.xlu0.b32.cont [12/16] 0.0, 128
    %2458 = vxpose.xlu0.b32.cont [13/16] 0.0, 128
    %2459 = vxpose.xlu0.b32.cont [14/16] 0.0, 128
    %2460 = vxpose.xlu0.b32.cont [15/16] 0.0, 128
    %2461 = vxpose.xlu0.b32.end [16/16] 0.0, 128
    %v2462 = vpop.trf.xlu0
    %v2463 = vpop.trf.xlu0
    %v2464 = vpop.trf.xlu0
    %v2465 = vpop.trf.xlu0
    %v2466 = vpop.trf.xlu0
    %v2467 = vpop.trf.xlu0
    %v2468 = vpop.trf.xlu0
    %v2469 = vpop.trf.xlu0
    %v2470 = vpop.trf.xlu0
    %v2471 = vpop.trf.xlu0
    %v2472 = vpop.trf.xlu0
    %v2473 = vpop.trf.xlu0
    %v2474 = vpop.trf.xlu0
    %v2475 = vpop.trf.xlu0
    %v2476 = vpop.trf.xlu0
    %v2477 = vpop.trf.xlu0
    %2478 = vxpose.xlu0.b32.start [1/16] %v1978, 128
    %2479 = vxpose.xlu0.b32.cont [2/16] %v1980, 128
    %2480 = vxpose.xlu0.b32.cont [3/16] %v1983, 128
    %2481 = vxpose.xlu0.b32.cont [4/16] %v1985, 128
    %2482 = vxpose.xlu0.b32.cont [5/16] %v1988, 128
    %2483 = vxpose.xlu0.b32.cont [6/16] %v1990, 128
    %2484 = vxpose.xlu0.b32.cont [7/16] %v1993, 128
    %2485 = vxpose.xlu0.b32.cont [8/16] %v1995, 128
    %2486 = vxpose.xlu0.b32.cont [9/16] 0.0, 128
    %2487 = vxpose.xlu0.b32.cont [10/16] 0.0, 128
    %2488 = vxpose.xlu0.b32.cont [11/16] 0.0, 128
    %2489 = vxpose.xlu0.b32.cont [12/16] 0.0, 128
    %2490 = vxpose.xlu0.b32.cont [13/16] 0.0, 128
    %2491 = vxpose.xlu0.b32.cont [14/16] 0.0, 128
    %2492 = vxpose.xlu0.b32.cont [15/16] 0.0, 128
    %2493 = vxpose.xlu0.b32.end [16/16] 0.0, 128
    %v2494 = vpop.trf.xlu0
    %v2495 = vpop.trf.xlu0
    %v2496 = vpop.trf.xlu0
    %v2497 = vpop.trf.xlu0
    %v2498 = vpop.trf.xlu0
    %v2499 = vpop.trf.xlu0
    %v2500 = vpop.trf.xlu0
    %v2501 = vpop.trf.xlu0
    %v2502 = vpop.trf.xlu0
    %v2503 = vpop.trf.xlu0
    %v2504 = vpop.trf.xlu0
    %v2505 = vpop.trf.xlu0
    %v2506 = vpop.trf.xlu0
    %v2507 = vpop.trf.xlu0
    %v2508 = vpop.trf.xlu0
    %v2509 = vpop.trf.xlu0
    %2574 = vrot.lane.b32.xlu0 %v2127, 112
    %v2575 = vpop.permute.xlu0 %2574
    %2576 = vrot.lane.b32.xlu0 %v2129, 112
    %v2577 = vpop.permute.xlu0 %2576
    %2578 = vrot.lane.b32.xlu0 %v2131, 112
    %v2579 = vpop.permute.xlu0 %2578
    %2580 = vrot.lane.b32.xlu0 %v2133, 112
    %v2581 = vpop.permute.xlu0 %2580
    %2582 = vrot.lane.b32.xlu0 %v2135, 112
    %v2583 = vpop.permute.xlu0 %2582
    %2584 = vrot.lane.b32.xlu0 %v2137, 112
    %v2585 = vpop.permute.xlu0 %2584
    %2586 = vrot.lane.b32.xlu0 %v2139, 112
    %v2587 = vpop.permute.xlu0 %2586
    %2588 = vrot.lane.b32.xlu0 %v2141, 112
    %v2589 = vpop.permute.xlu0 %2588
    %2590 = vrot.lane.b32.xlu0 %v2143, 112
    %v2591 = vpop.permute.xlu0 %2590
    %2592 = vrot.lane.b32.xlu0 %v2145, 112
    %v2593 = vpop.permute.xlu0 %2592
    %2594 = vrot.lane.b32.xlu0 %v2147, 112
    %v2595 = vpop.permute.xlu0 %2594
    %2596 = vrot.lane.b32.xlu0 %v2149, 112
    %v2597 = vpop.permute.xlu0 %2596
    %2598 = vrot.lane.b32.xlu0 %v2151, 112
    %v2599 = vpop.permute.xlu0 %2598
    %2600 = vrot.lane.b32.xlu0 %v2153, 112
    %v2601 = vpop.permute.xlu0 %2600
    %2602 = vrot.lane.b32.xlu0 %v2155, 112
    %v2603 = vpop.permute.xlu0 %2602
    %2604 = vrot.lane.b32.xlu0 %v2157, 112
    %v2605 = vpop.permute.xlu0 %2604
    %2606 = vrot.lane.b32.xlu0 %v2159, 112
    %v2607 = vpop.permute.xlu0 %2606
    %2608 = vrot.lane.b32.xlu0 %v2161, 112
    %v2609 = vpop.permute.xlu0 %2608
    %2610 = vrot.lane.b32.xlu0 %v2163, 112
    %v2611 = vpop.permute.xlu0 %2610
    %2612 = vrot.lane.b32.xlu0 %v2165, 112
    %v2613 = vpop.permute.xlu0 %2612
    %2614 = vrot.lane.b32.xlu0 %v2167, 112
    %v2615 = vpop.permute.xlu0 %2614
    %2616 = vrot.lane.b32.xlu0 %v2169, 112
    %v2617 = vpop.permute.xlu0 %2616
    %2618 = vrot.lane.b32.xlu0 %v2171, 112
    %v2619 = vpop.permute.xlu0 %2618
    %2620 = vrot.lane.b32.xlu0 %v2173, 112
    %v2621 = vpop.permute.xlu0 %2620
    %2622 = vrot.lane.b32.xlu0 %v2175, 112
    %v2623 = vpop.permute.xlu0 %2622
    %2624 = vrot.lane.b32.xlu0 %v2177, 112
    %v2625 = vpop.permute.xlu0 %2624
    %2626 = vrot.lane.b32.xlu0 %v2179, 112
    %v2627 = vpop.permute.xlu0 %2626
    %2628 = vrot.lane.b32.xlu0 %v2181, 112
    %v2629 = vpop.permute.xlu0 %2628
    %2630 = vrot.lane.b32.xlu0 %v2183, 112
    %v2631 = vpop.permute.xlu0 %2630
    %2632 = vrot.lane.b32.xlu0 %v2185, 112
    %v2633 = vpop.permute.xlu0 %2632
    %2634 = vrot.lane.b32.xlu0 %v2187, 112
    %v2635 = vpop.permute.xlu0 %2634
    %2636 = vrot.lane.b32.xlu0 %v2189, 112
    %v2637 = vpop.permute.xlu0 %2636
    %2638 = vrot.lane.b32.xlu0 %v2191, 112
    %v2639 = vpop.permute.xlu0 %2638
    %2640 = vrot.lane.b32.xlu0 %v2193, 112
    %v2641 = vpop.permute.xlu0 %2640
    %2642 = vrot.lane.b32.xlu0 %v2195, 112
    %v2643 = vpop.permute.xlu0 %2642
    %2644 = vrot.lane.b32.xlu0 %v2197, 112
    %v2645 = vpop.permute.xlu0 %2644
    %2646 = vrot.lane.b32.xlu0 %v2199, 112
    %v2647 = vpop.permute.xlu0 %2646
    %2648 = vrot.lane.b32.xlu0 %v2201, 112
    %v2649 = vpop.permute.xlu0 %2648
    %2650 = vrot.lane.b32.xlu0 %v2203, 112
    %v2651 = vpop.permute.xlu0 %2650
    %2652 = vrot.lane.b32.xlu0 %v2205, 112
    %v2653 = vpop.permute.xlu0 %2652
    %2654 = vrot.lane.b32.xlu0 %v2207, 112
    %v2655 = vpop.permute.xlu0 %2654
    %2656 = vrot.lane.b32.xlu0 %v2209, 112
    %v2657 = vpop.permute.xlu0 %2656
    %2658 = vrot.lane.b32.xlu0 %v2211, 112
    %v2659 = vpop.permute.xlu0 %2658
    %2660 = vrot.lane.b32.xlu0 %v2213, 112
    %v2661 = vpop.permute.xlu0 %2660
    %2662 = vrot.lane.b32.xlu0 %v2215, 112
    %v2663 = vpop.permute.xlu0 %2662
    %2664 = vrot.lane.b32.xlu0 %v2217, 112
    %v2665 = vpop.permute.xlu0 %2664
    %2666 = vrot.lane.b32.xlu0 %v2219, 112
    %v2667 = vpop.permute.xlu0 %2666
    %2668 = vrot.lane.b32.xlu0 %v2221, 112
    %v2669 = vpop.permute.xlu0 %2668
    %2670 = vrot.lane.b32.xlu0 %v2223, 112
    %v2671 = vpop.permute.xlu0 %2670
    %2672 = vrot.lane.b32.xlu0 %v2225, 112
    %v2673 = vpop.permute.xlu0 %2672
    %2674 = vrot.lane.b32.xlu0 %v2227, 112
    %v2675 = vpop.permute.xlu0 %2674
    %2676 = vrot.lane.b32.xlu0 %v2229, 112
    %v2677 = vpop.permute.xlu0 %2676
    %2678 = vrot.lane.b32.xlu0 %v2231, 112
    %v2679 = vpop.permute.xlu0 %2678
    %2680 = vrot.lane.b32.xlu0 %v2233, 112
    %v2681 = vpop.permute.xlu0 %2680
    %2682 = vrot.lane.b32.xlu0 %v2235, 112
    %v2683 = vpop.permute.xlu0 %2682
    %2684 = vrot.lane.b32.xlu0 %v2237, 112
    %v2685 = vpop.permute.xlu0 %2684
    %2686 = vrot.lane.b32.xlu0 %v2239, 112
    %v2687 = vpop.permute.xlu0 %2686
    %2688 = vrot.lane.b32.xlu0 %v2241, 112
    %v2689 = vpop.permute.xlu0 %2688
    %2690 = vrot.lane.b32.xlu0 %v2243, 112
    %v2691 = vpop.permute.xlu0 %2690
    %2692 = vrot.lane.b32.xlu0 %v2245, 112
    %v2693 = vpop.permute.xlu0 %2692
    %2694 = vrot.lane.b32.xlu0 %v2247, 112
    %v2695 = vpop.permute.xlu0 %2694
    %2696 = vrot.lane.b32.xlu0 %v2249, 112
    %v2697 = vpop.permute.xlu0 %2696
    %2698 = vrot.lane.b32.xlu0 %v2251, 112
    %v2699 = vpop.permute.xlu0 %2698
    %2700 = vrot.lane.b32.xlu0 %v2253, 112
    %v2701 = vpop.permute.xlu0 %2700
    %2766 = vxpose.xlu0.b32.start [1/16] %v2575, 128
    %2767 = vxpose.xlu0.b32.cont [2/16] %v2577, 128
    %2768 = vxpose.xlu0.b32.cont [3/16] %v2579, 128
    %2769 = vxpose.xlu0.b32.cont [4/16] %v2581, 128
    %2770 = vxpose.xlu0.b32.cont [5/16] %v2583, 128
    %2771 = vxpose.xlu0.b32.cont [6/16] %v2585, 128
    %2772 = vxpose.xlu0.b32.cont [7/16] %v2587, 128
    %2773 = vxpose.xlu0.b32.cont [8/16] %v2589, 128
    %2774 = vxpose.xlu0.b32.cont [9/16] 0.0, 128
    %2775 = vxpose.xlu0.b32.cont [10/16] 0.0, 128
    %2776 = vxpose.xlu0.b32.cont [11/16] 0.0, 128
    %2777 = vxpose.xlu0.b32.cont [12/16] 0.0, 128
    %2778 = vxpose.xlu0.b32.cont [13/16] 0.0, 128
    %2779 = vxpose.xlu0.b32.cont [14/16] 0.0, 128
    %2780 = vxpose.xlu0.b32.cont [15/16] 0.0, 128
    %2781 = vxpose.xlu0.b32.end [16/16] 0.0, 128
    %v2782 = vpop.trf.xlu0
    %v2783 = vpop.trf.xlu0
    %v2784 = vpop.trf.xlu0
    %v2785 = vpop.trf.xlu0
    %v2786 = vpop.trf.xlu0
    %v2787 = vpop.trf.xlu0
    %v2788 = vpop.trf.xlu0
    %v2789 = vpop.trf.xlu0
    %v2790 = vpop.trf.xlu0
    %v2791 = vpop.trf.xlu0
    %v2792 = vpop.trf.xlu0
    %v2793 = vpop.trf.xlu0
    %v2794 = vpop.trf.xlu0
    %v2795 = vpop.trf.xlu0
    %v2796 = vpop.trf.xlu0
    %v2797 = vpop.trf.xlu0
    %2798 = vxpose.xlu0.b32.start [1/16] %v2591, 128
    %2799 = vxpose.xlu0.b32.cont [2/16] %v2593, 128
    %2800 = vxpose.xlu0.b32.cont [3/16] %v2595, 128
    %2801 = vxpose.xlu0.b32.cont [4/16] %v2597, 128
    %2802 = vxpose.xlu0.b32.cont [5/16] %v2599, 128
    %2803 = vxpose.xlu0.b32.cont [6/16] %v2601, 128
    %2804 = vxpose.xlu0.b32.cont [7/16] %v2603, 128
    %2805 = vxpose.xlu0.b32.cont [8/16] %v2605, 128
    %2806 = vxpose.xlu0.b32.cont [9/16] 0.0, 128
    %2807 = vxpose.xlu0.b32.cont [10/16] 0.0, 128
    %2808 = vxpose.xlu0.b32.cont [11/16] 0.0, 128
    %2809 = vxpose.xlu0.b32.cont [12/16] 0.0, 128
    %2810 = vxpose.xlu0.b32.cont [13/16] 0.0, 128
    %2811 = vxpose.xlu0.b32.cont [14/16] 0.0, 128
    %2812 = vxpose.xlu0.b32.cont [15/16] 0.0, 128
    %2813 = vxpose.xlu0.b32.end [16/16] 0.0, 128
    %v2814 = vpop.trf.xlu0
    %v2815 = vpop.trf.xlu0
    %v2816 = vpop.trf.xlu0
    %v2817 = vpop.trf.xlu0
    %v2818 = vpop.trf.xlu0
    %v2819 = vpop.trf.xlu0
    %v2820 = vpop.trf.xlu0
    %v2821 = vpop.trf.xlu0
    %v2822 = vpop.trf.xlu0
    %v2823 = vpop.trf.xlu0
    %v2824 = vpop.trf.xlu0
    %v2825 = vpop.trf.xlu0
    %v2826 = vpop.trf.xlu0
    %v2827 = vpop.trf.xlu0
    %v2828 = vpop.trf.xlu0
    %v2829 = vpop.trf.xlu0
    %2830 = vxpose.xlu0.b32.start [1/16] %v2607, 128
    %2831 = vxpose.xlu0.b32.cont [2/16] %v2609, 128
    %2832 = vxpose.xlu0.b32.cont [3/16] %v2611, 128
    %2833 = vxpose.xlu0.b32.cont [4/16] %v2613, 128
    %2834 = vxpose.xlu0.b32.cont [5/16] %v2615, 128
    %2835 = vxpose.xlu0.b32.cont [6/16] %v2617, 128
    %2836 = vxpose.xlu0.b32.cont [7/16] %v2619, 128
    %2837 = vxpose.xlu0.b32.cont [8/16] %v2621, 128
    %2838 = vxpose.xlu0.b32.cont [9/16] 0.0, 128
    %2839 = vxpose.xlu0.b32.cont [10/16] 0.0, 128
    %2840 = vxpose.xlu0.b32.cont [11/16] 0.0, 128
    %2841 = vxpose.xlu0.b32.cont [12/16] 0.0, 128
    %2842 = vxpose.xlu0.b32.cont [13/16] 0.0, 128
    %2843 = vxpose.xlu0.b32.cont [14/16] 0.0, 128
    %2844 = vxpose.xlu0.b32.cont [15/16] 0.0, 128
    %2845 = vxpose.xlu0.b32.end [16/16] 0.0, 128
    %v2846 = vpop.trf.xlu0
    %v2847 = vpop.trf.xlu0
    %v2848 = vpop.trf.xlu0
    %v2849 = vpop.trf.xlu0
    %v2850 = vpop.trf.xlu0
    %v2851 = vpop.trf.xlu0
    %v2852 = vpop.trf.xlu0
    %v2853 = vpop.trf.xlu0
    %v2854 = vpop.trf.xlu0
    %v2855 = vpop.trf.xlu0
    %v2856 = vpop.trf.xlu0
    %v2857 = vpop.trf.xlu0
    %v2858 = vpop.trf.xlu0
    %v2859 = vpop.trf.xlu0
    %v2860 = vpop.trf.xlu0
    %v2861 = vpop.trf.xlu0
    %2862 = vxpose.xlu0.b32.start [1/16] %v2623, 128
    %2863 = vxpose.xlu0.b32.cont [2/16] %v2625, 128
    %2864 = vxpose.xlu0.b32.cont [3/16] %v2627, 128
    %2865 = vxpose.xlu0.b32.cont [4/16] %v2629, 128
    %2866 = vxpose.xlu0.b32.cont [5/16] %v2631, 128
    %2867 = vxpose.xlu0.b32.cont [6/16] %v2633, 128
    %2868 = vxpose.xlu0.b32.cont [7/16] %v2635, 128
    %2869 = vxpose.xlu0.b32.cont [8/16] %v2637, 128
    %2870 = vxpose.xlu0.b32.cont [9/16] 0.0, 128
    %2871 = vxpose.xlu0.b32.cont [10/16] 0.0, 128
    %2872 = vxpose.xlu0.b32.cont [11/16] 0.0, 128
    %2873 = vxpose.xlu0.b32.cont [12/16] 0.0, 128
    %2874 = vxpose.xlu0.b32.cont [13/16] 0.0, 128
    %2875 = vxpose.xlu0.b32.cont [14/16] 0.0, 128
    %2876 = vxpose.xlu0.b32.cont [15/16] 0.0, 128
    %2877 = vxpose.xlu0.b32.end [16/16] 0.0, 128
    %v2878 = vpop.trf.xlu0
    %v2879 = vpop.trf.xlu0
    %v2880 = vpop.trf.xlu0
    %v2881 = vpop.trf.xlu0
    %v2882 = vpop.trf.xlu0
    %v2883 = vpop.trf.xlu0
    %v2884 = vpop.trf.xlu0
    %v2885 = vpop.trf.xlu0
    %v2886 = vpop.trf.xlu0
    %v2887 = vpop.trf.xlu0
    %v2888 = vpop.trf.xlu0
    %v2889 = vpop.trf.xlu0
    %v2890 = vpop.trf.xlu0
    %v2891 = vpop.trf.xlu0
    %v2892 = vpop.trf.xlu0
    %v2893 = vpop.trf.xlu0
    %2894 = vxpose.xlu0.b32.start [1/16] %v2639, 128
    %2895 = vxpose.xlu0.b32.cont [2/16] %v2641, 128
    %2896 = vxpose.xlu0.b32.cont [3/16] %v2643, 128
    %2897 = vxpose.xlu0.b32.cont [4/16] %v2645, 128
    %2898 = vxpose.xlu0.b32.cont [5/16] %v2647, 128
    %2899 = vxpose.xlu0.b32.cont [6/16] %v2649, 128
    %2900 = vxpose.xlu0.b32.cont [7/16] %v2651, 128
    %2901 = vxpose.xlu0.b32.cont [8/16] %v2653, 128
    %2902 = vxpose.xlu0.b32.cont [9/16] 0.0, 128
    %2903 = vxpose.xlu0.b32.cont [10/16] 0.0, 128
    %2904 = vxpose.xlu0.b32.cont [11/16] 0.0, 128
    %2905 = vxpose.xlu0.b32.cont [12/16] 0.0, 128
    %2906 = vxpose.xlu0.b32.cont [13/16] 0.0, 128
    %2907 = vxpose.xlu0.b32.cont [14/16] 0.0, 128
    %2908 = vxpose.xlu0.b32.cont [15/16] 0.0, 128
    %2909 = vxpose.xlu0.b32.end [16/16] 0.0, 128
    %v2910 = vpop.trf.xlu0
    %v2911 = vpop.trf.xlu0
    %v2912 = vpop.trf.xlu0
    %v2913 = vpop.trf.xlu0
    %v2914 = vpop.trf.xlu0
    %v2915 = vpop.trf.xlu0
    %v2916 = vpop.trf.xlu0
    %v2917 = vpop.trf.xlu0
    %v2918 = vpop.trf.xlu0
    %v2919 = vpop.trf.xlu0
    %v2920 = vpop.trf.xlu0
    %v2921 = vpop.trf.xlu0
    %v2922 = vpop.trf.xlu0
    %v2923 = vpop.trf.xlu0
    %v2924 = vpop.trf.xlu0
    %v2925 = vpop.trf.xlu0
    %2926 = vxpose.xlu0.b32.start [1/16] %v2655, 128
    %2927 = vxpose.xlu0.b32.cont [2/16] %v2657, 128
    %2928 = vxpose.xlu0.b32.cont [3/16] %v2659, 128
    %2929 = vxpose.xlu0.b32.cont [4/16] %v2661, 128
    %2930 = vxpose.xlu0.b32.cont [5/16] %v2663, 128
    %2931 = vxpose.xlu0.b32.cont [6/16] %v2665, 128
    %2932 = vxpose.xlu0.b32.cont [7/16] %v2667, 128
    %2933 = vxpose.xlu0.b32.cont [8/16] %v2669, 128
    %2934 = vxpose.xlu0.b32.cont [9/16] 0.0, 128
    %2935 = vxpose.xlu0.b32.cont [10/16] 0.0, 128
    %2936 = vxpose.xlu0.b32.cont [11/16] 0.0, 128
    %2937 = vxpose.xlu0.b32.cont [12/16] 0.0, 128
    %2938 = vxpose.xlu0.b32.cont [13/16] 0.0, 128
    %2939 = vxpose.xlu0.b32.cont [14/16] 0.0, 128
    %2940 = vxpose.xlu0.b32.cont [15/16] 0.0, 128
    %2941 = vxpose.xlu0.b32.end [16/16] 0.0, 128
    %v2942 = vpop.trf.xlu0
    %v2943 = vpop.trf.xlu0
    %v2944 = vpop.trf.xlu0
    %v2945 = vpop.trf.xlu0
    %v2946 = vpop.trf.xlu0
    %v2947 = vpop.trf.xlu0
    %v2948 = vpop.trf.xlu0
    %v2949 = vpop.trf.xlu0
    %v2950 = vpop.trf.xlu0
    %v2951 = vpop.trf.xlu0
    %v2952 = vpop.trf.xlu0
    %v2953 = vpop.trf.xlu0
    %v2954 = vpop.trf.xlu0
    %v2955 = vpop.trf.xlu0
    %v2956 = vpop.trf.xlu0
    %v2957 = vpop.trf.xlu0
    %2958 = vxpose.xlu0.b32.start [1/16] %v2671, 128
    %2959 = vxpose.xlu0.b32.cont [2/16] %v2673, 128
    %2960 = vxpose.xlu0.b32.cont [3/16] %v2675, 128
    %2961 = vxpose.xlu0.b32.cont [4/16] %v2677, 128
    %2962 = vxpose.xlu0.b32.cont [5/16] %v2679, 128
    %2963 = vxpose.xlu0.b32.cont [6/16] %v2681, 128
    %2964 = vxpose.xlu0.b32.cont [7/16] %v2683, 128
    %2965 = vxpose.xlu0.b32.cont [8/16] %v2685, 128
    %2966 = vxpose.xlu0.b32.cont [9/16] 0.0, 128
    %2967 = vxpose.xlu0.b32.cont [10/16] 0.0, 128
    %2968 = vxpose.xlu0.b32.cont [11/16] 0.0, 128
    %2969 = vxpose.xlu0.b32.cont [12/16] 0.0, 128
    %2970 = vxpose.xlu0.b32.cont [13/16] 0.0, 128
    %2971 = vxpose.xlu0.b32.cont [14/16] 0.0, 128
    %2972 = vxpose.xlu0.b32.cont [15/16] 0.0, 128
    %2973 = vxpose.xlu0.b32.end [16/16] 0.0, 128
    %v2974 = vpop.trf.xlu0
    %v2975 = vpop.trf.xlu0
    %v2976 = vpop.trf.xlu0
    %v2977 = vpop.trf.xlu0
    %v2978 = vpop.trf.xlu0
    %v2979 = vpop.trf.xlu0
    %v2980 = vpop.trf.xlu0
    %v2981 = vpop.trf.xlu0
    %v2982 = vpop.trf.xlu0
    %v2983 = vpop.trf.xlu0
    %v2984 = vpop.trf.xlu0
    %v2985 = vpop.trf.xlu0
    %v2986 = vpop.trf.xlu0
    %v2987 = vpop.trf.xlu0
    %v2988 = vpop.trf.xlu0
    %v2989 = vpop.trf.xlu0
    %2990 = vxpose.xlu0.b32.start [1/16] %v2687, 128
    %2991 = vxpose.xlu0.b32.cont [2/16] %v2689, 128
    %2992 = vxpose.xlu0.b32.cont [3/16] %v2691, 128
    %2993 = vxpose.xlu0.b32.cont [4/16] %v2693, 128
    %2994 = vxpose.xlu0.b32.cont [5/16] %v2695, 128
    %2995 = vxpose.xlu0.b32.cont [6/16] %v2697, 128
    %2996 = vxpose.xlu0.b32.cont [7/16] %v2699, 128
    %2997 = vxpose.xlu0.b32.cont [8/16] %v2701, 128
    %2998 = vxpose.xlu0.b32.cont [9/16] 0.0, 128
    %2999 = vxpose.xlu0.b32.cont [10/16] 0.0, 128
    %3000 = vxpose.xlu0.b32.cont [11/16] 0.0, 128
    %3001 = vxpose.xlu0.b32.cont [12/16] 0.0, 128
    %3002 = vxpose.xlu0.b32.cont [13/16] 0.0, 128
    %3003 = vxpose.xlu0.b32.cont [14/16] 0.0, 128
    %3004 = vxpose.xlu0.b32.cont [15/16] 0.0, 128
    %3005 = vxpose.xlu0.b32.end [16/16] 0.0, 128
    %v3006 = vpop.trf.xlu0
    %v3007 = vpop.trf.xlu0
    %v3008 = vpop.trf.xlu0
    %v3009 = vpop.trf.xlu0
    %v3010 = vpop.trf.xlu0
    %v3011 = vpop.trf.xlu0
    %v3012 = vpop.trf.xlu0
    %v3013 = vpop.trf.xlu0
    %v3014 = vpop.trf.xlu0
    %v3015 = vpop.trf.xlu0
    %v3016 = vpop.trf.xlu0
    %v3017 = vpop.trf.xlu0
    %v3018 = vpop.trf.xlu0
    %v3019 = vpop.trf.xlu0
    %v3020 = vpop.trf.xlu0
    %v3021 = vpop.trf.xlu0
    %v3022 = vld [vmem:[%s1] sm:$0xff]
    %v3023 = vld [vmem:[%s1 + $0x8] sm:$0xff]
    %v3024 = vld [vmem:[%s1 + $0x10] sm:$0xff]
    %v3025 = vld [vmem:[%s1 + $0x18] sm:$0xff]
    %v3026 = vld [vmem:[%s1 + $0x20] sm:$0xff]
    %v3027 = vld [vmem:[%s1 + $0x28] sm:$0xff]
    %v3028 = vld [vmem:[%s1 + $0x30] sm:$0xff]
    %v3029 = vld [vmem:[%s1 + $0x38] sm:$0xff]
    %v3030 = vld [vmem:[%s1 + $0x40] sm:$0xff]
    %v3031 = vld [vmem:[%s1 + $0x48] sm:$0xff]
    %v3032 = vld [vmem:[%s1 + $0x50] sm:$0xff]
    %v3033 = vld [vmem:[%s1 + $0x58] sm:$0xff]
    %v3034 = vld [vmem:[%s1 + $0x60] sm:$0xff]
    %v3035 = vld [vmem:[%s1 + $0x68] sm:$0xff]
    %v3036 = vld [vmem:[%s1 + $0x70] sm:$0xff]
    %v3037 = vld [vmem:[%s1 + $0x78] sm:$0xff]
    %v3038 = vmul.f32 %v3022, %v2782
    %v3039 = vmul.f32 %v3023, %v2783
    %v3040 = vmul.f32 %v3024, %v2814
    %v3041 = vmul.f32 %v3025, %v2815
    %v3042 = vmul.f32 %v3026, %v2846
    %v3043 = vmul.f32 %v3027, %v2847
    %v3044 = vmul.f32 %v3028, %v2878
    %v3045 = vmul.f32 %v3029, %v2879
    %v3046 = vmul.f32 %v3030, %v2910
    %v3047 = vmul.f32 %v3031, %v2911
    %v3048 = vmul.f32 %v3032, %v2942
    %v3049 = vmul.f32 %v3033, %v2943
    %v3050 = vmul.f32 %v3034, %v2974
    %v3051 = vmul.f32 %v3035, %v2975
    %v3052 = vmul.f32 %v3036, %v3006
    %v3053 = vmul.f32 %v3037, %v3007
    %v3054 = vadd.f32 %v2270, %v3038
    %v3055 = vadd.f32 %v2271, %v3039
    %v3056 = vadd.f32 %v2302, %v3040
    %v3057 = vadd.f32 %v2303, %v3041
    %v3058 = vadd.f32 %v2334, %v3042
    %v3059 = vadd.f32 %v2335, %v3043
    %v3060 = vadd.f32 %v2366, %v3044
    %v3061 = vadd.f32 %v2367, %v3045
    %v3062 = vadd.f32 %v2398, %v3046
    %v3063 = vadd.f32 %v2399, %v3047
    %v3064 = vadd.f32 %v2430, %v3048
    %v3065 = vadd.f32 %v2431, %v3049
    %v3066 = vadd.f32 %v2462, %v3050
    %v3067 = vadd.f32 %v2463, %v3051
    %v3068 = vadd.f32 %v2494, %v3052
    %v3069 = vadd.f32 %v2495, %v3053
    %3086 = vrot.lane.b32.xlu0 %v3054, 64
    %v3087 = vpop.permute.xlu0 %3086
    %3088 = vrot.lane.b32.xlu0 %v3055, 64
    %v3089 = vpop.permute.xlu0 %3088
    %3090 = vrot.lane.b32.xlu0 %v3056, 64
    %v3091 = vpop.permute.xlu0 %3090
    %3092 = vrot.lane.b32.xlu0 %v3057, 64
    %v3093 = vpop.permute.xlu0 %3092
    %3094 = vrot.lane.b32.xlu0 %v3058, 64
    %v3095 = vpop.permute.xlu0 %3094
    %3096 = vrot.lane.b32.xlu0 %v3059, 64
    %v3097 = vpop.permute.xlu0 %3096
    %3098 = vrot.lane.b32.xlu0 %v3060, 64
    %v3099 = vpop.permute.xlu0 %3098
    %3100 = vrot.lane.b32.xlu0 %v3061, 64
    %v3101 = vpop.permute.xlu0 %3100
    %3102 = vrot.lane.b32.xlu0 %v3062, 64
    %v3103 = vpop.permute.xlu0 %3102
    %3104 = vrot.lane.b32.xlu0 %v3063, 64
    %v3105 = vpop.permute.xlu0 %3104
    %3106 = vrot.lane.b32.xlu0 %v3064, 64
    %v3107 = vpop.permute.xlu0 %3106
    %3108 = vrot.lane.b32.xlu0 %v3065, 64
    %v3109 = vpop.permute.xlu0 %3108
    %3110 = vrot.lane.b32.xlu0 %v3066, 64
    %v3111 = vpop.permute.xlu0 %3110
    %3112 = vrot.lane.b32.xlu0 %v3067, 64
    %v3113 = vpop.permute.xlu0 %3112
    %3114 = vrot.lane.b32.xlu0 %v3068, 64
    %v3115 = vpop.permute.xlu0 %3114
    %3116 = vrot.lane.b32.xlu0 %v3069, 64
    %v3117 = vpop.permute.xlu0 %3116
    %v3134 = vsel %vm1731, %v3054, %v3087
    %v3135 = vsel %vm1731, %v3055, %v3089
    %v3136 = vsel %vm1731, %v3056, %v3091
    %v3137 = vsel %vm1731, %v3057, %v3093
    %v3138 = vsel %vm1731, %v3058, %v3095
    %v3139 = vsel %vm1731, %v3059, %v3097
    %v3140 = vsel %vm1731, %v3060, %v3099
    %v3141 = vsel %vm1731, %v3061, %v3101
    %v3142 = vsel %vm1731, %v3062, %v3103
    %v3143 = vsel %vm1731, %v3063, %v3105
    %v3144 = vsel %vm1731, %v3064, %v3107
    %v3145 = vsel %vm1731, %v3065, %v3109
    %v3146 = vsel %vm1731, %v3066, %v3111
    %v3147 = vsel %vm1731, %v3067, %v3113
    %v3148 = vsel %vm1731, %v3068, %v3115
    %v3149 = vsel %vm1731, %v3069, %v3117
    %v3150 = vld [vmem:[#allocation9] sm:$0xf]
    %v3152 = vperm.slane %v3150, 0
    %v3153 = vperm.slane %v3150, 1
    %v3154 = vperm.slane %v3150, 2
    %v3155 = vperm.slane %v3150, 3
    %v3160 = vmul.f32 %v3134, %v3152
    %v3161 = vmul.f32 %v3134, %v3153
    %v3162 = vmul.f32 %v3134, %v3154
    %v3163 = vmul.f32 %v3134, %v3155
    %v3164 = vmul.f32 %v3135, %v3152
    %v3165 = vmul.f32 %v3135, %v3153
    %v3166 = vmul.f32 %v3135, %v3154
    %v3167 = vmul.f32 %v3135, %v3155
    %v3168 = vmul.f32 %v3136, %v3152
    %v3169 = vmul.f32 %v3136, %v3153
    %v3170 = vmul.f32 %v3136, %v3154
    %v3171 = vmul.f32 %v3136, %v3155
    %v3172 = vmul.f32 %v3137, %v3152
    %v3173 = vmul.f32 %v3137, %v3153
    %v3174 = vmul.f32 %v3137, %v3154
    %v3175 = vmul.f32 %v3137, %v3155
    %v3176 = vmul.f32 %v3138, %v3152
    %v3177 = vmul.f32 %v3138, %v3153
    %v3178 = vmul.f32 %v3138, %v3154
    %v3179 = vmul.f32 %v3138, %v3155
    %v3180 = vmul.f32 %v3139, %v3152
    %v3181 = vmul.f32 %v3139, %v3153
    %v3182 = vmul.f32 %v3139, %v3154
    %v3183 = vmul.f32 %v3139, %v3155
    %v3184 = vmul.f32 %v3140, %v3152
    %v3185 = vmul.f32 %v3140, %v3153
    %v3186 = vmul.f32 %v3140, %v3154
    %v3187 = vmul.f32 %v3140, %v3155
    %v3188 = vmul.f32 %v3141, %v3152
    %v3189 = vmul.f32 %v3141, %v3153
    %v3190 = vmul.f32 %v3141, %v3154
    %v3191 = vmul.f32 %v3141, %v3155
    %v3192 = vmul.f32 %v3142, %v3152
    %v3193 = vmul.f32 %v3142, %v3153
    %v3194 = vmul.f32 %v3142, %v3154
    %v3195 = vmul.f32 %v3142, %v3155
    %v3196 = vmul.f32 %v3143, %v3152
    %v3197 = vmul.f32 %v3143, %v3153
    %v3198 = vmul.f32 %v3143, %v3154
    %v3199 = vmul.f32 %v3143, %v3155
    %v3200 = vmul.f32 %v3144, %v3152
    %v3201 = vmul.f32 %v3144, %v3153
    %v3202 = vmul.f32 %v3144, %v3154
    %v3203 = vmul.f32 %v3144, %v3155
    %v3204 = vmul.f32 %v3145, %v3152
    %v3205 = vmul.f32 %v3145, %v3153
    %v3206 = vmul.f32 %v3145, %v3154
    %v3207 = vmul.f32 %v3145, %v3155
    %v3208 = vmul.f32 %v3146, %v3152
    %v3209 = vmul.f32 %v3146, %v3153
    %v3210 = vmul.f32 %v3146, %v3154
    %v3211 = vmul.f32 %v3146, %v3155
    %v3212 = vmul.f32 %v3147, %v3152
    %v3213 = vmul.f32 %v3147, %v3153
    %v3214 = vmul.f32 %v3147, %v3154
    %v3215 = vmul.f32 %v3147, %v3155
    %v3216 = vmul.f32 %v3148, %v3152
    %v3217 = vmul.f32 %v3148, %v3153
    %v3218 = vmul.f32 %v3148, %v3154
    %v3219 = vmul.f32 %v3148, %v3155
    %v3220 = vmul.f32 %v3149, %v3152
    %v3221 = vmul.f32 %v3149, %v3153
    %v3222 = vmul.f32 %v3149, %v3154
    %v3223 = vmul.f32 %v3149, %v3155
    %v3224 = vld [vmem:[#allocation10] sm:$0xf]
    %v3226 = vperm.slane %v3224, 0
    %v3227 = vperm.slane %v3224, 1
    %v3228 = vperm.slane %v3224, 2
    %v3229 = vperm.slane %v3224, 3
    %v3234 = vadd.f32 %v3160, %v3226
    %v3235 = vadd.f32 %v3161, %v3227
    %v3236 = vadd.f32 %v3162, %v3228
    %v3237 = vadd.f32 %v3163, %v3229
    %v3238 = vadd.f32 %v3164, %v3226
    %v3239 = vadd.f32 %v3165, %v3227
    %v3240 = vadd.f32 %v3166, %v3228
    %v3241 = vadd.f32 %v3167, %v3229
    %v3242 = vadd.f32 %v3168, %v3226
    %v3243 = vadd.f32 %v3169, %v3227
    %v3244 = vadd.f32 %v3170, %v3228
    %v3245 = vadd.f32 %v3171, %v3229
    %v3246 = vadd.f32 %v3172, %v3226
    %v3247 = vadd.f32 %v3173, %v3227
    %v3248 = vadd.f32 %v3174, %v3228
    %v3249 = vadd.f32 %v3175, %v3229
    %v3250 = vadd.f32 %v3176, %v3226
    %v3251 = vadd.f32 %v3177, %v3227
    %v3252 = vadd.f32 %v3178, %v3228
    %v3253 = vadd.f32 %v3179, %v3229
    %v3254 = vadd.f32 %v3180, %v3226
    %v3255 = vadd.f32 %v3181, %v3227
    %v3256 = vadd.f32 %v3182, %v3228
    %v3257 = vadd.f32 %v3183, %v3229
    %v3258 = vadd.f32 %v3184, %v3226
    %v3259 = vadd.f32 %v3185, %v3227
    %v3260 = vadd.f32 %v3186, %v3228
    %v3261 = vadd.f32 %v3187, %v3229
    %v3262 = vadd.f32 %v3188, %v3226
    %v3263 = vadd.f32 %v3189, %v3227
    %v3264 = vadd.f32 %v3190, %v3228
    %v3265 = vadd.f32 %v3191, %v3229
    %v3266 = vadd.f32 %v3192, %v3226
    %v3267 = vadd.f32 %v3193, %v3227
    %v3268 = vadd.f32 %v3194, %v3228
    %v3269 = vadd.f32 %v3195, %v3229
    %v3270 = vadd.f32 %v3196, %v3226
    %v3271 = vadd.f32 %v3197, %v3227
    %v3272 = vadd.f32 %v3198, %v3228
    %v3273 = vadd.f32 %v3199, %v3229
    %v3274 = vadd.f32 %v3200, %v3226
    %v3275 = vadd.f32 %v3201, %v3227
    %v3276 = vadd.f32 %v3202, %v3228
    %v3277 = vadd.f32 %v3203, %v3229
    %v3278 = vadd.f32 %v3204, %v3226
    %v3279 = vadd.f32 %v3205, %v3227
    %v3280 = vadd.f32 %v3206, %v3228
    %v3281 = vadd.f32 %v3207, %v3229
    %v3282 = vadd.f32 %v3208, %v3226
    %v3283 = vadd.f32 %v3209, %v3227
    %v3284 = vadd.f32 %v3210, %v3228
    %v3285 = vadd.f32 %v3211, %v3229
    %v3286 = vadd.f32 %v3212, %v3226
    %v3287 = vadd.f32 %v3213, %v3227
    %v3288 = vadd.f32 %v3214, %v3228
    %v3289 = vadd.f32 %v3215, %v3229
    %v3290 = vadd.f32 %v3216, %v3226
    %v3291 = vadd.f32 %v3217, %v3227
    %v3292 = vadd.f32 %v3218, %v3228
    %v3293 = vadd.f32 %v3219, %v3229
    %v3294 = vadd.f32 %v3220, %v3226
    %v3295 = vadd.f32 %v3221, %v3227
    %v3296 = vadd.f32 %v3222, %v3228
    %v3297 = vadd.f32 %v3223, %v3229
    %v3298 = vmax.f32 %v3234, 0.0
    %v3299 = vmax.f32 %v3235, 0.0
    %v3300 = vmax.f32 %v3236, 0.0
    %v3301 = vmax.f32 %v3237, 0.0
    %v3302 = vmax.f32 %v3238, 0.0
    %v3303 = vmax.f32 %v3239, 0.0
    %v3304 = vmax.f32 %v3240, 0.0
    %v3305 = vmax.f32 %v3241, 0.0
    %v3306 = vmax.f32 %v3242, 0.0
    %v3307 = vmax.f32 %v3243, 0.0
    %v3308 = vmax.f32 %v3244, 0.0
    %v3309 = vmax.f32 %v3245, 0.0
    %v3310 = vmax.f32 %v3246, 0.0
    %v3311 = vmax.f32 %v3247, 0.0
    %v3312 = vmax.f32 %v3248, 0.0
    %v3313 = vmax.f32 %v3249, 0.0
    %v3314 = vmax.f32 %v3250, 0.0
    %v3315 = vmax.f32 %v3251, 0.0
    %v3316 = vmax.f32 %v3252, 0.0
    %v3317 = vmax.f32 %v3253, 0.0
    %v3318 = vmax.f32 %v3254, 0.0
    %v3319 = vmax.f32 %v3255, 0.0
    %v3320 = vmax.f32 %v3256, 0.0
    %v3321 = vmax.f32 %v3257, 0.0
    %v3322 = vmax.f32 %v3258, 0.0
    %v3323 = vmax.f32 %v3259, 0.0
    %v3324 = vmax.f32 %v3260, 0.0
    %v3325 = vmax.f32 %v3261, 0.0
    %v3326 = vmax.f32 %v3262, 0.0
    %v3327 = vmax.f32 %v3263, 0.0
    %v3328 = vmax.f32 %v3264, 0.0
    %v3329 = vmax.f32 %v3265, 0.0
    %v3330 = vmax.f32 %v3266, 0.0
    %v3331 = vmax.f32 %v3267, 0.0
    %v3332 = vmax.f32 %v3268, 0.0
    %v3333 = vmax.f32 %v3269, 0.0
    %v3334 = vmax.f32 %v3270, 0.0
    %v3335 = vmax.f32 %v3271, 0.0
    %v3336 = vmax.f32 %v3272, 0.0
    %v3337 = vmax.f32 %v3273, 0.0
    %v3338 = vmax.f32 %v3274, 0.0
    %v3339 = vmax.f32 %v3275, 0.0
    %v3340 = vmax.f32 %v3276, 0.0
    %v3341 = vmax.f32 %v3277, 0.0
    %v3342 = vmax.f32 %v3278, 0.0
    %v3343 = vmax.f32 %v3279, 0.0
    %v3344 = vmax.f32 %v3280, 0.0
    %v3345 = vmax.f32 %v3281, 0.0
    %v3346 = vmax.f32 %v3282, 0.0
    %v3347 = vmax.f32 %v3283, 0.0
    %v3348 = vmax.f32 %v3284, 0.0
    %v3349 = vmax.f32 %v3285, 0.0
    %v3350 = vmax.f32 %v3286, 0.0
    %v3351 = vmax.f32 %v3287, 0.0
    %v3352 = vmax.f32 %v3288, 0.0
    %v3353 = vmax.f32 %v3289, 0.0
    %v3354 = vmax.f32 %v3290, 0.0
    %v3355 = vmax.f32 %v3291, 0.0
    %v3356 = vmax.f32 %v3292, 0.0
    %v3357 = vmax.f32 %v3293, 0.0
    %v3358 = vmax.f32 %v3294, 0.0
    %v3359 = vmax.f32 %v3295, 0.0
    %v3360 = vmax.f32 %v3296, 0.0
    %v3361 = vmax.f32 %v3297, 0.0
    %v3362 = vpack.c.bf16 %v3302, %v3298
    %v3363 = vpack.c.bf16 %v3303, %v3299
    %v3364 = vpack.c.bf16 %v3304, %v3300
    %v3365 = vpack.c.bf16 %v3305, %v3301
    %v3366 = vpack.c.bf16 %v3310, %v3306
    %v3367 = vpack.c.bf16 %v3311, %v3307
    %v3368 = vpack.c.bf16 %v3312, %v3308
    %v3369 = vpack.c.bf16 %v3313, %v3309
    %v3370 = vpack.c.bf16 %v3318, %v3314
    %v3371 = vpack.c.bf16 %v3319, %v3315
    %v3372 = vpack.c.bf16 %v3320, %v3316
    %v3373 = vpack.c.bf16 %v3321, %v3317
    %v3374 = vpack.c.bf16 %v3326, %v3322
    %v3375 = vpack.c.bf16 %v3327, %v3323
    %v3376 = vpack.c.bf16 %v3328, %v3324
    %v3377 = vpack.c.bf16 %v3329, %v3325
    %v3378 = vpack.c.bf16 %v3334, %v3330
    %v3379 = vpack.c.bf16 %v3335, %v3331
    %v3380 = vpack.c.bf16 %v3336, %v3332
    %v3381 = vpack.c.bf16 %v3337, %v3333
    %v3382 = vpack.c.bf16 %v3342, %v3338
    %v3383 = vpack.c.bf16 %v3343, %v3339
    %v3384 = vpack.c.bf16 %v3344, %v3340
    %v3385 = vpack.c.bf16 %v3345, %v3341
    %v3386 = vpack.c.bf16 %v3350, %v3346
    %v3387 = vpack.c.bf16 %v3351, %v3347
    %v3388 = vpack.c.bf16 %v3352, %v3348
    %v3389 = vpack.c.bf16 %v3353, %v3349
    %v3390 = vpack.c.bf16 %v3358, %v3354
    %v3391 = vpack.c.bf16 %v3359, %v3355
    %v3392 = vpack.c.bf16 %v3360, %v3356
    %v3393 = vpack.c.bf16 %v3361, %v3357
    %v3394 = vld [vmem:[#allocation12] sm:$0xf]
    %v3395 = vld [vmem:[#allocation12 + $0x4] sm:$0xf]
    %v3396 = vld [vmem:[#allocation12 + $0x8] sm:$0xf]
    %v3397 = vld [vmem:[#allocation12 + $0xc] sm:$0xf]
    %v3398 = vld [vmem:[#allocation12 + $0x10] sm:$0xf]
    %v3399 = vld [vmem:[#allocation12 + $0x14] sm:$0xf]
    %v3400 = vld [vmem:[#allocation12 + $0x18] sm:$0xf]
    %v3401 = vld [vmem:[#allocation12 + $0x1c] sm:$0xf]
    %v3402 = vld [vmem:[#allocation12 + $0x20] sm:$0xf]
    %v3403 = vld [vmem:[#allocation12 + $0x24] sm:$0xf]
    %v3404 = vld [vmem:[#allocation12 + $0x28] sm:$0xf]
    %v3405 = vld [vmem:[#allocation12 + $0x2c] sm:$0xf]
    %v3406 = vld [vmem:[#allocation12 + $0x30] sm:$0xf]
    %v3407 = vld [vmem:[#allocation12 + $0x34] sm:$0xf]
    %v3408 = vld [vmem:[#allocation12 + $0x38] sm:$0xf]
    %v3409 = vld [vmem:[#allocation12 + $0x3c] sm:$0xf]
    %v3410 = vld [vmem:[#allocation12 + $0x40] sm:$0xf]
    %v3411 = vld [vmem:[#allocation12 + $0x44] sm:$0xf]
    %v3412 = vld [vmem:[#allocation12 + $0x48] sm:$0xf]
    %v3413 = vld [vmem:[#allocation12 + $0x4c] sm:$0xf]
    %v3414 = vld [vmem:[#allocation12 + $0x50] sm:$0xf]
    %v3415 = vld [vmem:[#allocation12 + $0x54] sm:$0xf]
    %v3416 = vld [vmem:[#allocation12 + $0x58] sm:$0xf]
    %v3417 = vld [vmem:[#allocation12 + $0x5c] sm:$0xf]
    %v3418 = vld [vmem:[#allocation12 + $0x60] sm:$0xf]
    %v3419 = vld [vmem:[#allocation12 + $0x64] sm:$0xf]
    %v3420 = vld [vmem:[#allocation12 + $0x68] sm:$0xf]
    %v3421 = vld [vmem:[#allocation12 + $0x6c] sm:$0xf]
    %v3422 = vld [vmem:[#allocation12 + $0x70] sm:$0xf]
    %v3423 = vld [vmem:[#allocation12 + $0x74] sm:$0xf]
    %v3424 = vld [vmem:[#allocation12 + $0x78] sm:$0xf]
    %v3425 = vld [vmem:[#allocation12 + $0x7c] sm:$0xf]
    %v3426 = vld [vmem:[#allocation12 + $0x80] sm:$0xf]
    %v3427 = vld [vmem:[#allocation12 + $0x84] sm:$0xf]
    %v3428 = vld [vmem:[#allocation12 + $0x88] sm:$0xf]
    %v3429 = vld [vmem:[#allocation12 + $0x8c] sm:$0xf]
    %v3430 = vld [vmem:[#allocation12 + $0x90] sm:$0xf]
    %v3431 = vld [vmem:[#allocation12 + $0x94] sm:$0xf]
    %v3432 = vld [vmem:[#allocation12 + $0x98] sm:$0xf]
    %v3433 = vld [vmem:[#allocation12 + $0x9c] sm:$0xf]
    %v3434 = vld [vmem:[#allocation12 + $0xa0] sm:$0xf]
    %v3435 = vld [vmem:[#allocation12 + $0xa4] sm:$0xf]
    %v3436 = vld [vmem:[#allocation12 + $0xa8] sm:$0xf]
    %v3437 = vld [vmem:[#allocation12 + $0xac] sm:$0xf]
    %v3438 = vld [vmem:[#allocation12 + $0xb0] sm:$0xf]
    %v3439 = vld [vmem:[#allocation12 + $0xb4] sm:$0xf]
    %v3440 = vld [vmem:[#allocation12 + $0xb8] sm:$0xf]
    %v3441 = vld [vmem:[#allocation12 + $0xbc] sm:$0xf]
    %v3442 = vld [vmem:[#allocation12 + $0xc0] sm:$0xf]
    %v3443 = vld [vmem:[#allocation12 + $0xc4] sm:$0xf]
    %v3444 = vld [vmem:[#allocation12 + $0xc8] sm:$0xf]
    %v3445 = vld [vmem:[#allocation12 + $0xcc] sm:$0xf]
    %v3446 = vld [vmem:[#allocation12 + $0xd0] sm:$0xf]
    %v3447 = vld [vmem:[#allocation12 + $0xd4] sm:$0xf]
    %v3448 = vld [vmem:[#allocation12 + $0xd8] sm:$0xf]
    %v3449 = vld [vmem:[#allocation12 + $0xdc] sm:$0xf]
    %v3450 = vld [vmem:[#allocation12 + $0xe0] sm:$0xf]
    %v3451 = vld [vmem:[#allocation12 + $0xe4] sm:$0xf]
    %v3452 = vld [vmem:[#allocation12 + $0xe8] sm:$0xf]
    %v3453 = vld [vmem:[#allocation12 + $0xec] sm:$0xf]
    %v3454 = vld [vmem:[#allocation12 + $0xf0] sm:$0xf]
    %v3455 = vld [vmem:[#allocation12 + $0xf4] sm:$0xf]
    %v3456 = vld [vmem:[#allocation12 + $0xf8] sm:$0xf]
    %v3457 = vld [vmem:[#allocation12 + $0xfc] sm:$0xf]
    %v3522 = vunpack.c.l.b16 %v3394
    %v3523 = vunpack.c.l.b16 %v3395
    %v3524 = vunpack.c.l.b16 %v3396
    %v3525 = vunpack.c.l.b16 %v3397
    %v3526 = vunpack.c.l.b16 %v3398
    %v3527 = vunpack.c.l.b16 %v3399
    %v3528 = vunpack.c.l.b16 %v3400
    %v3529 = vunpack.c.l.b16 %v3401
    %v3530 = vunpack.c.l.b16 %v3402
    %v3531 = vunpack.c.l.b16 %v3403
    %v3532 = vunpack.c.l.b16 %v3404
    %v3533 = vunpack.c.l.b16 %v3405
    %v3534 = vunpack.c.l.b16 %v3406
    %v3535 = vunpack.c.l.b16 %v3407
    %v3536 = vunpack.c.l.b16 %v3408
    %v3537 = vunpack.c.l.b16 %v3409
    %v3538 = vunpack.c.l.b16 %v3410
    %v3539 = vunpack.c.l.b16 %v3411
    %v3540 = vunpack.c.l.b16 %v3412
    %v3541 = vunpack.c.l.b16 %v3413
    %v3542 = vunpack.c.l.b16 %v3414
    %v3543 = vunpack.c.l.b16 %v3415
    %v3544 = vunpack.c.l.b16 %v3416
    %v3545 = vunpack.c.l.b16 %v3417
    %v3546 = vunpack.c.l.b16 %v3418
    %v3547 = vunpack.c.l.b16 %v3419
    %v3548 = vunpack.c.l.b16 %v3420
    %v3549 = vunpack.c.l.b16 %v3421
    %v3550 = vunpack.c.l.b16 %v3422
    %v3551 = vunpack.c.l.b16 %v3423
    %v3552 = vunpack.c.l.b16 %v3424
    %v3553 = vunpack.c.l.b16 %v3425
    %v3554 = vunpack.c.l.b16 %v3426
    %v3555 = vunpack.c.l.b16 %v3427
    %v3556 = vunpack.c.l.b16 %v3428
    %v3557 = vunpack.c.l.b16 %v3429
    %v3558 = vunpack.c.l.b16 %v3430
    %v3559 = vunpack.c.l.b16 %v3431
    %v3560 = vunpack.c.l.b16 %v3432
    %v3561 = vunpack.c.l.b16 %v3433
    %v3562 = vunpack.c.l.b16 %v3434
    %v3563 = vunpack.c.l.b16 %v3435
    %v3564 = vunpack.c.l.b16 %v3436
    %v3565 = vunpack.c.l.b16 %v3437
    %v3566 = vunpack.c.l.b16 %v3438
    %v3567 = vunpack.c.l.b16 %v3439
    %v3568 = vunpack.c.l.b16 %v3440
    %v3569 = vunpack.c.l.b16 %v3441
    %v3570 = vunpack.c.l.b16 %v3442
    %v3571 = vunpack.c.l.b16 %v3443
    %v3572 = vunpack.c.l.b16 %v3444
    %v3573 = vunpack.c.l.b16 %v3445
    %v3574 = vunpack.c.l.b16 %v3446
    %v3575 = vunpack.c.l.b16 %v3447
    %v3576 = vunpack.c.l.b16 %v3448
    %v3577 = vunpack.c.l.b16 %v3449
    %v3578 = vunpack.c.l.b16 %v3450
    %v3579 = vunpack.c.l.b16 %v3451
    %v3580 = vunpack.c.l.b16 %v3452
    %v3581 = vunpack.c.l.b16 %v3453
    %v3582 = vunpack.c.l.b16 %v3454
    %v3583 = vunpack.c.l.b16 %v3455
    %v3584 = vunpack.c.l.b16 %v3456
    %v3585 = vunpack.c.l.b16 %v3457
    %v3586 = vpack.c.b16 %v3523, %v3522
    %v3587 = vpack.c.b16 %v3525, %v3524
    %v3588 = vpack.c.b16 %v3527, %v3526
    %v3589 = vpack.c.b16 %v3529, %v3528
    %v3590 = vpack.c.b16 %v3531, %v3530
    %v3591 = vpack.c.b16 %v3533, %v3532
    %v3592 = vpack.c.b16 %v3535, %v3534
    %v3593 = vpack.c.b16 %v3537, %v3536
    %v3594 = vpack.c.b16 %v3539, %v3538
    %v3595 = vpack.c.b16 %v3541, %v3540
    %v3596 = vpack.c.b16 %v3543, %v3542
    %v3597 = vpack.c.b16 %v3545, %v3544
    %v3598 = vpack.c.b16 %v3547, %v3546
    %v3599 = vpack.c.b16 %v3549, %v3548
    %v3600 = vpack.c.b16 %v3551, %v3550
    %v3601 = vpack.c.b16 %v3553, %v3552
    %v3602 = vpack.c.b16 %v3555, %v3554
    %v3603 = vpack.c.b16 %v3557, %v3556
    %v3604 = vpack.c.b16 %v3559, %v3558
    %v3605 = vpack.c.b16 %v3561, %v3560
    %v3606 = vpack.c.b16 %v3563, %v3562
    %v3607 = vpack.c.b16 %v3565, %v3564
    %v3608 = vpack.c.b16 %v3567, %v3566
    %v3609 = vpack.c.b16 %v3569, %v3568
    %v3610 = vpack.c.b16 %v3571, %v3570
    %v3611 = vpack.c.b16 %v3573, %v3572
    %v3612 = vpack.c.b16 %v3575, %v3574
    %v3613 = vpack.c.b16 %v3577, %v3576
    %v3614 = vpack.c.b16 %v3579, %v3578
    %v3615 = vpack.c.b16 %v3581, %v3580
    %v3616 = vpack.c.b16 %v3583, %v3582
    %v3617 = vpack.c.b16 %v3585, %v3584
    %3650 = vmatpush.bf16.msra.mxu0 %v3593
    %3651 = vmatpush.bf16.msra.mxu0 %v3592
    %3652 = vmatpush.bf16.msra.mxu0 %v3591
    %3653 = vmatpush.bf16.msra.mxu0 %v3590
    %3654 = vmatpush.bf16.msra.mxu0 %v3589
    %3655 = vmatpush.bf16.msra.mxu0 %v3588
    %3656 = vmatpush.bf16.msra.mxu0 %v3587
    %3657 = vmatpush.bf16.msra.mxu0 %v3586
    %3658 = vmatmul.bf16.gmra.mxu0 %v3362
    %v3659 = vpop.f32.mrf.mxu0
    %v3660 = vadd.f32 0.0, %v3659
    %v3661 = vpop.f32.mrf.mxu0
    %v3662 = vadd.f32 0.0, %v3661
    %3663 = vmatmul.bf16.gmra.mxu0 %v3366
    %v3664 = vpop.f32.mrf.mxu0
    %v3665 = vadd.f32 0.0, %v3664
    %v3666 = vpop.f32.mrf.mxu0
    %v3667 = vadd.f32 0.0, %v3666
    %3668 = vmatmul.bf16.gmra.mxu0 %v3370
    %v3669 = vpop.f32.mrf.mxu0
    %v3670 = vadd.f32 0.0, %v3669
    %v3671 = vpop.f32.mrf.mxu0
    %v3672 = vadd.f32 0.0, %v3671
    %3673 = vmatmul.bf16.gmra.mxu0 %v3374
    %v3674 = vpop.f32.mrf.mxu0
    %v3675 = vadd.f32 0.0, %v3674
    %v3676 = vpop.f32.mrf.mxu0
    %v3677 = vadd.f32 0.0, %v3676
    %3678 = vmatmul.bf16.gmra.mxu0 %v3378
    %v3679 = vpop.f32.mrf.mxu0
    %v3680 = vadd.f32 0.0, %v3679
    %v3681 = vpop.f32.mrf.mxu0
    %v3682 = vadd.f32 0.0, %v3681
    %3683 = vmatmul.bf16.gmra.mxu0 %v3382
    %v3684 = vpop.f32.mrf.mxu0
    %v3685 = vadd.f32 0.0, %v3684
    %v3686 = vpop.f32.mrf.mxu0
    %v3687 = vadd.f32 0.0, %v3686
    %3688 = vmatmul.bf16.gmra.mxu0 %v3386
    %v3689 = vpop.f32.mrf.mxu0
    %v3690 = vadd.f32 0.0, %v3689
    %v3691 = vpop.f32.mrf.mxu0
    %v3692 = vadd.f32 0.0, %v3691
    %3693 = vmatmul.bf16.gmra.mxu0 %v3390
    %v3694 = vpop.f32.mrf.mxu0
    %v3695 = vadd.f32 0.0, %v3694
    %v3696 = vpop.f32.mrf.mxu0
    %v3697 = vadd.f32 0.0, %v3696
    %3698 = vdwg.mxu0
    %3699 = vmatpush.bf16.msra.mxu0 %v3601
    %3700 = vmatpush.bf16.msra.mxu0 %v3600
    %3701 = vmatpush.bf16.msra.mxu0 %v3599
    %3702 = vmatpush.bf16.msra.mxu0 %v3598
    %3703 = vmatpush.bf16.msra.mxu0 %v3597
    %3704 = vmatpush.bf16.msra.mxu0 %v3596
    %3705 = vmatpush.bf16.msra.mxu0 %v3595
    %3706 = vmatpush.bf16.msra.mxu0 %v3594
    %3707 = vmatmul.bf16.gmra.mxu0 %v3363
    %v3708 = vpop.f32.mrf.mxu0
    %v3709 = vadd.f32 %v3660, %v3708
    %v3710 = vpop.f32.mrf.mxu0
    %v3711 = vadd.f32 %v3662, %v3710
    %3712 = vmatmul.bf16.gmra.mxu0 %v3367
    %v3713 = vpop.f32.mrf.mxu0
    %v3714 = vadd.f32 %v3665, %v3713
    %v3715 = vpop.f32.mrf.mxu0
    %v3716 = vadd.f32 %v3667, %v3715
    %3717 = vmatmul.bf16.gmra.mxu0 %v3371
    %v3718 = vpop.f32.mrf.mxu0
    %v3719 = vadd.f32 %v3670, %v3718
    %v3720 = vpop.f32.mrf.mxu0
    %v3721 = vadd.f32 %v3672, %v3720
    %3722 = vmatmul.bf16.gmra.mxu0 %v3375
    %v3723 = vpop.f32.mrf.mxu0
    %v3724 = vadd.f32 %v3675, %v3723
    %v3725 = vpop.f32.mrf.mxu0
    %v3726 = vadd.f32 %v3677, %v3725
    %3727 = vmatmul.bf16.gmra.mxu0 %v3379
    %v3728 = vpop.f32.mrf.mxu0
    %v3729 = vadd.f32 %v3680, %v3728
    %v3730 = vpop.f32.mrf.mxu0
    %v3731 = vadd.f32 %v3682, %v3730
    %3732 = vmatmul.bf16.gmra.mxu0 %v3383
    %v3733 = vpop.f32.mrf.mxu0
    %v3734 = vadd.f32 %v3685, %v3733
    %v3735 = vpop.f32.mrf.mxu0
    %v3736 = vadd.f32 %v3687, %v3735
    %3737 = vmatmul.bf16.gmra.mxu0 %v3387
    %v3738 = vpop.f32.mrf.mxu0
    %v3739 = vadd.f32 %v3690, %v3738
    %v3740 = vpop.f32.mrf.mxu0
    %v3741 = vadd.f32 %v3692, %v3740
    %3742 = vmatmul.bf16.gmra.mxu0 %v3391
    %v3743 = vpop.f32.mrf.mxu0
    %v3744 = vadd.f32 %v3695, %v3743
    %v3745 = vpop.f32.mrf.mxu0
    %v3746 = vadd.f32 %v3697, %v3745
    %3747 = vdwg.mxu0
    %3748 = vmatpush.bf16.msra.mxu0 %v3609
    %3749 = vmatpush.bf16.msra.mxu0 %v3608
    %3750 = vmatpush.bf16.msra.mxu0 %v3607
    %3751 = vmatpush.bf16.msra.mxu0 %v3606
    %3752 = vmatpush.bf16.msra.mxu0 %v3605
    %3753 = vmatpush.bf16.msra.mxu0 %v3604
    %3754 = vmatpush.bf16.msra.mxu0 %v3603
    %3755 = vmatpush.bf16.msra.mxu0 %v3602
    %3756 = vmatmul.bf16.gmra.mxu0 %v3364
    %v3757 = vpop.f32.mrf.mxu0
    %v3758 = vadd.f32 %v3709, %v3757
    %v3759 = vpop.f32.mrf.mxu0
    %v3760 = vadd.f32 %v3711, %v3759
    %3761 = vmatmul.bf16.gmra.mxu0 %v3368
    %v3762 = vpop.f32.mrf.mxu0
    %v3763 = vadd.f32 %v3714, %v3762
    %v3764 = vpop.f32.mrf.mxu0
    %v3765 = vadd.f32 %v3716, %v3764
    %3766 = vmatmul.bf16.gmra.mxu0 %v3372
    %v3767 = vpop.f32.mrf.mxu0
    %v3768 = vadd.f32 %v3719, %v3767
    %v3769 = vpop.f32.mrf.mxu0
    %v3770 = vadd.f32 %v3721, %v3769
    %3771 = vmatmul.bf16.gmra.mxu0 %v3376
    %v3772 = vpop.f32.mrf.mxu0
    %v3773 = vadd.f32 %v3724, %v3772
    %v3774 = vpop.f32.mrf.mxu0
    %v3775 = vadd.f32 %v3726, %v3774
    %3776 = vmatmul.bf16.gmra.mxu0 %v3380
    %v3777 = vpop.f32.mrf.mxu0
    %v3778 = vadd.f32 %v3729, %v3777
    %v3779 = vpop.f32.mrf.mxu0
    %v3780 = vadd.f32 %v3731, %v3779
    %3781 = vmatmul.bf16.gmra.mxu0 %v3384
    %v3782 = vpop.f32.mrf.mxu0
    %v3783 = vadd.f32 %v3734, %v3782
    %v3784 = vpop.f32.mrf.mxu0
    %v3785 = vadd.f32 %v3736, %v3784
    %3786 = vmatmul.bf16.gmra.mxu0 %v3388
    %v3787 = vpop.f32.mrf.mxu0
    %v3788 = vadd.f32 %v3739, %v3787
    %v3789 = vpop.f32.mrf.mxu0
    %v3790 = vadd.f32 %v3741, %v3789
    %3791 = vmatmul.bf16.gmra.mxu0 %v3392
    %v3792 = vpop.f32.mrf.mxu0
    %v3793 = vadd.f32 %v3744, %v3792
    %v3794 = vpop.f32.mrf.mxu0
    %v3795 = vadd.f32 %v3746, %v3794
    %3796 = vdwg.mxu0
    %3797 = vmatpush.bf16.msra.mxu0 %v3617
    %3798 = vmatpush.bf16.msra.mxu0 %v3616
    %3799 = vmatpush.bf16.msra.mxu0 %v3615
    %3800 = vmatpush.bf16.msra.mxu0 %v3614
    %3801 = vmatpush.bf16.msra.mxu0 %v3613
    %3802 = vmatpush.bf16.msra.mxu0 %v3612
    %3803 = vmatpush.bf16.msra.mxu0 %v3611
    %3804 = vmatpush.bf16.msra.mxu0 %v3610
    %3805 = vmatmul.bf16.gmra.mxu0 %v3365
    %v3806 = vpop.f32.mrf.mxu0
    %v3807 = vadd.f32 %v3758, %v3806
    %v3808 = vpop.f32.mrf.mxu0
    %v3809 = vadd.f32 %v3760, %v3808
    %3810 = vmatmul.bf16.gmra.mxu0 %v3369
    %v3811 = vpop.f32.mrf.mxu0
    %v3812 = vadd.f32 %v3763, %v3811
    %v3813 = vpop.f32.mrf.mxu0
    %v3814 = vadd.f32 %v3765, %v3813
    %3815 = vmatmul.bf16.gmra.mxu0 %v3373
    %v3816 = vpop.f32.mrf.mxu0
    %v3817 = vadd.f32 %v3768, %v3816
    %v3818 = vpop.f32.mrf.mxu0
    %v3819 = vadd.f32 %v3770, %v3818
    %3820 = vmatmul.bf16.gmra.mxu0 %v3377
    %v3821 = vpop.f32.mrf.mxu0
    %v3822 = vadd.f32 %v3773, %v3821
    %v3823 = vpop.f32.mrf.mxu0
    %v3824 = vadd.f32 %v3775, %v3823
    %3825 = vmatmul.bf16.gmra.mxu0 %v3381
    %v3826 = vpop.f32.mrf.mxu0
    %v3827 = vadd.f32 %v3778, %v3826
    %v3828 = vpop.f32.mrf.mxu0
    %v3829 = vadd.f32 %v3780, %v3828
    %3830 = vmatmul.bf16.gmra.mxu0 %v3385
    %v3831 = vpop.f32.mrf.mxu0
    %v3832 = vadd.f32 %v3783, %v3831
    %v3833 = vpop.f32.mrf.mxu0
    %v3834 = vadd.f32 %v3785, %v3833
    %3835 = vmatmul.bf16.gmra.mxu0 %v3389
    %v3836 = vpop.f32.mrf.mxu0
    %v3837 = vadd.f32 %v3788, %v3836
    %v3838 = vpop.f32.mrf.mxu0
    %v3839 = vadd.f32 %v3790, %v3838
    %3840 = vmatmul.bf16.gmra.mxu0 %v3393
    %v3841 = vpop.f32.mrf.mxu0
    %v3842 = vadd.f32 %v3793, %v3841
    %v3843 = vpop.f32.mrf.mxu0
    %v3844 = vadd.f32 %v3795, %v3843
    %3845 = vdwg.mxu0
    %v3846 = vpack.c.bf16 %v3809, %v3807
    %v3847 = vpack.c.bf16 %v3814, %v3812
    %v3848 = vpack.c.bf16 %v3819, %v3817
    %v3849 = vpack.c.bf16 %v3824, %v3822
    %v3850 = vpack.c.bf16 %v3829, %v3827
    %v3851 = vpack.c.bf16 %v3834, %v3832
    %v3852 = vpack.c.bf16 %v3839, %v3837
    %v3853 = vpack.c.bf16 %v3844, %v3842
    %v3854 = vld [vmem:[%s11] sm:$0xff]
    %v3855 = vld [vmem:[%s11 + $0x8] sm:$0xf]
    %v3856 = vld [vmem:[%s11 + $0xc] sm:$0xff]
    %v3857 = vld [vmem:[%s11 + $0x14] sm:$0xf]
    %v3858 = vld [vmem:[%s11 + $0x18] sm:$0xff]
    %v3859 = vld [vmem:[%s11 + $0x20] sm:$0xf]
    %v3860 = vld [vmem:[%s11 + $0x24] sm:$0xff]
    %v3861 = vld [vmem:[%s11 + $0x2c] sm:$0xf]
    %v3862 = vld [vmem:[%s11 + $0x30] sm:$0xff]
    %v3863 = vld [vmem:[%s11 + $0x38] sm:$0xf]
    %v3864 = vld [vmem:[%s11 + $0x3c] sm:$0xff]
    %v3865 = vld [vmem:[%s11 + $0x44] sm:$0xf]
    %v3866 = vld [vmem:[%s11 + $0x48] sm:$0xff]
    %v3867 = vld [vmem:[%s11 + $0x50] sm:$0xf]
    %v3868 = vld [vmem:[%s11 + $0x54] sm:$0xff]
    %v3869 = vld [vmem:[%s11 + $0x5c] sm:$0xf]
    %v3870 = vld [vmem:[%s11 + $0x60] sm:$0xff]
    %v3871 = vld [vmem:[%s11 + $0x68] sm:$0xf]
    %v3872 = vld [vmem:[%s11 + $0x6c] sm:$0xff]
    %v3873 = vld [vmem:[%s11 + $0x74] sm:$0xf]
    %v3874 = vld [vmem:[%s11 + $0x78] sm:$0xff]
    %v3875 = vld [vmem:[%s11 + $0x80] sm:$0xf]
    %v3876 = vld [vmem:[%s11 + $0x84] sm:$0xff]
    %v3877 = vld [vmem:[%s11 + $0x8c] sm:$0xf]
    %v3878 = vld [vmem:[%s11 + $0x90] sm:$0xff]
    %v3879 = vld [vmem:[%s11 + $0x98] sm:$0xf]
    %v3880 = vld [vmem:[%s11 + $0x9c] sm:$0xff]
    %v3881 = vld [vmem:[%s11 + $0xa4] sm:$0xf]
    %v3882 = vld [vmem:[%s11 + $0xa8] sm:$0xff]
    %v3883 = vld [vmem:[%s11 + $0xb0] sm:$0xf]
    %v3884 = vld [vmem:[%s11 + $0xb4] sm:$0xff]
    %v3885 = vld [vmem:[%s11 + $0xbc] sm:$0xf]
    %v3886 = vld [vmem:[#allocation13] sm:$0x7]
    %v3888 = vperm.slane %v3886, 0
    %v3889 = vperm.slane %v3886, 1
    %v3890 = vperm.slane %v3886, 2
    %v3926 = vunpack.c.l.b16 %v3854
    %v3927 = vunpack.c.h.b16 %v3854
    %v3928 = vunpack.c.l.b16 %v3855
    %v3929 = vunpack.c.l.b16 %v3856
    %v3930 = vunpack.c.h.b16 %v3856
    %v3931 = vunpack.c.l.b16 %v3857
    %v3932 = vunpack.c.l.b16 %v3858
    %v3933 = vunpack.c.h.b16 %v3858
    %v3934 = vunpack.c.l.b16 %v3859
    %v3935 = vunpack.c.l.b16 %v3860
    %v3936 = vunpack.c.h.b16 %v3860
    %v3937 = vunpack.c.l.b16 %v3861
    %v3938 = vunpack.c.l.b16 %v3862
    %v3939 = vunpack.c.h.b16 %v3862
    %v3940 = vunpack.c.l.b16 %v3863
    %v3941 = vunpack.c.l.b16 %v3864
    %v3942 = vunpack.c.h.b16 %v3864
    %v3943 = vunpack.c.l.b16 %v3865
    %v3944 = vunpack.c.l.b16 %v3866
    %v3945 = vunpack.c.h.b16 %v3866
    %v3946 = vunpack.c.l.b16 %v3867
    %v3947 = vunpack.c.l.b16 %v3868
    %v3948 = vunpack.c.h.b16 %v3868
    %v3949 = vunpack.c.l.b16 %v3869
    %v3950 = vunpack.c.l.b16 %v3870
    %v3951 = vunpack.c.h.b16 %v3870
    %v3952 = vunpack.c.l.b16 %v3871
    %v3953 = vunpack.c.l.b16 %v3872
    %v3954 = vunpack.c.h.b16 %v3872
    %v3955 = vunpack.c.l.b16 %v3873
    %v3956 = vunpack.c.l.b16 %v3874
    %v3957 = vunpack.c.h.b16 %v3874
    %v3958 = vunpack.c.l.b16 %v3875
    %v3959 = vunpack.c.l.b16 %v3876
    %v3960 = vunpack.c.h.b16 %v3876
    %v3961 = vunpack.c.l.b16 %v3877
    %v3962 = vunpack.c.l.b16 %v3878
    %v3963 = vunpack.c.h.b16 %v3878
    %v3964 = vunpack.c.l.b16 %v3879
    %v3965 = vunpack.c.l.b16 %v3880
    %v3966 = vunpack.c.h.b16 %v3880
    %v3967 = vunpack.c.l.b16 %v3881
    %v3968 = vunpack.c.l.b16 %v3882
    %v3969 = vunpack.c.h.b16 %v3882
    %v3970 = vunpack.c.l.b16 %v3883
    %v3971 = vunpack.c.l.b16 %v3884
    %v3972 = vunpack.c.h.b16 %v3884
    %v3973 = vunpack.c.l.b16 %v3885
    %v3974 = vpack.c.b16 %v3929, %v3926
    %v3975 = vpack.c.b16 %v3930, %v3927
    %v3976 = vpack.c.b16 %v3931, %v3928
    %v3977 = vpack.c.b16 %v3935, %v3932
    %v3978 = vpack.c.b16 %v3936, %v3933
    %v3979 = vpack.c.b16 %v3937, %v3934
    %v3980 = vpack.c.b16 %v3941, %v3938
    %v3981 = vpack.c.b16 %v3942, %v3939
    %v3982 = vpack.c.b16 %v3943, %v3940
    %v3983 = vpack.c.b16 %v3947, %v3944
    %v3984 = vpack.c.b16 %v3948, %v3945
    %v3985 = vpack.c.b16 %v3949, %v3946
    %v3986 = vpack.c.b16 %v3953, %v3950
    %v3987 = vpack.c.b16 %v3954, %v3951
    %v3988 = vpack.c.b16 %v3955, %v3952
    %v3989 = vpack.c.b16 %v3959, %v3956
    %v3990 = vpack.c.b16 %v3960, %v3957
    %v3991 = vpack.c.b16 %v3961, %v3958
    %v3992 = vpack.c.b16 %v3965, %v3962
    %v3993 = vpack.c.b16 %v3966, %v3963
    %v3994 = vpack.c.b16 %v3967, %v3964
    %v3995 = vpack.c.b16 %v3971, %v3968
    %v3996 = vpack.c.b16 %v3972, %v3969
    %v3997 = vpack.c.b16 %v3973, %v3970
    %4022 = vmatpush.bf16.msra.mxu0 %v3995
    %4023 = vmatpush.bf16.msra.mxu0 %v3992
    %4024 = vmatpush.bf16.msra.mxu0 %v3989
    %4025 = vmatpush.bf16.msra.mxu0 %v3986
    %4026 = vmatpush.bf16.msra.mxu0 %v3983
    %4027 = vmatpush.bf16.msra.mxu0 %v3980
    %4028 = vmatpush.bf16.msra.mxu0 %v3977
    %4029 = vmatpush.bf16.msra.mxu0 %v3974
    %4030 = vmatmul.bf16.gmra.mxu0 %v3846
    %v4031 = vpop.f32.mrf.mxu0
    %v4032 = vadd.f32 %v3888, %v4031
    %v4033 = vpop.f32.mrf.mxu0
    %v4034 = vadd.f32 %v3888, %v4033
    %4035 = vmatmul.bf16.gmra.mxu0 %v3847
    %v4036 = vpop.f32.mrf.mxu0
    %v4037 = vadd.f32 %v3888, %v4036
    %v4038 = vpop.f32.mrf.mxu0
    %v4039 = vadd.f32 %v3888, %v4038
    %4040 = vmatmul.bf16.gmra.mxu0 %v3848
    %v4041 = vpop.f32.mrf.mxu0
    %v4042 = vadd.f32 %v3888, %v4041
    %v4043 = vpop.f32.mrf.mxu0
    %v4044 = vadd.f32 %v3888, %v4043
    %4045 = vmatmul.bf16.gmra.mxu0 %v3849
    %v4046 = vpop.f32.mrf.mxu0
    %v4047 = vadd.f32 %v3888, %v4046
    %v4048 = vpop.f32.mrf.mxu0
    %v4049 = vadd.f32 %v3888, %v4048
    %4050 = vmatmul.bf16.gmra.mxu0 %v3850
    %v4051 = vpop.f32.mrf.mxu0
    %v4052 = vadd.f32 %v3888, %v4051
    %v4053 = vpop.f32.mrf.mxu0
    %v4054 = vadd.f32 %v3888, %v4053
    %4055 = vmatmul.bf16.gmra.mxu0 %v3851
    %v4056 = vpop.f32.mrf.mxu0
    %v4057 = vadd.f32 %v3888, %v4056
    %v4058 = vpop.f32.mrf.mxu0
    %v4059 = vadd.f32 %v3888, %v4058
    %4060 = vmatmul.bf16.gmra.mxu0 %v3852
    %v4061 = vpop.f32.mrf.mxu0
    %v4062 = vadd.f32 %v3888, %v4061
    %v4063 = vpop.f32.mrf.mxu0
    %v4064 = vadd.f32 %v3888, %v4063
    %4065 = vmatmul.bf16.gmra.mxu0 %v3853
    %v4066 = vpop.f32.mrf.mxu0
    %v4067 = vadd.f32 %v3888, %v4066
    %v4068 = vpop.f32.mrf.mxu0
    %v4069 = vadd.f32 %v3888, %v4068
    %4070 = vdwg.mxu0
    %4071 = vmatpush.bf16.msra.mxu0 %v3996
    %4072 = vmatpush.bf16.msra.mxu0 %v3993
    %4073 = vmatpush.bf16.msra.mxu0 %v3990
    %4074 = vmatpush.bf16.msra.mxu0 %v3987
    %4075 = vmatpush.bf16.msra.mxu0 %v3984
    %4076 = vmatpush.bf16.msra.mxu0 %v3981
    %4077 = vmatpush.bf16.msra.mxu0 %v3978
    %4078 = vmatpush.bf16.msra.mxu0 %v3975
    %4079 = vmatmul.bf16.gmra.mxu0 %v3846
    %v4080 = vpop.f32.mrf.mxu0
    %v4081 = vadd.f32 %v3889, %v4080
    %v4082 = vpop.f32.mrf.mxu0
    %v4083 = vadd.f32 %v3889, %v4082
    %4084 = vmatmul.bf16.gmra.mxu0 %v3847
    %v4085 = vpop.f32.mrf.mxu0
    %v4086 = vadd.f32 %v3889, %v4085
    %v4087 = vpop.f32.mrf.mxu0
    %v4088 = vadd.f32 %v3889, %v4087
    %4089 = vmatmul.bf16.gmra.mxu0 %v3848
    %v4090 = vpop.f32.mrf.mxu0
    %v4091 = vadd.f32 %v3889, %v4090
    %v4092 = vpop.f32.mrf.mxu0
    %v4093 = vadd.f32 %v3889, %v4092
    %4094 = vmatmul.bf16.gmra.mxu0 %v3849
    %v4095 = vpop.f32.mrf.mxu0
    %v4096 = vadd.f32 %v3889, %v4095
    %v4097 = vpop.f32.mrf.mxu0
    %v4098 = vadd.f32 %v3889, %v4097
    %4099 = vmatmul.bf16.gmra.mxu0 %v3850
    %v4100 = vpop.f32.mrf.mxu0
    %v4101 = vadd.f32 %v3889, %v4100
    %v4102 = vpop.f32.mrf.mxu0
    %v4103 = vadd.f32 %v3889, %v4102
    %4104 = vmatmul.bf16.gmra.mxu0 %v3851
    %v4105 = vpop.f32.mrf.mxu0
    %v4106 = vadd.f32 %v3889, %v4105
    %v4107 = vpop.f32.mrf.mxu0
    %v4108 = vadd.f32 %v3889, %v4107
    %4109 = vmatmul.bf16.gmra.mxu0 %v3852
    %v4110 = vpop.f32.mrf.mxu0
    %v4111 = vadd.f32 %v3889, %v4110
    %v4112 = vpop.f32.mrf.mxu0
    %v4113 = vadd.f32 %v3889, %v4112
    %4114 = vmatmul.bf16.gmra.mxu0 %v3853
    %v4115 = vpop.f32.mrf.mxu0
    %v4116 = vadd.f32 %v3889, %v4115
    %v4117 = vpop.f32.mrf.mxu0
    %v4118 = vadd.f32 %v3889, %v4117
    %4119 = vdwg.mxu0
    %4120 = vmatpush.bf16.msra.mxu0 %v3997
    %4121 = vmatpush.bf16.msra.mxu0 %v3994
    %4122 = vmatpush.bf16.msra.mxu0 %v3991
    %4123 = vmatpush.bf16.msra.mxu0 %v3988
    %4124 = vmatpush.bf16.msra.mxu0 %v3985
    %4125 = vmatpush.bf16.msra.mxu0 %v3982
    %4126 = vmatpush.bf16.msra.mxu0 %v3979
    %4127 = vmatpush.bf16.msra.mxu0 %v3976
    %4128 = vmatmul.bf16.gmra.mxu0 %v3846
    %v4129 = vpop.f32.mrf.mxu0
    %v4130 = vadd.f32 %v3890, %v4129
    %v4131 = vpop.f32.mrf.mxu0
    %v4132 = vadd.f32 %v3890, %v4131
    %4133 = vmatmul.bf16.gmra.mxu0 %v3847
    %v4134 = vpop.f32.mrf.mxu0
    %v4135 = vadd.f32 %v3890, %v4134
    %v4136 = vpop.f32.mrf.mxu0
    %v4137 = vadd.f32 %v3890, %v4136
    %4138 = vmatmul.bf16.gmra.mxu0 %v3848
    %v4139 = vpop.f32.mrf.mxu0
    %v4140 = vadd.f32 %v3890, %v4139
    %v4141 = vpop.f32.mrf.mxu0
    %v4142 = vadd.f32 %v3890, %v4141
    %4143 = vmatmul.bf16.gmra.mxu0 %v3849
    %v4144 = vpop.f32.mrf.mxu0
    %v4145 = vadd.f32 %v3890, %v4144
    %v4146 = vpop.f32.mrf.mxu0
    %v4147 = vadd.f32 %v3890, %v4146
    %4148 = vmatmul.bf16.gmra.mxu0 %v3850
    %v4149 = vpop.f32.mrf.mxu0
    %v4150 = vadd.f32 %v3890, %v4149
    %v4151 = vpop.f32.mrf.mxu0
    %v4152 = vadd.f32 %v3890, %v4151
    %4153 = vmatmul.bf16.gmra.mxu0 %v3851
    %v4154 = vpop.f32.mrf.mxu0
    %v4155 = vadd.f32 %v3890, %v4154
    %v4156 = vpop.f32.mrf.mxu0
    %v4157 = vadd.f32 %v3890, %v4156
    %4158 = vmatmul.bf16.gmra.mxu0 %v3852
    %v4159 = vpop.f32.mrf.mxu0
    %v4160 = vadd.f32 %v3890, %v4159
    %v4161 = vpop.f32.mrf.mxu0
    %v4162 = vadd.f32 %v3890, %v4161
    %4163 = vmatmul.bf16.gmra.mxu0 %v3853
    %v4164 = vpop.f32.mrf.mxu0
    %v4165 = vadd.f32 %v3890, %v4164
    %v4166 = vpop.f32.mrf.mxu0
    %v4167 = vadd.f32 %v3890, %v4166
    %4168 = vdwg.mxu0
    %v4169 = vmax.f32 %v4032, 0.0
    %v4170 = vmax.f32 %v4081, 0.0
    %v4171 = vmax.f32 %v4130, 0.0
    %v4172 = vmax.f32 %v4034, 0.0
    %v4173 = vmax.f32 %v4083, 0.0
    %v4174 = vmax.f32 %v4132, 0.0
    %v4175 = vmax.f32 %v4037, 0.0
    %v4176 = vmax.f32 %v4086, 0.0
    %v4177 = vmax.f32 %v4135, 0.0
    %v4178 = vmax.f32 %v4039, 0.0
    %v4179 = vmax.f32 %v4088, 0.0
    %v4180 = vmax.f32 %v4137, 0.0
    %v4181 = vmax.f32 %v4042, 0.0
    %v4182 = vmax.f32 %v4091, 0.0
    %v4183 = vmax.f32 %v4140, 0.0
    %v4184 = vmax.f32 %v4044, 0.0
    %v4185 = vmax.f32 %v4093, 0.0
    %v4186 = vmax.f32 %v4142, 0.0
    %v4187 = vmax.f32 %v4047, 0.0
    %v4188 = vmax.f32 %v4096, 0.0
    %v4189 = vmax.f32 %v4145, 0.0
    %v4190 = vmax.f32 %v4049, 0.0
    %v4191 = vmax.f32 %v4098, 0.0
    %v4192 = vmax.f32 %v4147, 0.0
    %v4193 = vmax.f32 %v4052, 0.0
    %v4194 = vmax.f32 %v4101, 0.0
    %v4195 = vmax.f32 %v4150, 0.0
    %v4196 = vmax.f32 %v4054, 0.0
    %v4197 = vmax.f32 %v4103, 0.0
    %v4198 = vmax.f32 %v4152, 0.0
    %v4199 = vmax.f32 %v4057, 0.0
    %v4200 = vmax.f32 %v4106, 0.0
    %v4201 = vmax.f32 %v4155, 0.0
    %v4202 = vmax.f32 %v4059, 0.0
    %v4203 = vmax.f32 %v4108, 0.0
    %v4204 = vmax.f32 %v4157, 0.0
    %v4205 = vmax.f32 %v4062, 0.0
    %v4206 = vmax.f32 %v4111, 0.0
    %v4207 = vmax.f32 %v4160, 0.0
    %v4208 = vmax.f32 %v4064, 0.0
    %v4209 = vmax.f32 %v4113, 0.0
    %v4210 = vmax.f32 %v4162, 0.0
    %v4211 = vmax.f32 %v4067, 0.0
    %v4212 = vmax.f32 %v4116, 0.0
    %v4213 = vmax.f32 %v4165, 0.0
    %v4214 = vmax.f32 %v4069, 0.0
    %v4215 = vmax.f32 %v4118, 0.0
    %v4216 = vmax.f32 %v4167, 0.0
    %v4217 = vpack.c.bf16 %v4172, %v4169
    %v4218 = vpack.c.bf16 %v4173, %v4170
    %v4219 = vpack.c.bf16 %v4174, %v4171
    %v4220 = vpack.c.bf16 %v4178, %v4175
    %v4221 = vpack.c.bf16 %v4179, %v4176
    %v4222 = vpack.c.bf16 %v4180, %v4177
    %v4223 = vpack.c.bf16 %v4184, %v4181
    %v4224 = vpack.c.bf16 %v4185, %v4182
    %v4225 = vpack.c.bf16 %v4186, %v4183
    %v4226 = vpack.c.bf16 %v4190, %v4187
    %v4227 = vpack.c.bf16 %v4191, %v4188
    %v4228 = vpack.c.bf16 %v4192, %v4189
    %v4229 = vpack.c.bf16 %v4196, %v4193
    %v4230 = vpack.c.bf16 %v4197, %v4194
    %v4231 = vpack.c.bf16 %v4198, %v4195
    %v4232 = vpack.c.bf16 %v4202, %v4199
    %v4233 = vpack.c.bf16 %v4203, %v4200
    %v4234 = vpack.c.bf16 %v4204, %v4201
    %v4235 = vpack.c.bf16 %v4208, %v4205
    %v4236 = vpack.c.bf16 %v4209, %v4206
    %v4237 = vpack.c.bf16 %v4210, %v4207
    %v4238 = vpack.c.bf16 %v4214, %v4211
    %v4239 = vpack.c.bf16 %v4215, %v4212
    %v4240 = vpack.c.bf16 %v4216, %v4213
    %v4241 = vld [vmem:[%s13] sm:$0xf]
    %v4242 = vld [vmem:[%s13 + $0x4] sm:$0xf]
    %v4243 = vld [vmem:[%s13 + $0x8] sm:$0xf]
    %v4244 = vld [vmem:[%s13 + $0xc] sm:$0xf]
    %v4245 = vld [vmem:[%s13 + $0x10] sm:$0xf]
    %v4246 = vld [vmem:[%s13 + $0x14] sm:$0xf]
    %v4247 = vld [vmem:[%s13 + $0x18] sm:$0xf]
    %v4248 = vld [vmem:[%s13 + $0x1c] sm:$0xf]
    %v4249 = vld [vmem:[%s13 + $0x20] sm:$0xf]
    %v4250 = vld [vmem:[%s13 + $0x24] sm:$0xf]
    %v4251 = vld [vmem:[%s13 + $0x28] sm:$0xf]
    %v4252 = vld [vmem:[%s13 + $0x2c] sm:$0xf]
    %v4253 = vld [vmem:[%s13 + $0x30] sm:$0xf]
    %v4254 = vld [vmem:[%s13 + $0x34] sm:$0xf]
    %v4255 = vld [vmem:[%s13 + $0x38] sm:$0xf]
    %v4256 = vld [vmem:[%s13 + $0x3c] sm:$0xf]
    %v4257 = vld [vmem:[%s13 + $0x40] sm:$0xf]
    %v4258 = vld [vmem:[%s13 + $0x44] sm:$0xf]
    %v4259 = vld [vmem:[%s13 + $0x48] sm:$0xf]
    %v4260 = vld [vmem:[%s13 + $0x4c] sm:$0xf]
    %v4261 = vld [vmem:[%s13 + $0x50] sm:$0xf]
    %v4262 = vld [vmem:[%s13 + $0x54] sm:$0xf]
    %v4263 = vld [vmem:[%s13 + $0x58] sm:$0xf]
    %v4264 = vld [vmem:[%s13 + $0x5c] sm:$0xf]
    %v4265 = vld [vmem:[%s13 + $0x60] sm:$0xf]
    %v4266 = vld [vmem:[%s13 + $0x64] sm:$0xf]
    %v4267 = vld [vmem:[%s13 + $0x68] sm:$0xf]
    %v4268 = vld [vmem:[%s13 + $0x6c] sm:$0xf]
    %v4269 = vld [vmem:[%s13 + $0x70] sm:$0xf]
    %v4270 = vld [vmem:[%s13 + $0x74] sm:$0xf]
    %v4271 = vld [vmem:[%s13 + $0x78] sm:$0xf]
    %v4272 = vld [vmem:[%s13 + $0x7c] sm:$0xf]
    %v4273 = vld [vmem:[%s13 + $0x80] sm:$0xf]
    %v4274 = vld [vmem:[%s13 + $0x84] sm:$0xf]
    %v4275 = vld [vmem:[%s13 + $0x88] sm:$0xf]
    %v4276 = vld [vmem:[%s13 + $0x8c] sm:$0xf]
    %v4277 = vld [vmem:[%s13 + $0x90] sm:$0xf]
    %v4278 = vld [vmem:[%s13 + $0x94] sm:$0xf]
    %v4279 = vld [vmem:[%s13 + $0x98] sm:$0xf]
    %v4280 = vld [vmem:[%s13 + $0x9c] sm:$0xf]
    %v4281 = vld [vmem:[%s13 + $0xa0] sm:$0xf]
    %v4282 = vld [vmem:[%s13 + $0xa4] sm:$0xf]
    %v4283 = vld [vmem:[#allocation15] sm:$0x1]
    %v4285 = vperm.slane %v4283, 0
    %v4329 = vunpack.c.l.b16 %v4241
    %v4330 = vunpack.c.l.b16 %v4242
    %v4331 = vunpack.c.l.b16 %v4243
    %v4332 = vunpack.c.l.b16 %v4244
    %v4333 = vunpack.c.l.b16 %v4245
    %v4334 = vunpack.c.l.b16 %v4246
    %v4335 = vunpack.c.l.b16 %v4247
    %v4336 = vunpack.c.l.b16 %v4248
    %v4337 = vunpack.c.l.b16 %v4249
    %v4338 = vunpack.c.l.b16 %v4250
    %v4339 = vunpack.c.l.b16 %v4251
    %v4340 = vunpack.c.l.b16 %v4252
    %v4341 = vunpack.c.l.b16 %v4253
    %v4342 = vunpack.c.l.b16 %v4254
    %v4343 = vunpack.c.l.b16 %v4255
    %v4344 = vunpack.c.l.b16 %v4256
    %v4345 = vunpack.c.l.b16 %v4257
    %v4346 = vunpack.c.l.b16 %v4258
    %v4347 = vunpack.c.l.b16 %v4259
    %v4348 = vunpack.c.l.b16 %v4260
    %v4349 = vunpack.c.l.b16 %v4261
    %v4350 = vunpack.c.l.b16 %v4262
    %v4351 = vunpack.c.l.b16 %v4263
    %v4352 = vunpack.c.l.b16 %v4264
    %v4353 = vunpack.c.l.b16 %v4265
    %v4354 = vunpack.c.l.b16 %v4266
    %v4355 = vunpack.c.l.b16 %v4267
    %v4356 = vunpack.c.l.b16 %v4268
    %v4357 = vunpack.c.l.b16 %v4269
    %v4358 = vunpack.c.l.b16 %v4270
    %v4359 = vunpack.c.l.b16 %v4271
    %v4360 = vunpack.c.l.b16 %v4272
    %v4361 = vunpack.c.l.b16 %v4273
    %v4362 = vunpack.c.l.b16 %v4274
    %v4363 = vunpack.c.l.b16 %v4275
    %v4364 = vunpack.c.l.b16 %v4276
    %v4365 = vunpack.c.l.b16 %v4277
    %v4366 = vunpack.c.l.b16 %v4278
    %v4367 = vunpack.c.l.b16 %v4279
    %v4368 = vunpack.c.l.b16 %v4280
    %v4369 = vunpack.c.l.b16 %v4281
    %v4370 = vunpack.c.l.b16 %v4282
    %v4371 = vpack.c.b16 %v4330, %v4329
    %v4372 = vpack.c.b16 %v4332, %v4331
    %v4373 = vpack.c.b16 %v4334, %v4333
    %v4374 = vpack.c.b16 %v4336, %v4335
    %v4375 = vpack.c.b16 %v4338, %v4337
    %v4376 = vpack.c.b16 %v4340, %v4339
    %v4377 = vpack.c.b16 %v4342, %v4341
    %v4378 = vpack.c.b16 %v4344, %v4343
    %v4379 = vpack.c.b16 %v4346, %v4345
    %v4380 = vpack.c.b16 %v4348, %v4347
    %v4381 = vpack.c.b16 %v4350, %v4349
    %v4382 = vpack.c.b16 %v4352, %v4351
    %v4383 = vpack.c.b16 %v4354, %v4353
    %v4384 = vpack.c.b16 %v4356, %v4355
    %v4385 = vpack.c.b16 %v4358, %v4357
    %v4386 = vpack.c.b16 %v4360, %v4359
    %v4387 = vpack.c.b16 %v4362, %v4361
    %v4388 = vpack.c.b16 %v4364, %v4363
    %v4389 = vpack.c.b16 %v4366, %v4365
    %v4390 = vpack.c.b16 %v4368, %v4367
    %v4391 = vpack.c.b16 %v4370, %v4369
    %vm4413 = vcmask 654336
    %v4415 = vsel %vm4413, %v4219, 0
    %v4418 = vsel %vm4413, %v4222, 0
    %v4421 = vsel %vm4413, %v4225, 0
    %v4424 = vsel %vm4413, %v4228, 0
    %v4427 = vsel %vm4413, %v4231, 0
    %v4430 = vsel %vm4413, %v4234, 0
    %v4433 = vsel %vm4413, %v4237, 0
    %v4436 = vsel %vm4413, %v4240, 0
    %4438 = vmatpush.bf16.msra.mxu0 %v4378
    %4439 = vmatpush.bf16.msra.mxu0 %v4377
    %4440 = vmatpush.bf16.msra.mxu0 %v4376
    %4441 = vmatpush.bf16.msra.mxu0 %v4375
    %4442 = vmatpush.bf16.msra.mxu0 %v4374
    %4443 = vmatpush.bf16.msra.mxu0 %v4373
    %4444 = vmatpush.bf16.msra.mxu0 %v4372
    %4445 = vmatpush.bf16.msra.mxu0 %v4371
    %4446 = vmatmul.bf16.gmra.mxu0 %v4217
    %v4447 = vpop.f32.mrf.mxu0
    %v4448 = vadd.f32 %v4285, %v4447
    %v4449 = vpop.f32.mrf.mxu0
    %v4450 = vadd.f32 %v4285, %v4449
    %4451 = vmatmul.bf16.gmra.mxu0 %v4220
    %v4452 = vpop.f32.mrf.mxu0
    %v4453 = vadd.f32 %v4285, %v4452
    %v4454 = vpop.f32.mrf.mxu0
    %v4455 = vadd.f32 %v4285, %v4454
    %4456 = vmatmul.bf16.gmra.mxu0 %v4223
    %v4457 = vpop.f32.mrf.mxu0
    %v4458 = vadd.f32 %v4285, %v4457
    %v4459 = vpop.f32.mrf.mxu0
    %v4460 = vadd.f32 %v4285, %v4459
    %4461 = vmatmul.bf16.gmra.mxu0 %v4226
    %v4462 = vpop.f32.mrf.mxu0
    %v4463 = vadd.f32 %v4285, %v4462
    %v4464 = vpop.f32.mrf.mxu0
    %v4465 = vadd.f32 %v4285, %v4464
    %4466 = vmatmul.bf16.gmra.mxu0 %v4229
    %v4467 = vpop.f32.mrf.mxu0
    %v4468 = vadd.f32 %v4285, %v4467
    %v4469 = vpop.f32.mrf.mxu0
    %v4470 = vadd.f32 %v4285, %v4469
    %4471 = vmatmul.bf16.gmra.mxu0 %v4232
    %v4472 = vpop.f32.mrf.mxu0
    %v4473 = vadd.f32 %v4285, %v4472
    %v4474 = vpop.f32.mrf.mxu0
    %v4475 = vadd.f32 %v4285, %v4474
    %4476 = vmatmul.bf16.gmra.mxu0 %v4235
    %v4477 = vpop.f32.mrf.mxu0
    %v4478 = vadd.f32 %v4285, %v4477
    %v4479 = vpop.f32.mrf.mxu0
    %v4480 = vadd.f32 %v4285, %v4479
    %4481 = vmatmul.bf16.gmra.mxu0 %v4238
    %v4482 = vpop.f32.mrf.mxu0
    %v4483 = vadd.f32 %v4285, %v4482
    %v4484 = vpop.f32.mrf.mxu0
    %v4485 = vadd.f32 %v4285, %v4484
    %4486 = vdwg.mxu0
    %4487 = vmatpush.bf16.msra.mxu0 %v4386
    %4488 = vmatpush.bf16.msra.mxu0 %v4385
    %4489 = vmatpush.bf16.msra.mxu0 %v4384
    %4490 = vmatpush.bf16.msra.mxu0 %v4383
    %4491 = vmatpush.bf16.msra.mxu0 %v4382
    %4492 = vmatpush.bf16.msra.mxu0 %v4381
    %4493 = vmatpush.bf16.msra.mxu0 %v4380
    %4494 = vmatpush.bf16.msra.mxu0 %v4379
    %4495 = vmatmul.bf16.gmra.mxu0 %v4218
    %v4496 = vpop.f32.mrf.mxu0
    %v4497 = vadd.f32 %v4448, %v4496
    %v4498 = vpop.f32.mrf.mxu0
    %v4499 = vadd.f32 %v4450, %v4498
    %4500 = vmatmul.bf16.gmra.mxu0 %v4221
    %v4501 = vpop.f32.mrf.mxu0
    %v4502 = vadd.f32 %v4453, %v4501
    %v4503 = vpop.f32.mrf.mxu0
    %v4504 = vadd.f32 %v4455, %v4503
    %4505 = vmatmul.bf16.gmra.mxu0 %v4224
    %v4506 = vpop.f32.mrf.mxu0
    %v4507 = vadd.f32 %v4458, %v4506
    %v4508 = vpop.f32.mrf.mxu0
    %v4509 = vadd.f32 %v4460, %v4508
    %4510 = vmatmul.bf16.gmra.mxu0 %v4227
    %v4511 = vpop.f32.mrf.mxu0
    %v4512 = vadd.f32 %v4463, %v4511
    %v4513 = vpop.f32.mrf.mxu0
    %v4514 = vadd.f32 %v4465, %v4513
    %4515 = vmatmul.bf16.gmra.mxu0 %v4230
    %v4516 = vpop.f32.mrf.mxu0
    %v4517 = vadd.f32 %v4468, %v4516
    %v4518 = vpop.f32.mrf.mxu0
    %v4519 = vadd.f32 %v4470, %v4518
    %4520 = vmatmul.bf16.gmra.mxu0 %v4233
    %v4521 = vpop.f32.mrf.mxu0
    %v4522 = vadd.f32 %v4473, %v4521
    %v4523 = vpop.f32.mrf.mxu0
    %v4524 = vadd.f32 %v4475, %v4523
    %4525 = vmatmul.bf16.gmra.mxu0 %v4236
    %v4526 = vpop.f32.mrf.mxu0
    %v4527 = vadd.f32 %v4478, %v4526
    %v4528 = vpop.f32.mrf.mxu0
    %v4529 = vadd.f32 %v4480, %v4528
    %4530 = vmatmul.bf16.gmra.mxu0 %v4239
    %v4531 = vpop.f32.mrf.mxu0
    %v4532 = vadd.f32 %v4483, %v4531
    %v4533 = vpop.f32.mrf.mxu0
    %v4534 = vadd.f32 %v4485, %v4533
    %4535 = vdwg.mxu0
    %4536 = vmatpush.bf16.msra.mxu0 0
    %4537 = vmatpush.bf16.msra.mxu0 0
    %4538 = vmatpush.bf16.msra.mxu0 0
    %4539 = vmatpush.bf16.msra.mxu0 %v4391
    %4540 = vmatpush.bf16.msra.mxu0 %v4390
    %4541 = vmatpush.bf16.msra.mxu0 %v4389
    %4542 = vmatpush.bf16.msra.mxu0 %v4388
    %4543 = vmatpush.bf16.msra.mxu0 %v4387
    %4544 = vmatmul.bf16.gmra.mxu0 %v4415
    %v4545 = vpop.f32.mrf.mxu0
    %v4546 = vadd.f32 %v4497, %v4545
    %v4547 = vpop.f32.mrf.mxu0
    %v4548 = vadd.f32 %v4499, %v4547
    %4549 = vmatmul.bf16.gmra.mxu0 %v4418
    %v4550 = vpop.f32.mrf.mxu0
    %v4551 = vadd.f32 %v4502, %v4550
    %v4552 = vpop.f32.mrf.mxu0
    %v4553 = vadd.f32 %v4504, %v4552
    %4554 = vmatmul.bf16.gmra.mxu0 %v4421
    %v4555 = vpop.f32.mrf.mxu0
    %v4556 = vadd.f32 %v4507, %v4555
    %v4557 = vpop.f32.mrf.mxu0
    %v4558 = vadd.f32 %v4509, %v4557
    %4559 = vmatmul.bf16.gmra.mxu0 %v4424
    %v4560 = vpop.f32.mrf.mxu0
    %v4561 = vadd.f32 %v4512, %v4560
    %v4562 = vpop.f32.mrf.mxu0
    %v4563 = vadd.f32 %v4514, %v4562
    %4564 = vmatmul.bf16.gmra.mxu0 %v4427
    %v4565 = vpop.f32.mrf.mxu0
    %v4566 = vadd.f32 %v4517, %v4565
    %v4567 = vpop.f32.mrf.mxu0
    %v4568 = vadd.f32 %v4519, %v4567
    %4569 = vmatmul.bf16.gmra.mxu0 %v4430
    %v4570 = vpop.f32.mrf.mxu0
    %v4571 = vadd.f32 %v4522, %v4570
    %v4572 = vpop.f32.mrf.mxu0
    %v4573 = vadd.f32 %v4524, %v4572
    %4574 = vmatmul.bf16.gmra.mxu0 %v4433
    %v4575 = vpop.f32.mrf.mxu0
    %v4576 = vadd.f32 %v4527, %v4575
    %v4577 = vpop.f32.mrf.mxu0
    %v4578 = vadd.f32 %v4529, %v4577
    %4579 = vmatmul.bf16.gmra.mxu0 %v4436
    %v4580 = vpop.f32.mrf.mxu0
    %v4581 = vadd.f32 %v4532, %v4580
    %v4582 = vpop.f32.mrf.mxu0
    %v4583 = vadd.f32 %v4534, %v4582
    %4584 = vdwg.mxu0
    %v4585 = vmax.f32 %v4546, 0.0
    %v4586 = vmax.f32 %v4548, 0.0
    %v4587 = vmax.f32 %v4551, 0.0
    %v4588 = vmax.f32 %v4553, 0.0
    %v4589 = vmax.f32 %v4556, 0.0
    %v4590 = vmax.f32 %v4558, 0.0
    %v4591 = vmax.f32 %v4561, 0.0
    %v4592 = vmax.f32 %v4563, 0.0
    %v4593 = vmax.f32 %v4566, 0.0
    %v4594 = vmax.f32 %v4568, 0.0
    %v4595 = vmax.f32 %v4571, 0.0
    %v4596 = vmax.f32 %v4573, 0.0
    %v4597 = vmax.f32 %v4576, 0.0
    %v4598 = vmax.f32 %v4578, 0.0
    %v4599 = vmax.f32 %v4581, 0.0
    %v4600 = vmax.f32 %v4583, 0.0
    %v4601 = vpack.c.bf16 %v4586, %v4585
    %v4602 = vpack.c.bf16 %v4588, %v4587
    %v4603 = vpack.c.bf16 %v4590, %v4589
    %v4604 = vpack.c.bf16 %v4592, %v4591
    %v4605 = vpack.c.bf16 %v4594, %v4593
    %v4606 = vpack.c.bf16 %v4596, %v4595
    %v4607 = vpack.c.bf16 %v4598, %v4597
    %v4608 = vpack.c.bf16 %v4600, %v4599
    %v4609 = vld [vmem:[%s15] sm:$0xf]
    %v4610 = vld [vmem:[%s15 + $0x4] sm:$0xf]
    %v4611 = vld [vmem:[%s15 + $0x8] sm:$0xf]
    %v4612 = vld [vmem:[%s15 + $0xc] sm:$0xf]
    %v4613 = vld [vmem:[%s15 + $0x10] sm:$0xf]
    %v4614 = vld [vmem:[%s15 + $0x14] sm:$0xf]
    %v4615 = vld [vmem:[%s15 + $0x18] sm:$0xf]
    %v4616 = vld [vmem:[%s15 + $0x1c] sm:$0xf]
    %v4617 = vld [vmem:[%s15 + $0x20] sm:$0xf]
    %v4618 = vld [vmem:[%s15 + $0x24] sm:$0xf]
    %v4619 = vld [vmem:[%s15 + $0x28] sm:$0x3]
    %v4620 = vld [vmem:[#allocation16] sm:$0x1]
    %v4622 = vperm.slane %v4620, 0
    %v4635 = vunpack.c.l.b16 %v4609
    %v4636 = vunpack.c.l.b16 %v4610
    %v4637 = vunpack.c.l.b16 %v4611
    %v4638 = vunpack.c.l.b16 %v4612
    %v4639 = vunpack.c.l.b16 %v4613
    %v4640 = vunpack.c.l.b16 %v4614
    %v4641 = vunpack.c.l.b16 %v4615
    %v4642 = vunpack.c.l.b16 %v4616
    %v4643 = vunpack.c.l.b16 %v4617
    %v4644 = vunpack.c.l.b16 %v4618
    %v4645 = vunpack.c.l.b16 %v4619
    %v4646 = vpack.c.b16 %v4636, %v4635
    %v4647 = vpack.c.b16 %v4638, %v4637
    %v4648 = vpack.c.b16 %v4640, %v4639
    %v4649 = vpack.c.b16 %v4642, %v4641
    %v4650 = vpack.c.b16 %v4644, %v4643
    %v4651 = vpack.c.b16 %v4645, %v4645
    %vm4657 = vcmask 687104
    %v4659 = vsel %vm4657, %v4601, 0
    %v4662 = vsel %vm4657, %v4602, 0
    %v4665 = vsel %vm4657, %v4603, 0
    %v4668 = vsel %vm4657, %v4604, 0
    %v4671 = vsel %vm4657, %v4605, 0
    %v4674 = vsel %vm4657, %v4606, 0
    %v4677 = vsel %vm4657, %v4607, 0
    %v4680 = vsel %vm4657, %v4608, 0
    %vm4682 = vcmask 1041408
    %v4684 = vsel %vm4682, %v4651, 0
    %4686 = vmatpush.bf16.msra.mxu0 0
    %4687 = vmatpush.bf16.msra.mxu0 0
    %4688 = vmatpush.bf16.msra.mxu0 %v4684
    %4689 = vmatpush.bf16.msra.mxu0 %v4650
    %4690 = vmatpush.bf16.msra.mxu0 %v4649
    %4691 = vmatpush.bf16.msra.mxu0 %v4648
    %4692 = vmatpush.bf16.msra.mxu0 %v4647
    %4693 = vmatpush.bf16.msra.mxu0 %v4646
    %4694 = vmatmul.bf16.gmra.mxu0 %v4659
    %v4695 = vpop.f32.mrf.mxu0
    %v4696 = vadd.f32 %v4622, %v4695
    %v4697 = vpop.f32.mrf.mxu0
    %v4698 = vadd.f32 %v4622, %v4697
    %4699 = vmatmul.bf16.gmra.mxu0 %v4662
    %v4700 = vpop.f32.mrf.mxu0
    %v4701 = vadd.f32 %v4622, %v4700
    %v4702 = vpop.f32.mrf.mxu0
    %v4703 = vadd.f32 %v4622, %v4702
    %4704 = vmatmul.bf16.gmra.mxu0 %v4665
    %v4705 = vpop.f32.mrf.mxu0
    %v4706 = vadd.f32 %v4622, %v4705
    %v4707 = vpop.f32.mrf.mxu0
    %v4708 = vadd.f32 %v4622, %v4707
    %4709 = vmatmul.bf16.gmra.mxu0 %v4668
    %v4710 = vpop.f32.mrf.mxu0
    %v4711 = vadd.f32 %v4622, %v4710
    %v4712 = vpop.f32.mrf.mxu0
    %v4713 = vadd.f32 %v4622, %v4712
    %4714 = vmatmul.bf16.gmra.mxu0 %v4671
    %v4715 = vpop.f32.mrf.mxu0
    %v4716 = vadd.f32 %v4622, %v4715
    %v4717 = vpop.f32.mrf.mxu0
    %v4718 = vadd.f32 %v4622, %v4717
    %4719 = vmatmul.bf16.gmra.mxu0 %v4674
    %v4720 = vpop.f32.mrf.mxu0
    %v4721 = vadd.f32 %v4622, %v4720
    %v4722 = vpop.f32.mrf.mxu0
    %v4723 = vadd.f32 %v4622, %v4722
    %4724 = vmatmul.bf16.gmra.mxu0 %v4677
    %v4725 = vpop.f32.mrf.mxu0
    %v4726 = vadd.f32 %v4622, %v4725
    %v4727 = vpop.f32.mrf.mxu0
    %v4728 = vadd.f32 %v4622, %v4727
    %4729 = vmatmul.bf16.gmra.mxu0 %v4680
    %v4730 = vpop.f32.mrf.mxu0
    %v4731 = vadd.f32 %v4622, %v4730
    %v4732 = vpop.f32.mrf.mxu0
    %v4733 = vadd.f32 %v4622, %v4732
    %4734 = vdwg.mxu0
    %v4735 = vxor.u32 %v4696, 2147483648
    %v4736 = vxor.u32 %v4698, 2147483648
    %v4737 = vxor.u32 %v4701, 2147483648
    %v4738 = vxor.u32 %v4703, 2147483648
    %v4739 = vxor.u32 %v4706, 2147483648
    %v4740 = vxor.u32 %v4708, 2147483648
    %v4741 = vxor.u32 %v4711, 2147483648
    %v4742 = vxor.u32 %v4713, 2147483648
    %v4743 = vxor.u32 %v4716, 2147483648
    %v4744 = vxor.u32 %v4718, 2147483648
    %v4745 = vxor.u32 %v4721, 2147483648
    %v4746 = vxor.u32 %v4723, 2147483648
    %v4747 = vxor.u32 %v4726, 2147483648
    %v4748 = vxor.u32 %v4728, 2147483648
    %v4749 = vxor.u32 %v4731, 2147483648
    %v4750 = vxor.u32 %v4733, 2147483648
    %v4751 = vmul.f32 %v4735, 1.442695
    %v4752 = vpow.pop %v4751
    %v4753 = vmul.f32 %v4736, 1.442695
    %v4754 = vpow.pop %v4753
    %v4755 = vmul.f32 %v4737, 1.442695
    %v4756 = vpow.pop %v4755
    %v4757 = vmul.f32 %v4738, 1.442695
    %v4758 = vpow.pop %v4757
    %v4759 = vmul.f32 %v4739, 1.442695
    %v4760 = vpow.pop %v4759
    %v4761 = vmul.f32 %v4740, 1.442695
    %v4762 = vpow.pop %v4761
    %v4763 = vmul.f32 %v4741, 1.442695
    %v4764 = vpow.pop %v4763
    %v4765 = vmul.f32 %v4742, 1.442695
    %v4766 = vpow.pop %v4765
    %v4767 = vmul.f32 %v4743, 1.442695
    %v4768 = vpow.pop %v4767
    %v4769 = vmul.f32 %v4744, 1.442695
    %v4770 = vpow.pop %v4769
    %v4771 = vmul.f32 %v4745, 1.442695
    %v4772 = vpow.pop %v4771
    %v4773 = vmul.f32 %v4746, 1.442695
    %v4774 = vpow.pop %v4773
    %v4775 = vmul.f32 %v4747, 1.442695
    %v4776 = vpow.pop %v4775
    %v4777 = vmul.f32 %v4748, 1.442695
    %v4778 = vpow.pop %v4777
    %v4779 = vmul.f32 %v4749, 1.442695
    %v4780 = vpow.pop %v4779
    %v4781 = vmul.f32 %v4750, 1.442695
    %v4782 = vpow.pop %v4781
    %v4783 = vadd.f32 %v4752, 1.0
    %v4784 = vadd.f32 %v4754, 1.0
    %v4785 = vadd.f32 %v4756, 1.0
    %v4786 = vadd.f32 %v4758, 1.0
    %v4787 = vadd.f32 %v4760, 1.0
    %v4788 = vadd.f32 %v4762, 1.0
    %v4789 = vadd.f32 %v4764, 1.0
    %v4790 = vadd.f32 %v4766, 1.0
    %v4791 = vadd.f32 %v4768, 1.0
    %v4792 = vadd.f32 %v4770, 1.0
    %v4793 = vadd.f32 %v4772, 1.0
    %v4794 = vadd.f32 %v4774, 1.0
    %v4795 = vadd.f32 %v4776, 1.0
    %v4796 = vadd.f32 %v4778, 1.0
    %v4797 = vadd.f32 %v4780, 1.0
    %v4798 = vadd.f32 %v4782, 1.0
    %v4799 = vrcp.pop %v4783
    %v4800 = vmul.f32 %v4783, %v4799
    %v4801 = vsub.f32 1.0, %v4800
    %v4802 = vmul.f32 %v4799, %v4801
    %v4803 = vadd.f32 %v4799, %v4802
    %vm4804 = vweird.f32 %v4783
    %vm4805 = vweird.f32 %v4799
    %vm4806 = vmor %vm4804, %vm4805
    %v4807 = vsel %vm4806, %v4799, %v4803
    %v4808 = vand.u32 2147483647, %v4783
    %vm4809 = vcmp.eq.f32.partialorder %v4808, 8.507059e+37
    %v4810 = vand.u32 %v4783, 2147483648
    %v4811 = vor.u32 1.1754944e-38, %v4810
    %v4812 = vsel %vm4809, %v4811, %v4807
    %v4813 = vmul.f32 1.0, %v4812
    %v4814 = vrcp.pop %v4784
    %v4815 = vmul.f32 %v4784, %v4814
    %v4816 = vsub.f32 1.0, %v4815
    %v4817 = vmul.f32 %v4814, %v4816
    %v4818 = vadd.f32 %v4814, %v4817
    %vm4819 = vweird.f32 %v4784
    %vm4820 = vweird.f32 %v4814
    %vm4821 = vmor %vm4819, %vm4820
    %v4822 = vsel %vm4821, %v4814, %v4818
    %v4823 = vand.u32 2147483647, %v4784
    %vm4824 = vcmp.eq.f32.partialorder %v4823, 8.507059e+37
    %v4825 = vand.u32 %v4784, 2147483648
    %v4826 = vor.u32 1.1754944e-38, %v4825
    %v4827 = vsel %vm4824, %v4826, %v4822
    %v4828 = vmul.f32 1.0, %v4827
    %v4829 = vrcp.pop %v4785
    %v4830 = vmul.f32 %v4785, %v4829
    %v4831 = vsub.f32 1.0, %v4830
    %v4832 = vmul.f32 %v4829, %v4831
    %v4833 = vadd.f32 %v4829, %v4832
    %vm4834 = vweird.f32 %v4785
    %vm4835 = vweird.f32 %v4829
    %vm4836 = vmor %vm4834, %vm4835
    %v4837 = vsel %vm4836, %v4829, %v4833
    %v4838 = vand.u32 2147483647, %v4785
    %vm4839 = vcmp.eq.f32.partialorder %v4838, 8.507059e+37
    %v4840 = vand.u32 %v4785, 2147483648
    %v4841 = vor.u32 1.1754944e-38, %v4840
    %v4842 = vsel %vm4839, %v4841, %v4837
    %v4843 = vmul.f32 1.0, %v4842
    %v4844 = vrcp.pop %v4786
    %v4845 = vmul.f32 %v4786, %v4844
    %v4846 = vsub.f32 1.0, %v4845
    %v4847 = vmul.f32 %v4844, %v4846
    %v4848 = vadd.f32 %v4844, %v4847
    %vm4849 = vweird.f32 %v4786
    %vm4850 = vweird.f32 %v4844
    %vm4851 = vmor %vm4849, %vm4850
    %v4852 = vsel %vm4851, %v4844, %v4848
    %v4853 = vand.u32 2147483647, %v4786
    %vm4854 = vcmp.eq.f32.partialorder %v4853, 8.507059e+37
    %v4855 = vand.u32 %v4786, 2147483648
    %v4856 = vor.u32 1.1754944e-38, %v4855
    %v4857 = vsel %vm4854, %v4856, %v4852
    %v4858 = vmul.f32 1.0, %v4857
    %v4859 = vrcp.pop %v4787
    %v4860 = vmul.f32 %v4787, %v4859
    %v4861 = vsub.f32 1.0, %v4860
    %v4862 = vmul.f32 %v4859, %v4861
    %v4863 = vadd.f32 %v4859, %v4862
    %vm4864 = vweird.f32 %v4787
    %vm4865 = vweird.f32 %v4859
    %vm4866 = vmor %vm4864, %vm4865
    %v4867 = vsel %vm4866, %v4859, %v4863
    %v4868 = vand.u32 2147483647, %v4787
    %vm4869 = vcmp.eq.f32.partialorder %v4868, 8.507059e+37
    %v4870 = vand.u32 %v4787, 2147483648
    %v4871 = vor.u32 1.1754944e-38, %v4870
    %v4872 = vsel %vm4869, %v4871, %v4867
    %v4873 = vmul.f32 1.0, %v4872
    %v4874 = vrcp.pop %v4788
    %v4875 = vmul.f32 %v4788, %v4874
    %v4876 = vsub.f32 1.0, %v4875
    %v4877 = vmul.f32 %v4874, %v4876
    %v4878 = vadd.f32 %v4874, %v4877
    %vm4879 = vweird.f32 %v4788
    %vm4880 = vweird.f32 %v4874
    %vm4881 = vmor %vm4879, %vm4880
    %v4882 = vsel %vm4881, %v4874, %v4878
    %v4883 = vand.u32 2147483647, %v4788
    %vm4884 = vcmp.eq.f32.partialorder %v4883, 8.507059e+37
    %v4885 = vand.u32 %v4788, 2147483648
    %v4886 = vor.u32 1.1754944e-38, %v4885
    %v4887 = vsel %vm4884, %v4886, %v4882
    %v4888 = vmul.f32 1.0, %v4887
    %v4889 = vrcp.pop %v4789
    %v4890 = vmul.f32 %v4789, %v4889
    %v4891 = vsub.f32 1.0, %v4890
    %v4892 = vmul.f32 %v4889, %v4891
    %v4893 = vadd.f32 %v4889, %v4892
    %vm4894 = vweird.f32 %v4789
    %vm4895 = vweird.f32 %v4889
    %vm4896 = vmor %vm4894, %vm4895
    %v4897 = vsel %vm4896, %v4889, %v4893
    %v4898 = vand.u32 2147483647, %v4789
    %vm4899 = vcmp.eq.f32.partialorder %v4898, 8.507059e+37
    %v4900 = vand.u32 %v4789, 2147483648
    %v4901 = vor.u32 1.1754944e-38, %v4900
    %v4902 = vsel %vm4899, %v4901, %v4897
    %v4903 = vmul.f32 1.0, %v4902
    %v4904 = vrcp.pop %v4790
    %v4905 = vmul.f32 %v4790, %v4904
    %v4906 = vsub.f32 1.0, %v4905
    %v4907 = vmul.f32 %v4904, %v4906
    %v4908 = vadd.f32 %v4904, %v4907
    %vm4909 = vweird.f32 %v4790
    %vm4910 = vweird.f32 %v4904
    %vm4911 = vmor %vm4909, %vm4910
    %v4912 = vsel %vm4911, %v4904, %v4908
    %v4913 = vand.u32 2147483647, %v4790
    %vm4914 = vcmp.eq.f32.partialorder %v4913, 8.507059e+37
    %v4915 = vand.u32 %v4790, 2147483648
    %v4916 = vor.u32 1.1754944e-38, %v4915
    %v4917 = vsel %vm4914, %v4916, %v4912
    %v4918 = vmul.f32 1.0, %v4917
    %v4919 = vrcp.pop %v4791
    %v4920 = vmul.f32 %v4791, %v4919
    %v4921 = vsub.f32 1.0, %v4920
    %v4922 = vmul.f32 %v4919, %v4921
    %v4923 = vadd.f32 %v4919, %v4922
    %vm4924 = vweird.f32 %v4791
    %vm4925 = vweird.f32 %v4919
    %vm4926 = vmor %vm4924, %vm4925
    %v4927 = vsel %vm4926, %v4919, %v4923
    %v4928 = vand.u32 2147483647, %v4791
    %vm4929 = vcmp.eq.f32.partialorder %v4928, 8.507059e+37
    %v4930 = vand.u32 %v4791, 2147483648
    %v4931 = vor.u32 1.1754944e-38, %v4930
    %v4932 = vsel %vm4929, %v4931, %v4927
    %v4933 = vmul.f32 1.0, %v4932
    %v4934 = vrcp.pop %v4792
    %v4935 = vmul.f32 %v4792, %v4934
    %v4936 = vsub.f32 1.0, %v4935
    %v4937 = vmul.f32 %v4934, %v4936
    %v4938 = vadd.f32 %v4934, %v4937
    %vm4939 = vweird.f32 %v4792
    %vm4940 = vweird.f32 %v4934
    %vm4941 = vmor %vm4939, %vm4940
    %v4942 = vsel %vm4941, %v4934, %v4938
    %v4943 = vand.u32 2147483647, %v4792
    %vm4944 = vcmp.eq.f32.partialorder %v4943, 8.507059e+37
    %v4945 = vand.u32 %v4792, 2147483648
    %v4946 = vor.u32 1.1754944e-38, %v4945
    %v4947 = vsel %vm4944, %v4946, %v4942
    %v4948 = vmul.f32 1.0, %v4947
    %v4949 = vrcp.pop %v4793
    %v4950 = vmul.f32 %v4793, %v4949
    %v4951 = vsub.f32 1.0, %v4950
    %v4952 = vmul.f32 %v4949, %v4951
    %v4953 = vadd.f32 %v4949, %v4952
    %vm4954 = vweird.f32 %v4793
    %vm4955 = vweird.f32 %v4949
    %vm4956 = vmor %vm4954, %vm4955
    %v4957 = vsel %vm4956, %v4949, %v4953
    %v4958 = vand.u32 2147483647, %v4793
    %vm4959 = vcmp.eq.f32.partialorder %v4958, 8.507059e+37
    %v4960 = vand.u32 %v4793, 2147483648
    %v4961 = vor.u32 1.1754944e-38, %v4960
    %v4962 = vsel %vm4959, %v4961, %v4957
    %v4963 = vmul.f32 1.0, %v4962
    %v4964 = vrcp.pop %v4794
    %v4965 = vmul.f32 %v4794, %v4964
    %v4966 = vsub.f32 1.0, %v4965
    %v4967 = vmul.f32 %v4964, %v4966
    %v4968 = vadd.f32 %v4964, %v4967
    %vm4969 = vweird.f32 %v4794
    %vm4970 = vweird.f32 %v4964
    %vm4971 = vmor %vm4969, %vm4970
    %v4972 = vsel %vm4971, %v4964, %v4968
    %v4973 = vand.u32 2147483647, %v4794
    %vm4974 = vcmp.eq.f32.partialorder %v4973, 8.507059e+37
    %v4975 = vand.u32 %v4794, 2147483648
    %v4976 = vor.u32 1.1754944e-38, %v4975
    %v4977 = vsel %vm4974, %v4976, %v4972
    %v4978 = vmul.f32 1.0, %v4977
    %v4979 = vrcp.pop %v4795
    %v4980 = vmul.f32 %v4795, %v4979
    %v4981 = vsub.f32 1.0, %v4980
    %v4982 = vmul.f32 %v4979, %v4981
    %v4983 = vadd.f32 %v4979, %v4982
    %vm4984 = vweird.f32 %v4795
    %vm4985 = vweird.f32 %v4979
    %vm4986 = vmor %vm4984, %vm4985
    %v4987 = vsel %vm4986, %v4979, %v4983
    %v4988 = vand.u32 2147483647, %v4795
    %vm4989 = vcmp.eq.f32.partialorder %v4988, 8.507059e+37
    %v4990 = vand.u32 %v4795, 2147483648
    %v4991 = vor.u32 1.1754944e-38, %v4990
    %v4992 = vsel %vm4989, %v4991, %v4987
    %v4993 = vmul.f32 1.0, %v4992
    %v4994 = vrcp.pop %v4796
    %v4995 = vmul.f32 %v4796, %v4994
    %v4996 = vsub.f32 1.0, %v4995
    %v4997 = vmul.f32 %v4994, %v4996
    %v4998 = vadd.f32 %v4994, %v4997
    %vm4999 = vweird.f32 %v4796
    %vm5000 = vweird.f32 %v4994
    %vm5001 = vmor %vm4999, %vm5000
    %v5002 = vsel %vm5001, %v4994, %v4998
    %v5003 = vand.u32 2147483647, %v4796
    %vm5004 = vcmp.eq.f32.partialorder %v5003, 8.507059e+37
    %v5005 = vand.u32 %v4796, 2147483648
    %v5006 = vor.u32 1.1754944e-38, %v5005
    %v5007 = vsel %vm5004, %v5006, %v5002
    %v5008 = vmul.f32 1.0, %v5007
    %v5009 = vrcp.pop %v4797
    %v5010 = vmul.f32 %v4797, %v5009
    %v5011 = vsub.f32 1.0, %v5010
    %v5012 = vmul.f32 %v5009, %v5011
    %v5013 = vadd.f32 %v5009, %v5012
    %vm5014 = vweird.f32 %v4797
    %vm5015 = vweird.f32 %v5009
    %vm5016 = vmor %vm5014, %vm5015
    %v5017 = vsel %vm5016, %v5009, %v5013
    %v5018 = vand.u32 2147483647, %v4797
    %vm5019 = vcmp.eq.f32.partialorder %v5018, 8.507059e+37
    %v5020 = vand.u32 %v4797, 2147483648
    %v5021 = vor.u32 1.1754944e-38, %v5020
    %v5022 = vsel %vm5019, %v5021, %v5017
    %v5023 = vmul.f32 1.0, %v5022
    %v5024 = vrcp.pop %v4798
    %v5025 = vmul.f32 %v4798, %v5024
    %v5026 = vsub.f32 1.0, %v5025
    %v5027 = vmul.f32 %v5024, %v5026
    %v5028 = vadd.f32 %v5024, %v5027
    %vm5029 = vweird.f32 %v4798
    %vm5030 = vweird.f32 %v5024
    %vm5031 = vmor %vm5029, %vm5030
    %v5032 = vsel %vm5031, %v5024, %v5028
    %v5033 = vand.u32 2147483647, %v4798
    %vm5034 = vcmp.eq.f32.partialorder %v5033, 8.507059e+37
    %v5035 = vand.u32 %v4798, 2147483648
    %v5036 = vor.u32 1.1754944e-38, %v5035
    %v5037 = vsel %vm5034, %v5036, %v5032
    %v5038 = vmul.f32 1.0, %v5037
    %vm5039 = vcmask 171008
    %5040 = vst.msk [vmem:[%s18] sm:$0xff] %vm5039, %v4813
    %5041 = vst.msk [vmem:[%s18 + $0x8] sm:$0xff] %vm5039, %v4828
    %5042 = vst.msk [vmem:[%s18 + $0x10] sm:$0xff] %vm5039, %v4843
    %5043 = vst.msk [vmem:[%s18 + $0x18] sm:$0xff] %vm5039, %v4858
    %5044 = vst.msk [vmem:[%s18 + $0x20] sm:$0xff] %vm5039, %v4873
    %5045 = vst.msk [vmem:[%s18 + $0x28] sm:$0xff] %vm5039, %v4888
    %5046 = vst.msk [vmem:[%s18 + $0x30] sm:$0xff] %vm5039, %v4903
    %5047 = vst.msk [vmem:[%s18 + $0x38] sm:$0xff] %vm5039, %v4918
    %5048 = vst.msk [vmem:[%s18 + $0x40] sm:$0xff] %vm5039, %v4933
    %5049 = vst.msk [vmem:[%s18 + $0x48] sm:$0xff] %vm5039, %v4948
    %5050 = vst.msk [vmem:[%s18 + $0x50] sm:$0xff] %vm5039, %v4963
    %5051 = vst.msk [vmem:[%s18 + $0x58] sm:$0xff] %vm5039, %v4978
    %5052 = vst.msk [vmem:[%s18 + $0x60] sm:$0xff] %vm5039, %v4993
    %5053 = vst.msk [vmem:[%s18 + $0x68] sm:$0xff] %vm5039, %v5008
    %5054 = vst.msk [vmem:[%s18 + $0x70] sm:$0xff] %vm5039, %v5023
    %5055 = vst.msk [vmem:[%s18 + $0x78] sm:$0xff] %vm5039, %v5038
    // Predicated region
    $region110: #{vae_forward.3} parent=1 // pred_check
      _
    $region111: #{vae_forward.3} parent=1 // pred_check_branch
      %5057 = sbr.rel (0) target = $region113
    $region112: #{vae_forward.3} parent=1 // pred_region
      _
    $region113: #{vae_forward.3} parent=1 // pred_fallthru
      _
    // Predicated region
    $region114: #{vae_forward.3} parent=1 // pred_check
      _
    $region115: #{vae_forward.3} parent=1 // pred_check_branch
      %5059 = sbr.rel (0) target = $region117
    $region116: #{vae_forward.3} parent=1 // pred_region
      _
    $region117: #{vae_forward.3} parent=1 // pred_fallthru
      _
    // Predicated region
    $region118: #{vae_forward.3} parent=1 // pred_check
      _
    $region119: #{vae_forward.3} parent=1 // pred_check_branch
      %5061 = sbr.rel (0) target = $region121
    $region120: #{vae_forward.3} parent=1 // pred_region
      _
    $region121: #{vae_forward.3} parent=1 // pred_fallthru
      _
    // Predicated region
    $region122: #{vae_forward.3} parent=1 // pred_check
      _
    $region123: #{vae_forward.3} parent=1 // pred_check_branch
      %5063 = sbr.rel (0) target = $region125
    $region124: #{vae_forward.3} parent=1 // pred_region
      _
    $region125: #{vae_forward.3} parent=1 // pred_fallthru
      _
    %5064 = vsyncpa [#allocation3], 1
    %5065 = vsyncpa [#allocation5], 1
    %5066 = vsyncpa [#allocation8], 1
    %5067 = vsyncpa [#allocation11], 1
    %5068 = vsyncpa [#allocation14], 1
    %5069 = vsyncpa [#allocation17], 1

// kernel: vae_forward.2
$region0: #{vae_forward.2}
  #allocation0 [shape = 'u32[]', space=smem, size = 0x4, offset = 0x4, fixed_abs, tag = 'smem constant byte address 0x4 - core index']
  #allocation1 [shape = 'u32[72,128]{1,0:T(1,128)}', space=vmem, size = 0x9000, scoped, tag = 'internal scratch']
  %s0 = inlined_call_operand.vmem [shape: bf16[8,315], index: 0, kind: input, shape index: {}]
  %s1 = inlined_call_operand.hbm [shape: bf16[315,5383], index: 1, kind: input, shape index: {}]
  %s2 = inlined_call_operand.hbm [shape: f32[1,5248], index: 2, kind: input, shape index: {}]
  %s3 = inlined_call_operand.vmem [shape: bf16[8,5248], index: 3, kind: output, shape index: {0}]
  %s4 = inlined_call_operand.vmem [shape: f32[8,135], index: 4, kind: output, shape index: {1}]
  %5 = xla_tuple %s3, %s4
  %s6 = sld [smem:[#allocation0]]
  $region38: #{vae_forward.2} parent=0
    _
  %s8 = ssub.s32 1, %s6
  %s9 = scalar_select 0, %s8, %s6
  $region1: #{vae_forward.2} parent=0
    #allocation2 [shape = 'u8[3522560]{0}', space=vmem, size = 0x35c000, scoped, tag = 'input window, operand 1, single buffered']
    #allocation3 [shape = 's32[1]{0}', space=sflag, size = 0x4, scoped, tag = 'scoped memory for vae_forward.2']
    #allocation4 [shape = 'u8[20992]{0}', space=vmem, size = 0x5400, scoped, tag = 'input window, operand 2, single buffered']
    #allocation5 [shape = 's32[1]{0}', space=sflag, size = 0x4, scoped, tag = 'scoped memory for vae_forward.2']
    %10 = vsyncpa [#allocation3], 0
    %11 = vsyncpa [#allocation5], 0
    // Predicated region
    $region2: #{vae_forward.2} parent=1 // pred_check
      _
    $region3: #{vae_forward.2} parent=1 // pred_check_branch
      %13 = sbr.rel (0) target = $region5
    $region4: #{vae_forward.2} parent=1 // pred_region
      _
    $region5: #{vae_forward.2} parent=1 // pred_fallthru
      _
    // Predicated region
    $region6: #{vae_forward.2} parent=1 // pred_check
      _
    $region7: #{vae_forward.2} parent=1 // pred_check_branch
      %15 = sbr.rel (0) target = $region9
    $region8: #{vae_forward.2} parent=1 // pred_region
      %17 = vsyncadd [#allocation3], 0
      %s18 = sshll.u32 %s1, 4
      %s19 = int_to_ptr.hbm [resolvable:$true] %s18
      %s20 = sshll.u32 [#allocation2], 4
      %s21 = int_to_ptr.vmem [resolvable:$true] %s20
      %26 = dma.hbm_to_vmem [thread:$0]  %s19, 110080, %s21, [#allocation3], 2752, 2752, 172
    $region9: #{vae_forward.2} parent=1 // pred_fallthru
      _
    // Predicated region
    $region10: #{vae_forward.2} parent=1 // pred_check
      _
    $region11: #{vae_forward.2} parent=1 // pred_check_branch
      %28 = sbr.rel (0) target = $region13
    $region12: #{vae_forward.2} parent=1 // pred_region
      %30 = vsyncadd [#allocation5], 0
      %s32 = sshll.u32 %s2, 4
      %s33 = int_to_ptr.hbm [resolvable:$true] %s32
      %s34 = sshll.u32 [#allocation4], 4
      %s35 = int_to_ptr.vmem [resolvable:$true] %s34
      %37 = dma.hbm_to_vmem [thread:$0]  %s33, 656, %s35, [#allocation5]
    $region13: #{vae_forward.2} parent=1 // pred_fallthru
      _
    // Predicated region
    $region14: #{vae_forward.2} parent=1 // pred_check
      _
    $region15: #{vae_forward.2} parent=1 // pred_check_branch
      %39 = sbr.rel (0) target = $region17
    $region16: #{vae_forward.2} parent=1 // pred_region
      %41 = dma.done [#allocation3], 110080
    $region17: #{vae_forward.2} parent=1 // pred_fallthru
      _
    // Predicated region
    $region18: #{vae_forward.2} parent=1 // pred_check
      _
    $region19: #{vae_forward.2} parent=1 // pred_check_branch
      %43 = sbr.rel (0) target = $region21
    $region20: #{vae_forward.2} parent=1 // pred_region
      %45 = dma.done [#allocation5], 656
    $region21: #{vae_forward.2} parent=1 // pred_fallthru
      _
    %v47 = vld [vmem:[%s0] sm:$0xff]
    %v48 = vld [vmem:[%s0 + $0x8] sm:$0xf]
    %v49 = vld [vmem:[#allocation2] sm:$0xff]
    %v50 = vld [vmem:[#allocation2 + $0x8] sm:$0xff]
    %v51 = vld [vmem:[#allocation2 + $0x10] sm:$0xff]
    %v52 = vld [vmem:[#allocation2 + $0x18] sm:$0xff]
    %v53 = vld [vmem:[#allocation2 + $0x20] sm:$0xff]
    %v54 = vld [vmem:[#allocation2 + $0x28] sm:$0xff]
    %v55 = vld [vmem:[#allocation2 + $0x30] sm:$0xff]
    %v56 = vld [vmem:[#allocation2 + $0x38] sm:$0xff]
    %v57 = vld [vmem:[#allocation2 + $0x40] sm:$0xff]
    %v58 = vld [vmem:[#allocation2 + $0x48] sm:$0xff]
    %v59 = vld [vmem:[#allocation2 + $0x50] sm:$0xff]
    %v60 = vld [vmem:[#allocation2 + $0x58] sm:$0xff]
    %v61 = vld [vmem:[#allocation2 + $0x60] sm:$0xff]
    %v62 = vld [vmem:[#allocation2 + $0x68] sm:$0xff]
    %v63 = vld [vmem:[#allocation2 + $0x70] sm:$0xff]
    %v64 = vld [vmem:[#allocation2 + $0x78] sm:$0xff]
    %v65 = vld [vmem:[#allocation2 + $0x80] sm:$0xff]
    %v66 = vld [vmem:[#allocation2 + $0x88] sm:$0xff]
    %v67 = vld [vmem:[#allocation2 + $0x90] sm:$0xff]
    %v68 = vld [vmem:[#allocation2 + $0x98] sm:$0xff]
    %v69 = vld [vmem:[#allocation2 + $0xa0] sm:$0xff]
    %v70 = vld [vmem:[#allocation2 + $0xa8] sm:$0xf]
    %v71 = vld [vmem:[#allocation2 + $0xac] sm:$0xff]
    %v72 = vld [vmem:[#allocation2 + $0xb4] sm:$0xff]
    %v73 = vld [vmem:[#allocation2 + $0xbc] sm:$0xff]
    %v74 = vld [vmem:[#allocation2 + $0xc4] sm:$0xff]
    %v75 = vld [vmem:[#allocation2 + $0xcc] sm:$0xff]
    %v76 = vld [vmem:[#allocation2 + $0xd4] sm:$0xff]
    %v77 = vld [vmem:[#allocation2 + $0xdc] sm:$0xff]
    %v78 = vld [vmem:[#allocation2 + $0xe4] sm:$0xff]
    %v79 = vld [vmem:[#allocation2 + $0xec] sm:$0xff]
    %v80 = vld [vmem:[#allocation2 + $0xf4] sm:$0xff]
    %v81 = vld [vmem:[#allocation2 + $0xfc] sm:$0xff]
    %v82 = vld [vmem:[#allocation2 + $0x104] sm:$0xff]
    %v83 = vld [vmem:[#allocation2 + $0x10c] sm:$0xff]
    %v84 = vld [vmem:[#allocation2 + $0x114] sm:$0xff]
    %v85 = vld [vmem:[#allocation2 + $0x11c] sm:$0xff]
    %v86 = vld [vmem:[#allocation2 + $0x124] sm:$0xff]
    %v87 = vld [vmem:[#allocation2 + $0x12c] sm:$0xff]
    %v88 = vld [vmem:[#allocation2 + $0x134] sm:$0xff]
    %v89 = vld [vmem:[#allocation2 + $0x13c] sm:$0xff]
    %v90 = vld [vmem:[#allocation2 + $0x144] sm:$0xff]
    %v91 = vld [vmem:[#allocation2 + $0x14c] sm:$0xff]
    %v92 = vld [vmem:[#allocation2 + $0x154] sm:$0xf]
    %v93 = vld [vmem:[#allocation2 + $0x158] sm:$0xff]
    %v94 = vld [vmem:[#allocation2 + $0x160] sm:$0xff]
    %v95 = vld [vmem:[#allocation2 + $0x168] sm:$0xff]
    %v96 = vld [vmem:[#allocation2 + $0x170] sm:$0xff]
    %v97 = vld [vmem:[#allocation2 + $0x178] sm:$0xff]
    %v98 = vld [vmem:[#allocation2 + $0x180] sm:$0xff]
    %v99 = vld [vmem:[#allocation2 + $0x188] sm:$0xff]
    %v100 = vld [vmem:[#allocation2 + $0x190] sm:$0xff]
    %v101 = vld [vmem:[#allocation2 + $0x198] sm:$0xff]
    %v102 = vld [vmem:[#allocation2 + $0x1a0] sm:$0xff]
    %v103 = vld [vmem:[#allocation2 + $0x1a8] sm:$0xff]
    %v104 = vld [vmem:[#allocation2 + $0x1b0] sm:$0xff]
    %v105 = vld [vmem:[#allocation2 + $0x1b8] sm:$0xff]
    %v106 = vld [vmem:[#allocation2 + $0x1c0] sm:$0xff]
    %v107 = vld [vmem:[#allocation2 + $0x1c8] sm:$0xff]
    %v108 = vld [vmem:[#allocation2 + $0x1d0] sm:$0xff]
    %v109 = vld [vmem:[#allocation2 + $0x1d8] sm:$0xff]
    %v110 = vld [vmem:[#allocation2 + $0x1e0] sm:$0xff]
    %v111 = vld [vmem:[#allocation2 + $0x1e8] sm:$0xff]
    %v112 = vld [vmem:[#allocation2 + $0x1f0] sm:$0xff]
    %v113 = vld [vmem:[#allocation2 + $0x1f8] sm:$0xff]
    %v114 = vld [vmem:[#allocation2 + $0x200] sm:$0xf]
    %v115 = vld [vmem:[#allocation2 + $0x204] sm:$0xff]
    %v116 = vld [vmem:[#allocation2 + $0x20c] sm:$0xff]
    %v117 = vld [vmem:[#allocation2 + $0x214] sm:$0xff]
    %v118 = vld [vmem:[#allocation2 + $0x21c] sm:$0xff]
    %v119 = vld [vmem:[#allocation2 + $0x224] sm:$0xff]
    %v120 = vld [vmem:[#allocation2 + $0x22c] sm:$0xff]
    %v121 = vld [vmem:[#allocation2 + $0x234] sm:$0xff]
    %v122 = vld [vmem:[#allocation2 + $0x23c] sm:$0xff]
    %v123 = vld [vmem:[#allocation2 + $0x244] sm:$0xff]
    %v124 = vld [vmem:[#allocation2 + $0x24c] sm:$0xff]
    %v125 = vld [vmem:[#allocation2 + $0x254] sm:$0xff]
    %v126 = vld [vmem:[#allocation2 + $0x25c] sm:$0xff]
    %v127 = vld [vmem:[#allocation2 + $0x264] sm:$0xff]
    %v128 = vld [vmem:[#allocation2 + $0x26c] sm:$0xff]
    %v129 = vld [vmem:[#allocation2 + $0x274] sm:$0xff]
    %v130 = vld [vmem:[#allocation2 + $0x27c] sm:$0xff]
    %v131 = vld [vmem:[#allocation2 + $0x284] sm:$0xff]
    %v132 = vld [vmem:[#allocation2 + $0x28c] sm:$0xff]
    %v133 = vld [vmem:[#allocation2 + $0x294] sm:$0xff]
    %v134 = vld [vmem:[#allocation2 + $0x29c] sm:$0xff]
    %v135 = vld [vmem:[#allocation2 + $0x2a4] sm:$0xff]
    %v136 = vld [vmem:[#allocation2 + $0x2ac] sm:$0xf]
    %v137 = vld [vmem:[#allocation2 + $0x2b0] sm:$0xff]
    %v138 = vld [vmem:[#allocation2 + $0x2b8] sm:$0xff]
    %v139 = vld [vmem:[#allocation2 + $0x2c0] sm:$0xff]
    %v140 = vld [vmem:[#allocation2 + $0x2c8] sm:$0xff]
    %v141 = vld [vmem:[#allocation2 + $0x2d0] sm:$0xff]
    %v142 = vld [vmem:[#allocation2 + $0x2d8] sm:$0xff]
    %v143 = vld [vmem:[#allocation2 + $0x2e0] sm:$0xff]
    %v144 = vld [vmem:[#allocation2 + $0x2e8] sm:$0xff]
    %v145 = vld [vmem:[#allocation2 + $0x2f0] sm:$0xff]
    %v146 = vld [vmem:[#allocation2 + $0x2f8] sm:$0xff]
    %v147 = vld [vmem:[#allocation2 + $0x300] sm:$0xff]
    %v148 = vld [vmem:[#allocation2 + $0x308] sm:$0xff]
    %v149 = vld [vmem:[#allocation2 + $0x310] sm:$0xff]
    %v150 = vld [vmem:[#allocation2 + $0x318] sm:$0xff]
    %v151 = vld [vmem:[#allocation2 + $0x320] sm:$0xff]
    %v152 = vld [vmem:[#allocation2 + $0x328] sm:$0xff]
    %v153 = vld [vmem:[#allocation2 + $0x330] sm:$0xff]
    %v154 = vld [vmem:[#allocation2 + $0x338] sm:$0xff]
    %v155 = vld [vmem:[#allocation2 + $0x340] sm:$0xff]
    %v156 = vld [vmem:[#allocation2 + $0x348] sm:$0xff]
    %v157 = vld [vmem:[#allocation2 + $0x350] sm:$0xff]
    %v158 = vld [vmem:[#allocation2 + $0x358] sm:$0xf]
    %v159 = vld [vmem:[#allocation2 + $0x35c] sm:$0xff]
    %v160 = vld [vmem:[#allocation2 + $0x364] sm:$0xff]
    %v161 = vld [vmem:[#allocation2 + $0x36c] sm:$0xff]
    %v162 = vld [vmem:[#allocation2 + $0x374] sm:$0xff]
    %v163 = vld [vmem:[#allocation2 + $0x37c] sm:$0xff]
    %v164 = vld [vmem:[#allocation2 + $0x384] sm:$0xff]
    %v165 = vld [vmem:[#allocation2 + $0x38c] sm:$0xff]
    %v166 = vld [vmem:[#allocation2 + $0x394] sm:$0xff]
    %v167 = vld [vmem:[#allocation2 + $0x39c] sm:$0xff]
    %v168 = vld [vmem:[#allocation2 + $0x3a4] sm:$0xff]
    %v169 = vld [vmem:[#allocation2 + $0x3ac] sm:$0xff]
    %v170 = vld [vmem:[#allocation2 + $0x3b4] sm:$0xff]
    %v171 = vld [vmem:[#allocation2 + $0x3bc] sm:$0xff]
    %v172 = vld [vmem:[#allocation2 + $0x3c4] sm:$0xff]
    %v173 = vld [vmem:[#allocation2 + $0x3cc] sm:$0xff]
    %v174 = vld [vmem:[#allocation2 + $0x3d4] sm:$0xff]
    %v175 = vld [vmem:[#allocation2 + $0x3dc] sm:$0xff]
    %v176 = vld [vmem:[#allocation2 + $0x3e4] sm:$0xff]
    %v177 = vld [vmem:[#allocation2 + $0x3ec] sm:$0xff]
    %v178 = vld [vmem:[#allocation2 + $0x3f4] sm:$0xff]
    %v179 = vld [vmem:[#allocation2 + $0x3fc] sm:$0xff]
    %v180 = vld [vmem:[#allocation2 + $0x404] sm:$0xf]
    %v181 = vld [vmem:[#allocation2 + $0x408] sm:$0xff]
    %v182 = vld [vmem:[#allocation2 + $0x410] sm:$0xff]
    %v183 = vld [vmem:[#allocation2 + $0x418] sm:$0xff]
    %v184 = vld [vmem:[#allocation2 + $0x420] sm:$0xff]
    %v185 = vld [vmem:[#allocation2 + $0x428] sm:$0xff]
    %v186 = vld [vmem:[#allocation2 + $0x430] sm:$0xff]
    %v187 = vld [vmem:[#allocation2 + $0x438] sm:$0xff]
    %v188 = vld [vmem:[#allocation2 + $0x440] sm:$0xff]
    %v189 = vld [vmem:[#allocation2 + $0x448] sm:$0xff]
    %v190 = vld [vmem:[#allocation2 + $0x450] sm:$0xff]
    %v191 = vld [vmem:[#allocation2 + $0x458] sm:$0xff]
    %v192 = vld [vmem:[#allocation2 + $0x460] sm:$0xff]
    %v193 = vld [vmem:[#allocation2 + $0x468] sm:$0xff]
    %v194 = vld [vmem:[#allocation2 + $0x470] sm:$0xff]
    %v195 = vld [vmem:[#allocation2 + $0x478] sm:$0xff]
    %v196 = vld [vmem:[#allocation2 + $0x480] sm:$0xff]
    %v197 = vld [vmem:[#allocation2 + $0x488] sm:$0xff]
    %v198 = vld [vmem:[#allocation2 + $0x490] sm:$0xff]
    %v199 = vld [vmem:[#allocation2 + $0x498] sm:$0xff]
    %v200 = vld [vmem:[#allocation2 + $0x4a0] sm:$0xff]
    %v201 = vld [vmem:[#allocation2 + $0x4a8] sm:$0xff]
    %v202 = vld [vmem:[#allocation2 + $0x4b0] sm:$0xf]
    %v203 = vld [vmem:[#allocation2 + $0x4b4] sm:$0xff]
    %v204 = vld [vmem:[#allocation2 + $0x4bc] sm:$0xff]
    %v205 = vld [vmem:[#allocation2 + $0x4c4] sm:$0xff]
    %v206 = vld [vmem:[#allocation2 + $0x4cc] sm:$0xff]
    %v207 = vld [vmem:[#allocation2 + $0x4d4] sm:$0xff]
    %v208 = vld [vmem:[#allocation2 + $0x4dc] sm:$0xff]
    %v209 = vld [vmem:[#allocation2 + $0x4e4] sm:$0xff]
    %v210 = vld [vmem:[#allocation2 + $0x4ec] sm:$0xff]
    %v211 = vld [vmem:[#allocation2 + $0x4f4] sm:$0xff]
    %v212 = vld [vmem:[#allocation2 + $0x4fc] sm:$0xff]
    %v213 = vld [vmem:[#allocation2 + $0x504] sm:$0xff]
    %v214 = vld [vmem:[#allocation2 + $0x50c] sm:$0xff]
    %v215 = vld [vmem:[#allocation2 + $0x514] sm:$0xff]
    %v216 = vld [vmem:[#allocation2 + $0x51c] sm:$0xff]
    %v217 = vld [vmem:[#allocation2 + $0x524] sm:$0xff]
    %v218 = vld [vmem:[#allocation2 + $0x52c] sm:$0xff]
    %v219 = vld [vmem:[#allocation2 + $0x534] sm:$0xff]
    %v220 = vld [vmem:[#allocation2 + $0x53c] sm:$0xff]
    %v221 = vld [vmem:[#allocation2 + $0x544] sm:$0xff]
    %v222 = vld [vmem:[#allocation2 + $0x54c] sm:$0xff]
    %v223 = vld [vmem:[#allocation2 + $0x554] sm:$0xff]
    %v224 = vld [vmem:[#allocation2 + $0x55c] sm:$0xf]
    %v225 = vld [vmem:[#allocation2 + $0x560] sm:$0xff]
    %v226 = vld [vmem:[#allocation2 + $0x568] sm:$0xff]
    %v227 = vld [vmem:[#allocation2 + $0x570] sm:$0xff]
    %v228 = vld [vmem:[#allocation2 + $0x578] sm:$0xff]
    %v229 = vld [vmem:[#allocation2 + $0x580] sm:$0xff]
    %v230 = vld [vmem:[#allocation2 + $0x588] sm:$0xff]
    %v231 = vld [vmem:[#allocation2 + $0x590] sm:$0xff]
    %v232 = vld [vmem:[#allocation2 + $0x598] sm:$0xff]
    %v233 = vld [vmem:[#allocation2 + $0x5a0] sm:$0xff]
    %v234 = vld [vmem:[#allocation2 + $0x5a8] sm:$0xff]
    %v235 = vld [vmem:[#allocation2 + $0x5b0] sm:$0xff]
    %v236 = vld [vmem:[#allocation2 + $0x5b8] sm:$0xff]
    %v237 = vld [vmem:[#allocation2 + $0x5c0] sm:$0xff]
    %v238 = vld [vmem:[#allocation2 + $0x5c8] sm:$0xff]
    %v239 = vld [vmem:[#allocation2 + $0x5d0] sm:$0xff]
    %v240 = vld [vmem:[#allocation2 + $0x5d8] sm:$0xff]
    %v241 = vld [vmem:[#allocation2 + $0x5e0] sm:$0xff]
    %v242 = vld [vmem:[#allocation2 + $0x5e8] sm:$0xff]
    %v243 = vld [vmem:[#allocation2 + $0x5f0] sm:$0xff]
    %v244 = vld [vmem:[#allocation2 + $0x5f8] sm:$0xff]
    %v245 = vld [vmem:[#allocation2 + $0x600] sm:$0xff]
    %v246 = vld [vmem:[#allocation2 + $0x608] sm:$0xf]
    %v247 = vld [vmem:[#allocation2 + $0x60c] sm:$0xff]
    %v248 = vld [vmem:[#allocation2 + $0x614] sm:$0xff]
    %v249 = vld [vmem:[#allocation2 + $0x61c] sm:$0xff]
    %v250 = vld [vmem:[#allocation2 + $0x624] sm:$0xff]
    %v251 = vld [vmem:[#allocation2 + $0x62c] sm:$0xff]
    %v252 = vld [vmem:[#allocation2 + $0x634] sm:$0xff]
    %v253 = vld [vmem:[#allocation2 + $0x63c] sm:$0xff]
    %v254 = vld [vmem:[#allocation2 + $0x644] sm:$0xff]
    %v255 = vld [vmem:[#allocation2 + $0x64c] sm:$0xff]
    %v256 = vld [vmem:[#allocation2 + $0x654] sm:$0xff]
    %v257 = vld [vmem:[#allocation2 + $0x65c] sm:$0xff]
    %v258 = vld [vmem:[#allocation2 + $0x664] sm:$0xff]
    %v259 = vld [vmem:[#allocation2 + $0x66c] sm:$0xff]
    %v260 = vld [vmem:[#allocation2 + $0x674] sm:$0xff]
    %v261 = vld [vmem:[#allocation2 + $0x67c] sm:$0xff]
    %v262 = vld [vmem:[#allocation2 + $0x684] sm:$0xff]
    %v263 = vld [vmem:[#allocation2 + $0x68c] sm:$0xff]
    %v264 = vld [vmem:[#allocation2 + $0x694] sm:$0xff]
    %v265 = vld [vmem:[#allocation2 + $0x69c] sm:$0xff]
    %v266 = vld [vmem:[#allocation2 + $0x6a4] sm:$0xff]
    %v267 = vld [vmem:[#allocation2 + $0x6ac] sm:$0xff]
    %v268 = vld [vmem:[#allocation2 + $0x6b4] sm:$0xf]
    %v269 = vld [vmem:[#allocation2 + $0x6b8] sm:$0xff]
    %v270 = vld [vmem:[#allocation2 + $0x6c0] sm:$0xff]
    %v271 = vld [vmem:[#allocation2 + $0x6c8] sm:$0xff]
    %v272 = vld [vmem:[#allocation2 + $0x6d0] sm:$0xff]
    %v273 = vld [vmem:[#allocation2 + $0x6d8] sm:$0xff]
    %v274 = vld [vmem:[#allocation2 + $0x6e0] sm:$0xff]
    %v275 = vld [vmem:[#allocation2 + $0x6e8] sm:$0xff]
    %v276 = vld [vmem:[#allocation2 + $0x6f0] sm:$0xff]
    %v277 = vld [vmem:[#allocation2 + $0x6f8] sm:$0xff]
    %v278 = vld [vmem:[#allocation2 + $0x700] sm:$0xff]
    %v279 = vld [vmem:[#allocation2 + $0x708] sm:$0xff]
    %v280 = vld [vmem:[#allocation2 + $0x710] sm:$0xff]
    %v281 = vld [vmem:[#allocation2 + $0x718] sm:$0xff]
    %v282 = vld [vmem:[#allocation2 + $0x720] sm:$0xff]
    %v283 = vld [vmem:[#allocation2 + $0x728] sm:$0xff]
    %v284 = vld [vmem:[#allocation2 + $0x730] sm:$0xff]
    %v285 = vld [vmem:[#allocation2 + $0x738] sm:$0xff]
    %v286 = vld [vmem:[#allocation2 + $0x740] sm:$0xff]
    %v287 = vld [vmem:[#allocation2 + $0x748] sm:$0xff]
    %v288 = vld [vmem:[#allocation2 + $0x750] sm:$0xff]
    %v289 = vld [vmem:[#allocation2 + $0x758] sm:$0xff]
    %v290 = vld [vmem:[#allocation2 + $0x760] sm:$0xf]
    %v291 = vld [vmem:[#allocation2 + $0x764] sm:$0xff]
    %v292 = vld [vmem:[#allocation2 + $0x76c] sm:$0xff]
    %v293 = vld [vmem:[#allocation2 + $0x774] sm:$0xff]
    %v294 = vld [vmem:[#allocation2 + $0x77c] sm:$0xff]
    %v295 = vld [vmem:[#allocation2 + $0x784] sm:$0xff]
    %v296 = vld [vmem:[#allocation2 + $0x78c] sm:$0xff]
    %v297 = vld [vmem:[#allocation2 + $0x794] sm:$0xff]
    %v298 = vld [vmem:[#allocation2 + $0x79c] sm:$0xff]
    %v299 = vld [vmem:[#allocation2 + $0x7a4] sm:$0xff]
    %v300 = vld [vmem:[#allocation2 + $0x7ac] sm:$0xff]
    %v301 = vld [vmem:[#allocation2 + $0x7b4] sm:$0xff]
    %v302 = vld [vmem:[#allocation2 + $0x7bc] sm:$0xff]
    %v303 = vld [vmem:[#allocation2 + $0x7c4] sm:$0xff]
    %v304 = vld [vmem:[#allocation2 + $0x7cc] sm:$0xff]
    %v305 = vld [vmem:[#allocation2 + $0x7d4] sm:$0xff]
    %v306 = vld [vmem:[#allocation2 + $0x7dc] sm:$0xff]
    %v307 = vld [vmem:[#allocation2 + $0x7e4] sm:$0xff]
    %v308 = vld [vmem:[#allocation2 + $0x7ec] sm:$0xff]
    %v309 = vld [vmem:[#allocation2 + $0x7f4] sm:$0xff]
    %v310 = vld [vmem:[#allocation2 + $0x7fc] sm:$0xff]
    %v311 = vld [vmem:[#allocation2 + $0x804] sm:$0xff]
    %v312 = vld [vmem:[#allocation2 + $0x80c] sm:$0xf]
    %v313 = vld [vmem:[#allocation2 + $0x810] sm:$0xff]
    %v314 = vld [vmem:[#allocation2 + $0x818] sm:$0xff]
    %v315 = vld [vmem:[#allocation2 + $0x820] sm:$0xff]
    %v316 = vld [vmem:[#allocation2 + $0x828] sm:$0xff]
    %v317 = vld [vmem:[#allocation2 + $0x830] sm:$0xff]
    %v318 = vld [vmem:[#allocation2 + $0x838] sm:$0xff]
    %v319 = vld [vmem:[#allocation2 + $0x840] sm:$0xff]
    %v320 = vld [vmem:[#allocation2 + $0x848] sm:$0xff]
    %v321 = vld [vmem:[#allocation2 + $0x850] sm:$0xff]
    %v322 = vld [vmem:[#allocation2 + $0x858] sm:$0xff]
    %v323 = vld [vmem:[#allocation2 + $0x860] sm:$0xff]
    %v324 = vld [vmem:[#allocation2 + $0x868] sm:$0xff]
    %v325 = vld [vmem:[#allocation2 + $0x870] sm:$0xff]
    %v326 = vld [vmem:[#allocation2 + $0x878] sm:$0xff]
    %v327 = vld [vmem:[#allocation2 + $0x880] sm:$0xff]
    %v328 = vld [vmem:[#allocation2 + $0x888] sm:$0xff]
    %v329 = vld [vmem:[#allocation2 + $0x890] sm:$0xff]
    %v330 = vld [vmem:[#allocation2 + $0x898] sm:$0xff]
    %v331 = vld [vmem:[#allocation2 + $0x8a0] sm:$0xff]
    %v332 = vld [vmem:[#allocation2 + $0x8a8] sm:$0xff]
    %v333 = vld [vmem:[#allocation2 + $0x8b0] sm:$0xff]
    %v334 = vld [vmem:[#allocation2 + $0x8b8] sm:$0xf]
    %v335 = vld [vmem:[#allocation2 + $0x8bc] sm:$0xff]
    %v336 = vld [vmem:[#allocation2 + $0x8c4] sm:$0xff]
    %v337 = vld [vmem:[#allocation2 + $0x8cc] sm:$0xff]
    %v338 = vld [vmem:[#allocation2 + $0x8d4] sm:$0xff]
    %v339 = vld [vmem:[#allocation2 + $0x8dc] sm:$0xff]
    %v340 = vld [vmem:[#allocation2 + $0x8e4] sm:$0xff]
    %v341 = vld [vmem:[#allocation2 + $0x8ec] sm:$0xff]
    %v342 = vld [vmem:[#allocation2 + $0x8f4] sm:$0xff]
    %v343 = vld [vmem:[#allocation2 + $0x8fc] sm:$0xff]
    %v344 = vld [vmem:[#allocation2 + $0x904] sm:$0xff]
    %v345 = vld [vmem:[#allocation2 + $0x90c] sm:$0xff]
    %v346 = vld [vmem:[#allocation2 + $0x914] sm:$0xff]
    %v347 = vld [vmem:[#allocation2 + $0x91c] sm:$0xff]
    %v348 = vld [vmem:[#allocation2 + $0x924] sm:$0xff]
    %v349 = vld [vmem:[#allocation2 + $0x92c] sm:$0xff]
    %v350 = vld [vmem:[#allocation2 + $0x934] sm:$0xff]
    %v351 = vld [vmem:[#allocation2 + $0x93c] sm:$0xff]
    %v352 = vld [vmem:[#allocation2 + $0x944] sm:$0xff]
    %v353 = vld [vmem:[#allocation2 + $0x94c] sm:$0xff]
    %v354 = vld [vmem:[#allocation2 + $0x954] sm:$0xff]
    %v355 = vld [vmem:[#allocation2 + $0x95c] sm:$0xff]
    %v356 = vld [vmem:[#allocation2 + $0x964] sm:$0xf]
    %v357 = vld [vmem:[#allocation2 + $0x968] sm:$0xff]
    %v358 = vld [vmem:[#allocation2 + $0x970] sm:$0xff]
    %v359 = vld [vmem:[#allocation2 + $0x978] sm:$0xff]
    %v360 = vld [vmem:[#allocation2 + $0x980] sm:$0xff]
    %v361 = vld [vmem:[#allocation2 + $0x988] sm:$0xff]
    %v362 = vld [vmem:[#allocation2 + $0x990] sm:$0xff]
    %v363 = vld [vmem:[#allocation2 + $0x998] sm:$0xff]
    %v364 = vld [vmem:[#allocation2 + $0x9a0] sm:$0xff]
    %v365 = vld [vmem:[#allocation2 + $0x9a8] sm:$0xff]
    %v366 = vld [vmem:[#allocation2 + $0x9b0] sm:$0xff]
    %v367 = vld [vmem:[#allocation2 + $0x9b8] sm:$0xff]
    %v368 = vld [vmem:[#allocation2 + $0x9c0] sm:$0xff]
    %v369 = vld [vmem:[#allocation2 + $0x9c8] sm:$0xff]
    %v370 = vld [vmem:[#allocation2 + $0x9d0] sm:$0xff]
    %v371 = vld [vmem:[#allocation2 + $0x9d8] sm:$0xff]
    %v372 = vld [vmem:[#allocation2 + $0x9e0] sm:$0xff]
    %v373 = vld [vmem:[#allocation2 + $0x9e8] sm:$0xff]
    %v374 = vld [vmem:[#allocation2 + $0x9f0] sm:$0xff]
    %v375 = vld [vmem:[#allocation2 + $0x9f8] sm:$0xff]
    %v376 = vld [vmem:[#allocation2 + $0xa00] sm:$0xff]
    %v377 = vld [vmem:[#allocation2 + $0xa08] sm:$0xff]
    %v378 = vld [vmem:[#allocation2 + $0xa10] sm:$0xf]
    %v379 = vld [vmem:[#allocation2 + $0xa14] sm:$0xff]
    %v380 = vld [vmem:[#allocation2 + $0xa1c] sm:$0xff]
    %v381 = vld [vmem:[#allocation2 + $0xa24] sm:$0xff]
    %v382 = vld [vmem:[#allocation2 + $0xa2c] sm:$0xff]
    %v383 = vld [vmem:[#allocation2 + $0xa34] sm:$0xff]
    %v384 = vld [vmem:[#allocation2 + $0xa3c] sm:$0xff]
    %v385 = vld [vmem:[#allocation2 + $0xa44] sm:$0xff]
    %v386 = vld [vmem:[#allocation2 + $0xa4c] sm:$0xff]
    %v387 = vld [vmem:[#allocation2 + $0xa54] sm:$0xff]
    %v388 = vld [vmem:[#allocation2 + $0xa5c] sm:$0xff]
    %v389 = vld [vmem:[#allocation2 + $0xa64] sm:$0xff]
    %v390 = vld [vmem:[#allocation2 + $0xa6c] sm:$0xff]
    %v391 = vld [vmem:[#allocation2 + $0xa74] sm:$0xff]
    %v392 = vld [vmem:[#allocation2 + $0xa7c] sm:$0xff]
    %v393 = vld [vmem:[#allocation2 + $0xa84] sm:$0xff]
    %v394 = vld [vmem:[#allocation2 + $0xa8c] sm:$0xff]
    %v395 = vld [vmem:[#allocation2 + $0xa94] sm:$0xff]
    %v396 = vld [vmem:[#allocation2 + $0xa9c] sm:$0xff]
    %v397 = vld [vmem:[#allocation2 + $0xaa4] sm:$0xff]
    %v398 = vld [vmem:[#allocation2 + $0xaac] sm:$0xff]
    %v399 = vld [vmem:[#allocation2 + $0xab4] sm:$0xff]
    %v400 = vld [vmem:[#allocation2 + $0xabc] sm:$0xf]
    %v401 = vld [vmem:[#allocation2 + $0xac0] sm:$0xff]
    %v402 = vld [vmem:[#allocation2 + $0xac8] sm:$0xff]
    %v403 = vld [vmem:[#allocation2 + $0xad0] sm:$0xff]
    %v404 = vld [vmem:[#allocation2 + $0xad8] sm:$0xff]
    %v405 = vld [vmem:[#allocation2 + $0xae0] sm:$0xff]
    %v406 = vld [vmem:[#allocation2 + $0xae8] sm:$0xff]
    %v407 = vld [vmem:[#allocation2 + $0xaf0] sm:$0xff]
    %v408 = vld [vmem:[#allocation2 + $0xaf8] sm:$0xff]
    %v409 = vld [vmem:[#allocation2 + $0xb00] sm:$0xff]
    %v410 = vld [vmem:[#allocation2 + $0xb08] sm:$0xff]
    %v411 = vld [vmem:[#allocation2 + $0xb10] sm:$0xff]
    %v412 = vld [vmem:[#allocation2 + $0xb18] sm:$0xff]
    %v413 = vld [vmem:[#allocation2 + $0xb20] sm:$0xff]
    %v414 = vld [vmem:[#allocation2 + $0xb28] sm:$0xff]
    %v415 = vld [vmem:[#allocation2 + $0xb30] sm:$0xff]
    %v416 = vld [vmem:[#allocation2 + $0xb38] sm:$0xff]
    %v417 = vld [vmem:[#allocation2 + $0xb40] sm:$0xff]
    %v418 = vld [vmem:[#allocation2 + $0xb48] sm:$0xff]
    %v419 = vld [vmem:[#allocation2 + $0xb50] sm:$0xff]
    %v420 = vld [vmem:[#allocation2 + $0xb58] sm:$0xff]
    %v421 = vld [vmem:[#allocation2 + $0xb60] sm:$0xff]
    %v422 = vld [vmem:[#allocation2 + $0xb68] sm:$0xf]
    %v423 = vld [vmem:[#allocation2 + $0xb6c] sm:$0xff]
    %v424 = vld [vmem:[#allocation2 + $0xb74] sm:$0xff]
    %v425 = vld [vmem:[#allocation2 + $0xb7c] sm:$0xff]
    %v426 = vld [vmem:[#allocation2 + $0xb84] sm:$0xff]
    %v427 = vld [vmem:[#allocation2 + $0xb8c] sm:$0xff]
    %v428 = vld [vmem:[#allocation2 + $0xb94] sm:$0xff]
    %v429 = vld [vmem:[#allocation2 + $0xb9c] sm:$0xff]
    %v430 = vld [vmem:[#allocation2 + $0xba4] sm:$0xff]
    %v431 = vld [vmem:[#allocation2 + $0xbac] sm:$0xff]
    %v432 = vld [vmem:[#allocation2 + $0xbb4] sm:$0xff]
    %v433 = vld [vmem:[#allocation2 + $0xbbc] sm:$0xff]
    %v434 = vld [vmem:[#allocation2 + $0xbc4] sm:$0xff]
    %v435 = vld [vmem:[#allocation2 + $0xbcc] sm:$0xff]
    %v436 = vld [vmem:[#allocation2 + $0xbd4] sm:$0xff]
    %v437 = vld [vmem:[#allocation2 + $0xbdc] sm:$0xff]
    %v438 = vld [vmem:[#allocation2 + $0xbe4] sm:$0xff]
    %v439 = vld [vmem:[#allocation2 + $0xbec] sm:$0xff]
    %v440 = vld [vmem:[#allocation2 + $0xbf4] sm:$0xff]
    %v441 = vld [vmem:[#allocation2 + $0xbfc] sm:$0xff]
    %v442 = vld [vmem:[#allocation2 + $0xc04] sm:$0xff]
    %v443 = vld [vmem:[#allocation2 + $0xc0c] sm:$0xff]
    %v444 = vld [vmem:[#allocation2 + $0xc14] sm:$0xf]
    %v445 = vld [vmem:[#allocation2 + $0xc18] sm:$0xff]
    %v446 = vld [vmem:[#allocation2 + $0xc20] sm:$0xff]
    %v447 = vld [vmem:[#allocation2 + $0xc28] sm:$0xff]
    %v448 = vld [vmem:[#allocation2 + $0xc30] sm:$0xff]
    %v449 = vld [vmem:[#allocation2 + $0xc38] sm:$0xff]
    %v450 = vld [vmem:[#allocation2 + $0xc40] sm:$0xff]
    %v451 = vld [vmem:[#allocation2 + $0xc48] sm:$0xff]
    %v452 = vld [vmem:[#allocation2 + $0xc50] sm:$0xff]
    %v453 = vld [vmem:[#allocation2 + $0xc58] sm:$0xff]
    %v454 = vld [vmem:[#allocation2 + $0xc60] sm:$0xff]
    %v455 = vld [vmem:[#allocation2 + $0xc68] sm:$0xff]
    %v456 = vld [vmem:[#allocation2 + $0xc70] sm:$0xff]
    %v457 = vld [vmem:[#allocation2 + $0xc78] sm:$0xff]
    %v458 = vld [vmem:[#allocation2 + $0xc80] sm:$0xff]
    %v459 = vld [vmem:[#allocation2 + $0xc88] sm:$0xff]
    %v460 = vld [vmem:[#allocation2 + $0xc90] sm:$0xff]
    %v461 = vld [vmem:[#allocation2 + $0xc98] sm:$0xff]
    %v462 = vld [vmem:[#allocation2 + $0xca0] sm:$0xff]
    %v463 = vld [vmem:[#allocation2 + $0xca8] sm:$0xff]
    %v464 = vld [vmem:[#allocation2 + $0xcb0] sm:$0xff]
    %v465 = vld [vmem:[#allocation2 + $0xcb8] sm:$0xff]
    %v466 = vld [vmem:[#allocation2 + $0xcc0] sm:$0xf]
    %v467 = vld [vmem:[#allocation2 + $0xcc4] sm:$0xff]
    %v468 = vld [vmem:[#allocation2 + $0xccc] sm:$0xff]
    %v469 = vld [vmem:[#allocation2 + $0xcd4] sm:$0xff]
    %v470 = vld [vmem:[#allocation2 + $0xcdc] sm:$0xff]
    %v471 = vld [vmem:[#allocation2 + $0xce4] sm:$0xff]
    %v472 = vld [vmem:[#allocation2 + $0xcec] sm:$0xff]
    %v473 = vld [vmem:[#allocation2 + $0xcf4] sm:$0xff]
    %v474 = vld [vmem:[#allocation2 + $0xcfc] sm:$0xff]
    %v475 = vld [vmem:[#allocation2 + $0xd04] sm:$0xff]
    %v476 = vld [vmem:[#allocation2 + $0xd0c] sm:$0xff]
    %v477 = vld [vmem:[#allocation2 + $0xd14] sm:$0xff]
    %v478 = vld [vmem:[#allocation2 + $0xd1c] sm:$0xff]
    %v479 = vld [vmem:[#allocation2 + $0xd24] sm:$0xff]
    %v480 = vld [vmem:[#allocation2 + $0xd2c] sm:$0xff]
    %v481 = vld [vmem:[#allocation2 + $0xd34] sm:$0xff]
    %v482 = vld [vmem:[#allocation2 + $0xd3c] sm:$0xff]
    %v483 = vld [vmem:[#allocation2 + $0xd44] sm:$0xff]
    %v484 = vld [vmem:[#allocation2 + $0xd4c] sm:$0xff]
    %v485 = vld [vmem:[#allocation2 + $0xd54] sm:$0xff]
    %v486 = vld [vmem:[#allocation2 + $0xd5c] sm:$0xff]
    %v487 = vld [vmem:[#allocation2 + $0xd64] sm:$0xff]
    %v488 = vld [vmem:[#allocation2 + $0xd6c] sm:$0xf]
    %v489 = vld [vmem:[#allocation2 + $0xd70] sm:$0xff]
    %v490 = vld [vmem:[#allocation2 + $0xd78] sm:$0xff]
    %v491 = vld [vmem:[#allocation2 + $0xd80] sm:$0xff]
    %v492 = vld [vmem:[#allocation2 + $0xd88] sm:$0xff]
    %v493 = vld [vmem:[#allocation2 + $0xd90] sm:$0xff]
    %v494 = vld [vmem:[#allocation2 + $0xd98] sm:$0xff]
    %v495 = vld [vmem:[#allocation2 + $0xda0] sm:$0xff]
    %v496 = vld [vmem:[#allocation2 + $0xda8] sm:$0xff]
    %v497 = vld [vmem:[#allocation2 + $0xdb0] sm:$0xff]
    %v498 = vld [vmem:[#allocation2 + $0xdb8] sm:$0xff]
    %v499 = vld [vmem:[#allocation2 + $0xdc0] sm:$0xff]
    %v500 = vld [vmem:[#allocation2 + $0xdc8] sm:$0xff]
    %v501 = vld [vmem:[#allocation2 + $0xdd0] sm:$0xff]
    %v502 = vld [vmem:[#allocation2 + $0xdd8] sm:$0xff]
    %v503 = vld [vmem:[#allocation2 + $0xde0] sm:$0xff]
    %v504 = vld [vmem:[#allocation2 + $0xde8] sm:$0xff]
    %v505 = vld [vmem:[#allocation2 + $0xdf0] sm:$0xff]
    %v506 = vld [vmem:[#allocation2 + $0xdf8] sm:$0xff]
    %v507 = vld [vmem:[#allocation2 + $0xe00] sm:$0xff]
    %v508 = vld [vmem:[#allocation2 + $0xe08] sm:$0xff]
    %v509 = vld [vmem:[#allocation2 + $0xe10] sm:$0xff]
    %v510 = vld [vmem:[#allocation2 + $0xe18] sm:$0xf]
    %v511 = vld [vmem:[#allocation2 + $0xe1c] sm:$0xff]
    %v512 = vld [vmem:[#allocation2 + $0xe24] sm:$0xff]
    %v513 = vld [vmem:[#allocation2 + $0xe2c] sm:$0xff]
    %v514 = vld [vmem:[#allocation2 + $0xe34] sm:$0xff]
    %v515 = vld [vmem:[#allocation2 + $0xe3c] sm:$0xff]
    %v516 = vld [vmem:[#allocation2 + $0xe44] sm:$0xff]
    %v517 = vld [vmem:[#allocation2 + $0xe4c] sm:$0xff]
    %v518 = vld [vmem:[#allocation2 + $0xe54] sm:$0xff]
    %v519 = vld [vmem:[#allocation2 + $0xe5c] sm:$0xff]
    %v520 = vld [vmem:[#allocation2 + $0xe64] sm:$0xff]
    %v521 = vld [vmem:[#allocation2 + $0xe6c] sm:$0xff]
    %v522 = vld [vmem:[#allocation2 + $0xe74] sm:$0xff]
    %v523 = vld [vmem:[#allocation2 + $0xe7c] sm:$0xff]
    %v524 = vld [vmem:[#allocation2 + $0xe84] sm:$0xff]
    %v525 = vld [vmem:[#allocation2 + $0xe8c] sm:$0xff]
    %v526 = vld [vmem:[#allocation2 + $0xe94] sm:$0xff]
    %v527 = vld [vmem:[#allocation2 + $0xe9c] sm:$0xff]
    %v528 = vld [vmem:[#allocation2 + $0xea4] sm:$0xff]
    %v529 = vld [vmem:[#allocation2 + $0xeac] sm:$0xff]
    %v530 = vld [vmem:[#allocation2 + $0xeb4] sm:$0xff]
    %v531 = vld [vmem:[#allocation2 + $0xebc] sm:$0xff]
    %v532 = vld [vmem:[#allocation2 + $0xec4] sm:$0xf]
    %v533 = vld [vmem:[#allocation2 + $0xec8] sm:$0xff]
    %v534 = vld [vmem:[#allocation2 + $0xed0] sm:$0xff]
    %v535 = vld [vmem:[#allocation2 + $0xed8] sm:$0xff]
    %v536 = vld [vmem:[#allocation2 + $0xee0] sm:$0xff]
    %v537 = vld [vmem:[#allocation2 + $0xee8] sm:$0xff]
    %v538 = vld [vmem:[#allocation2 + $0xef0] sm:$0xff]
    %v539 = vld [vmem:[#allocation2 + $0xef8] sm:$0xff]
    %v540 = vld [vmem:[#allocation2 + $0xf00] sm:$0xff]
    %v541 = vld [vmem:[#allocation2 + $0xf08] sm:$0xff]
    %v542 = vld [vmem:[#allocation2 + $0xf10] sm:$0xff]
    %v543 = vld [vmem:[#allocation2 + $0xf18] sm:$0xff]
    %v544 = vld [vmem:[#allocation2 + $0xf20] sm:$0xff]
    %v545 = vld [vmem:[#allocation2 + $0xf28] sm:$0xff]
    %v546 = vld [vmem:[#allocation2 + $0xf30] sm:$0xff]
    %v547 = vld [vmem:[#allocation2 + $0xf38] sm:$0xff]
    %v548 = vld [vmem:[#allocation2 + $0xf40] sm:$0xff]
    %v549 = vld [vmem:[#allocation2 + $0xf48] sm:$0xff]
    %v550 = vld [vmem:[#allocation2 + $0xf50] sm:$0xff]
    %v551 = vld [vmem:[#allocation2 + $0xf58] sm:$0xff]
    %v552 = vld [vmem:[#allocation2 + $0xf60] sm:$0xff]
    %v553 = vld [vmem:[#allocation2 + $0xf68] sm:$0xff]
    %v554 = vld [vmem:[#allocation2 + $0xf70] sm:$0xf]
    %v555 = vld [vmem:[#allocation2 + $0xf74] sm:$0xff]
    %v556 = vld [vmem:[#allocation2 + $0xf7c] sm:$0xff]
    %v557 = vld [vmem:[#allocation2 + $0xf84] sm:$0xff]
    %v558 = vld [vmem:[#allocation2 + $0xf8c] sm:$0xff]
    %v559 = vld [vmem:[#allocation2 + $0xf94] sm:$0xff]
    %v560 = vld [vmem:[#allocation2 + $0xf9c] sm:$0xff]
    %v561 = vld [vmem:[#allocation2 + $0xfa4] sm:$0xff]
    %v562 = vld [vmem:[#allocation2 + $0xfac] sm:$0xff]
    %v563 = vld [vmem:[#allocation2 + $0xfb4] sm:$0xff]
    %v564 = vld [vmem:[#allocation2 + $0xfbc] sm:$0xff]
    %v565 = vld [vmem:[#allocation2 + $0xfc4] sm:$0xff]
    %v566 = vld [vmem:[#allocation2 + $0xfcc] sm:$0xff]
    %v567 = vld [vmem:[#allocation2 + $0xfd4] sm:$0xff]
    %v568 = vld [vmem:[#allocation2 + $0xfdc] sm:$0xff]
    %v569 = vld [vmem:[#allocation2 + $0xfe4] sm:$0xff]
    %v570 = vld [vmem:[#allocation2 + $0xfec] sm:$0xff]
    %v571 = vld [vmem:[#allocation2 + $0xff4] sm:$0xff]
    %v572 = vld [vmem:[#allocation2 + $0xffc] sm:$0xff]
    %v573 = vld [vmem:[#allocation2 + $0x1004] sm:$0xff]
    %v574 = vld [vmem:[#allocation2 + $0x100c] sm:$0xff]
    %v575 = vld [vmem:[#allocation2 + $0x1014] sm:$0xff]
    %v576 = vld [vmem:[#allocation2 + $0x101c] sm:$0xf]
    %v577 = vld [vmem:[#allocation2 + $0x1020] sm:$0xff]
    %v578 = vld [vmem:[#allocation2 + $0x1028] sm:$0xff]
    %v579 = vld [vmem:[#allocation2 + $0x1030] sm:$0xff]
    %v580 = vld [vmem:[#allocation2 + $0x1038] sm:$0xff]
    %v581 = vld [vmem:[#allocation2 + $0x1040] sm:$0xff]
    %v582 = vld [vmem:[#allocation2 + $0x1048] sm:$0xff]
    %v583 = vld [vmem:[#allocation2 + $0x1050] sm:$0xff]
    %v584 = vld [vmem:[#allocation2 + $0x1058] sm:$0xff]
    %v585 = vld [vmem:[#allocation2 + $0x1060] sm:$0xff]
    %v586 = vld [vmem:[#allocation2 + $0x1068] sm:$0xff]
    %v587 = vld [vmem:[#allocation2 + $0x1070] sm:$0xff]
    %v588 = vld [vmem:[#allocation2 + $0x1078] sm:$0xff]
    %v589 = vld [vmem:[#allocation2 + $0x1080] sm:$0xff]
    %v590 = vld [vmem:[#allocation2 + $0x1088] sm:$0xff]
    %v591 = vld [vmem:[#allocation2 + $0x1090] sm:$0xff]
    %v592 = vld [vmem:[#allocation2 + $0x1098] sm:$0xff]
    %v593 = vld [vmem:[#allocation2 + $0x10a0] sm:$0xff]
    %v594 = vld [vmem:[#allocation2 + $0x10a8] sm:$0xff]
    %v595 = vld [vmem:[#allocation2 + $0x10b0] sm:$0xff]
    %v596 = vld [vmem:[#allocation2 + $0x10b8] sm:$0xff]
    %v597 = vld [vmem:[#allocation2 + $0x10c0] sm:$0xff]
    %v598 = vld [vmem:[#allocation2 + $0x10c8] sm:$0xf]
    %v599 = vld [vmem:[#allocation2 + $0x10cc] sm:$0xff]
    %v600 = vld [vmem:[#allocation2 + $0x10d4] sm:$0xff]
    %v601 = vld [vmem:[#allocation2 + $0x10dc] sm:$0xff]
    %v602 = vld [vmem:[#allocation2 + $0x10e4] sm:$0xff]
    %v603 = vld [vmem:[#allocation2 + $0x10ec] sm:$0xff]
    %v604 = vld [vmem:[#allocation2 + $0x10f4] sm:$0xff]
    %v605 = vld [vmem:[#allocation2 + $0x10fc] sm:$0xff]
    %v606 = vld [vmem:[#allocation2 + $0x1104] sm:$0xff]
    %v607 = vld [vmem:[#allocation2 + $0x110c] sm:$0xff]
    %v608 = vld [vmem:[#allocation2 + $0x1114] sm:$0xff]
    %v609 = vld [vmem:[#allocation2 + $0x111c] sm:$0xff]
    %v610 = vld [vmem:[#allocation2 + $0x1124] sm:$0xff]
    %v611 = vld [vmem:[#allocation2 + $0x112c] sm:$0xff]
    %v612 = vld [vmem:[#allocation2 + $0x1134] sm:$0xff]
    %v613 = vld [vmem:[#allocation2 + $0x113c] sm:$0xff]
    %v614 = vld [vmem:[#allocation2 + $0x1144] sm:$0xff]
    %v615 = vld [vmem:[#allocation2 + $0x114c] sm:$0xff]
    %v616 = vld [vmem:[#allocation2 + $0x1154] sm:$0xff]
    %v617 = vld [vmem:[#allocation2 + $0x115c] sm:$0xff]
    %v618 = vld [vmem:[#allocation2 + $0x1164] sm:$0xff]
    %v619 = vld [vmem:[#allocation2 + $0x116c] sm:$0xff]
    %v620 = vld [vmem:[#allocation2 + $0x1174] sm:$0xf]
    %v621 = vld [vmem:[#allocation2 + $0x1178] sm:$0xff]
    %v622 = vld [vmem:[#allocation2 + $0x1180] sm:$0xff]
    %v623 = vld [vmem:[#allocation2 + $0x1188] sm:$0xff]
    %v624 = vld [vmem:[#allocation2 + $0x1190] sm:$0xff]
    %v625 = vld [vmem:[#allocation2 + $0x1198] sm:$0xff]
    %v626 = vld [vmem:[#allocation2 + $0x11a0] sm:$0xff]
    %v627 = vld [vmem:[#allocation2 + $0x11a8] sm:$0xff]
    %v628 = vld [vmem:[#allocation2 + $0x11b0] sm:$0xff]
    %v629 = vld [vmem:[#allocation2 + $0x11b8] sm:$0xff]
    %v630 = vld [vmem:[#allocation2 + $0x11c0] sm:$0xff]
    %v631 = vld [vmem:[#allocation2 + $0x11c8] sm:$0xff]
    %v632 = vld [vmem:[#allocation2 + $0x11d0] sm:$0xff]
    %v633 = vld [vmem:[#allocation2 + $0x11d8] sm:$0xff]
    %v634 = vld [vmem:[#allocation2 + $0x11e0] sm:$0xff]
    %v635 = vld [vmem:[#allocation2 + $0x11e8] sm:$0xff]
    %v636 = vld [vmem:[#allocation2 + $0x11f0] sm:$0xff]
    %v637 = vld [vmem:[#allocation2 + $0x11f8] sm:$0xff]
    %v638 = vld [vmem:[#allocation2 + $0x1200] sm:$0xff]
    %v639 = vld [vmem:[#allocation2 + $0x1208] sm:$0xff]
    %v640 = vld [vmem:[#allocation2 + $0x1210] sm:$0xff]
    %v641 = vld [vmem:[#allocation2 + $0x1218] sm:$0xff]
    %v642 = vld [vmem:[#allocation2 + $0x1220] sm:$0xf]
    %v643 = vld [vmem:[#allocation2 + $0x1224] sm:$0xff]
    %v644 = vld [vmem:[#allocation2 + $0x122c] sm:$0xff]
    %v645 = vld [vmem:[#allocation2 + $0x1234] sm:$0xff]
    %v646 = vld [vmem:[#allocation2 + $0x123c] sm:$0xff]
    %v647 = vld [vmem:[#allocation2 + $0x1244] sm:$0xff]
    %v648 = vld [vmem:[#allocation2 + $0x124c] sm:$0xff]
    %v649 = vld [vmem:[#allocation2 + $0x1254] sm:$0xff]
    %v650 = vld [vmem:[#allocation2 + $0x125c] sm:$0xff]
    %v651 = vld [vmem:[#allocation2 + $0x1264] sm:$0xff]
    %v652 = vld [vmem:[#allocation2 + $0x126c] sm:$0xff]
    %v653 = vld [vmem:[#allocation2 + $0x1274] sm:$0xff]
    %v654 = vld [vmem:[#allocation2 + $0x127c] sm:$0xff]
    %v655 = vld [vmem:[#allocation2 + $0x1284] sm:$0xff]
    %v656 = vld [vmem:[#allocation2 + $0x128c] sm:$0xff]
    %v657 = vld [vmem:[#allocation2 + $0x1294] sm:$0xff]
    %v658 = vld [vmem:[#allocation2 + $0x129c] sm:$0xff]
    %v659 = vld [vmem:[#allocation2 + $0x12a4] sm:$0xff]
    %v660 = vld [vmem:[#allocation2 + $0x12ac] sm:$0xff]
    %v661 = vld [vmem:[#allocation2 + $0x12b4] sm:$0xff]
    %v662 = vld [vmem:[#allocation2 + $0x12bc] sm:$0xff]
    %v663 = vld [vmem:[#allocation2 + $0x12c4] sm:$0xff]
    %v664 = vld [vmem:[#allocation2 + $0x12cc] sm:$0xf]
    %v665 = vld [vmem:[#allocation2 + $0x12d0] sm:$0xff]
    %v666 = vld [vmem:[#allocation2 + $0x12d8] sm:$0xff]
    %v667 = vld [vmem:[#allocation2 + $0x12e0] sm:$0xff]
    %v668 = vld [vmem:[#allocation2 + $0x12e8] sm:$0xff]
    %v669 = vld [vmem:[#allocation2 + $0x12f0] sm:$0xff]
    %v670 = vld [vmem:[#allocation2 + $0x12f8] sm:$0xff]
    %v671 = vld [vmem:[#allocation2 + $0x1300] sm:$0xff]
    %v672 = vld [vmem:[#allocation2 + $0x1308] sm:$0xff]
    %v673 = vld [vmem:[#allocation2 + $0x1310] sm:$0xff]
    %v674 = vld [vmem:[#allocation2 + $0x1318] sm:$0xff]
    %v675 = vld [vmem:[#allocation2 + $0x1320] sm:$0xff]
    %v676 = vld [vmem:[#allocation2 + $0x1328] sm:$0xff]
    %v677 = vld [vmem:[#allocation2 + $0x1330] sm:$0xff]
    %v678 = vld [vmem:[#allocation2 + $0x1338] sm:$0xff]
    %v679 = vld [vmem:[#allocation2 + $0x1340] sm:$0xff]
    %v680 = vld [vmem:[#allocation2 + $0x1348] sm:$0xff]
    %v681 = vld [vmem:[#allocation2 + $0x1350] sm:$0xff]
    %v682 = vld [vmem:[#allocation2 + $0x1358] sm:$0xff]
    %v683 = vld [vmem:[#allocation2 + $0x1360] sm:$0xff]
    %v684 = vld [vmem:[#allocation2 + $0x1368] sm:$0xff]
    %v685 = vld [vmem:[#allocation2 + $0x1370] sm:$0xff]
    %v686 = vld [vmem:[#allocation2 + $0x1378] sm:$0xf]
    %v687 = vld [vmem:[#allocation2 + $0x137c] sm:$0xff]
    %v688 = vld [vmem:[#allocation2 + $0x1384] sm:$0xff]
    %v689 = vld [vmem:[#allocation2 + $0x138c] sm:$0xff]
    %v690 = vld [vmem:[#allocation2 + $0x1394] sm:$0xff]
    %v691 = vld [vmem:[#allocation2 + $0x139c] sm:$0xff]
    %v692 = vld [vmem:[#allocation2 + $0x13a4] sm:$0xff]
    %v693 = vld [vmem:[#allocation2 + $0x13ac] sm:$0xff]
    %v694 = vld [vmem:[#allocation2 + $0x13b4] sm:$0xff]
    %v695 = vld [vmem:[#allocation2 + $0x13bc] sm:$0xff]
    %v696 = vld [vmem:[#allocation2 + $0x13c4] sm:$0xff]
    %v697 = vld [vmem:[#allocation2 + $0x13cc] sm:$0xff]
    %v698 = vld [vmem:[#allocation2 + $0x13d4] sm:$0xff]
    %v699 = vld [vmem:[#allocation2 + $0x13dc] sm:$0xff]
    %v700 = vld [vmem:[#allocation2 + $0x13e4] sm:$0xff]
    %v701 = vld [vmem:[#allocation2 + $0x13ec] sm:$0xff]
    %v702 = vld [vmem:[#allocation2 + $0x13f4] sm:$0xff]
    %v703 = vld [vmem:[#allocation2 + $0x13fc] sm:$0xff]
    %v704 = vld [vmem:[#allocation2 + $0x1404] sm:$0xff]
    %v705 = vld [vmem:[#allocation2 + $0x140c] sm:$0xff]
    %v706 = vld [vmem:[#allocation2 + $0x1414] sm:$0xff]
    %v707 = vld [vmem:[#allocation2 + $0x141c] sm:$0xff]
    %v708 = vld [vmem:[#allocation2 + $0x1424] sm:$0xf]
    %v709 = vld [vmem:[#allocation2 + $0x1428] sm:$0xff]
    %v710 = vld [vmem:[#allocation2 + $0x1430] sm:$0xff]
    %v711 = vld [vmem:[#allocation2 + $0x1438] sm:$0xff]
    %v712 = vld [vmem:[#allocation2 + $0x1440] sm:$0xff]
    %v713 = vld [vmem:[#allocation2 + $0x1448] sm:$0xff]
    %v714 = vld [vmem:[#allocation2 + $0x1450] sm:$0xff]
    %v715 = vld [vmem:[#allocation2 + $0x1458] sm:$0xff]
    %v716 = vld [vmem:[#allocation2 + $0x1460] sm:$0xff]
    %v717 = vld [vmem:[#allocation2 + $0x1468] sm:$0xff]
    %v718 = vld [vmem:[#allocation2 + $0x1470] sm:$0xff]
    %v719 = vld [vmem:[#allocation2 + $0x1478] sm:$0xff]
    %v720 = vld [vmem:[#allocation2 + $0x1480] sm:$0xff]
    %v721 = vld [vmem:[#allocation2 + $0x1488] sm:$0xff]
    %v722 = vld [vmem:[#allocation2 + $0x1490] sm:$0xff]
    %v723 = vld [vmem:[#allocation2 + $0x1498] sm:$0xff]
    %v724 = vld [vmem:[#allocation2 + $0x14a0] sm:$0xff]
    %v725 = vld [vmem:[#allocation2 + $0x14a8] sm:$0xff]
    %v726 = vld [vmem:[#allocation2 + $0x14b0] sm:$0xff]
    %v727 = vld [vmem:[#allocation2 + $0x14b8] sm:$0xff]
    %v728 = vld [vmem:[#allocation2 + $0x14c0] sm:$0xff]
    %v729 = vld [vmem:[#allocation2 + $0x14c8] sm:$0xff]
    %v730 = vld [vmem:[#allocation2 + $0x14d0] sm:$0xf]
    %v731 = vld [vmem:[#allocation2 + $0x14d4] sm:$0xff]
    %v732 = vld [vmem:[#allocation2 + $0x14dc] sm:$0xff]
    %v733 = vld [vmem:[#allocation2 + $0x14e4] sm:$0xff]
    %v734 = vld [vmem:[#allocation2 + $0x14ec] sm:$0xff]
    %v735 = vld [vmem:[#allocation2 + $0x14f4] sm:$0xff]
    %v736 = vld [vmem:[#allocation2 + $0x14fc] sm:$0xff]
    %v737 = vld [vmem:[#allocation2 + $0x1504] sm:$0xff]
    %v738 = vld [vmem:[#allocation2 + $0x150c] sm:$0xff]
    %v739 = vld [vmem:[#allocation2 + $0x1514] sm:$0xff]
    %v740 = vld [vmem:[#allocation2 + $0x151c] sm:$0xff]
    %v741 = vld [vmem:[#allocation2 + $0x1524] sm:$0xff]
    %v742 = vld [vmem:[#allocation2 + $0x152c] sm:$0xff]
    %v743 = vld [vmem:[#allocation2 + $0x1534] sm:$0xff]
    %v744 = vld [vmem:[#allocation2 + $0x153c] sm:$0xff]
    %v745 = vld [vmem:[#allocation2 + $0x1544] sm:$0xff]
    %v746 = vld [vmem:[#allocation2 + $0x154c] sm:$0xff]
    %v747 = vld [vmem:[#allocation2 + $0x1554] sm:$0xff]
    %v748 = vld [vmem:[#allocation2 + $0x155c] sm:$0xff]
    %v749 = vld [vmem:[#allocation2 + $0x1564] sm:$0xff]
    %v750 = vld [vmem:[#allocation2 + $0x156c] sm:$0xff]
    %v751 = vld [vmem:[#allocation2 + $0x1574] sm:$0xff]
    %v752 = vld [vmem:[#allocation2 + $0x157c] sm:$0xf]
    %v753 = vld [vmem:[#allocation2 + $0x1580] sm:$0xff]
    %v754 = vld [vmem:[#allocation2 + $0x1588] sm:$0xff]
    %v755 = vld [vmem:[#allocation2 + $0x1590] sm:$0xff]
    %v756 = vld [vmem:[#allocation2 + $0x1598] sm:$0xff]
    %v757 = vld [vmem:[#allocation2 + $0x15a0] sm:$0xff]
    %v758 = vld [vmem:[#allocation2 + $0x15a8] sm:$0xff]
    %v759 = vld [vmem:[#allocation2 + $0x15b0] sm:$0xff]
    %v760 = vld [vmem:[#allocation2 + $0x15b8] sm:$0xff]
    %v761 = vld [vmem:[#allocation2 + $0x15c0] sm:$0xff]
    %v762 = vld [vmem:[#allocation2 + $0x15c8] sm:$0xff]
    %v763 = vld [vmem:[#allocation2 + $0x15d0] sm:$0xff]
    %v764 = vld [vmem:[#allocation2 + $0x15d8] sm:$0xff]
    %v765 = vld [vmem:[#allocation2 + $0x15e0] sm:$0xff]
    %v766 = vld [vmem:[#allocation2 + $0x15e8] sm:$0xff]
    %v767 = vld [vmem:[#allocation2 + $0x15f0] sm:$0xff]
    %v768 = vld [vmem:[#allocation2 + $0x15f8] sm:$0xff]
    %v769 = vld [vmem:[#allocation2 + $0x1600] sm:$0xff]
    %v770 = vld [vmem:[#allocation2 + $0x1608] sm:$0xff]
    %v771 = vld [vmem:[#allocation2 + $0x1610] sm:$0xff]
    %v772 = vld [vmem:[#allocation2 + $0x1618] sm:$0xff]
    %v773 = vld [vmem:[#allocation2 + $0x1620] sm:$0xff]
    %v774 = vld [vmem:[#allocation2 + $0x1628] sm:$0xf]
    %v775 = vld [vmem:[#allocation2 + $0x162c] sm:$0xff]
    %v776 = vld [vmem:[#allocation2 + $0x1634] sm:$0xff]
    %v777 = vld [vmem:[#allocation2 + $0x163c] sm:$0xff]
    %v778 = vld [vmem:[#allocation2 + $0x1644] sm:$0xff]
    %v779 = vld [vmem:[#allocation2 + $0x164c] sm:$0xff]
    %v780 = vld [vmem:[#allocation2 + $0x1654] sm:$0xff]
    %v781 = vld [vmem:[#allocation2 + $0x165c] sm:$0xff]
    %v782 = vld [vmem:[#allocation2 + $0x1664] sm:$0xff]
    %v783 = vld [vmem:[#allocation2 + $0x166c] sm:$0xff]
    %v784 = vld [vmem:[#allocation2 + $0x1674] sm:$0xff]
    %v785 = vld [vmem:[#allocation2 + $0x167c] sm:$0xff]
    %v786 = vld [vmem:[#allocation2 + $0x1684] sm:$0xff]
    %v787 = vld [vmem:[#allocation2 + $0x168c] sm:$0xff]
    %v788 = vld [vmem:[#allocation2 + $0x1694] sm:$0xff]
    %v789 = vld [vmem:[#allocation2 + $0x169c] sm:$0xff]
    %v790 = vld [vmem:[#allocation2 + $0x16a4] sm:$0xff]
    %v791 = vld [vmem:[#allocation2 + $0x16ac] sm:$0xff]
    %v792 = vld [vmem:[#allocation2 + $0x16b4] sm:$0xff]
    %v793 = vld [vmem:[#allocation2 + $0x16bc] sm:$0xff]
    %v794 = vld [vmem:[#allocation2 + $0x16c4] sm:$0xff]
    %v795 = vld [vmem:[#allocation2 + $0x16cc] sm:$0xff]
    %v796 = vld [vmem:[#allocation2 + $0x16d4] sm:$0xf]
    %v797 = vld [vmem:[#allocation2 + $0x16d8] sm:$0xff]
    %v798 = vld [vmem:[#allocation2 + $0x16e0] sm:$0xff]
    %v799 = vld [vmem:[#allocation2 + $0x16e8] sm:$0xff]
    %v800 = vld [vmem:[#allocation2 + $0x16f0] sm:$0xff]
    %v801 = vld [vmem:[#allocation2 + $0x16f8] sm:$0xff]
    %v802 = vld [vmem:[#allocation2 + $0x1700] sm:$0xff]
    %v803 = vld [vmem:[#allocation2 + $0x1708] sm:$0xff]
    %v804 = vld [vmem:[#allocation2 + $0x1710] sm:$0xff]
    %v805 = vld [vmem:[#allocation2 + $0x1718] sm:$0xff]
    %v806 = vld [vmem:[#allocation2 + $0x1720] sm:$0xff]
    %v807 = vld [vmem:[#allocation2 + $0x1728] sm:$0xff]
    %v808 = vld [vmem:[#allocation2 + $0x1730] sm:$0xff]
    %v809 = vld [vmem:[#allocation2 + $0x1738] sm:$0xff]
    %v810 = vld [vmem:[#allocation2 + $0x1740] sm:$0xff]
    %v811 = vld [vmem:[#allocation2 + $0x1748] sm:$0xff]
    %v812 = vld [vmem:[#allocation2 + $0x1750] sm:$0xff]
    %v813 = vld [vmem:[#allocation2 + $0x1758] sm:$0xff]
    %v814 = vld [vmem:[#allocation2 + $0x1760] sm:$0xff]
    %v815 = vld [vmem:[#allocation2 + $0x1768] sm:$0xff]
    %v816 = vld [vmem:[#allocation2 + $0x1770] sm:$0xff]
    %v817 = vld [vmem:[#allocation2 + $0x1778] sm:$0xff]
    %v818 = vld [vmem:[#allocation2 + $0x1780] sm:$0xf]
    %v819 = vld [vmem:[#allocation2 + $0x1784] sm:$0xff]
    %v820 = vld [vmem:[#allocation2 + $0x178c] sm:$0xff]
    %v821 = vld [vmem:[#allocation2 + $0x1794] sm:$0xff]
    %v822 = vld [vmem:[#allocation2 + $0x179c] sm:$0xff]
    %v823 = vld [vmem:[#allocation2 + $0x17a4] sm:$0xff]
    %v824 = vld [vmem:[#allocation2 + $0x17ac] sm:$0xff]
    %v825 = vld [vmem:[#allocation2 + $0x17b4] sm:$0xff]
    %v826 = vld [vmem:[#allocation2 + $0x17bc] sm:$0xff]
    %v827 = vld [vmem:[#allocation2 + $0x17c4] sm:$0xff]
    %v828 = vld [vmem:[#allocation2 + $0x17cc] sm:$0xff]
    %v829 = vld [vmem:[#allocation2 + $0x17d4] sm:$0xff]
    %v830 = vld [vmem:[#allocation2 + $0x17dc] sm:$0xff]
    %v831 = vld [vmem:[#allocation2 + $0x17e4] sm:$0xff]
    %v832 = vld [vmem:[#allocation2 + $0x17ec] sm:$0xff]
    %v833 = vld [vmem:[#allocation2 + $0x17f4] sm:$0xff]
    %v834 = vld [vmem:[#allocation2 + $0x17fc] sm:$0xff]
    %v835 = vld [vmem:[#allocation2 + $0x1804] sm:$0xff]
    %v836 = vld [vmem:[#allocation2 + $0x180c] sm:$0xff]
    %v837 = vld [vmem:[#allocation2 + $0x1814] sm:$0xff]
    %v838 = vld [vmem:[#allocation2 + $0x181c] sm:$0xff]
    %v839 = vld [vmem:[#allocation2 + $0x1824] sm:$0xff]
    %v840 = vld [vmem:[#allocation2 + $0x182c] sm:$0xf]
    %v841 = vld [vmem:[#allocation2 + $0x1830] sm:$0xff]
    %v842 = vld [vmem:[#allocation2 + $0x1838] sm:$0xff]
    %v843 = vld [vmem:[#allocation2 + $0x1840] sm:$0xff]
    %v844 = vld [vmem:[#allocation2 + $0x1848] sm:$0xff]
    %v845 = vld [vmem:[#allocation2 + $0x1850] sm:$0xff]
    %v846 = vld [vmem:[#allocation2 + $0x1858] sm:$0xff]
    %v847 = vld [vmem:[#allocation2 + $0x1860] sm:$0xff]
    %v848 = vld [vmem:[#allocation2 + $0x1868] sm:$0xff]
    %v849 = vld [vmem:[#allocation2 + $0x1870] sm:$0xff]
    %v850 = vld [vmem:[#allocation2 + $0x1878] sm:$0xff]
    %v851 = vld [vmem:[#allocation2 + $0x1880] sm:$0xff]
    %v852 = vld [vmem:[#allocation2 + $0x1888] sm:$0xff]
    %v853 = vld [vmem:[#allocation2 + $0x1890] sm:$0xff]
    %v854 = vld [vmem:[#allocation2 + $0x1898] sm:$0xff]
    %v855 = vld [vmem:[#allocation2 + $0x18a0] sm:$0xff]
    %v856 = vld [vmem:[#allocation2 + $0x18a8] sm:$0xff]
    %v857 = vld [vmem:[#allocation2 + $0x18b0] sm:$0xff]
    %v858 = vld [vmem:[#allocation2 + $0x18b8] sm:$0xff]
    %v859 = vld [vmem:[#allocation2 + $0x18c0] sm:$0xff]
    %v860 = vld [vmem:[#allocation2 + $0x18c8] sm:$0xff]
    %v861 = vld [vmem:[#allocation2 + $0x18d0] sm:$0xff]
    %v862 = vld [vmem:[#allocation2 + $0x18d8] sm:$0xf]
    %v863 = vld [vmem:[#allocation2 + $0x18dc] sm:$0xff]
    %v864 = vld [vmem:[#allocation2 + $0x18e4] sm:$0xff]
    %v865 = vld [vmem:[#allocation2 + $0x18ec] sm:$0xff]
    %v866 = vld [vmem:[#allocation2 + $0x18f4] sm:$0xff]
    %v867 = vld [vmem:[#allocation2 + $0x18fc] sm:$0xff]
    %v868 = vld [vmem:[#allocation2 + $0x1904] sm:$0xff]
    %v869 = vld [vmem:[#allocation2 + $0x190c] sm:$0xff]
    %v870 = vld [vmem:[#allocation2 + $0x1914] sm:$0xff]
    %v871 = vld [vmem:[#allocation2 + $0x191c] sm:$0xff]
    %v872 = vld [vmem:[#allocation2 + $0x1924] sm:$0xff]
    %v873 = vld [vmem:[#allocation2 + $0x192c] sm:$0xff]
    %v874 = vld [vmem:[#allocation2 + $0x1934] sm:$0xff]
    %v875 = vld [vmem:[#allocation2 + $0x193c] sm:$0xff]
    %v876 = vld [vmem:[#allocation2 + $0x1944] sm:$0xff]
    %v877 = vld [vmem:[#allocation2 + $0x194c] sm:$0xff]
    %v878 = vld [vmem:[#allocation2 + $0x1954] sm:$0xff]
    %v879 = vld [vmem:[#allocation2 + $0x195c] sm:$0xff]
    %v880 = vld [vmem:[#allocation2 + $0x1964] sm:$0xff]
    %v881 = vld [vmem:[#allocation2 + $0x196c] sm:$0xff]
    %v882 = vld [vmem:[#allocation2 + $0x1974] sm:$0xff]
    %v883 = vld [vmem:[#allocation2 + $0x197c] sm:$0xff]
    %v884 = vld [vmem:[#allocation2 + $0x1984] sm:$0xf]
    %v885 = vld [vmem:[#allocation2 + $0x1988] sm:$0xff]
    %v886 = vld [vmem:[#allocation2 + $0x1990] sm:$0xff]
    %v887 = vld [vmem:[#allocation2 + $0x1998] sm:$0xff]
    %v888 = vld [vmem:[#allocation2 + $0x19a0] sm:$0xff]
    %v889 = vld [vmem:[#allocation2 + $0x19a8] sm:$0xff]
    %v890 = vld [vmem:[#allocation2 + $0x19b0] sm:$0xff]
    %v891 = vld [vmem:[#allocation2 + $0x19b8] sm:$0xff]
    %v892 = vld [vmem:[#allocation2 + $0x19c0] sm:$0xff]
    %v893 = vld [vmem:[#allocation2 + $0x19c8] sm:$0xff]
    %v894 = vld [vmem:[#allocation2 + $0x19d0] sm:$0xff]
    %v895 = vld [vmem:[#allocation2 + $0x19d8] sm:$0xff]
    %v896 = vld [vmem:[#allocation2 + $0x19e0] sm:$0xff]
    %v897 = vld [vmem:[#allocation2 + $0x19e8] sm:$0xff]
    %v898 = vld [vmem:[#allocation2 + $0x19f0] sm:$0xff]
    %v899 = vld [vmem:[#allocation2 + $0x19f8] sm:$0xff]
    %v900 = vld [vmem:[#allocation2 + $0x1a00] sm:$0xff]
    %v901 = vld [vmem:[#allocation2 + $0x1a08] sm:$0xff]
    %v902 = vld [vmem:[#allocation2 + $0x1a10] sm:$0xff]
    %v903 = vld [vmem:[#allocation2 + $0x1a18] sm:$0xff]
    %v904 = vld [vmem:[#allocation2 + $0x1a20] sm:$0xff]
    %v905 = vld [vmem:[#allocation2 + $0x1a28] sm:$0xff]
    %v906 = vld [vmem:[#allocation2 + $0x1a30] sm:$0xf]
    %v907 = vld [vmem:[#allocation2 + $0x1a34] sm:$0x33]
    %v908 = vld [vmem:[#allocation2 + $0x1a3c] sm:$0x33]
    %v909 = vld [vmem:[#allocation2 + $0x1a44] sm:$0x33]
    %v910 = vld [vmem:[#allocation2 + $0x1a4c] sm:$0x33]
    %v911 = vld [vmem:[#allocation2 + $0x1a54] sm:$0x33]
    %v912 = vld [vmem:[#allocation2 + $0x1a5c] sm:$0x33]
    %v913 = vld [vmem:[#allocation2 + $0x1a64] sm:$0x33]
    %v914 = vld [vmem:[#allocation2 + $0x1a6c] sm:$0x33]
    %v915 = vld [vmem:[#allocation2 + $0x1a74] sm:$0x33]
    %v916 = vld [vmem:[#allocation2 + $0x1a7c] sm:$0x33]
    %v917 = vld [vmem:[#allocation2 + $0x1a84] sm:$0x33]
    %v918 = vld [vmem:[#allocation2 + $0x1a8c] sm:$0x33]
    %v919 = vld [vmem:[#allocation2 + $0x1a94] sm:$0x33]
    %v920 = vld [vmem:[#allocation2 + $0x1a9c] sm:$0x33]
    %v921 = vld [vmem:[#allocation2 + $0x1aa4] sm:$0x33]
    %v922 = vld [vmem:[#allocation2 + $0x1aac] sm:$0x33]
    %v923 = vld [vmem:[#allocation2 + $0x1ab4] sm:$0x33]
    %v924 = vld [vmem:[#allocation2 + $0x1abc] sm:$0x33]
    %v925 = vld [vmem:[#allocation2 + $0x1ac4] sm:$0x33]
    %v926 = vld [vmem:[#allocation2 + $0x1acc] sm:$0x33]
    %v927 = vld [vmem:[#allocation2 + $0x1ad4] sm:$0x33]
    %v928 = vld [vmem:[#allocation2 + $0x1adc] sm:$0x3]
    %v931 = vunpack.c.l.b16 %v47
    %v932 = vunpack.c.h.b16 %v47
    %v933 = vunpack.c.l.b16 %v48
    %v934 = vpack.c.b16 %v931, %v931
    %v935 = vpack.c.b16 %v932, %v932
    %v936 = vpack.c.b16 %v933, %v933
    %v1819 = vunpack.c.l.b16 %v49
    %v1820 = vunpack.c.h.b16 %v49
    %v1821 = vunpack.c.l.b16 %v50
    %v1822 = vunpack.c.h.b16 %v50
    %v1823 = vunpack.c.l.b16 %v51
    %v1824 = vunpack.c.h.b16 %v51
    %v1825 = vunpack.c.l.b16 %v52
    %v1826 = vunpack.c.h.b16 %v52
    %v1827 = vunpack.c.l.b16 %v53
    %v1828 = vunpack.c.h.b16 %v53
    %v1829 = vunpack.c.l.b16 %v54
    %v1830 = vunpack.c.h.b16 %v54
    %v1831 = vunpack.c.l.b16 %v55
    %v1832 = vunpack.c.h.b16 %v55
    %v1833 = vunpack.c.l.b16 %v56
    %v1834 = vunpack.c.h.b16 %v56
    %v1835 = vunpack.c.l.b16 %v57
    %v1836 = vunpack.c.h.b16 %v57
    %v1837 = vunpack.c.l.b16 %v58
    %v1838 = vunpack.c.h.b16 %v58
    %v1839 = vunpack.c.l.b16 %v59
    %v1840 = vunpack.c.h.b16 %v59
    %v1841 = vunpack.c.l.b16 %v60
    %v1842 = vunpack.c.h.b16 %v60
    %v1843 = vunpack.c.l.b16 %v61
    %v1844 = vunpack.c.h.b16 %v61
    %v1845 = vunpack.c.l.b16 %v62
    %v1846 = vunpack.c.h.b16 %v62
    %v1847 = vunpack.c.l.b16 %v63
    %v1848 = vunpack.c.h.b16 %v63
    %v1849 = vunpack.c.l.b16 %v64
    %v1850 = vunpack.c.h.b16 %v64
    %v1851 = vunpack.c.l.b16 %v65
    %v1852 = vunpack.c.h.b16 %v65
    %v1853 = vunpack.c.l.b16 %v66
    %v1854 = vunpack.c.h.b16 %v66
    %v1855 = vunpack.c.l.b16 %v67
    %v1856 = vunpack.c.h.b16 %v67
    %v1857 = vunpack.c.l.b16 %v68
    %v1858 = vunpack.c.h.b16 %v68
    %v1859 = vunpack.c.l.b16 %v69
    %v1860 = vunpack.c.h.b16 %v69
    %v1861 = vunpack.c.l.b16 %v70
    %v1862 = vunpack.c.l.b16 %v71
    %v1863 = vunpack.c.h.b16 %v71
    %v1864 = vunpack.c.l.b16 %v72
    %v1865 = vunpack.c.h.b16 %v72
    %v1866 = vunpack.c.l.b16 %v73
    %v1867 = vunpack.c.h.b16 %v73
    %v1868 = vunpack.c.l.b16 %v74
    %v1869 = vunpack.c.h.b16 %v74
    %v1870 = vunpack.c.l.b16 %v75
    %v1871 = vunpack.c.h.b16 %v75
    %v1872 = vunpack.c.l.b16 %v76
    %v1873 = vunpack.c.h.b16 %v76
    %v1874 = vunpack.c.l.b16 %v77
    %v1875 = vunpack.c.h.b16 %v77
    %v1876 = vunpack.c.l.b16 %v78
    %v1877 = vunpack.c.h.b16 %v78
    %v1878 = vunpack.c.l.b16 %v79
    %v1879 = vunpack.c.h.b16 %v79
    %v1880 = vunpack.c.l.b16 %v80
    %v1881 = vunpack.c.h.b16 %v80
    %v1882 = vunpack.c.l.b16 %v81
    %v1883 = vunpack.c.h.b16 %v81
    %v1884 = vunpack.c.l.b16 %v82
    %v1885 = vunpack.c.h.b16 %v82
    %v1886 = vunpack.c.l.b16 %v83
    %v1887 = vunpack.c.h.b16 %v83
    %v1888 = vunpack.c.l.b16 %v84
    %v1889 = vunpack.c.h.b16 %v84
    %v1890 = vunpack.c.l.b16 %v85
    %v1891 = vunpack.c.h.b16 %v85
    %v1892 = vunpack.c.l.b16 %v86
    %v1893 = vunpack.c.h.b16 %v86
    %v1894 = vunpack.c.l.b16 %v87
    %v1895 = vunpack.c.h.b16 %v87
    %v1896 = vunpack.c.l.b16 %v88
    %v1897 = vunpack.c.h.b16 %v88
    %v1898 = vunpack.c.l.b16 %v89
    %v1899 = vunpack.c.h.b16 %v89
    %v1900 = vunpack.c.l.b16 %v90
    %v1901 = vunpack.c.h.b16 %v90
    %v1902 = vunpack.c.l.b16 %v91
    %v1903 = vunpack.c.h.b16 %v91
    %v1904 = vunpack.c.l.b16 %v92
    %v1905 = vunpack.c.l.b16 %v93
    %v1906 = vunpack.c.h.b16 %v93
    %v1907 = vunpack.c.l.b16 %v94
    %v1908 = vunpack.c.h.b16 %v94
    %v1909 = vunpack.c.l.b16 %v95
    %v1910 = vunpack.c.h.b16 %v95
    %v1911 = vunpack.c.l.b16 %v96
    %v1912 = vunpack.c.h.b16 %v96
    %v1913 = vunpack.c.l.b16 %v97
    %v1914 = vunpack.c.h.b16 %v97
    %v1915 = vunpack.c.l.b16 %v98
    %v1916 = vunpack.c.h.b16 %v98
    %v1917 = vunpack.c.l.b16 %v99
    %v1918 = vunpack.c.h.b16 %v99
    %v1919 = vunpack.c.l.b16 %v100
    %v1920 = vunpack.c.h.b16 %v100
    %v1921 = vunpack.c.l.b16 %v101
    %v1922 = vunpack.c.h.b16 %v101
    %v1923 = vunpack.c.l.b16 %v102
    %v1924 = vunpack.c.h.b16 %v102
    %v1925 = vunpack.c.l.b16 %v103
    %v1926 = vunpack.c.h.b16 %v103
    %v1927 = vunpack.c.l.b16 %v104
    %v1928 = vunpack.c.h.b16 %v104
    %v1929 = vunpack.c.l.b16 %v105
    %v1930 = vunpack.c.h.b16 %v105
    %v1931 = vunpack.c.l.b16 %v106
    %v1932 = vunpack.c.h.b16 %v106
    %v1933 = vunpack.c.l.b16 %v107
    %v1934 = vunpack.c.h.b16 %v107
    %v1935 = vunpack.c.l.b16 %v108
    %v1936 = vunpack.c.h.b16 %v108
    %v1937 = vunpack.c.l.b16 %v109
    %v1938 = vunpack.c.h.b16 %v109
    %v1939 = vunpack.c.l.b16 %v110
    %v1940 = vunpack.c.h.b16 %v110
    %v1941 = vunpack.c.l.b16 %v111
    %v1942 = vunpack.c.h.b16 %v111
    %v1943 = vunpack.c.l.b16 %v112
    %v1944 = vunpack.c.h.b16 %v112
    %v1945 = vunpack.c.l.b16 %v113
    %v1946 = vunpack.c.h.b16 %v113
    %v1947 = vunpack.c.l.b16 %v114
    %v1948 = vunpack.c.l.b16 %v115
    %v1949 = vunpack.c.h.b16 %v115
    %v1950 = vunpack.c.l.b16 %v116
    %v1951 = vunpack.c.h.b16 %v116
    %v1952 = vunpack.c.l.b16 %v117
    %v1953 = vunpack.c.h.b16 %v117
    %v1954 = vunpack.c.l.b16 %v118
    %v1955 = vunpack.c.h.b16 %v118
    %v1956 = vunpack.c.l.b16 %v119
    %v1957 = vunpack.c.h.b16 %v119
    %v1958 = vunpack.c.l.b16 %v120
    %v1959 = vunpack.c.h.b16 %v120
    %v1960 = vunpack.c.l.b16 %v121
    %v1961 = vunpack.c.h.b16 %v121
    %v1962 = vunpack.c.l.b16 %v122
    %v1963 = vunpack.c.h.b16 %v122
    %v1964 = vunpack.c.l.b16 %v123
    %v1965 = vunpack.c.h.b16 %v123
    %v1966 = vunpack.c.l.b16 %v124
    %v1967 = vunpack.c.h.b16 %v124
    %v1968 = vunpack.c.l.b16 %v125
    %v1969 = vunpack.c.h.b16 %v125
    %v1970 = vunpack.c.l.b16 %v126
    %v1971 = vunpack.c.h.b16 %v126
    %v1972 = vunpack.c.l.b16 %v127
    %v1973 = vunpack.c.h.b16 %v127
    %v1974 = vunpack.c.l.b16 %v128
    %v1975 = vunpack.c.h.b16 %v128
    %v1976 = vunpack.c.l.b16 %v129
    %v1977 = vunpack.c.h.b16 %v129
    %v1978 = vunpack.c.l.b16 %v130
    %v1979 = vunpack.c.h.b16 %v130
    %v1980 = vunpack.c.l.b16 %v131
    %v1981 = vunpack.c.h.b16 %v131
    %v1982 = vunpack.c.l.b16 %v132
    %v1983 = vunpack.c.h.b16 %v132
    %v1984 = vunpack.c.l.b16 %v133
    %v1985 = vunpack.c.h.b16 %v133
    %v1986 = vunpack.c.l.b16 %v134
    %v1987 = vunpack.c.h.b16 %v134
    %v1988 = vunpack.c.l.b16 %v135
    %v1989 = vunpack.c.h.b16 %v135
    %v1990 = vunpack.c.l.b16 %v136
    %v1991 = vunpack.c.l.b16 %v137
    %v1992 = vunpack.c.h.b16 %v137
    %v1993 = vunpack.c.l.b16 %v138
    %v1994 = vunpack.c.h.b16 %v138
    %v1995 = vunpack.c.l.b16 %v139
    %v1996 = vunpack.c.h.b16 %v139
    %v1997 = vunpack.c.l.b16 %v140
    %v1998 = vunpack.c.h.b16 %v140
    %v1999 = vunpack.c.l.b16 %v141
    %v2000 = vunpack.c.h.b16 %v141
    %v2001 = vunpack.c.l.b16 %v142
    %v2002 = vunpack.c.h.b16 %v142
    %v2003 = vunpack.c.l.b16 %v143
    %v2004 = vunpack.c.h.b16 %v143
    %v2005 = vunpack.c.l.b16 %v144
    %v2006 = vunpack.c.h.b16 %v144
    %v2007 = vunpack.c.l.b16 %v145
    %v2008 = vunpack.c.h.b16 %v145
    %v2009 = vunpack.c.l.b16 %v146
    %v2010 = vunpack.c.h.b16 %v146
    %v2011 = vunpack.c.l.b16 %v147
    %v2012 = vunpack.c.h.b16 %v147
    %v2013 = vunpack.c.l.b16 %v148
    %v2014 = vunpack.c.h.b16 %v148
    %v2015 = vunpack.c.l.b16 %v149
    %v2016 = vunpack.c.h.b16 %v149
    %v2017 = vunpack.c.l.b16 %v150
    %v2018 = vunpack.c.h.b16 %v150
    %v2019 = vunpack.c.l.b16 %v151
    %v2020 = vunpack.c.h.b16 %v151
    %v2021 = vunpack.c.l.b16 %v152
    %v2022 = vunpack.c.h.b16 %v152
    %v2023 = vunpack.c.l.b16 %v153
    %v2024 = vunpack.c.h.b16 %v153
    %v2025 = vunpack.c.l.b16 %v154
    %v2026 = vunpack.c.h.b16 %v154
    %v2027 = vunpack.c.l.b16 %v155
    %v2028 = vunpack.c.h.b16 %v155
    %v2029 = vunpack.c.l.b16 %v156
    %v2030 = vunpack.c.h.b16 %v156
    %v2031 = vunpack.c.l.b16 %v157
    %v2032 = vunpack.c.h.b16 %v157
    %v2033 = vunpack.c.l.b16 %v158
    %v2034 = vunpack.c.l.b16 %v159
    %v2035 = vunpack.c.h.b16 %v159
    %v2036 = vunpack.c.l.b16 %v160
    %v2037 = vunpack.c.h.b16 %v160
    %v2038 = vunpack.c.l.b16 %v161
    %v2039 = vunpack.c.h.b16 %v161
    %v2040 = vunpack.c.l.b16 %v162
    %v2041 = vunpack.c.h.b16 %v162
    %v2042 = vunpack.c.l.b16 %v163
    %v2043 = vunpack.c.h.b16 %v163
    %v2044 = vunpack.c.l.b16 %v164
    %v2045 = vunpack.c.h.b16 %v164
    %v2046 = vunpack.c.l.b16 %v165
    %v2047 = vunpack.c.h.b16 %v165
    %v2048 = vunpack.c.l.b16 %v166
    %v2049 = vunpack.c.h.b16 %v166
    %v2050 = vunpack.c.l.b16 %v167
    %v2051 = vunpack.c.h.b16 %v167
    %v2052 = vunpack.c.l.b16 %v168
    %v2053 = vunpack.c.h.b16 %v168
    %v2054 = vunpack.c.l.b16 %v169
    %v2055 = vunpack.c.h.b16 %v169
    %v2056 = vunpack.c.l.b16 %v170
    %v2057 = vunpack.c.h.b16 %v170
    %v2058 = vunpack.c.l.b16 %v171
    %v2059 = vunpack.c.h.b16 %v171
    %v2060 = vunpack.c.l.b16 %v172
    %v2061 = vunpack.c.h.b16 %v172
    %v2062 = vunpack.c.l.b16 %v173
    %v2063 = vunpack.c.h.b16 %v173
    %v2064 = vunpack.c.l.b16 %v174
    %v2065 = vunpack.c.h.b16 %v174
    %v2066 = vunpack.c.l.b16 %v175
    %v2067 = vunpack.c.h.b16 %v175
    %v2068 = vunpack.c.l.b16 %v176
    %v2069 = vunpack.c.h.b16 %v176
    %v2070 = vunpack.c.l.b16 %v177
    %v2071 = vunpack.c.h.b16 %v177
    %v2072 = vunpack.c.l.b16 %v178
    %v2073 = vunpack.c.h.b16 %v178
    %v2074 = vunpack.c.l.b16 %v179
    %v2075 = vunpack.c.h.b16 %v179
    %v2076 = vunpack.c.l.b16 %v180
    %v2077 = vunpack.c.l.b16 %v181
    %v2078 = vunpack.c.h.b16 %v181
    %v2079 = vunpack.c.l.b16 %v182
    %v2080 = vunpack.c.h.b16 %v182
    %v2081 = vunpack.c.l.b16 %v183
    %v2082 = vunpack.c.h.b16 %v183
    %v2083 = vunpack.c.l.b16 %v184
    %v2084 = vunpack.c.h.b16 %v184
    %v2085 = vunpack.c.l.b16 %v185
    %v2086 = vunpack.c.h.b16 %v185
    %v2087 = vunpack.c.l.b16 %v186
    %v2088 = vunpack.c.h.b16 %v186
    %v2089 = vunpack.c.l.b16 %v187
    %v2090 = vunpack.c.h.b16 %v187
    %v2091 = vunpack.c.l.b16 %v188
    %v2092 = vunpack.c.h.b16 %v188
    %v2093 = vunpack.c.l.b16 %v189
    %v2094 = vunpack.c.h.b16 %v189
    %v2095 = vunpack.c.l.b16 %v190
    %v2096 = vunpack.c.h.b16 %v190
    %v2097 = vunpack.c.l.b16 %v191
    %v2098 = vunpack.c.h.b16 %v191
    %v2099 = vunpack.c.l.b16 %v192
    %v2100 = vunpack.c.h.b16 %v192
    %v2101 = vunpack.c.l.b16 %v193
    %v2102 = vunpack.c.h.b16 %v193
    %v2103 = vunpack.c.l.b16 %v194
    %v2104 = vunpack.c.h.b16 %v194
    %v2105 = vunpack.c.l.b16 %v195
    %v2106 = vunpack.c.h.b16 %v195
    %v2107 = vunpack.c.l.b16 %v196
    %v2108 = vunpack.c.h.b16 %v196
    %v2109 = vunpack.c.l.b16 %v197
    %v2110 = vunpack.c.h.b16 %v197
    %v2111 = vunpack.c.l.b16 %v198
    %v2112 = vunpack.c.h.b16 %v198
    %v2113 = vunpack.c.l.b16 %v199
    %v2114 = vunpack.c.h.b16 %v199
    %v2115 = vunpack.c.l.b16 %v200
    %v2116 = vunpack.c.h.b16 %v200
    %v2117 = vunpack.c.l.b16 %v201
    %v2118 = vunpack.c.h.b16 %v201
    %v2119 = vunpack.c.l.b16 %v202
    %v2120 = vunpack.c.l.b16 %v203
    %v2121 = vunpack.c.h.b16 %v203
    %v2122 = vunpack.c.l.b16 %v204
    %v2123 = vunpack.c.h.b16 %v204
    %v2124 = vunpack.c.l.b16 %v205
    %v2125 = vunpack.c.h.b16 %v205
    %v2126 = vunpack.c.l.b16 %v206
    %v2127 = vunpack.c.h.b16 %v206
    %v2128 = vunpack.c.l.b16 %v207
    %v2129 = vunpack.c.h.b16 %v207
    %v2130 = vunpack.c.l.b16 %v208
    %v2131 = vunpack.c.h.b16 %v208
    %v2132 = vunpack.c.l.b16 %v209
    %v2133 = vunpack.c.h.b16 %v209
    %v2134 = vunpack.c.l.b16 %v210
    %v2135 = vunpack.c.h.b16 %v210
    %v2136 = vunpack.c.l.b16 %v211
    %v2137 = vunpack.c.h.b16 %v211
    %v2138 = vunpack.c.l.b16 %v212
    %v2139 = vunpack.c.h.b16 %v212
    %v2140 = vunpack.c.l.b16 %v213
    %v2141 = vunpack.c.h.b16 %v213
    %v2142 = vunpack.c.l.b16 %v214
    %v2143 = vunpack.c.h.b16 %v214
    %v2144 = vunpack.c.l.b16 %v215
    %v2145 = vunpack.c.h.b16 %v215
    %v2146 = vunpack.c.l.b16 %v216
    %v2147 = vunpack.c.h.b16 %v216
    %v2148 = vunpack.c.l.b16 %v217
    %v2149 = vunpack.c.h.b16 %v217
    %v2150 = vunpack.c.l.b16 %v218
    %v2151 = vunpack.c.h.b16 %v218
    %v2152 = vunpack.c.l.b16 %v219
    %v2153 = vunpack.c.h.b16 %v219
    %v2154 = vunpack.c.l.b16 %v220
    %v2155 = vunpack.c.h.b16 %v220
    %v2156 = vunpack.c.l.b16 %v221
    %v2157 = vunpack.c.h.b16 %v221
    %v2158 = vunpack.c.l.b16 %v222
    %v2159 = vunpack.c.h.b16 %v222
    %v2160 = vunpack.c.l.b16 %v223
    %v2161 = vunpack.c.h.b16 %v223
    %v2162 = vunpack.c.l.b16 %v224
    %v2163 = vunpack.c.l.b16 %v225
    %v2164 = vunpack.c.h.b16 %v225
    %v2165 = vunpack.c.l.b16 %v226
    %v2166 = vunpack.c.h.b16 %v226
    %v2167 = vunpack.c.l.b16 %v227
    %v2168 = vunpack.c.h.b16 %v227
    %v2169 = vunpack.c.l.b16 %v228
    %v2170 = vunpack.c.h.b16 %v228
    %v2171 = vunpack.c.l.b16 %v229
    %v2172 = vunpack.c.h.b16 %v229
    %v2173 = vunpack.c.l.b16 %v230
    %v2174 = vunpack.c.h.b16 %v230
    %v2175 = vunpack.c.l.b16 %v231
    %v2176 = vunpack.c.h.b16 %v231
    %v2177 = vunpack.c.l.b16 %v232
    %v2178 = vunpack.c.h.b16 %v232
    %v2179 = vunpack.c.l.b16 %v233
    %v2180 = vunpack.c.h.b16 %v233
    %v2181 = vunpack.c.l.b16 %v234
    %v2182 = vunpack.c.h.b16 %v234
    %v2183 = vunpack.c.l.b16 %v235
    %v2184 = vunpack.c.h.b16 %v235
    %v2185 = vunpack.c.l.b16 %v236
    %v2186 = vunpack.c.h.b16 %v236
    %v2187 = vunpack.c.l.b16 %v237
    %v2188 = vunpack.c.h.b16 %v237
    %v2189 = vunpack.c.l.b16 %v238
    %v2190 = vunpack.c.h.b16 %v238
    %v2191 = vunpack.c.l.b16 %v239
    %v2192 = vunpack.c.h.b16 %v239
    %v2193 = vunpack.c.l.b16 %v240
    %v2194 = vunpack.c.h.b16 %v240
    %v2195 = vunpack.c.l.b16 %v241
    %v2196 = vunpack.c.h.b16 %v241
    %v2197 = vunpack.c.l.b16 %v242
    %v2198 = vunpack.c.h.b16 %v242
    %v2199 = vunpack.c.l.b16 %v243
    %v2200 = vunpack.c.h.b16 %v243
    %v2201 = vunpack.c.l.b16 %v244
    %v2202 = vunpack.c.h.b16 %v244
    %v2203 = vunpack.c.l.b16 %v245
    %v2204 = vunpack.c.h.b16 %v245
    %v2205 = vunpack.c.l.b16 %v246
    %v2206 = vunpack.c.l.b16 %v247
    %v2207 = vunpack.c.h.b16 %v247
    %v2208 = vunpack.c.l.b16 %v248
    %v2209 = vunpack.c.h.b16 %v248
    %v2210 = vunpack.c.l.b16 %v249
    %v2211 = vunpack.c.h.b16 %v249
    %v2212 = vunpack.c.l.b16 %v250
    %v2213 = vunpack.c.h.b16 %v250
    %v2214 = vunpack.c.l.b16 %v251
    %v2215 = vunpack.c.h.b16 %v251
    %v2216 = vunpack.c.l.b16 %v252
    %v2217 = vunpack.c.h.b16 %v252
    %v2218 = vunpack.c.l.b16 %v253
    %v2219 = vunpack.c.h.b16 %v253
    %v2220 = vunpack.c.l.b16 %v254
    %v2221 = vunpack.c.h.b16 %v254
    %v2222 = vunpack.c.l.b16 %v255
    %v2223 = vunpack.c.h.b16 %v255
    %v2224 = vunpack.c.l.b16 %v256
    %v2225 = vunpack.c.h.b16 %v256
    %v2226 = vunpack.c.l.b16 %v257
    %v2227 = vunpack.c.h.b16 %v257
    %v2228 = vunpack.c.l.b16 %v258
    %v2229 = vunpack.c.h.b16 %v258
    %v2230 = vunpack.c.l.b16 %v259
    %v2231 = vunpack.c.h.b16 %v259
    %v2232 = vunpack.c.l.b16 %v260
    %v2233 = vunpack.c.h.b16 %v260
    %v2234 = vunpack.c.l.b16 %v261
    %v2235 = vunpack.c.h.b16 %v261
    %v2236 = vunpack.c.l.b16 %v262
    %v2237 = vunpack.c.h.b16 %v262
    %v2238 = vunpack.c.l.b16 %v263
    %v2239 = vunpack.c.h.b16 %v263
    %v2240 = vunpack.c.l.b16 %v264
    %v2241 = vunpack.c.h.b16 %v264
    %v2242 = vunpack.c.l.b16 %v265
    %v2243 = vunpack.c.h.b16 %v265
    %v2244 = vunpack.c.l.b16 %v266
    %v2245 = vunpack.c.h.b16 %v266
    %v2246 = vunpack.c.l.b16 %v267
    %v2247 = vunpack.c.h.b16 %v267
    %v2248 = vunpack.c.l.b16 %v268
    %v2249 = vunpack.c.l.b16 %v269
    %v2250 = vunpack.c.h.b16 %v269
    %v2251 = vunpack.c.l.b16 %v270
    %v2252 = vunpack.c.h.b16 %v270
    %v2253 = vunpack.c.l.b16 %v271
    %v2254 = vunpack.c.h.b16 %v271
    %v2255 = vunpack.c.l.b16 %v272
    %v2256 = vunpack.c.h.b16 %v272
    %v2257 = vunpack.c.l.b16 %v273
    %v2258 = vunpack.c.h.b16 %v273
    %v2259 = vunpack.c.l.b16 %v274
    %v2260 = vunpack.c.h.b16 %v274
    %v2261 = vunpack.c.l.b16 %v275
    %v2262 = vunpack.c.h.b16 %v275
    %v2263 = vunpack.c.l.b16 %v276
    %v2264 = vunpack.c.h.b16 %v276
    %v2265 = vunpack.c.l.b16 %v277
    %v2266 = vunpack.c.h.b16 %v277
    %v2267 = vunpack.c.l.b16 %v278
    %v2268 = vunpack.c.h.b16 %v278
    %v2269 = vunpack.c.l.b16 %v279
    %v2270 = vunpack.c.h.b16 %v279
    %v2271 = vunpack.c.l.b16 %v280
    %v2272 = vunpack.c.h.b16 %v280
    %v2273 = vunpack.c.l.b16 %v281
    %v2274 = vunpack.c.h.b16 %v281
    %v2275 = vunpack.c.l.b16 %v282
    %v2276 = vunpack.c.h.b16 %v282
    %v2277 = vunpack.c.l.b16 %v283
    %v2278 = vunpack.c.h.b16 %v283
    %v2279 = vunpack.c.l.b16 %v284
    %v2280 = vunpack.c.h.b16 %v284
    %v2281 = vunpack.c.l.b16 %v285
    %v2282 = vunpack.c.h.b16 %v285
    %v2283 = vunpack.c.l.b16 %v286
    %v2284 = vunpack.c.h.b16 %v286
    %v2285 = vunpack.c.l.b16 %v287
    %v2286 = vunpack.c.h.b16 %v287
    %v2287 = vunpack.c.l.b16 %v288
    %v2288 = vunpack.c.h.b16 %v288
    %v2289 = vunpack.c.l.b16 %v289
    %v2290 = vunpack.c.h.b16 %v289
    %v2291 = vunpack.c.l.b16 %v290
    %v2292 = vunpack.c.l.b16 %v291
    %v2293 = vunpack.c.h.b16 %v291
    %v2294 = vunpack.c.l.b16 %v292
    %v2295 = vunpack.c.h.b16 %v292
    %v2296 = vunpack.c.l.b16 %v293
    %v2297 = vunpack.c.h.b16 %v293
    %v2298 = vunpack.c.l.b16 %v294
    %v2299 = vunpack.c.h.b16 %v294
    %v2300 = vunpack.c.l.b16 %v295
    %v2301 = vunpack.c.h.b16 %v295
    %v2302 = vunpack.c.l.b16 %v296
    %v2303 = vunpack.c.h.b16 %v296
    %v2304 = vunpack.c.l.b16 %v297
    %v2305 = vunpack.c.h.b16 %v297
    %v2306 = vunpack.c.l.b16 %v298
    %v2307 = vunpack.c.h.b16 %v298
    %v2308 = vunpack.c.l.b16 %v299
    %v2309 = vunpack.c.h.b16 %v299
    %v2310 = vunpack.c.l.b16 %v300
    %v2311 = vunpack.c.h.b16 %v300
    %v2312 = vunpack.c.l.b16 %v301
    %v2313 = vunpack.c.h.b16 %v301
    %v2314 = vunpack.c.l.b16 %v302
    %v2315 = vunpack.c.h.b16 %v302
    %v2316 = vunpack.c.l.b16 %v303
    %v2317 = vunpack.c.h.b16 %v303
    %v2318 = vunpack.c.l.b16 %v304
    %v2319 = vunpack.c.h.b16 %v304
    %v2320 = vunpack.c.l.b16 %v305
    %v2321 = vunpack.c.h.b16 %v305
    %v2322 = vunpack.c.l.b16 %v306
    %v2323 = vunpack.c.h.b16 %v306
    %v2324 = vunpack.c.l.b16 %v307
    %v2325 = vunpack.c.h.b16 %v307
    %v2326 = vunpack.c.l.b16 %v308
    %v2327 = vunpack.c.h.b16 %v308
    %v2328 = vunpack.c.l.b16 %v309
    %v2329 = vunpack.c.h.b16 %v309
    %v2330 = vunpack.c.l.b16 %v310
    %v2331 = vunpack.c.h.b16 %v310
    %v2332 = vunpack.c.l.b16 %v311
    %v2333 = vunpack.c.h.b16 %v311
    %v2334 = vunpack.c.l.b16 %v312
    %v2335 = vunpack.c.l.b16 %v313
    %v2336 = vunpack.c.h.b16 %v313
    %v2337 = vunpack.c.l.b16 %v314
    %v2338 = vunpack.c.h.b16 %v314
    %v2339 = vunpack.c.l.b16 %v315
    %v2340 = vunpack.c.h.b16 %v315
    %v2341 = vunpack.c.l.b16 %v316
    %v2342 = vunpack.c.h.b16 %v316
    %v2343 = vunpack.c.l.b16 %v317
    %v2344 = vunpack.c.h.b16 %v317
    %v2345 = vunpack.c.l.b16 %v318
    %v2346 = vunpack.c.h.b16 %v318
    %v2347 = vunpack.c.l.b16 %v319
    %v2348 = vunpack.c.h.b16 %v319
    %v2349 = vunpack.c.l.b16 %v320
    %v2350 = vunpack.c.h.b16 %v320
    %v2351 = vunpack.c.l.b16 %v321
    %v2352 = vunpack.c.h.b16 %v321
    %v2353 = vunpack.c.l.b16 %v322
    %v2354 = vunpack.c.h.b16 %v322
    %v2355 = vunpack.c.l.b16 %v323
    %v2356 = vunpack.c.h.b16 %v323
    %v2357 = vunpack.c.l.b16 %v324
    %v2358 = vunpack.c.h.b16 %v324
    %v2359 = vunpack.c.l.b16 %v325
    %v2360 = vunpack.c.h.b16 %v325
    %v2361 = vunpack.c.l.b16 %v326
    %v2362 = vunpack.c.h.b16 %v326
    %v2363 = vunpack.c.l.b16 %v327
    %v2364 = vunpack.c.h.b16 %v327
    %v2365 = vunpack.c.l.b16 %v328
    %v2366 = vunpack.c.h.b16 %v328
    %v2367 = vunpack.c.l.b16 %v329
    %v2368 = vunpack.c.h.b16 %v329
    %v2369 = vunpack.c.l.b16 %v330
    %v2370 = vunpack.c.h.b16 %v330
    %v2371 = vunpack.c.l.b16 %v331
    %v2372 = vunpack.c.h.b16 %v331
    %v2373 = vunpack.c.l.b16 %v332
    %v2374 = vunpack.c.h.b16 %v332
    %v2375 = vunpack.c.l.b16 %v333
    %v2376 = vunpack.c.h.b16 %v333
    %v2377 = vunpack.c.l.b16 %v334
    %v2378 = vunpack.c.l.b16 %v335
    %v2379 = vunpack.c.h.b16 %v335
    %v2380 = vunpack.c.l.b16 %v336
    %v2381 = vunpack.c.h.b16 %v336
    %v2382 = vunpack.c.l.b16 %v337
    %v2383 = vunpack.c.h.b16 %v337
    %v2384 = vunpack.c.l.b16 %v338
    %v2385 = vunpack.c.h.b16 %v338
    %v2386 = vunpack.c.l.b16 %v339
    %v2387 = vunpack.c.h.b16 %v339
    %v2388 = vunpack.c.l.b16 %v340
    %v2389 = vunpack.c.h.b16 %v340
    %v2390 = vunpack.c.l.b16 %v341
    %v2391 = vunpack.c.h.b16 %v341
    %v2392 = vunpack.c.l.b16 %v342
    %v2393 = vunpack.c.h.b16 %v342
    %v2394 = vunpack.c.l.b16 %v343
    %v2395 = vunpack.c.h.b16 %v343
    %v2396 = vunpack.c.l.b16 %v344
    %v2397 = vunpack.c.h.b16 %v344
    %v2398 = vunpack.c.l.b16 %v345
    %v2399 = vunpack.c.h.b16 %v345
    %v2400 = vunpack.c.l.b16 %v346
    %v2401 = vunpack.c.h.b16 %v346
    %v2402 = vunpack.c.l.b16 %v347
    %v2403 = vunpack.c.h.b16 %v347
    %v2404 = vunpack.c.l.b16 %v348
    %v2405 = vunpack.c.h.b16 %v348
    %v2406 = vunpack.c.l.b16 %v349
    %v2407 = vunpack.c.h.b16 %v349
    %v2408 = vunpack.c.l.b16 %v350
    %v2409 = vunpack.c.h.b16 %v350
    %v2410 = vunpack.c.l.b16 %v351
    %v2411 = vunpack.c.h.b16 %v351
    %v2412 = vunpack.c.l.b16 %v352
    %v2413 = vunpack.c.h.b16 %v352
    %v2414 = vunpack.c.l.b16 %v353
    %v2415 = vunpack.c.h.b16 %v353
    %v2416 = vunpack.c.l.b16 %v354
    %v2417 = vunpack.c.h.b16 %v354
    %v2418 = vunpack.c.l.b16 %v355
    %v2419 = vunpack.c.h.b16 %v355
    %v2420 = vunpack.c.l.b16 %v356
    %v2421 = vunpack.c.l.b16 %v357
    %v2422 = vunpack.c.h.b16 %v357
    %v2423 = vunpack.c.l.b16 %v358
    %v2424 = vunpack.c.h.b16 %v358
    %v2425 = vunpack.c.l.b16 %v359
    %v2426 = vunpack.c.h.b16 %v359
    %v2427 = vunpack.c.l.b16 %v360
    %v2428 = vunpack.c.h.b16 %v360
    %v2429 = vunpack.c.l.b16 %v361
    %v2430 = vunpack.c.h.b16 %v361
    %v2431 = vunpack.c.l.b16 %v362
    %v2432 = vunpack.c.h.b16 %v362
    %v2433 = vunpack.c.l.b16 %v363
    %v2434 = vunpack.c.h.b16 %v363
    %v2435 = vunpack.c.l.b16 %v364
    %v2436 = vunpack.c.h.b16 %v364
    %v2437 = vunpack.c.l.b16 %v365
    %v2438 = vunpack.c.h.b16 %v365
    %v2439 = vunpack.c.l.b16 %v366
    %v2440 = vunpack.c.h.b16 %v366
    %v2441 = vunpack.c.l.b16 %v367
    %v2442 = vunpack.c.h.b16 %v367
    %v2443 = vunpack.c.l.b16 %v368
    %v2444 = vunpack.c.h.b16 %v368
    %v2445 = vunpack.c.l.b16 %v369
    %v2446 = vunpack.c.h.b16 %v369
    %v2447 = vunpack.c.l.b16 %v370
    %v2448 = vunpack.c.h.b16 %v370
    %v2449 = vunpack.c.l.b16 %v371
    %v2450 = vunpack.c.h.b16 %v371
    %v2451 = vunpack.c.l.b16 %v372
    %v2452 = vunpack.c.h.b16 %v372
    %v2453 = vunpack.c.l.b16 %v373
    %v2454 = vunpack.c.h.b16 %v373
    %v2455 = vunpack.c.l.b16 %v374
    %v2456 = vunpack.c.h.b16 %v374
    %v2457 = vunpack.c.l.b16 %v375
    %v2458 = vunpack.c.h.b16 %v375
    %v2459 = vunpack.c.l.b16 %v376
    %v2460 = vunpack.c.h.b16 %v376
    %v2461 = vunpack.c.l.b16 %v377
    %v2462 = vunpack.c.h.b16 %v377
    %v2463 = vunpack.c.l.b16 %v378
    %v2464 = vunpack.c.l.b16 %v379
    %v2465 = vunpack.c.h.b16 %v379
    %v2466 = vunpack.c.l.b16 %v380
    %v2467 = vunpack.c.h.b16 %v380
    %v2468 = vunpack.c.l.b16 %v381
    %v2469 = vunpack.c.h.b16 %v381
    %v2470 = vunpack.c.l.b16 %v382
    %v2471 = vunpack.c.h.b16 %v382
    %v2472 = vunpack.c.l.b16 %v383
    %v2473 = vunpack.c.h.b16 %v383
    %v2474 = vunpack.c.l.b16 %v384
    %v2475 = vunpack.c.h.b16 %v384
    %v2476 = vunpack.c.l.b16 %v385
    %v2477 = vunpack.c.h.b16 %v385
    %v2478 = vunpack.c.l.b16 %v386
    %v2479 = vunpack.c.h.b16 %v386
    %v2480 = vunpack.c.l.b16 %v387
    %v2481 = vunpack.c.h.b16 %v387
    %v2482 = vunpack.c.l.b16 %v388
    %v2483 = vunpack.c.h.b16 %v388
    %v2484 = vunpack.c.l.b16 %v389
    %v2485 = vunpack.c.h.b16 %v389
    %v2486 = vunpack.c.l.b16 %v390
    %v2487 = vunpack.c.h.b16 %v390
    %v2488 = vunpack.c.l.b16 %v391
    %v2489 = vunpack.c.h.b16 %v391
    %v2490 = vunpack.c.l.b16 %v392
    %v2491 = vunpack.c.h.b16 %v392
    %v2492 = vunpack.c.l.b16 %v393
    %v2493 = vunpack.c.h.b16 %v393
    %v2494 = vunpack.c.l.b16 %v394
    %v2495 = vunpack.c.h.b16 %v394
    %v2496 = vunpack.c.l.b16 %v395
    %v2497 = vunpack.c.h.b16 %v395
    %v2498 = vunpack.c.l.b16 %v396
    %v2499 = vunpack.c.h.b16 %v396
    %v2500 = vunpack.c.l.b16 %v397
    %v2501 = vunpack.c.h.b16 %v397
    %v2502 = vunpack.c.l.b16 %v398
    %v2503 = vunpack.c.h.b16 %v398
    %v2504 = vunpack.c.l.b16 %v399
    %v2505 = vunpack.c.h.b16 %v399
    %v2506 = vunpack.c.l.b16 %v400
    %v2507 = vunpack.c.l.b16 %v401
    %v2508 = vunpack.c.h.b16 %v401
    %v2509 = vunpack.c.l.b16 %v402
    %v2510 = vunpack.c.h.b16 %v402
    %v2511 = vunpack.c.l.b16 %v403
    %v2512 = vunpack.c.h.b16 %v403
    %v2513 = vunpack.c.l.b16 %v404
    %v2514 = vunpack.c.h.b16 %v404
    %v2515 = vunpack.c.l.b16 %v405
    %v2516 = vunpack.c.h.b16 %v405
    %v2517 = vunpack.c.l.b16 %v406
    %v2518 = vunpack.c.h.b16 %v406
    %v2519 = vunpack.c.l.b16 %v407
    %v2520 = vunpack.c.h.b16 %v407
    %v2521 = vunpack.c.l.b16 %v408
    %v2522 = vunpack.c.h.b16 %v408
    %v2523 = vunpack.c.l.b16 %v409
    %v2524 = vunpack.c.h.b16 %v409
    %v2525 = vunpack.c.l.b16 %v410
    %v2526 = vunpack.c.h.b16 %v410
    %v2527 = vunpack.c.l.b16 %v411
    %v2528 = vunpack.c.h.b16 %v411
    %v2529 = vunpack.c.l.b16 %v412
    %v2530 = vunpack.c.h.b16 %v412
    %v2531 = vunpack.c.l.b16 %v413
    %v2532 = vunpack.c.h.b16 %v413
    %v2533 = vunpack.c.l.b16 %v414
    %v2534 = vunpack.c.h.b16 %v414
    %v2535 = vunpack.c.l.b16 %v415
    %v2536 = vunpack.c.h.b16 %v415
    %v2537 = vunpack.c.l.b16 %v416
    %v2538 = vunpack.c.h.b16 %v416
    %v2539 = vunpack.c.l.b16 %v417
    %v2540 = vunpack.c.h.b16 %v417
    %v2541 = vunpack.c.l.b16 %v418
    %v2542 = vunpack.c.h.b16 %v418
    %v2543 = vunpack.c.l.b16 %v419
    %v2544 = vunpack.c.h.b16 %v419
    %v2545 = vunpack.c.l.b16 %v420
    %v2546 = vunpack.c.h.b16 %v420
    %v2547 = vunpack.c.l.b16 %v421
    %v2548 = vunpack.c.h.b16 %v421
    %v2549 = vunpack.c.l.b16 %v422
    %v2550 = vunpack.c.l.b16 %v423
    %v2551 = vunpack.c.h.b16 %v423
    %v2552 = vunpack.c.l.b16 %v424
    %v2553 = vunpack.c.h.b16 %v424
    %v2554 = vunpack.c.l.b16 %v425
    %v2555 = vunpack.c.h.b16 %v425
    %v2556 = vunpack.c.l.b16 %v426
    %v2557 = vunpack.c.h.b16 %v426
    %v2558 = vunpack.c.l.b16 %v427
    %v2559 = vunpack.c.h.b16 %v427
    %v2560 = vunpack.c.l.b16 %v428
    %v2561 = vunpack.c.h.b16 %v428
    %v2562 = vunpack.c.l.b16 %v429
    %v2563 = vunpack.c.h.b16 %v429
    %v2564 = vunpack.c.l.b16 %v430
    %v2565 = vunpack.c.h.b16 %v430
    %v2566 = vunpack.c.l.b16 %v431
    %v2567 = vunpack.c.h.b16 %v431
    %v2568 = vunpack.c.l.b16 %v432
    %v2569 = vunpack.c.h.b16 %v432
    %v2570 = vunpack.c.l.b16 %v433
    %v2571 = vunpack.c.h.b16 %v433
    %v2572 = vunpack.c.l.b16 %v434
    %v2573 = vunpack.c.h.b16 %v434
    %v2574 = vunpack.c.l.b16 %v435
    %v2575 = vunpack.c.h.b16 %v435
    %v2576 = vunpack.c.l.b16 %v436
    %v2577 = vunpack.c.h.b16 %v436
    %v2578 = vunpack.c.l.b16 %v437
    %v2579 = vunpack.c.h.b16 %v437
    %v2580 = vunpack.c.l.b16 %v438
    %v2581 = vunpack.c.h.b16 %v438
    %v2582 = vunpack.c.l.b16 %v439
    %v2583 = vunpack.c.h.b16 %v439
    %v2584 = vunpack.c.l.b16 %v440
    %v2585 = vunpack.c.h.b16 %v440
    %v2586 = vunpack.c.l.b16 %v441
    %v2587 = vunpack.c.h.b16 %v441
    %v2588 = vunpack.c.l.b16 %v442
    %v2589 = vunpack.c.h.b16 %v442
    %v2590 = vunpack.c.l.b16 %v443
    %v2591 = vunpack.c.h.b16 %v443
    %v2592 = vunpack.c.l.b16 %v444
    %v2593 = vunpack.c.l.b16 %v445
    %v2594 = vunpack.c.h.b16 %v445
    %v2595 = vunpack.c.l.b16 %v446
    %v2596 = vunpack.c.h.b16 %v446
    %v2597 = vunpack.c.l.b16 %v447
    %v2598 = vunpack.c.h.b16 %v447
    %v2599 = vunpack.c.l.b16 %v448
    %v2600 = vunpack.c.h.b16 %v448
    %v2601 = vunpack.c.l.b16 %v449
    %v2602 = vunpack.c.h.b16 %v449
    %v2603 = vunpack.c.l.b16 %v450
    %v2604 = vunpack.c.h.b16 %v450
    %v2605 = vunpack.c.l.b16 %v451
    %v2606 = vunpack.c.h.b16 %v451
    %v2607 = vunpack.c.l.b16 %v452
    %v2608 = vunpack.c.h.b16 %v452
    %v2609 = vunpack.c.l.b16 %v453
    %v2610 = vunpack.c.h.b16 %v453
    %v2611 = vunpack.c.l.b16 %v454
    %v2612 = vunpack.c.h.b16 %v454
    %v2613 = vunpack.c.l.b16 %v455
    %v2614 = vunpack.c.h.b16 %v455
    %v2615 = vunpack.c.l.b16 %v456
    %v2616 = vunpack.c.h.b16 %v456
    %v2617 = vunpack.c.l.b16 %v457
    %v2618 = vunpack.c.h.b16 %v457
    %v2619 = vunpack.c.l.b16 %v458
    %v2620 = vunpack.c.h.b16 %v458
    %v2621 = vunpack.c.l.b16 %v459
    %v2622 = vunpack.c.h.b16 %v459
    %v2623 = vunpack.c.l.b16 %v460
    %v2624 = vunpack.c.h.b16 %v460
    %v2625 = vunpack.c.l.b16 %v461
    %v2626 = vunpack.c.h.b16 %v461
    %v2627 = vunpack.c.l.b16 %v462
    %v2628 = vunpack.c.h.b16 %v462
    %v2629 = vunpack.c.l.b16 %v463
    %v2630 = vunpack.c.h.b16 %v463
    %v2631 = vunpack.c.l.b16 %v464
    %v2632 = vunpack.c.h.b16 %v464
    %v2633 = vunpack.c.l.b16 %v465
    %v2634 = vunpack.c.h.b16 %v465
    %v2635 = vunpack.c.l.b16 %v466
    %v2636 = vunpack.c.l.b16 %v467
    %v2637 = vunpack.c.h.b16 %v467
    %v2638 = vunpack.c.l.b16 %v468
    %v2639 = vunpack.c.h.b16 %v468
    %v2640 = vunpack.c.l.b16 %v469
    %v2641 = vunpack.c.h.b16 %v469
    %v2642 = vunpack.c.l.b16 %v470
    %v2643 = vunpack.c.h.b16 %v470
    %v2644 = vunpack.c.l.b16 %v471
    %v2645 = vunpack.c.h.b16 %v471
    %v2646 = vunpack.c.l.b16 %v472
    %v2647 = vunpack.c.h.b16 %v472
    %v2648 = vunpack.c.l.b16 %v473
    %v2649 = vunpack.c.h.b16 %v473
    %v2650 = vunpack.c.l.b16 %v474
    %v2651 = vunpack.c.h.b16 %v474
    %v2652 = vunpack.c.l.b16 %v475
    %v2653 = vunpack.c.h.b16 %v475
    %v2654 = vunpack.c.l.b16 %v476
    %v2655 = vunpack.c.h.b16 %v476
    %v2656 = vunpack.c.l.b16 %v477
    %v2657 = vunpack.c.h.b16 %v477
    %v2658 = vunpack.c.l.b16 %v478
    %v2659 = vunpack.c.h.b16 %v478
    %v2660 = vunpack.c.l.b16 %v479
    %v2661 = vunpack.c.h.b16 %v479
    %v2662 = vunpack.c.l.b16 %v480
    %v2663 = vunpack.c.h.b16 %v480
    %v2664 = vunpack.c.l.b16 %v481
    %v2665 = vunpack.c.h.b16 %v481
    %v2666 = vunpack.c.l.b16 %v482
    %v2667 = vunpack.c.h.b16 %v482
    %v2668 = vunpack.c.l.b16 %v483
    %v2669 = vunpack.c.h.b16 %v483
    %v2670 = vunpack.c.l.b16 %v484
    %v2671 = vunpack.c.h.b16 %v484
    %v2672 = vunpack.c.l.b16 %v485
    %v2673 = vunpack.c.h.b16 %v485
    %v2674 = vunpack.c.l.b16 %v486
    %v2675 = vunpack.c.h.b16 %v486
    %v2676 = vunpack.c.l.b16 %v487
    %v2677 = vunpack.c.h.b16 %v487
    %v2678 = vunpack.c.l.b16 %v488
    %v2679 = vunpack.c.l.b16 %v489
    %v2680 = vunpack.c.h.b16 %v489
    %v2681 = vunpack.c.l.b16 %v490
    %v2682 = vunpack.c.h.b16 %v490
    %v2683 = vunpack.c.l.b16 %v491
    %v2684 = vunpack.c.h.b16 %v491
    %v2685 = vunpack.c.l.b16 %v492
    %v2686 = vunpack.c.h.b16 %v492
    %v2687 = vunpack.c.l.b16 %v493
    %v2688 = vunpack.c.h.b16 %v493
    %v2689 = vunpack.c.l.b16 %v494
    %v2690 = vunpack.c.h.b16 %v494
    %v2691 = vunpack.c.l.b16 %v495
    %v2692 = vunpack.c.h.b16 %v495
    %v2693 = vunpack.c.l.b16 %v496
    %v2694 = vunpack.c.h.b16 %v496
    %v2695 = vunpack.c.l.b16 %v497
    %v2696 = vunpack.c.h.b16 %v497
    %v2697 = vunpack.c.l.b16 %v498
    %v2698 = vunpack.c.h.b16 %v498
    %v2699 = vunpack.c.l.b16 %v499
    %v2700 = vunpack.c.h.b16 %v499
    %v2701 = vunpack.c.l.b16 %v500
    %v2702 = vunpack.c.h.b16 %v500
    %v2703 = vunpack.c.l.b16 %v501
    %v2704 = vunpack.c.h.b16 %v501
    %v2705 = vunpack.c.l.b16 %v502
    %v2706 = vunpack.c.h.b16 %v502
    %v2707 = vunpack.c.l.b16 %v503
    %v2708 = vunpack.c.h.b16 %v503
    %v2709 = vunpack.c.l.b16 %v504
    %v2710 = vunpack.c.h.b16 %v504
    %v2711 = vunpack.c.l.b16 %v505
    %v2712 = vunpack.c.h.b16 %v505
    %v2713 = vunpack.c.l.b16 %v506
    %v2714 = vunpack.c.h.b16 %v506
    %v2715 = vunpack.c.l.b16 %v507
    %v2716 = vunpack.c.h.b16 %v507
    %v2717 = vunpack.c.l.b16 %v508
    %v2718 = vunpack.c.h.b16 %v508
    %v2719 = vunpack.c.l.b16 %v509
    %v2720 = vunpack.c.h.b16 %v509
    %v2721 = vunpack.c.l.b16 %v510
    %v2722 = vunpack.c.l.b16 %v511
    %v2723 = vunpack.c.h.b16 %v511
    %v2724 = vunpack.c.l.b16 %v512
    %v2725 = vunpack.c.h.b16 %v512
    %v2726 = vunpack.c.l.b16 %v513
    %v2727 = vunpack.c.h.b16 %v513
    %v2728 = vunpack.c.l.b16 %v514
    %v2729 = vunpack.c.h.b16 %v514
    %v2730 = vunpack.c.l.b16 %v515
    %v2731 = vunpack.c.h.b16 %v515
    %v2732 = vunpack.c.l.b16 %v516
    %v2733 = vunpack.c.h.b16 %v516
    %v2734 = vunpack.c.l.b16 %v517
    %v2735 = vunpack.c.h.b16 %v517
    %v2736 = vunpack.c.l.b16 %v518
    %v2737 = vunpack.c.h.b16 %v518
    %v2738 = vunpack.c.l.b16 %v519
    %v2739 = vunpack.c.h.b16 %v519
    %v2740 = vunpack.c.l.b16 %v520
    %v2741 = vunpack.c.h.b16 %v520
    %v2742 = vunpack.c.l.b16 %v521
    %v2743 = vunpack.c.h.b16 %v521
    %v2744 = vunpack.c.l.b16 %v522
    %v2745 = vunpack.c.h.b16 %v522
    %v2746 = vunpack.c.l.b16 %v523
    %v2747 = vunpack.c.h.b16 %v523
    %v2748 = vunpack.c.l.b16 %v524
    %v2749 = vunpack.c.h.b16 %v524
    %v2750 = vunpack.c.l.b16 %v525
    %v2751 = vunpack.c.h.b16 %v525
    %v2752 = vunpack.c.l.b16 %v526
    %v2753 = vunpack.c.h.b16 %v526
    %v2754 = vunpack.c.l.b16 %v527
    %v2755 = vunpack.c.h.b16 %v527
    %v2756 = vunpack.c.l.b16 %v528
    %v2757 = vunpack.c.h.b16 %v528
    %v2758 = vunpack.c.l.b16 %v529
    %v2759 = vunpack.c.h.b16 %v529
    %v2760 = vunpack.c.l.b16 %v530
    %v2761 = vunpack.c.h.b16 %v530
    %v2762 = vunpack.c.l.b16 %v531
    %v2763 = vunpack.c.h.b16 %v531
    %v2764 = vunpack.c.l.b16 %v532
    %v2765 = vunpack.c.l.b16 %v533
    %v2766 = vunpack.c.h.b16 %v533
    %v2767 = vunpack.c.l.b16 %v534
    %v2768 = vunpack.c.h.b16 %v534
    %v2769 = vunpack.c.l.b16 %v535
    %v2770 = vunpack.c.h.b16 %v535
    %v2771 = vunpack.c.l.b16 %v536
    %v2772 = vunpack.c.h.b16 %v536
    %v2773 = vunpack.c.l.b16 %v537
    %v2774 = vunpack.c.h.b16 %v537
    %v2775 = vunpack.c.l.b16 %v538
    %v2776 = vunpack.c.h.b16 %v538
    %v2777 = vunpack.c.l.b16 %v539
    %v2778 = vunpack.c.h.b16 %v539
    %v2779 = vunpack.c.l.b16 %v540
    %v2780 = vunpack.c.h.b16 %v540
    %v2781 = vunpack.c.l.b16 %v541
    %v2782 = vunpack.c.h.b16 %v541
    %v2783 = vunpack.c.l.b16 %v542
    %v2784 = vunpack.c.h.b16 %v542
    %v2785 = vunpack.c.l.b16 %v543
    %v2786 = vunpack.c.h.b16 %v543
    %v2787 = vunpack.c.l.b16 %v544
    %v2788 = vunpack.c.h.b16 %v544
    %v2789 = vunpack.c.l.b16 %v545
    %v2790 = vunpack.c.h.b16 %v545
    %v2791 = vunpack.c.l.b16 %v546
    %v2792 = vunpack.c.h.b16 %v546
    %v2793 = vunpack.c.l.b16 %v547
    %v2794 = vunpack.c.h.b16 %v547
    %v2795 = vunpack.c.l.b16 %v548
    %v2796 = vunpack.c.h.b16 %v548
    %v2797 = vunpack.c.l.b16 %v549
    %v2798 = vunpack.c.h.b16 %v549
    %v2799 = vunpack.c.l.b16 %v550
    %v2800 = vunpack.c.h.b16 %v550
    %v2801 = vunpack.c.l.b16 %v551
    %v2802 = vunpack.c.h.b16 %v551
    %v2803 = vunpack.c.l.b16 %v552
    %v2804 = vunpack.c.h.b16 %v552
    %v2805 = vunpack.c.l.b16 %v553
    %v2806 = vunpack.c.h.b16 %v553
    %v2807 = vunpack.c.l.b16 %v554
    %v2808 = vunpack.c.l.b16 %v555
    %v2809 = vunpack.c.h.b16 %v555
    %v2810 = vunpack.c.l.b16 %v556
    %v2811 = vunpack.c.h.b16 %v556
    %v2812 = vunpack.c.l.b16 %v557
    %v2813 = vunpack.c.h.b16 %v557
    %v2814 = vunpack.c.l.b16 %v558
    %v2815 = vunpack.c.h.b16 %v558
    %v2816 = vunpack.c.l.b16 %v559
    %v2817 = vunpack.c.h.b16 %v559
    %v2818 = vunpack.c.l.b16 %v560
    %v2819 = vunpack.c.h.b16 %v560
    %v2820 = vunpack.c.l.b16 %v561
    %v2821 = vunpack.c.h.b16 %v561
    %v2822 = vunpack.c.l.b16 %v562
    %v2823 = vunpack.c.h.b16 %v562
    %v2824 = vunpack.c.l.b16 %v563
    %v2825 = vunpack.c.h.b16 %v563
    %v2826 = vunpack.c.l.b16 %v564
    %v2827 = vunpack.c.h.b16 %v564
    %v2828 = vunpack.c.l.b16 %v565
    %v2829 = vunpack.c.h.b16 %v565
    %v2830 = vunpack.c.l.b16 %v566
    %v2831 = vunpack.c.h.b16 %v566
    %v2832 = vunpack.c.l.b16 %v567
    %v2833 = vunpack.c.h.b16 %v567
    %v2834 = vunpack.c.l.b16 %v568
    %v2835 = vunpack.c.h.b16 %v568
    %v2836 = vunpack.c.l.b16 %v569
    %v2837 = vunpack.c.h.b16 %v569
    %v2838 = vunpack.c.l.b16 %v570
    %v2839 = vunpack.c.h.b16 %v570
    %v2840 = vunpack.c.l.b16 %v571
    %v2841 = vunpack.c.h.b16 %v571
    %v2842 = vunpack.c.l.b16 %v572
    %v2843 = vunpack.c.h.b16 %v572
    %v2844 = vunpack.c.l.b16 %v573
    %v2845 = vunpack.c.h.b16 %v573
    %v2846 = vunpack.c.l.b16 %v574
    %v2847 = vunpack.c.h.b16 %v574
    %v2848 = vunpack.c.l.b16 %v575
    %v2849 = vunpack.c.h.b16 %v575
    %v2850 = vunpack.c.l.b16 %v576
    %v2851 = vunpack.c.l.b16 %v577
    %v2852 = vunpack.c.h.b16 %v577
    %v2853 = vunpack.c.l.b16 %v578
    %v2854 = vunpack.c.h.b16 %v578
    %v2855 = vunpack.c.l.b16 %v579
    %v2856 = vunpack.c.h.b16 %v579
    %v2857 = vunpack.c.l.b16 %v580
    %v2858 = vunpack.c.h.b16 %v580
    %v2859 = vunpack.c.l.b16 %v581
    %v2860 = vunpack.c.h.b16 %v581
    %v2861 = vunpack.c.l.b16 %v582
    %v2862 = vunpack.c.h.b16 %v582
    %v2863 = vunpack.c.l.b16 %v583
    %v2864 = vunpack.c.h.b16 %v583
    %v2865 = vunpack.c.l.b16 %v584
    %v2866 = vunpack.c.h.b16 %v584
    %v2867 = vunpack.c.l.b16 %v585
    %v2868 = vunpack.c.h.b16 %v585
    %v2869 = vunpack.c.l.b16 %v586
    %v2870 = vunpack.c.h.b16 %v586
    %v2871 = vunpack.c.l.b16 %v587
    %v2872 = vunpack.c.h.b16 %v587
    %v2873 = vunpack.c.l.b16 %v588
    %v2874 = vunpack.c.h.b16 %v588
    %v2875 = vunpack.c.l.b16 %v589
    %v2876 = vunpack.c.h.b16 %v589
    %v2877 = vunpack.c.l.b16 %v590
    %v2878 = vunpack.c.h.b16 %v590
    %v2879 = vunpack.c.l.b16 %v591
    %v2880 = vunpack.c.h.b16 %v591
    %v2881 = vunpack.c.l.b16 %v592
    %v2882 = vunpack.c.h.b16 %v592
    %v2883 = vunpack.c.l.b16 %v593
    %v2884 = vunpack.c.h.b16 %v593
    %v2885 = vunpack.c.l.b16 %v594
    %v2886 = vunpack.c.h.b16 %v594
    %v2887 = vunpack.c.l.b16 %v595
    %v2888 = vunpack.c.h.b16 %v595
    %v2889 = vunpack.c.l.b16 %v596
    %v2890 = vunpack.c.h.b16 %v596
    %v2891 = vunpack.c.l.b16 %v597
    %v2892 = vunpack.c.h.b16 %v597
    %v2893 = vunpack.c.l.b16 %v598
    %v2894 = vunpack.c.l.b16 %v599
    %v2895 = vunpack.c.h.b16 %v599
    %v2896 = vunpack.c.l.b16 %v600
    %v2897 = vunpack.c.h.b16 %v600
    %v2898 = vunpack.c.l.b16 %v601
    %v2899 = vunpack.c.h.b16 %v601
    %v2900 = vunpack.c.l.b16 %v602
    %v2901 = vunpack.c.h.b16 %v602
    %v2902 = vunpack.c.l.b16 %v603
    %v2903 = vunpack.c.h.b16 %v603
    %v2904 = vunpack.c.l.b16 %v604
    %v2905 = vunpack.c.h.b16 %v604
    %v2906 = vunpack.c.l.b16 %v605
    %v2907 = vunpack.c.h.b16 %v605
    %v2908 = vunpack.c.l.b16 %v606
    %v2909 = vunpack.c.h.b16 %v606
    %v2910 = vunpack.c.l.b16 %v607
    %v2911 = vunpack.c.h.b16 %v607
    %v2912 = vunpack.c.l.b16 %v608
    %v2913 = vunpack.c.h.b16 %v608
    %v2914 = vunpack.c.l.b16 %v609
    %v2915 = vunpack.c.h.b16 %v609
    %v2916 = vunpack.c.l.b16 %v610
    %v2917 = vunpack.c.h.b16 %v610
    %v2918 = vunpack.c.l.b16 %v611
    %v2919 = vunpack.c.h.b16 %v611
    %v2920 = vunpack.c.l.b16 %v612
    %v2921 = vunpack.c.h.b16 %v612
    %v2922 = vunpack.c.l.b16 %v613
    %v2923 = vunpack.c.h.b16 %v613
    %v2924 = vunpack.c.l.b16 %v614
    %v2925 = vunpack.c.h.b16 %v614
    %v2926 = vunpack.c.l.b16 %v615
    %v2927 = vunpack.c.h.b16 %v615
    %v2928 = vunpack.c.l.b16 %v616
    %v2929 = vunpack.c.h.b16 %v616
    %v2930 = vunpack.c.l.b16 %v617
    %v2931 = vunpack.c.h.b16 %v617
    %v2932 = vunpack.c.l.b16 %v618
    %v2933 = vunpack.c.h.b16 %v618
    %v2934 = vunpack.c.l.b16 %v619
    %v2935 = vunpack.c.h.b16 %v619
    %v2936 = vunpack.c.l.b16 %v620
    %v2937 = vunpack.c.l.b16 %v621
    %v2938 = vunpack.c.h.b16 %v621
    %v2939 = vunpack.c.l.b16 %v622
    %v2940 = vunpack.c.h.b16 %v622
    %v2941 = vunpack.c.l.b16 %v623
    %v2942 = vunpack.c.h.b16 %v623
    %v2943 = vunpack.c.l.b16 %v624
    %v2944 = vunpack.c.h.b16 %v624
    %v2945 = vunpack.c.l.b16 %v625
    %v2946 = vunpack.c.h.b16 %v625
    %v2947 = vunpack.c.l.b16 %v626
    %v2948 = vunpack.c.h.b16 %v626
    %v2949 = vunpack.c.l.b16 %v627
    %v2950 = vunpack.c.h.b16 %v627
    %v2951 = vunpack.c.l.b16 %v628
    %v2952 = vunpack.c.h.b16 %v628
    %v2953 = vunpack.c.l.b16 %v629
    %v2954 = vunpack.c.h.b16 %v629
    %v2955 = vunpack.c.l.b16 %v630
    %v2956 = vunpack.c.h.b16 %v630
    %v2957 = vunpack.c.l.b16 %v631
    %v2958 = vunpack.c.h.b16 %v631
    %v2959 = vunpack.c.l.b16 %v632
    %v2960 = vunpack.c.h.b16 %v632
    %v2961 = vunpack.c.l.b16 %v633
    %v2962 = vunpack.c.h.b16 %v633
    %v2963 = vunpack.c.l.b16 %v634
    %v2964 = vunpack.c.h.b16 %v634
    %v2965 = vunpack.c.l.b16 %v635
    %v2966 = vunpack.c.h.b16 %v635
    %v2967 = vunpack.c.l.b16 %v636
    %v2968 = vunpack.c.h.b16 %v636
    %v2969 = vunpack.c.l.b16 %v637
    %v2970 = vunpack.c.h.b16 %v637
    %v2971 = vunpack.c.l.b16 %v638
    %v2972 = vunpack.c.h.b16 %v638
    %v2973 = vunpack.c.l.b16 %v639
    %v2974 = vunpack.c.h.b16 %v639
    %v2975 = vunpack.c.l.b16 %v640
    %v2976 = vunpack.c.h.b16 %v640
    %v2977 = vunpack.c.l.b16 %v641
    %v2978 = vunpack.c.h.b16 %v641
    %v2979 = vunpack.c.l.b16 %v642
    %v2980 = vunpack.c.l.b16 %v643
    %v2981 = vunpack.c.h.b16 %v643
    %v2982 = vunpack.c.l.b16 %v644
    %v2983 = vunpack.c.h.b16 %v644
    %v2984 = vunpack.c.l.b16 %v645
    %v2985 = vunpack.c.h.b16 %v645
    %v2986 = vunpack.c.l.b16 %v646
    %v2987 = vunpack.c.h.b16 %v646
    %v2988 = vunpack.c.l.b16 %v647
    %v2989 = vunpack.c.h.b16 %v647
    %v2990 = vunpack.c.l.b16 %v648
    %v2991 = vunpack.c.h.b16 %v648
    %v2992 = vunpack.c.l.b16 %v649
    %v2993 = vunpack.c.h.b16 %v649
    %v2994 = vunpack.c.l.b16 %v650
    %v2995 = vunpack.c.h.b16 %v650
    %v2996 = vunpack.c.l.b16 %v651
    %v2997 = vunpack.c.h.b16 %v651
    %v2998 = vunpack.c.l.b16 %v652
    %v2999 = vunpack.c.h.b16 %v652
    %v3000 = vunpack.c.l.b16 %v653
    %v3001 = vunpack.c.h.b16 %v653
    %v3002 = vunpack.c.l.b16 %v654
    %v3003 = vunpack.c.h.b16 %v654
    %v3004 = vunpack.c.l.b16 %v655
    %v3005 = vunpack.c.h.b16 %v655
    %v3006 = vunpack.c.l.b16 %v656
    %v3007 = vunpack.c.h.b16 %v656
    %v3008 = vunpack.c.l.b16 %v657
    %v3009 = vunpack.c.h.b16 %v657
    %v3010 = vunpack.c.l.b16 %v658
    %v3011 = vunpack.c.h.b16 %v658
    %v3012 = vunpack.c.l.b16 %v659
    %v3013 = vunpack.c.h.b16 %v659
    %v3014 = vunpack.c.l.b16 %v660
    %v3015 = vunpack.c.h.b16 %v660
    %v3016 = vunpack.c.l.b16 %v661
    %v3017 = vunpack.c.h.b16 %v661
    %v3018 = vunpack.c.l.b16 %v662
    %v3019 = vunpack.c.h.b16 %v662
    %v3020 = vunpack.c.l.b16 %v663
    %v3021 = vunpack.c.h.b16 %v663
    %v3022 = vunpack.c.l.b16 %v664
    %v3023 = vunpack.c.l.b16 %v665
    %v3024 = vunpack.c.h.b16 %v665
    %v3025 = vunpack.c.l.b16 %v666
    %v3026 = vunpack.c.h.b16 %v666
    %v3027 = vunpack.c.l.b16 %v667
    %v3028 = vunpack.c.h.b16 %v667
    %v3029 = vunpack.c.l.b16 %v668
    %v3030 = vunpack.c.h.b16 %v668
    %v3031 = vunpack.c.l.b16 %v669
    %v3032 = vunpack.c.h.b16 %v669
    %v3033 = vunpack.c.l.b16 %v670
    %v3034 = vunpack.c.h.b16 %v670
    %v3035 = vunpack.c.l.b16 %v671
    %v3036 = vunpack.c.h.b16 %v671
    %v3037 = vunpack.c.l.b16 %v672
    %v3038 = vunpack.c.h.b16 %v672
    %v3039 = vunpack.c.l.b16 %v673
    %v3040 = vunpack.c.h.b16 %v673
    %v3041 = vunpack.c.l.b16 %v674
    %v3042 = vunpack.c.h.b16 %v674
    %v3043 = vunpack.c.l.b16 %v675
    %v3044 = vunpack.c.h.b16 %v675
    %v3045 = vunpack.c.l.b16 %v676
    %v3046 = vunpack.c.h.b16 %v676
    %v3047 = vunpack.c.l.b16 %v677
    %v3048 = vunpack.c.h.b16 %v677
    %v3049 = vunpack.c.l.b16 %v678
    %v3050 = vunpack.c.h.b16 %v678
    %v3051 = vunpack.c.l.b16 %v679
    %v3052 = vunpack.c.h.b16 %v679
    %v3053 = vunpack.c.l.b16 %v680
    %v3054 = vunpack.c.h.b16 %v680
    %v3055 = vunpack.c.l.b16 %v681
    %v3056 = vunpack.c.h.b16 %v681
    %v3057 = vunpack.c.l.b16 %v682
    %v3058 = vunpack.c.h.b16 %v682
    %v3059 = vunpack.c.l.b16 %v683
    %v3060 = vunpack.c.h.b16 %v683
    %v3061 = vunpack.c.l.b16 %v684
    %v3062 = vunpack.c.h.b16 %v684
    %v3063 = vunpack.c.l.b16 %v685
    %v3064 = vunpack.c.h.b16 %v685
    %v3065 = vunpack.c.l.b16 %v686
    %v3066 = vunpack.c.l.b16 %v687
    %v3067 = vunpack.c.h.b16 %v687
    %v3068 = vunpack.c.l.b16 %v688
    %v3069 = vunpack.c.h.b16 %v688
    %v3070 = vunpack.c.l.b16 %v689
    %v3071 = vunpack.c.h.b16 %v689
    %v3072 = vunpack.c.l.b16 %v690
    %v3073 = vunpack.c.h.b16 %v690
    %v3074 = vunpack.c.l.b16 %v691
    %v3075 = vunpack.c.h.b16 %v691
    %v3076 = vunpack.c.l.b16 %v692
    %v3077 = vunpack.c.h.b16 %v692
    %v3078 = vunpack.c.l.b16 %v693
    %v3079 = vunpack.c.h.b16 %v693
    %v3080 = vunpack.c.l.b16 %v694
    %v3081 = vunpack.c.h.b16 %v694
    %v3082 = vunpack.c.l.b16 %v695
    %v3083 = vunpack.c.h.b16 %v695
    %v3084 = vunpack.c.l.b16 %v696
    %v3085 = vunpack.c.h.b16 %v696
    %v3086 = vunpack.c.l.b16 %v697
    %v3087 = vunpack.c.h.b16 %v697
    %v3088 = vunpack.c.l.b16 %v698
    %v3089 = vunpack.c.h.b16 %v698
    %v3090 = vunpack.c.l.b16 %v699
    %v3091 = vunpack.c.h.b16 %v699
    %v3092 = vunpack.c.l.b16 %v700
    %v3093 = vunpack.c.h.b16 %v700
    %v3094 = vunpack.c.l.b16 %v701
    %v3095 = vunpack.c.h.b16 %v701
    %v3096 = vunpack.c.l.b16 %v702
    %v3097 = vunpack.c.h.b16 %v702
    %v3098 = vunpack.c.l.b16 %v703
    %v3099 = vunpack.c.h.b16 %v703
    %v3100 = vunpack.c.l.b16 %v704
    %v3101 = vunpack.c.h.b16 %v704
    %v3102 = vunpack.c.l.b16 %v705
    %v3103 = vunpack.c.h.b16 %v705
    %v3104 = vunpack.c.l.b16 %v706
    %v3105 = vunpack.c.h.b16 %v706
    %v3106 = vunpack.c.l.b16 %v707
    %v3107 = vunpack.c.h.b16 %v707
    %v3108 = vunpack.c.l.b16 %v708
    %v3109 = vunpack.c.l.b16 %v709
    %v3110 = vunpack.c.h.b16 %v709
    %v3111 = vunpack.c.l.b16 %v710
    %v3112 = vunpack.c.h.b16 %v710
    %v3113 = vunpack.c.l.b16 %v711
    %v3114 = vunpack.c.h.b16 %v711
    %v3115 = vunpack.c.l.b16 %v712
    %v3116 = vunpack.c.h.b16 %v712
    %v3117 = vunpack.c.l.b16 %v713
    %v3118 = vunpack.c.h.b16 %v713
    %v3119 = vunpack.c.l.b16 %v714
    %v3120 = vunpack.c.h.b16 %v714
    %v3121 = vunpack.c.l.b16 %v715
    %v3122 = vunpack.c.h.b16 %v715
    %v3123 = vunpack.c.l.b16 %v716
    %v3124 = vunpack.c.h.b16 %v716
    %v3125 = vunpack.c.l.b16 %v717
    %v3126 = vunpack.c.h.b16 %v717
    %v3127 = vunpack.c.l.b16 %v718
    %v3128 = vunpack.c.h.b16 %v718
    %v3129 = vunpack.c.l.b16 %v719
    %v3130 = vunpack.c.h.b16 %v719
    %v3131 = vunpack.c.l.b16 %v720
    %v3132 = vunpack.c.h.b16 %v720
    %v3133 = vunpack.c.l.b16 %v721
    %v3134 = vunpack.c.h.b16 %v721
    %v3135 = vunpack.c.l.b16 %v722
    %v3136 = vunpack.c.h.b16 %v722
    %v3137 = vunpack.c.l.b16 %v723
    %v3138 = vunpack.c.h.b16 %v723
    %v3139 = vunpack.c.l.b16 %v724
    %v3140 = vunpack.c.h.b16 %v724
    %v3141 = vunpack.c.l.b16 %v725
    %v3142 = vunpack.c.h.b16 %v725
    %v3143 = vunpack.c.l.b16 %v726
    %v3144 = vunpack.c.h.b16 %v726
    %v3145 = vunpack.c.l.b16 %v727
    %v3146 = vunpack.c.h.b16 %v727
    %v3147 = vunpack.c.l.b16 %v728
    %v3148 = vunpack.c.h.b16 %v728
    %v3149 = vunpack.c.l.b16 %v729
    %v3150 = vunpack.c.h.b16 %v729
    %v3151 = vunpack.c.l.b16 %v730
    %v3152 = vunpack.c.l.b16 %v731
    %v3153 = vunpack.c.h.b16 %v731
    %v3154 = vunpack.c.l.b16 %v732
    %v3155 = vunpack.c.h.b16 %v732
    %v3156 = vunpack.c.l.b16 %v733
    %v3157 = vunpack.c.h.b16 %v733
    %v3158 = vunpack.c.l.b16 %v734
    %v3159 = vunpack.c.h.b16 %v734
    %v3160 = vunpack.c.l.b16 %v735
    %v3161 = vunpack.c.h.b16 %v735
    %v3162 = vunpack.c.l.b16 %v736
    %v3163 = vunpack.c.h.b16 %v736
    %v3164 = vunpack.c.l.b16 %v737
    %v3165 = vunpack.c.h.b16 %v737
    %v3166 = vunpack.c.l.b16 %v738
    %v3167 = vunpack.c.h.b16 %v738
    %v3168 = vunpack.c.l.b16 %v739
    %v3169 = vunpack.c.h.b16 %v739
    %v3170 = vunpack.c.l.b16 %v740
    %v3171 = vunpack.c.h.b16 %v740
    %v3172 = vunpack.c.l.b16 %v741
    %v3173 = vunpack.c.h.b16 %v741
    %v3174 = vunpack.c.l.b16 %v742
    %v3175 = vunpack.c.h.b16 %v742
    %v3176 = vunpack.c.l.b16 %v743
    %v3177 = vunpack.c.h.b16 %v743
    %v3178 = vunpack.c.l.b16 %v744
    %v3179 = vunpack.c.h.b16 %v744
    %v3180 = vunpack.c.l.b16 %v745
    %v3181 = vunpack.c.h.b16 %v745
    %v3182 = vunpack.c.l.b16 %v746
    %v3183 = vunpack.c.h.b16 %v746
    %v3184 = vunpack.c.l.b16 %v747
    %v3185 = vunpack.c.h.b16 %v747
    %v3186 = vunpack.c.l.b16 %v748
    %v3187 = vunpack.c.h.b16 %v748
    %v3188 = vunpack.c.l.b16 %v749
    %v3189 = vunpack.c.h.b16 %v749
    %v3190 = vunpack.c.l.b16 %v750
    %v3191 = vunpack.c.h.b16 %v750
    %v3192 = vunpack.c.l.b16 %v751
    %v3193 = vunpack.c.h.b16 %v751
    %v3194 = vunpack.c.l.b16 %v752
    %v3195 = vunpack.c.l.b16 %v753
    %v3196 = vunpack.c.h.b16 %v753
    %v3197 = vunpack.c.l.b16 %v754
    %v3198 = vunpack.c.h.b16 %v754
    %v3199 = vunpack.c.l.b16 %v755
    %v3200 = vunpack.c.h.b16 %v755
    %v3201 = vunpack.c.l.b16 %v756
    %v3202 = vunpack.c.h.b16 %v756
    %v3203 = vunpack.c.l.b16 %v757
    %v3204 = vunpack.c.h.b16 %v757
    %v3205 = vunpack.c.l.b16 %v758
    %v3206 = vunpack.c.h.b16 %v758
    %v3207 = vunpack.c.l.b16 %v759
    %v3208 = vunpack.c.h.b16 %v759
    %v3209 = vunpack.c.l.b16 %v760
    %v3210 = vunpack.c.h.b16 %v760
    %v3211 = vunpack.c.l.b16 %v761
    %v3212 = vunpack.c.h.b16 %v761
    %v3213 = vunpack.c.l.b16 %v762
    %v3214 = vunpack.c.h.b16 %v762
    %v3215 = vunpack.c.l.b16 %v763
    %v3216 = vunpack.c.h.b16 %v763
    %v3217 = vunpack.c.l.b16 %v764
    %v3218 = vunpack.c.h.b16 %v764
    %v3219 = vunpack.c.l.b16 %v765
    %v3220 = vunpack.c.h.b16 %v765
    %v3221 = vunpack.c.l.b16 %v766
    %v3222 = vunpack.c.h.b16 %v766
    %v3223 = vunpack.c.l.b16 %v767
    %v3224 = vunpack.c.h.b16 %v767
    %v3225 = vunpack.c.l.b16 %v768
    %v3226 = vunpack.c.h.b16 %v768
    %v3227 = vunpack.c.l.b16 %v769
    %v3228 = vunpack.c.h.b16 %v769
    %v3229 = vunpack.c.l.b16 %v770
    %v3230 = vunpack.c.h.b16 %v770
    %v3231 = vunpack.c.l.b16 %v771
    %v3232 = vunpack.c.h.b16 %v771
    %v3233 = vunpack.c.l.b16 %v772
    %v3234 = vunpack.c.h.b16 %v772
    %v3235 = vunpack.c.l.b16 %v773
    %v3236 = vunpack.c.h.b16 %v773
    %v3237 = vunpack.c.l.b16 %v774
    %v3238 = vunpack.c.l.b16 %v775
    %v3239 = vunpack.c.h.b16 %v775
    %v3240 = vunpack.c.l.b16 %v776
    %v3241 = vunpack.c.h.b16 %v776
    %v3242 = vunpack.c.l.b16 %v777
    %v3243 = vunpack.c.h.b16 %v777
    %v3244 = vunpack.c.l.b16 %v778
    %v3245 = vunpack.c.h.b16 %v778
    %v3246 = vunpack.c.l.b16 %v779
    %v3247 = vunpack.c.h.b16 %v779
    %v3248 = vunpack.c.l.b16 %v780
    %v3249 = vunpack.c.h.b16 %v780
    %v3250 = vunpack.c.l.b16 %v781
    %v3251 = vunpack.c.h.b16 %v781
    %v3252 = vunpack.c.l.b16 %v782
    %v3253 = vunpack.c.h.b16 %v782
    %v3254 = vunpack.c.l.b16 %v783
    %v3255 = vunpack.c.h.b16 %v783
    %v3256 = vunpack.c.l.b16 %v784
    %v3257 = vunpack.c.h.b16 %v784
    %v3258 = vunpack.c.l.b16 %v785
    %v3259 = vunpack.c.h.b16 %v785
    %v3260 = vunpack.c.l.b16 %v786
    %v3261 = vunpack.c.h.b16 %v786
    %v3262 = vunpack.c.l.b16 %v787
    %v3263 = vunpack.c.h.b16 %v787
    %v3264 = vunpack.c.l.b16 %v788
    %v3265 = vunpack.c.h.b16 %v788
    %v3266 = vunpack.c.l.b16 %v789
    %v3267 = vunpack.c.h.b16 %v789
    %v3268 = vunpack.c.l.b16 %v790
    %v3269 = vunpack.c.h.b16 %v790
    %v3270 = vunpack.c.l.b16 %v791
    %v3271 = vunpack.c.h.b16 %v791
    %v3272 = vunpack.c.l.b16 %v792
    %v3273 = vunpack.c.h.b16 %v792
    %v3274 = vunpack.c.l.b16 %v793
    %v3275 = vunpack.c.h.b16 %v793
    %v3276 = vunpack.c.l.b16 %v794
    %v3277 = vunpack.c.h.b16 %v794
    %v3278 = vunpack.c.l.b16 %v795
    %v3279 = vunpack.c.h.b16 %v795
    %v3280 = vunpack.c.l.b16 %v796
    %v3281 = vunpack.c.l.b16 %v797
    %v3282 = vunpack.c.h.b16 %v797
    %v3283 = vunpack.c.l.b16 %v798
    %v3284 = vunpack.c.h.b16 %v798
    %v3285 = vunpack.c.l.b16 %v799
    %v3286 = vunpack.c.h.b16 %v799
    %v3287 = vunpack.c.l.b16 %v800
    %v3288 = vunpack.c.h.b16 %v800
    %v3289 = vunpack.c.l.b16 %v801
    %v3290 = vunpack.c.h.b16 %v801
    %v3291 = vunpack.c.l.b16 %v802
    %v3292 = vunpack.c.h.b16 %v802
    %v3293 = vunpack.c.l.b16 %v803
    %v3294 = vunpack.c.h.b16 %v803
    %v3295 = vunpack.c.l.b16 %v804
    %v3296 = vunpack.c.h.b16 %v804
    %v3297 = vunpack.c.l.b16 %v805
    %v3298 = vunpack.c.h.b16 %v805
    %v3299 = vunpack.c.l.b16 %v806
    %v3300 = vunpack.c.h.b16 %v806
    %v3301 = vunpack.c.l.b16 %v807
    %v3302 = vunpack.c.h.b16 %v807
    %v3303 = vunpack.c.l.b16 %v808
    %v3304 = vunpack.c.h.b16 %v808
    %v3305 = vunpack.c.l.b16 %v809
    %v3306 = vunpack.c.h.b16 %v809
    %v3307 = vunpack.c.l.b16 %v810
    %v3308 = vunpack.c.h.b16 %v810
    %v3309 = vunpack.c.l.b16 %v811
    %v3310 = vunpack.c.h.b16 %v811
    %v3311 = vunpack.c.l.b16 %v812
    %v3312 = vunpack.c.h.b16 %v812
    %v3313 = vunpack.c.l.b16 %v813
    %v3314 = vunpack.c.h.b16 %v813
    %v3315 = vunpack.c.l.b16 %v814
    %v3316 = vunpack.c.h.b16 %v814
    %v3317 = vunpack.c.l.b16 %v815
    %v3318 = vunpack.c.h.b16 %v815
    %v3319 = vunpack.c.l.b16 %v816
    %v3320 = vunpack.c.h.b16 %v816
    %v3321 = vunpack.c.l.b16 %v817
    %v3322 = vunpack.c.h.b16 %v817
    %v3323 = vunpack.c.l.b16 %v818
    %v3324 = vunpack.c.l.b16 %v819
    %v3325 = vunpack.c.h.b16 %v819
    %v3326 = vunpack.c.l.b16 %v820
    %v3327 = vunpack.c.h.b16 %v820
    %v3328 = vunpack.c.l.b16 %v821
    %v3329 = vunpack.c.h.b16 %v821
    %v3330 = vunpack.c.l.b16 %v822
    %v3331 = vunpack.c.h.b16 %v822
    %v3332 = vunpack.c.l.b16 %v823
    %v3333 = vunpack.c.h.b16 %v823
    %v3334 = vunpack.c.l.b16 %v824
    %v3335 = vunpack.c.h.b16 %v824
    %v3336 = vunpack.c.l.b16 %v825
    %v3337 = vunpack.c.h.b16 %v825
    %v3338 = vunpack.c.l.b16 %v826
    %v3339 = vunpack.c.h.b16 %v826
    %v3340 = vunpack.c.l.b16 %v827
    %v3341 = vunpack.c.h.b16 %v827
    %v3342 = vunpack.c.l.b16 %v828
    %v3343 = vunpack.c.h.b16 %v828
    %v3344 = vunpack.c.l.b16 %v829
    %v3345 = vunpack.c.h.b16 %v829
    %v3346 = vunpack.c.l.b16 %v830
    %v3347 = vunpack.c.h.b16 %v830
    %v3348 = vunpack.c.l.b16 %v831
    %v3349 = vunpack.c.h.b16 %v831
    %v3350 = vunpack.c.l.b16 %v832
    %v3351 = vunpack.c.h.b16 %v832
    %v3352 = vunpack.c.l.b16 %v833
    %v3353 = vunpack.c.h.b16 %v833
    %v3354 = vunpack.c.l.b16 %v834
    %v3355 = vunpack.c.h.b16 %v834
    %v3356 = vunpack.c.l.b16 %v835
    %v3357 = vunpack.c.h.b16 %v835
    %v3358 = vunpack.c.l.b16 %v836
    %v3359 = vunpack.c.h.b16 %v836
    %v3360 = vunpack.c.l.b16 %v837
    %v3361 = vunpack.c.h.b16 %v837
    %v3362 = vunpack.c.l.b16 %v838
    %v3363 = vunpack.c.h.b16 %v838
    %v3364 = vunpack.c.l.b16 %v839
    %v3365 = vunpack.c.h.b16 %v839
    %v3366 = vunpack.c.l.b16 %v840
    %v3367 = vunpack.c.l.b16 %v841
    %v3368 = vunpack.c.h.b16 %v841
    %v3369 = vunpack.c.l.b16 %v842
    %v3370 = vunpack.c.h.b16 %v842
    %v3371 = vunpack.c.l.b16 %v843
    %v3372 = vunpack.c.h.b16 %v843
    %v3373 = vunpack.c.l.b16 %v844
    %v3374 = vunpack.c.h.b16 %v844
    %v3375 = vunpack.c.l.b16 %v845
    %v3376 = vunpack.c.h.b16 %v845
    %v3377 = vunpack.c.l.b16 %v846
    %v3378 = vunpack.c.h.b16 %v846
    %v3379 = vunpack.c.l.b16 %v847
    %v3380 = vunpack.c.h.b16 %v847
    %v3381 = vunpack.c.l.b16 %v848
    %v3382 = vunpack.c.h.b16 %v848
    %v3383 = vunpack.c.l.b16 %v849
    %v3384 = vunpack.c.h.b16 %v849
    %v3385 = vunpack.c.l.b16 %v850
    %v3386 = vunpack.c.h.b16 %v850
    %v3387 = vunpack.c.l.b16 %v851
    %v3388 = vunpack.c.h.b16 %v851
    %v3389 = vunpack.c.l.b16 %v852
    %v3390 = vunpack.c.h.b16 %v852
    %v3391 = vunpack.c.l.b16 %v853
    %v3392 = vunpack.c.h.b16 %v853
    %v3393 = vunpack.c.l.b16 %v854
    %v3394 = vunpack.c.h.b16 %v854
    %v3395 = vunpack.c.l.b16 %v855
    %v3396 = vunpack.c.h.b16 %v855
    %v3397 = vunpack.c.l.b16 %v856
    %v3398 = vunpack.c.h.b16 %v856
    %v3399 = vunpack.c.l.b16 %v857
    %v3400 = vunpack.c.h.b16 %v857
    %v3401 = vunpack.c.l.b16 %v858
    %v3402 = vunpack.c.h.b16 %v858
    %v3403 = vunpack.c.l.b16 %v859
    %v3404 = vunpack.c.h.b16 %v859
    %v3405 = vunpack.c.l.b16 %v860
    %v3406 = vunpack.c.h.b16 %v860
    %v3407 = vunpack.c.l.b16 %v861
    %v3408 = vunpack.c.h.b16 %v861
    %v3409 = vunpack.c.l.b16 %v862
    %v3410 = vunpack.c.l.b16 %v863
    %v3411 = vunpack.c.h.b16 %v863
    %v3412 = vunpack.c.l.b16 %v864
    %v3413 = vunpack.c.h.b16 %v864
    %v3414 = vunpack.c.l.b16 %v865
    %v3415 = vunpack.c.h.b16 %v865
    %v3416 = vunpack.c.l.b16 %v866
    %v3417 = vunpack.c.h.b16 %v866
    %v3418 = vunpack.c.l.b16 %v867
    %v3419 = vunpack.c.h.b16 %v867
    %v3420 = vunpack.c.l.b16 %v868
    %v3421 = vunpack.c.h.b16 %v868
    %v3422 = vunpack.c.l.b16 %v869
    %v3423 = vunpack.c.h.b16 %v869
    %v3424 = vunpack.c.l.b16 %v870
    %v3425 = vunpack.c.h.b16 %v870
    %v3426 = vunpack.c.l.b16 %v871
    %v3427 = vunpack.c.h.b16 %v871
    %v3428 = vunpack.c.l.b16 %v872
    %v3429 = vunpack.c.h.b16 %v872
    %v3430 = vunpack.c.l.b16 %v873
    %v3431 = vunpack.c.h.b16 %v873
    %v3432 = vunpack.c.l.b16 %v874
    %v3433 = vunpack.c.h.b16 %v874
    %v3434 = vunpack.c.l.b16 %v875
    %v3435 = vunpack.c.h.b16 %v875
    %v3436 = vunpack.c.l.b16 %v876
    %v3437 = vunpack.c.h.b16 %v876
    %v3438 = vunpack.c.l.b16 %v877
    %v3439 = vunpack.c.h.b16 %v877
    %v3440 = vunpack.c.l.b16 %v878
    %v3441 = vunpack.c.h.b16 %v878
    %v3442 = vunpack.c.l.b16 %v879
    %v3443 = vunpack.c.h.b16 %v879
    %v3444 = vunpack.c.l.b16 %v880
    %v3445 = vunpack.c.h.b16 %v880
    %v3446 = vunpack.c.l.b16 %v881
    %v3447 = vunpack.c.h.b16 %v881
    %v3448 = vunpack.c.l.b16 %v882
    %v3449 = vunpack.c.h.b16 %v882
    %v3450 = vunpack.c.l.b16 %v883
    %v3451 = vunpack.c.h.b16 %v883
    %v3452 = vunpack.c.l.b16 %v884
    %v3453 = vunpack.c.l.b16 %v885
    %v3454 = vunpack.c.h.b16 %v885
    %v3455 = vunpack.c.l.b16 %v886
    %v3456 = vunpack.c.h.b16 %v886
    %v3457 = vunpack.c.l.b16 %v887
    %v3458 = vunpack.c.h.b16 %v887
    %v3459 = vunpack.c.l.b16 %v888
    %v3460 = vunpack.c.h.b16 %v888
    %v3461 = vunpack.c.l.b16 %v889
    %v3462 = vunpack.c.h.b16 %v889
    %v3463 = vunpack.c.l.b16 %v890
    %v3464 = vunpack.c.h.b16 %v890
    %v3465 = vunpack.c.l.b16 %v891
    %v3466 = vunpack.c.h.b16 %v891
    %v3467 = vunpack.c.l.b16 %v892
    %v3468 = vunpack.c.h.b16 %v892
    %v3469 = vunpack.c.l.b16 %v893
    %v3470 = vunpack.c.h.b16 %v893
    %v3471 = vunpack.c.l.b16 %v894
    %v3472 = vunpack.c.h.b16 %v894
    %v3473 = vunpack.c.l.b16 %v895
    %v3474 = vunpack.c.h.b16 %v895
    %v3475 = vunpack.c.l.b16 %v896
    %v3476 = vunpack.c.h.b16 %v896
    %v3477 = vunpack.c.l.b16 %v897
    %v3478 = vunpack.c.h.b16 %v897
    %v3479 = vunpack.c.l.b16 %v898
    %v3480 = vunpack.c.h.b16 %v898
    %v3481 = vunpack.c.l.b16 %v899
    %v3482 = vunpack.c.h.b16 %v899
    %v3483 = vunpack.c.l.b16 %v900
    %v3484 = vunpack.c.h.b16 %v900
    %v3485 = vunpack.c.l.b16 %v901
    %v3486 = vunpack.c.h.b16 %v901
    %v3487 = vunpack.c.l.b16 %v902
    %v3488 = vunpack.c.h.b16 %v902
    %v3489 = vunpack.c.l.b16 %v903
    %v3490 = vunpack.c.h.b16 %v903
    %v3491 = vunpack.c.l.b16 %v904
    %v3492 = vunpack.c.h.b16 %v904
    %v3493 = vunpack.c.l.b16 %v905
    %v3494 = vunpack.c.h.b16 %v905
    %v3495 = vunpack.c.l.b16 %v906
    %v3496 = vunpack.c.l.b16 %v907
    %v3497 = vunpack.c.h.b16 %v907
    %v3498 = vunpack.c.l.b16 %v908
    %v3499 = vunpack.c.h.b16 %v908
    %v3500 = vunpack.c.l.b16 %v909
    %v3501 = vunpack.c.h.b16 %v909
    %v3502 = vunpack.c.l.b16 %v910
    %v3503 = vunpack.c.h.b16 %v910
    %v3504 = vunpack.c.l.b16 %v911
    %v3505 = vunpack.c.h.b16 %v911
    %v3506 = vunpack.c.l.b16 %v912
    %v3507 = vunpack.c.h.b16 %v912
    %v3508 = vunpack.c.l.b16 %v913
    %v3509 = vunpack.c.h.b16 %v913
    %v3510 = vunpack.c.l.b16 %v914
    %v3511 = vunpack.c.h.b16 %v914
    %v3512 = vunpack.c.l.b16 %v915
    %v3513 = vunpack.c.h.b16 %v915
    %v3514 = vunpack.c.l.b16 %v916
    %v3515 = vunpack.c.h.b16 %v916
    %v3516 = vunpack.c.l.b16 %v917
    %v3517 = vunpack.c.h.b16 %v917
    %v3518 = vunpack.c.l.b16 %v918
    %v3519 = vunpack.c.h.b16 %v918
    %v3520 = vunpack.c.l.b16 %v919
    %v3521 = vunpack.c.h.b16 %v919
    %v3522 = vunpack.c.l.b16 %v920
    %v3523 = vunpack.c.h.b16 %v920
    %v3524 = vunpack.c.l.b16 %v921
    %v3525 = vunpack.c.h.b16 %v921
    %v3526 = vunpack.c.l.b16 %v922
    %v3527 = vunpack.c.h.b16 %v922
    %v3528 = vunpack.c.l.b16 %v923
    %v3529 = vunpack.c.h.b16 %v923
    %v3530 = vunpack.c.l.b16 %v924
    %v3531 = vunpack.c.h.b16 %v924
    %v3532 = vunpack.c.l.b16 %v925
    %v3533 = vunpack.c.h.b16 %v925
    %v3534 = vunpack.c.l.b16 %v926
    %v3535 = vunpack.c.h.b16 %v926
    %v3536 = vunpack.c.l.b16 %v927
    %v3537 = vunpack.c.h.b16 %v927
    %v3538 = vunpack.c.l.b16 %v928
    %v3539 = vpack.c.b16 %v1862, %v1819
    %v3540 = vpack.c.b16 %v1863, %v1820
    %v3541 = vpack.c.b16 %v1864, %v1821
    %v3542 = vpack.c.b16 %v1865, %v1822
    %v3543 = vpack.c.b16 %v1866, %v1823
    %v3544 = vpack.c.b16 %v1867, %v1824
    %v3545 = vpack.c.b16 %v1868, %v1825
    %v3546 = vpack.c.b16 %v1869, %v1826
    %v3547 = vpack.c.b16 %v1870, %v1827
    %v3548 = vpack.c.b16 %v1871, %v1828
    %v3549 = vpack.c.b16 %v1872, %v1829
    %v3550 = vpack.c.b16 %v1873, %v1830
    %v3551 = vpack.c.b16 %v1874, %v1831
    %v3552 = vpack.c.b16 %v1875, %v1832
    %v3553 = vpack.c.b16 %v1876, %v1833
    %v3554 = vpack.c.b16 %v1877, %v1834
    %v3555 = vpack.c.b16 %v1878, %v1835
    %v3556 = vpack.c.b16 %v1879, %v1836
    %v3557 = vpack.c.b16 %v1880, %v1837
    %v3558 = vpack.c.b16 %v1881, %v1838
    %v3559 = vpack.c.b16 %v1882, %v1839
    %v3560 = vpack.c.b16 %v1883, %v1840
    %v3561 = vpack.c.b16 %v1884, %v1841
    %v3562 = vpack.c.b16 %v1885, %v1842
    %v3563 = vpack.c.b16 %v1886, %v1843
    %v3564 = vpack.c.b16 %v1887, %v1844
    %v3565 = vpack.c.b16 %v1888, %v1845
    %v3566 = vpack.c.b16 %v1889, %v1846
    %v3567 = vpack.c.b16 %v1890, %v1847
    %v3568 = vpack.c.b16 %v1891, %v1848
    %v3569 = vpack.c.b16 %v1892, %v1849
    %v3570 = vpack.c.b16 %v1893, %v1850
    %v3571 = vpack.c.b16 %v1894, %v1851
    %v3572 = vpack.c.b16 %v1895, %v1852
    %v3573 = vpack.c.b16 %v1896, %v1853
    %v3574 = vpack.c.b16 %v1897, %v1854
    %v3575 = vpack.c.b16 %v1898, %v1855
    %v3576 = vpack.c.b16 %v1899, %v1856
    %v3577 = vpack.c.b16 %v1900, %v1857
    %v3578 = vpack.c.b16 %v1901, %v1858
    %v3579 = vpack.c.b16 %v1902, %v1859
    %v3580 = vpack.c.b16 %v1903, %v1860
    %v3581 = vpack.c.b16 %v1904, %v1861
    %v3582 = vpack.c.b16 %v1948, %v1905
    %v3583 = vpack.c.b16 %v1949, %v1906
    %v3584 = vpack.c.b16 %v1950, %v1907
    %v3585 = vpack.c.b16 %v1951, %v1908
    %v3586 = vpack.c.b16 %v1952, %v1909
    %v3587 = vpack.c.b16 %v1953, %v1910
    %v3588 = vpack.c.b16 %v1954, %v1911
    %v3589 = vpack.c.b16 %v1955, %v1912
    %v3590 = vpack.c.b16 %v1956, %v1913
    %v3591 = vpack.c.b16 %v1957, %v1914
    %v3592 = vpack.c.b16 %v1958, %v1915
    %v3593 = vpack.c.b16 %v1959, %v1916
    %v3594 = vpack.c.b16 %v1960, %v1917
    %v3595 = vpack.c.b16 %v1961, %v1918
    %v3596 = vpack.c.b16 %v1962, %v1919
    %v3597 = vpack.c.b16 %v1963, %v1920
    %v3598 = vpack.c.b16 %v1964, %v1921
    %v3599 = vpack.c.b16 %v1965, %v1922
    %v3600 = vpack.c.b16 %v1966, %v1923
    %v3601 = vpack.c.b16 %v1967, %v1924
    %v3602 = vpack.c.b16 %v1968, %v1925
    %v3603 = vpack.c.b16 %v1969, %v1926
    %v3604 = vpack.c.b16 %v1970, %v1927
    %v3605 = vpack.c.b16 %v1971, %v1928
    %v3606 = vpack.c.b16 %v1972, %v1929
    %v3607 = vpack.c.b16 %v1973, %v1930
    %v3608 = vpack.c.b16 %v1974, %v1931
    %v3609 = vpack.c.b16 %v1975, %v1932
    %v3610 = vpack.c.b16 %v1976, %v1933
    %v3611 = vpack.c.b16 %v1977, %v1934
    %v3612 = vpack.c.b16 %v1978, %v1935
    %v3613 = vpack.c.b16 %v1979, %v1936
    %v3614 = vpack.c.b16 %v1980, %v1937
    %v3615 = vpack.c.b16 %v1981, %v1938
    %v3616 = vpack.c.b16 %v1982, %v1939
    %v3617 = vpack.c.b16 %v1983, %v1940
    %v3618 = vpack.c.b16 %v1984, %v1941
    %v3619 = vpack.c.b16 %v1985, %v1942
    %v3620 = vpack.c.b16 %v1986, %v1943
    %v3621 = vpack.c.b16 %v1987, %v1944
    %v3622 = vpack.c.b16 %v1988, %v1945
    %v3623 = vpack.c.b16 %v1989, %v1946
    %v3624 = vpack.c.b16 %v1990, %v1947
    %v3625 = vpack.c.b16 %v2034, %v1991
    %v3626 = vpack.c.b16 %v2035, %v1992
    %v3627 = vpack.c.b16 %v2036, %v1993
    %v3628 = vpack.c.b16 %v2037, %v1994
    %v3629 = vpack.c.b16 %v2038, %v1995
    %v3630 = vpack.c.b16 %v2039, %v1996
    %v3631 = vpack.c.b16 %v2040, %v1997
    %v3632 = vpack.c.b16 %v2041, %v1998
    %v3633 = vpack.c.b16 %v2042, %v1999
    %v3634 = vpack.c.b16 %v2043, %v2000
    %v3635 = vpack.c.b16 %v2044, %v2001
    %v3636 = vpack.c.b16 %v2045, %v2002
    %v3637 = vpack.c.b16 %v2046, %v2003
    %v3638 = vpack.c.b16 %v2047, %v2004
    %v3639 = vpack.c.b16 %v2048, %v2005
    %v3640 = vpack.c.b16 %v2049, %v2006
    %v3641 = vpack.c.b16 %v2050, %v2007
    %v3642 = vpack.c.b16 %v2051, %v2008
    %v3643 = vpack.c.b16 %v2052, %v2009
    %v3644 = vpack.c.b16 %v2053, %v2010
    %v3645 = vpack.c.b16 %v2054, %v2011
    %v3646 = vpack.c.b16 %v2055, %v2012
    %v3647 = vpack.c.b16 %v2056, %v2013
    %v3648 = vpack.c.b16 %v2057, %v2014
    %v3649 = vpack.c.b16 %v2058, %v2015
    %v3650 = vpack.c.b16 %v2059, %v2016
    %v3651 = vpack.c.b16 %v2060, %v2017
    %v3652 = vpack.c.b16 %v2061, %v2018
    %v3653 = vpack.c.b16 %v2062, %v2019
    %v3654 = vpack.c.b16 %v2063, %v2020
    %v3655 = vpack.c.b16 %v2064, %v2021
    %v3656 = vpack.c.b16 %v2065, %v2022
    %v3657 = vpack.c.b16 %v2066, %v2023
    %v3658 = vpack.c.b16 %v2067, %v2024
    %v3659 = vpack.c.b16 %v2068, %v2025
    %v3660 = vpack.c.b16 %v2069, %v2026
    %v3661 = vpack.c.b16 %v2070, %v2027
    %v3662 = vpack.c.b16 %v2071, %v2028
    %v3663 = vpack.c.b16 %v2072, %v2029
    %v3664 = vpack.c.b16 %v2073, %v2030
    %v3665 = vpack.c.b16 %v2074, %v2031
    %v3666 = vpack.c.b16 %v2075, %v2032
    %v3667 = vpack.c.b16 %v2076, %v2033
    %v3668 = vpack.c.b16 %v2120, %v2077
    %v3669 = vpack.c.b16 %v2121, %v2078
    %v3670 = vpack.c.b16 %v2122, %v2079
    %v3671 = vpack.c.b16 %v2123, %v2080
    %v3672 = vpack.c.b16 %v2124, %v2081
    %v3673 = vpack.c.b16 %v2125, %v2082
    %v3674 = vpack.c.b16 %v2126, %v2083
    %v3675 = vpack.c.b16 %v2127, %v2084
    %v3676 = vpack.c.b16 %v2128, %v2085
    %v3677 = vpack.c.b16 %v2129, %v2086
    %v3678 = vpack.c.b16 %v2130, %v2087
    %v3679 = vpack.c.b16 %v2131, %v2088
    %v3680 = vpack.c.b16 %v2132, %v2089
    %v3681 = vpack.c.b16 %v2133, %v2090
    %v3682 = vpack.c.b16 %v2134, %v2091
    %v3683 = vpack.c.b16 %v2135, %v2092
    %v3684 = vpack.c.b16 %v2136, %v2093
    %v3685 = vpack.c.b16 %v2137, %v2094
    %v3686 = vpack.c.b16 %v2138, %v2095
    %v3687 = vpack.c.b16 %v2139, %v2096
    %v3688 = vpack.c.b16 %v2140, %v2097
    %v3689 = vpack.c.b16 %v2141, %v2098
    %v3690 = vpack.c.b16 %v2142, %v2099
    %v3691 = vpack.c.b16 %v2143, %v2100
    %v3692 = vpack.c.b16 %v2144, %v2101
    %v3693 = vpack.c.b16 %v2145, %v2102
    %v3694 = vpack.c.b16 %v2146, %v2103
    %v3695 = vpack.c.b16 %v2147, %v2104
    %v3696 = vpack.c.b16 %v2148, %v2105
    %v3697 = vpack.c.b16 %v2149, %v2106
    %v3698 = vpack.c.b16 %v2150, %v2107
    %v3699 = vpack.c.b16 %v2151, %v2108
    %v3700 = vpack.c.b16 %v2152, %v2109
    %v3701 = vpack.c.b16 %v2153, %v2110
    %v3702 = vpack.c.b16 %v2154, %v2111
    %v3703 = vpack.c.b16 %v2155, %v2112
    %v3704 = vpack.c.b16 %v2156, %v2113
    %v3705 = vpack.c.b16 %v2157, %v2114
    %v3706 = vpack.c.b16 %v2158, %v2115
    %v3707 = vpack.c.b16 %v2159, %v2116
    %v3708 = vpack.c.b16 %v2160, %v2117
    %v3709 = vpack.c.b16 %v2161, %v2118
    %v3710 = vpack.c.b16 %v2162, %v2119
    %v3711 = vpack.c.b16 %v2206, %v2163
    %v3712 = vpack.c.b16 %v2207, %v2164
    %v3713 = vpack.c.b16 %v2208, %v2165
    %v3714 = vpack.c.b16 %v2209, %v2166
    %v3715 = vpack.c.b16 %v2210, %v2167
    %v3716 = vpack.c.b16 %v2211, %v2168
    %v3717 = vpack.c.b16 %v2212, %v2169
    %v3718 = vpack.c.b16 %v2213, %v2170
    %v3719 = vpack.c.b16 %v2214, %v2171
    %v3720 = vpack.c.b16 %v2215, %v2172
    %v3721 = vpack.c.b16 %v2216, %v2173
    %v3722 = vpack.c.b16 %v2217, %v2174
    %v3723 = vpack.c.b16 %v2218, %v2175
    %v3724 = vpack.c.b16 %v2219, %v2176
    %v3725 = vpack.c.b16 %v2220, %v2177
    %v3726 = vpack.c.b16 %v2221, %v2178
    %v3727 = vpack.c.b16 %v2222, %v2179
    %v3728 = vpack.c.b16 %v2223, %v2180
    %v3729 = vpack.c.b16 %v2224, %v2181
    %v3730 = vpack.c.b16 %v2225, %v2182
    %v3731 = vpack.c.b16 %v2226, %v2183
    %v3732 = vpack.c.b16 %v2227, %v2184
    %v3733 = vpack.c.b16 %v2228, %v2185
    %v3734 = vpack.c.b16 %v2229, %v2186
    %v3735 = vpack.c.b16 %v2230, %v2187
    %v3736 = vpack.c.b16 %v2231, %v2188
    %v3737 = vpack.c.b16 %v2232, %v2189
    %v3738 = vpack.c.b16 %v2233, %v2190
    %v3739 = vpack.c.b16 %v2234, %v2191
    %v3740 = vpack.c.b16 %v2235, %v2192
    %v3741 = vpack.c.b16 %v2236, %v2193
    %v3742 = vpack.c.b16 %v2237, %v2194
    %v3743 = vpack.c.b16 %v2238, %v2195
    %v3744 = vpack.c.b16 %v2239, %v2196
    %v3745 = vpack.c.b16 %v2240, %v2197
    %v3746 = vpack.c.b16 %v2241, %v2198
    %v3747 = vpack.c.b16 %v2242, %v2199
    %v3748 = vpack.c.b16 %v2243, %v2200
    %v3749 = vpack.c.b16 %v2244, %v2201
    %v3750 = vpack.c.b16 %v2245, %v2202
    %v3751 = vpack.c.b16 %v2246, %v2203
    %v3752 = vpack.c.b16 %v2247, %v2204
    %v3753 = vpack.c.b16 %v2248, %v2205
    %v3754 = vpack.c.b16 %v2292, %v2249
    %v3755 = vpack.c.b16 %v2293, %v2250
    %v3756 = vpack.c.b16 %v2294, %v2251
    %v3757 = vpack.c.b16 %v2295, %v2252
    %v3758 = vpack.c.b16 %v2296, %v2253
    %v3759 = vpack.c.b16 %v2297, %v2254
    %v3760 = vpack.c.b16 %v2298, %v2255
    %v3761 = vpack.c.b16 %v2299, %v2256
    %v3762 = vpack.c.b16 %v2300, %v2257
    %v3763 = vpack.c.b16 %v2301, %v2258
    %v3764 = vpack.c.b16 %v2302, %v2259
    %v3765 = vpack.c.b16 %v2303, %v2260
    %v3766 = vpack.c.b16 %v2304, %v2261
    %v3767 = vpack.c.b16 %v2305, %v2262
    %v3768 = vpack.c.b16 %v2306, %v2263
    %v3769 = vpack.c.b16 %v2307, %v2264
    %v3770 = vpack.c.b16 %v2308, %v2265
    %v3771 = vpack.c.b16 %v2309, %v2266
    %v3772 = vpack.c.b16 %v2310, %v2267
    %v3773 = vpack.c.b16 %v2311, %v2268
    %v3774 = vpack.c.b16 %v2312, %v2269
    %v3775 = vpack.c.b16 %v2313, %v2270
    %v3776 = vpack.c.b16 %v2314, %v2271
    %v3777 = vpack.c.b16 %v2315, %v2272
    %v3778 = vpack.c.b16 %v2316, %v2273
    %v3779 = vpack.c.b16 %v2317, %v2274
    %v3780 = vpack.c.b16 %v2318, %v2275
    %v3781 = vpack.c.b16 %v2319, %v2276
    %v3782 = vpack.c.b16 %v2320, %v2277
    %v3783 = vpack.c.b16 %v2321, %v2278
    %v3784 = vpack.c.b16 %v2322, %v2279
    %v3785 = vpack.c.b16 %v2323, %v2280
    %v3786 = vpack.c.b16 %v2324, %v2281
    %v3787 = vpack.c.b16 %v2325, %v2282
    %v3788 = vpack.c.b16 %v2326, %v2283
    %v3789 = vpack.c.b16 %v2327, %v2284
    %v3790 = vpack.c.b16 %v2328, %v2285
    %v3791 = vpack.c.b16 %v2329, %v2286
    %v3792 = vpack.c.b16 %v2330, %v2287
    %v3793 = vpack.c.b16 %v2331, %v2288
    %v3794 = vpack.c.b16 %v2332, %v2289
    %v3795 = vpack.c.b16 %v2333, %v2290
    %v3796 = vpack.c.b16 %v2334, %v2291
    %v3797 = vpack.c.b16 %v2378, %v2335
    %v3798 = vpack.c.b16 %v2379, %v2336
    %v3799 = vpack.c.b16 %v2380, %v2337
    %v3800 = vpack.c.b16 %v2381, %v2338
    %v3801 = vpack.c.b16 %v2382, %v2339
    %v3802 = vpack.c.b16 %v2383, %v2340
    %v3803 = vpack.c.b16 %v2384, %v2341
    %v3804 = vpack.c.b16 %v2385, %v2342
    %v3805 = vpack.c.b16 %v2386, %v2343
    %v3806 = vpack.c.b16 %v2387, %v2344
    %v3807 = vpack.c.b16 %v2388, %v2345
    %v3808 = vpack.c.b16 %v2389, %v2346
    %v3809 = vpack.c.b16 %v2390, %v2347
    %v3810 = vpack.c.b16 %v2391, %v2348
    %v3811 = vpack.c.b16 %v2392, %v2349
    %v3812 = vpack.c.b16 %v2393, %v2350
    %v3813 = vpack.c.b16 %v2394, %v2351
    %v3814 = vpack.c.b16 %v2395, %v2352
    %v3815 = vpack.c.b16 %v2396, %v2353
    %v3816 = vpack.c.b16 %v2397, %v2354
    %v3817 = vpack.c.b16 %v2398, %v2355
    %v3818 = vpack.c.b16 %v2399, %v2356
    %v3819 = vpack.c.b16 %v2400, %v2357
    %v3820 = vpack.c.b16 %v2401, %v2358
    %v3821 = vpack.c.b16 %v2402, %v2359
    %v3822 = vpack.c.b16 %v2403, %v2360
    %v3823 = vpack.c.b16 %v2404, %v2361
    %v3824 = vpack.c.b16 %v2405, %v2362
    %v3825 = vpack.c.b16 %v2406, %v2363
    %v3826 = vpack.c.b16 %v2407, %v2364
    %v3827 = vpack.c.b16 %v2408, %v2365
    %v3828 = vpack.c.b16 %v2409, %v2366
    %v3829 = vpack.c.b16 %v2410, %v2367
    %v3830 = vpack.c.b16 %v2411, %v2368
    %v3831 = vpack.c.b16 %v2412, %v2369
    %v3832 = vpack.c.b16 %v2413, %v2370
    %v3833 = vpack.c.b16 %v2414, %v2371
    %v3834 = vpack.c.b16 %v2415, %v2372
    %v3835 = vpack.c.b16 %v2416, %v2373
    %v3836 = vpack.c.b16 %v2417, %v2374
    %v3837 = vpack.c.b16 %v2418, %v2375
    %v3838 = vpack.c.b16 %v2419, %v2376
    %v3839 = vpack.c.b16 %v2420, %v2377
    %v3840 = vpack.c.b16 %v2464, %v2421
    %v3841 = vpack.c.b16 %v2465, %v2422
    %v3842 = vpack.c.b16 %v2466, %v2423
    %v3843 = vpack.c.b16 %v2467, %v2424
    %v3844 = vpack.c.b16 %v2468, %v2425
    %v3845 = vpack.c.b16 %v2469, %v2426
    %v3846 = vpack.c.b16 %v2470, %v2427
    %v3847 = vpack.c.b16 %v2471, %v2428
    %v3848 = vpack.c.b16 %v2472, %v2429
    %v3849 = vpack.c.b16 %v2473, %v2430
    %v3850 = vpack.c.b16 %v2474, %v2431
    %v3851 = vpack.c.b16 %v2475, %v2432
    %v3852 = vpack.c.b16 %v2476, %v2433
    %v3853 = vpack.c.b16 %v2477, %v2434
    %v3854 = vpack.c.b16 %v2478, %v2435
    %v3855 = vpack.c.b16 %v2479, %v2436
    %v3856 = vpack.c.b16 %v2480, %v2437
    %v3857 = vpack.c.b16 %v2481, %v2438
    %v3858 = vpack.c.b16 %v2482, %v2439
    %v3859 = vpack.c.b16 %v2483, %v2440
    %v3860 = vpack.c.b16 %v2484, %v2441
    %v3861 = vpack.c.b16 %v2485, %v2442
    %v3862 = vpack.c.b16 %v2486, %v2443
    %v3863 = vpack.c.b16 %v2487, %v2444
    %v3864 = vpack.c.b16 %v2488, %v2445
    %v3865 = vpack.c.b16 %v2489, %v2446
    %v3866 = vpack.c.b16 %v2490, %v2447
    %v3867 = vpack.c.b16 %v2491, %v2448
    %v3868 = vpack.c.b16 %v2492, %v2449
    %v3869 = vpack.c.b16 %v2493, %v2450
    %v3870 = vpack.c.b16 %v2494, %v2451
    %v3871 = vpack.c.b16 %v2495, %v2452
    %v3872 = vpack.c.b16 %v2496, %v2453
    %v3873 = vpack.c.b16 %v2497, %v2454
    %v3874 = vpack.c.b16 %v2498, %v2455
    %v3875 = vpack.c.b16 %v2499, %v2456
    %v3876 = vpack.c.b16 %v2500, %v2457
    %v3877 = vpack.c.b16 %v2501, %v2458
    %v3878 = vpack.c.b16 %v2502, %v2459
    %v3879 = vpack.c.b16 %v2503, %v2460
    %v3880 = vpack.c.b16 %v2504, %v2461
    %v3881 = vpack.c.b16 %v2505, %v2462
    %v3882 = vpack.c.b16 %v2506, %v2463
    %v3883 = vpack.c.b16 %v2550, %v2507
    %v3884 = vpack.c.b16 %v2551, %v2508
    %v3885 = vpack.c.b16 %v2552, %v2509
    %v3886 = vpack.c.b16 %v2553, %v2510
    %v3887 = vpack.c.b16 %v2554, %v2511
    %v3888 = vpack.c.b16 %v2555, %v2512
    %v3889 = vpack.c.b16 %v2556, %v2513
    %v3890 = vpack.c.b16 %v2557, %v2514
    %v3891 = vpack.c.b16 %v2558, %v2515
    %v3892 = vpack.c.b16 %v2559, %v2516
    %v3893 = vpack.c.b16 %v2560, %v2517
    %v3894 = vpack.c.b16 %v2561, %v2518
    %v3895 = vpack.c.b16 %v2562, %v2519
    %v3896 = vpack.c.b16 %v2563, %v2520
    %v3897 = vpack.c.b16 %v2564, %v2521
    %v3898 = vpack.c.b16 %v2565, %v2522
    %v3899 = vpack.c.b16 %v2566, %v2523
    %v3900 = vpack.c.b16 %v2567, %v2524
    %v3901 = vpack.c.b16 %v2568, %v2525
    %v3902 = vpack.c.b16 %v2569, %v2526
    %v3903 = vpack.c.b16 %v2570, %v2527
    %v3904 = vpack.c.b16 %v2571, %v2528
    %v3905 = vpack.c.b16 %v2572, %v2529
    %v3906 = vpack.c.b16 %v2573, %v2530
    %v3907 = vpack.c.b16 %v2574, %v2531
    %v3908 = vpack.c.b16 %v2575, %v2532
    %v3909 = vpack.c.b16 %v2576, %v2533
    %v3910 = vpack.c.b16 %v2577, %v2534
    %v3911 = vpack.c.b16 %v2578, %v2535
    %v3912 = vpack.c.b16 %v2579, %v2536
    %v3913 = vpack.c.b16 %v2580, %v2537
    %v3914 = vpack.c.b16 %v2581, %v2538
    %v3915 = vpack.c.b16 %v2582, %v2539
    %v3916 = vpack.c.b16 %v2583, %v2540
    %v3917 = vpack.c.b16 %v2584, %v2541
    %v3918 = vpack.c.b16 %v2585, %v2542
    %v3919 = vpack.c.b16 %v2586, %v2543
    %v3920 = vpack.c.b16 %v2587, %v2544
    %v3921 = vpack.c.b16 %v2588, %v2545
    %v3922 = vpack.c.b16 %v2589, %v2546
    %v3923 = vpack.c.b16 %v2590, %v2547
    %v3924 = vpack.c.b16 %v2591, %v2548
    %v3925 = vpack.c.b16 %v2592, %v2549
    %v3926 = vpack.c.b16 %v2636, %v2593
    %v3927 = vpack.c.b16 %v2637, %v2594
    %v3928 = vpack.c.b16 %v2638, %v2595
    %v3929 = vpack.c.b16 %v2639, %v2596
    %v3930 = vpack.c.b16 %v2640, %v2597
    %v3931 = vpack.c.b16 %v2641, %v2598
    %v3932 = vpack.c.b16 %v2642, %v2599
    %v3933 = vpack.c.b16 %v2643, %v2600
    %v3934 = vpack.c.b16 %v2644, %v2601
    %v3935 = vpack.c.b16 %v2645, %v2602
    %v3936 = vpack.c.b16 %v2646, %v2603
    %v3937 = vpack.c.b16 %v2647, %v2604
    %v3938 = vpack.c.b16 %v2648, %v2605
    %v3939 = vpack.c.b16 %v2649, %v2606
    %v3940 = vpack.c.b16 %v2650, %v2607
    %v3941 = vpack.c.b16 %v2651, %v2608
    %v3942 = vpack.c.b16 %v2652, %v2609
    %v3943 = vpack.c.b16 %v2653, %v2610
    %v3944 = vpack.c.b16 %v2654, %v2611
    %v3945 = vpack.c.b16 %v2655, %v2612
    %v3946 = vpack.c.b16 %v2656, %v2613
    %v3947 = vpack.c.b16 %v2657, %v2614
    %v3948 = vpack.c.b16 %v2658, %v2615
    %v3949 = vpack.c.b16 %v2659, %v2616
    %v3950 = vpack.c.b16 %v2660, %v2617
    %v3951 = vpack.c.b16 %v2661, %v2618
    %v3952 = vpack.c.b16 %v2662, %v2619
    %v3953 = vpack.c.b16 %v2663, %v2620
    %v3954 = vpack.c.b16 %v2664, %v2621
    %v3955 = vpack.c.b16 %v2665, %v2622
    %v3956 = vpack.c.b16 %v2666, %v2623
    %v3957 = vpack.c.b16 %v2667, %v2624
    %v3958 = vpack.c.b16 %v2668, %v2625
    %v3959 = vpack.c.b16 %v2669, %v2626
    %v3960 = vpack.c.b16 %v2670, %v2627
    %v3961 = vpack.c.b16 %v2671, %v2628
    %v3962 = vpack.c.b16 %v2672, %v2629
    %v3963 = vpack.c.b16 %v2673, %v2630
    %v3964 = vpack.c.b16 %v2674, %v2631
    %v3965 = vpack.c.b16 %v2675, %v2632
    %v3966 = vpack.c.b16 %v2676, %v2633
    %v3967 = vpack.c.b16 %v2677, %v2634
    %v3968 = vpack.c.b16 %v2678, %v2635
    %v3969 = vpack.c.b16 %v2722, %v2679
    %v3970 = vpack.c.b16 %v2723, %v2680
    %v3971 = vpack.c.b16 %v2724, %v2681
    %v3972 = vpack.c.b16 %v2725, %v2682
    %v3973 = vpack.c.b16 %v2726, %v2683
    %v3974 = vpack.c.b16 %v2727, %v2684
    %v3975 = vpack.c.b16 %v2728, %v2685
    %v3976 = vpack.c.b16 %v2729, %v2686
    %v3977 = vpack.c.b16 %v2730, %v2687
    %v3978 = vpack.c.b16 %v2731, %v2688
    %v3979 = vpack.c.b16 %v2732, %v2689
    %v3980 = vpack.c.b16 %v2733, %v2690
    %v3981 = vpack.c.b16 %v2734, %v2691
    %v3982 = vpack.c.b16 %v2735, %v2692
    %v3983 = vpack.c.b16 %v2736, %v2693
    %v3984 = vpack.c.b16 %v2737, %v2694
    %v3985 = vpack.c.b16 %v2738, %v2695
    %v3986 = vpack.c.b16 %v2739, %v2696
    %v3987 = vpack.c.b16 %v2740, %v2697
    %v3988 = vpack.c.b16 %v2741, %v2698
    %v3989 = vpack.c.b16 %v2742, %v2699
    %v3990 = vpack.c.b16 %v2743, %v2700
    %v3991 = vpack.c.b16 %v2744, %v2701
    %v3992 = vpack.c.b16 %v2745, %v2702
    %v3993 = vpack.c.b16 %v2746, %v2703
    %v3994 = vpack.c.b16 %v2747, %v2704
    %v3995 = vpack.c.b16 %v2748, %v2705
    %v3996 = vpack.c.b16 %v2749, %v2706
    %v3997 = vpack.c.b16 %v2750, %v2707
    %v3998 = vpack.c.b16 %v2751, %v2708
    %v3999 = vpack.c.b16 %v2752, %v2709
    %v4000 = vpack.c.b16 %v2753, %v2710
    %v4001 = vpack.c.b16 %v2754, %v2711
    %v4002 = vpack.c.b16 %v2755, %v2712
    %v4003 = vpack.c.b16 %v2756, %v2713
    %v4004 = vpack.c.b16 %v2757, %v2714
    %v4005 = vpack.c.b16 %v2758, %v2715
    %v4006 = vpack.c.b16 %v2759, %v2716
    %v4007 = vpack.c.b16 %v2760, %v2717
    %v4008 = vpack.c.b16 %v2761, %v2718
    %v4009 = vpack.c.b16 %v2762, %v2719
    %v4010 = vpack.c.b16 %v2763, %v2720
    %v4011 = vpack.c.b16 %v2764, %v2721
    %v4012 = vpack.c.b16 %v2808, %v2765
    %v4013 = vpack.c.b16 %v2809, %v2766
    %v4014 = vpack.c.b16 %v2810, %v2767
    %v4015 = vpack.c.b16 %v2811, %v2768
    %v4016 = vpack.c.b16 %v2812, %v2769
    %v4017 = vpack.c.b16 %v2813, %v2770
    %v4018 = vpack.c.b16 %v2814, %v2771
    %v4019 = vpack.c.b16 %v2815, %v2772
    %v4020 = vpack.c.b16 %v2816, %v2773
    %v4021 = vpack.c.b16 %v2817, %v2774
    %v4022 = vpack.c.b16 %v2818, %v2775
    %v4023 = vpack.c.b16 %v2819, %v2776
    %v4024 = vpack.c.b16 %v2820, %v2777
    %v4025 = vpack.c.b16 %v2821, %v2778
    %v4026 = vpack.c.b16 %v2822, %v2779
    %v4027 = vpack.c.b16 %v2823, %v2780
    %v4028 = vpack.c.b16 %v2824, %v2781
    %v4029 = vpack.c.b16 %v2825, %v2782
    %v4030 = vpack.c.b16 %v2826, %v2783
    %v4031 = vpack.c.b16 %v2827, %v2784
    %v4032 = vpack.c.b16 %v2828, %v2785
    %v4033 = vpack.c.b16 %v2829, %v2786
    %v4034 = vpack.c.b16 %v2830, %v2787
    %v4035 = vpack.c.b16 %v2831, %v2788
    %v4036 = vpack.c.b16 %v2832, %v2789
    %v4037 = vpack.c.b16 %v2833, %v2790
    %v4038 = vpack.c.b16 %v2834, %v2791
    %v4039 = vpack.c.b16 %v2835, %v2792
    %v4040 = vpack.c.b16 %v2836, %v2793
    %v4041 = vpack.c.b16 %v2837, %v2794
    %v4042 = vpack.c.b16 %v2838, %v2795
    %v4043 = vpack.c.b16 %v2839, %v2796
    %v4044 = vpack.c.b16 %v2840, %v2797
    %v4045 = vpack.c.b16 %v2841, %v2798
    %v4046 = vpack.c.b16 %v2842, %v2799
    %v4047 = vpack.c.b16 %v2843, %v2800
    %v4048 = vpack.c.b16 %v2844, %v2801
    %v4049 = vpack.c.b16 %v2845, %v2802
    %v4050 = vpack.c.b16 %v2846, %v2803
    %v4051 = vpack.c.b16 %v2847, %v2804
    %v4052 = vpack.c.b16 %v2848, %v2805
    %v4053 = vpack.c.b16 %v2849, %v2806
    %v4054 = vpack.c.b16 %v2850, %v2807
    %v4055 = vpack.c.b16 %v2894, %v2851
    %v4056 = vpack.c.b16 %v2895, %v2852
    %v4057 = vpack.c.b16 %v2896, %v2853
    %v4058 = vpack.c.b16 %v2897, %v2854
    %v4059 = vpack.c.b16 %v2898, %v2855
    %v4060 = vpack.c.b16 %v2899, %v2856
    %v4061 = vpack.c.b16 %v2900, %v2857
    %v4062 = vpack.c.b16 %v2901, %v2858
    %v4063 = vpack.c.b16 %v2902, %v2859
    %v4064 = vpack.c.b16 %v2903, %v2860
    %v4065 = vpack.c.b16 %v2904, %v2861
    %v4066 = vpack.c.b16 %v2905, %v2862
    %v4067 = vpack.c.b16 %v2906, %v2863
    %v4068 = vpack.c.b16 %v2907, %v2864
    %v4069 = vpack.c.b16 %v2908, %v2865
    %v4070 = vpack.c.b16 %v2909, %v2866
    %v4071 = vpack.c.b16 %v2910, %v2867
    %v4072 = vpack.c.b16 %v2911, %v2868
    %v4073 = vpack.c.b16 %v2912, %v2869
    %v4074 = vpack.c.b16 %v2913, %v2870
    %v4075 = vpack.c.b16 %v2914, %v2871
    %v4076 = vpack.c.b16 %v2915, %v2872
    %v4077 = vpack.c.b16 %v2916, %v2873
    %v4078 = vpack.c.b16 %v2917, %v2874
    %v4079 = vpack.c.b16 %v2918, %v2875
    %v4080 = vpack.c.b16 %v2919, %v2876
    %v4081 = vpack.c.b16 %v2920, %v2877
    %v4082 = vpack.c.b16 %v2921, %v2878
    %v4083 = vpack.c.b16 %v2922, %v2879
    %v4084 = vpack.c.b16 %v2923, %v2880
    %v4085 = vpack.c.b16 %v2924, %v2881
    %v4086 = vpack.c.b16 %v2925, %v2882
    %v4087 = vpack.c.b16 %v2926, %v2883
    %v4088 = vpack.c.b16 %v2927, %v2884
    %v4089 = vpack.c.b16 %v2928, %v2885
    %v4090 = vpack.c.b16 %v2929, %v2886
    %v4091 = vpack.c.b16 %v2930, %v2887
    %v4092 = vpack.c.b16 %v2931, %v2888
    %v4093 = vpack.c.b16 %v2932, %v2889
    %v4094 = vpack.c.b16 %v2933, %v2890
    %v4095 = vpack.c.b16 %v2934, %v2891
    %v4096 = vpack.c.b16 %v2935, %v2892
    %v4097 = vpack.c.b16 %v2936, %v2893
    %v4098 = vpack.c.b16 %v2980, %v2937
    %v4099 = vpack.c.b16 %v2981, %v2938
    %v4100 = vpack.c.b16 %v2982, %v2939
    %v4101 = vpack.c.b16 %v2983, %v2940
    %v4102 = vpack.c.b16 %v2984, %v2941
    %v4103 = vpack.c.b16 %v2985, %v2942
    %v4104 = vpack.c.b16 %v2986, %v2943
    %v4105 = vpack.c.b16 %v2987, %v2944
    %v4106 = vpack.c.b16 %v2988, %v2945
    %v4107 = vpack.c.b16 %v2989, %v2946
    %v4108 = vpack.c.b16 %v2990, %v2947
    %v4109 = vpack.c.b16 %v2991, %v2948
    %v4110 = vpack.c.b16 %v2992, %v2949
    %v4111 = vpack.c.b16 %v2993, %v2950
    %v4112 = vpack.c.b16 %v2994, %v2951
    %v4113 = vpack.c.b16 %v2995, %v2952
    %v4114 = vpack.c.b16 %v2996, %v2953
    %v4115 = vpack.c.b16 %v2997, %v2954
    %v4116 = vpack.c.b16 %v2998, %v2955
    %v4117 = vpack.c.b16 %v2999, %v2956
    %v4118 = vpack.c.b16 %v3000, %v2957
    %v4119 = vpack.c.b16 %v3001, %v2958
    %v4120 = vpack.c.b16 %v3002, %v2959
    %v4121 = vpack.c.b16 %v3003, %v2960
    %v4122 = vpack.c.b16 %v3004, %v2961
    %v4123 = vpack.c.b16 %v3005, %v2962
    %v4124 = vpack.c.b16 %v3006, %v2963
    %v4125 = vpack.c.b16 %v3007, %v2964
    %v4126 = vpack.c.b16 %v3008, %v2965
    %v4127 = vpack.c.b16 %v3009, %v2966
    %v4128 = vpack.c.b16 %v3010, %v2967
    %v4129 = vpack.c.b16 %v3011, %v2968
    %v4130 = vpack.c.b16 %v3012, %v2969
    %v4131 = vpack.c.b16 %v3013, %v2970
    %v4132 = vpack.c.b16 %v3014, %v2971
    %v4133 = vpack.c.b16 %v3015, %v2972
    %v4134 = vpack.c.b16 %v3016, %v2973
    %v4135 = vpack.c.b16 %v3017, %v2974
    %v4136 = vpack.c.b16 %v3018, %v2975
    %v4137 = vpack.c.b16 %v3019, %v2976
    %v4138 = vpack.c.b16 %v3020, %v2977
    %v4139 = vpack.c.b16 %v3021, %v2978
    %v4140 = vpack.c.b16 %v3022, %v2979
    %v4141 = vpack.c.b16 %v3066, %v3023
    %v4142 = vpack.c.b16 %v3067, %v3024
    %v4143 = vpack.c.b16 %v3068, %v3025
    %v4144 = vpack.c.b16 %v3069, %v3026
    %v4145 = vpack.c.b16 %v3070, %v3027
    %v4146 = vpack.c.b16 %v3071, %v3028
    %v4147 = vpack.c.b16 %v3072, %v3029
    %v4148 = vpack.c.b16 %v3073, %v3030
    %v4149 = vpack.c.b16 %v3074, %v3031
    %v4150 = vpack.c.b16 %v3075, %v3032
    %v4151 = vpack.c.b16 %v3076, %v3033
    %v4152 = vpack.c.b16 %v3077, %v3034
    %v4153 = vpack.c.b16 %v3078, %v3035
    %v4154 = vpack.c.b16 %v3079, %v3036
    %v4155 = vpack.c.b16 %v3080, %v3037
    %v4156 = vpack.c.b16 %v3081, %v3038
    %v4157 = vpack.c.b16 %v3082, %v3039
    %v4158 = vpack.c.b16 %v3083, %v3040
    %v4159 = vpack.c.b16 %v3084, %v3041
    %v4160 = vpack.c.b16 %v3085, %v3042
    %v4161 = vpack.c.b16 %v3086, %v3043
    %v4162 = vpack.c.b16 %v3087, %v3044
    %v4163 = vpack.c.b16 %v3088, %v3045
    %v4164 = vpack.c.b16 %v3089, %v3046
    %v4165 = vpack.c.b16 %v3090, %v3047
    %v4166 = vpack.c.b16 %v3091, %v3048
    %v4167 = vpack.c.b16 %v3092, %v3049
    %v4168 = vpack.c.b16 %v3093, %v3050
    %v4169 = vpack.c.b16 %v3094, %v3051
    %v4170 = vpack.c.b16 %v3095, %v3052
    %v4171 = vpack.c.b16 %v3096, %v3053
    %v4172 = vpack.c.b16 %v3097, %v3054
    %v4173 = vpack.c.b16 %v3098, %v3055
    %v4174 = vpack.c.b16 %v3099, %v3056
    %v4175 = vpack.c.b16 %v3100, %v3057
    %v4176 = vpack.c.b16 %v3101, %v3058
    %v4177 = vpack.c.b16 %v3102, %v3059
    %v4178 = vpack.c.b16 %v3103, %v3060
    %v4179 = vpack.c.b16 %v3104, %v3061
    %v4180 = vpack.c.b16 %v3105, %v3062
    %v4181 = vpack.c.b16 %v3106, %v3063
    %v4182 = vpack.c.b16 %v3107, %v3064
    %v4183 = vpack.c.b16 %v3108, %v3065
    %v4184 = vpack.c.b16 %v3152, %v3109
    %v4185 = vpack.c.b16 %v3153, %v3110
    %v4186 = vpack.c.b16 %v3154, %v3111
    %v4187 = vpack.c.b16 %v3155, %v3112
    %v4188 = vpack.c.b16 %v3156, %v3113
    %v4189 = vpack.c.b16 %v3157, %v3114
    %v4190 = vpack.c.b16 %v3158, %v3115
    %v4191 = vpack.c.b16 %v3159, %v3116
    %v4192 = vpack.c.b16 %v3160, %v3117
    %v4193 = vpack.c.b16 %v3161, %v3118
    %v4194 = vpack.c.b16 %v3162, %v3119
    %v4195 = vpack.c.b16 %v3163, %v3120
    %v4196 = vpack.c.b16 %v3164, %v3121
    %v4197 = vpack.c.b16 %v3165, %v3122
    %v4198 = vpack.c.b16 %v3166, %v3123
    %v4199 = vpack.c.b16 %v3167, %v3124
    %v4200 = vpack.c.b16 %v3168, %v3125
    %v4201 = vpack.c.b16 %v3169, %v3126
    %v4202 = vpack.c.b16 %v3170, %v3127
    %v4203 = vpack.c.b16 %v3171, %v3128
    %v4204 = vpack.c.b16 %v3172, %v3129
    %v4205 = vpack.c.b16 %v3173, %v3130
    %v4206 = vpack.c.b16 %v3174, %v3131
    %v4207 = vpack.c.b16 %v3175, %v3132
    %v4208 = vpack.c.b16 %v3176, %v3133
    %v4209 = vpack.c.b16 %v3177, %v3134
    %v4210 = vpack.c.b16 %v3178, %v3135
    %v4211 = vpack.c.b16 %v3179, %v3136
    %v4212 = vpack.c.b16 %v3180, %v3137
    %v4213 = vpack.c.b16 %v3181, %v3138
    %v4214 = vpack.c.b16 %v3182, %v3139
    %v4215 = vpack.c.b16 %v3183, %v3140
    %v4216 = vpack.c.b16 %v3184, %v3141
    %v4217 = vpack.c.b16 %v3185, %v3142
    %v4218 = vpack.c.b16 %v3186, %v3143
    %v4219 = vpack.c.b16 %v3187, %v3144
    %v4220 = vpack.c.b16 %v3188, %v3145
    %v4221 = vpack.c.b16 %v3189, %v3146
    %v4222 = vpack.c.b16 %v3190, %v3147
    %v4223 = vpack.c.b16 %v3191, %v3148
    %v4224 = vpack.c.b16 %v3192, %v3149
    %v4225 = vpack.c.b16 %v3193, %v3150
    %v4226 = vpack.c.b16 %v3194, %v3151
    %v4227 = vpack.c.b16 %v3238, %v3195
    %v4228 = vpack.c.b16 %v3239, %v3196
    %v4229 = vpack.c.b16 %v3240, %v3197
    %v4230 = vpack.c.b16 %v3241, %v3198
    %v4231 = vpack.c.b16 %v3242, %v3199
    %v4232 = vpack.c.b16 %v3243, %v3200
    %v4233 = vpack.c.b16 %v3244, %v3201
    %v4234 = vpack.c.b16 %v3245, %v3202
    %v4235 = vpack.c.b16 %v3246, %v3203
    %v4236 = vpack.c.b16 %v3247, %v3204
    %v4237 = vpack.c.b16 %v3248, %v3205
    %v4238 = vpack.c.b16 %v3249, %v3206
    %v4239 = vpack.c.b16 %v3250, %v3207
    %v4240 = vpack.c.b16 %v3251, %v3208
    %v4241 = vpack.c.b16 %v3252, %v3209
    %v4242 = vpack.c.b16 %v3253, %v3210
    %v4243 = vpack.c.b16 %v3254, %v3211
    %v4244 = vpack.c.b16 %v3255, %v3212
    %v4245 = vpack.c.b16 %v3256, %v3213
    %v4246 = vpack.c.b16 %v3257, %v3214
    %v4247 = vpack.c.b16 %v3258, %v3215
    %v4248 = vpack.c.b16 %v3259, %v3216
    %v4249 = vpack.c.b16 %v3260, %v3217
    %v4250 = vpack.c.b16 %v3261, %v3218
    %v4251 = vpack.c.b16 %v3262, %v3219
    %v4252 = vpack.c.b16 %v3263, %v3220
    %v4253 = vpack.c.b16 %v3264, %v3221
    %v4254 = vpack.c.b16 %v3265, %v3222
    %v4255 = vpack.c.b16 %v3266, %v3223
    %v4256 = vpack.c.b16 %v3267, %v3224
    %v4257 = vpack.c.b16 %v3268, %v3225
    %v4258 = vpack.c.b16 %v3269, %v3226
    %v4259 = vpack.c.b16 %v3270, %v3227
    %v4260 = vpack.c.b16 %v3271, %v3228
    %v4261 = vpack.c.b16 %v3272, %v3229
    %v4262 = vpack.c.b16 %v3273, %v3230
    %v4263 = vpack.c.b16 %v3274, %v3231
    %v4264 = vpack.c.b16 %v3275, %v3232
    %v4265 = vpack.c.b16 %v3276, %v3233
    %v4266 = vpack.c.b16 %v3277, %v3234
    %v4267 = vpack.c.b16 %v3278, %v3235
    %v4268 = vpack.c.b16 %v3279, %v3236
    %v4269 = vpack.c.b16 %v3280, %v3237
    %v4270 = vpack.c.b16 %v3324, %v3281
    %v4271 = vpack.c.b16 %v3325, %v3282
    %v4272 = vpack.c.b16 %v3326, %v3283
    %v4273 = vpack.c.b16 %v3327, %v3284
    %v4274 = vpack.c.b16 %v3328, %v3285
    %v4275 = vpack.c.b16 %v3329, %v3286
    %v4276 = vpack.c.b16 %v3330, %v3287
    %v4277 = vpack.c.b16 %v3331, %v3288
    %v4278 = vpack.c.b16 %v3332, %v3289
    %v4279 = vpack.c.b16 %v3333, %v3290
    %v4280 = vpack.c.b16 %v3334, %v3291
    %v4281 = vpack.c.b16 %v3335, %v3292
    %v4282 = vpack.c.b16 %v3336, %v3293
    %v4283 = vpack.c.b16 %v3337, %v3294
    %v4284 = vpack.c.b16 %v3338, %v3295
    %v4285 = vpack.c.b16 %v3339, %v3296
    %v4286 = vpack.c.b16 %v3340, %v3297
    %v4287 = vpack.c.b16 %v3341, %v3298
    %v4288 = vpack.c.b16 %v3342, %v3299
    %v4289 = vpack.c.b16 %v3343, %v3300
    %v4290 = vpack.c.b16 %v3344, %v3301
    %v4291 = vpack.c.b16 %v3345, %v3302
    %v4292 = vpack.c.b16 %v3346, %v3303
    %v4293 = vpack.c.b16 %v3347, %v3304
    %v4294 = vpack.c.b16 %v3348, %v3305
    %v4295 = vpack.c.b16 %v3349, %v3306
    %v4296 = vpack.c.b16 %v3350, %v3307
    %v4297 = vpack.c.b16 %v3351, %v3308
    %v4298 = vpack.c.b16 %v3352, %v3309
    %v4299 = vpack.c.b16 %v3353, %v3310
    %v4300 = vpack.c.b16 %v3354, %v3311
    %v4301 = vpack.c.b16 %v3355, %v3312
    %v4302 = vpack.c.b16 %v3356, %v3313
    %v4303 = vpack.c.b16 %v3357, %v3314
    %v4304 = vpack.c.b16 %v3358, %v3315
    %v4305 = vpack.c.b16 %v3359, %v3316
    %v4306 = vpack.c.b16 %v3360, %v3317
    %v4307 = vpack.c.b16 %v3361, %v3318
    %v4308 = vpack.c.b16 %v3362, %v3319
    %v4309 = vpack.c.b16 %v3363, %v3320
    %v4310 = vpack.c.b16 %v3364, %v3321
    %v4311 = vpack.c.b16 %v3365, %v3322
    %v4312 = vpack.c.b16 %v3366, %v3323
    %v4313 = vpack.c.b16 %v3410, %v3367
    %v4314 = vpack.c.b16 %v3411, %v3368
    %v4315 = vpack.c.b16 %v3412, %v3369
    %v4316 = vpack.c.b16 %v3413, %v3370
    %v4317 = vpack.c.b16 %v3414, %v3371
    %v4318 = vpack.c.b16 %v3415, %v3372
    %v4319 = vpack.c.b16 %v3416, %v3373
    %v4320 = vpack.c.b16 %v3417, %v3374
    %v4321 = vpack.c.b16 %v3418, %v3375
    %v4322 = vpack.c.b16 %v3419, %v3376
    %v4323 = vpack.c.b16 %v3420, %v3377
    %v4324 = vpack.c.b16 %v3421, %v3378
    %v4325 = vpack.c.b16 %v3422, %v3379
    %v4326 = vpack.c.b16 %v3423, %v3380
    %v4327 = vpack.c.b16 %v3424, %v3381
    %v4328 = vpack.c.b16 %v3425, %v3382
    %v4329 = vpack.c.b16 %v3426, %v3383
    %v4330 = vpack.c.b16 %v3427, %v3384
    %v4331 = vpack.c.b16 %v3428, %v3385
    %v4332 = vpack.c.b16 %v3429, %v3386
    %v4333 = vpack.c.b16 %v3430, %v3387
    %v4334 = vpack.c.b16 %v3431, %v3388
    %v4335 = vpack.c.b16 %v3432, %v3389
    %v4336 = vpack.c.b16 %v3433, %v3390
    %v4337 = vpack.c.b16 %v3434, %v3391
    %v4338 = vpack.c.b16 %v3435, %v3392
    %v4339 = vpack.c.b16 %v3436, %v3393
    %v4340 = vpack.c.b16 %v3437, %v3394
    %v4341 = vpack.c.b16 %v3438, %v3395
    %v4342 = vpack.c.b16 %v3439, %v3396
    %v4343 = vpack.c.b16 %v3440, %v3397
    %v4344 = vpack.c.b16 %v3441, %v3398
    %v4345 = vpack.c.b16 %v3442, %v3399
    %v4346 = vpack.c.b16 %v3443, %v3400
    %v4347 = vpack.c.b16 %v3444, %v3401
    %v4348 = vpack.c.b16 %v3445, %v3402
    %v4349 = vpack.c.b16 %v3446, %v3403
    %v4350 = vpack.c.b16 %v3447, %v3404
    %v4351 = vpack.c.b16 %v3448, %v3405
    %v4352 = vpack.c.b16 %v3449, %v3406
    %v4353 = vpack.c.b16 %v3450, %v3407
    %v4354 = vpack.c.b16 %v3451, %v3408
    %v4355 = vpack.c.b16 %v3452, %v3409
    %v4356 = vpack.c.b16 %v3496, %v3453
    %v4357 = vpack.c.b16 %v3497, %v3454
    %v4358 = vpack.c.b16 %v3498, %v3455
    %v4359 = vpack.c.b16 %v3499, %v3456
    %v4360 = vpack.c.b16 %v3500, %v3457
    %v4361 = vpack.c.b16 %v3501, %v3458
    %v4362 = vpack.c.b16 %v3502, %v3459
    %v4363 = vpack.c.b16 %v3503, %v3460
    %v4364 = vpack.c.b16 %v3504, %v3461
    %v4365 = vpack.c.b16 %v3505, %v3462
    %v4366 = vpack.c.b16 %v3506, %v3463
    %v4367 = vpack.c.b16 %v3507, %v3464
    %v4368 = vpack.c.b16 %v3508, %v3465
    %v4369 = vpack.c.b16 %v3509, %v3466
    %v4370 = vpack.c.b16 %v3510, %v3467
    %v4371 = vpack.c.b16 %v3511, %v3468
    %v4372 = vpack.c.b16 %v3512, %v3469
    %v4373 = vpack.c.b16 %v3513, %v3470
    %v4374 = vpack.c.b16 %v3514, %v3471
    %v4375 = vpack.c.b16 %v3515, %v3472
    %v4376 = vpack.c.b16 %v3516, %v3473
    %v4377 = vpack.c.b16 %v3517, %v3474
    %v4378 = vpack.c.b16 %v3518, %v3475
    %v4379 = vpack.c.b16 %v3519, %v3476
    %v4380 = vpack.c.b16 %v3520, %v3477
    %v4381 = vpack.c.b16 %v3521, %v3478
    %v4382 = vpack.c.b16 %v3522, %v3479
    %v4383 = vpack.c.b16 %v3523, %v3480
    %v4384 = vpack.c.b16 %v3524, %v3481
    %v4385 = vpack.c.b16 %v3525, %v3482
    %v4386 = vpack.c.b16 %v3526, %v3483
    %v4387 = vpack.c.b16 %v3527, %v3484
    %v4388 = vpack.c.b16 %v3528, %v3485
    %v4389 = vpack.c.b16 %v3529, %v3486
    %v4390 = vpack.c.b16 %v3530, %v3487
    %v4391 = vpack.c.b16 %v3531, %v3488
    %v4392 = vpack.c.b16 %v3532, %v3489
    %v4393 = vpack.c.b16 %v3533, %v3490
    %v4394 = vpack.c.b16 %v3534, %v3491
    %v4395 = vpack.c.b16 %v3535, %v3492
    %v4396 = vpack.c.b16 %v3536, %v3493
    %v4397 = vpack.c.b16 %v3537, %v3494
    %v4398 = vpack.c.b16 %v3538, %v3495
    %vm5216 = vcmask 482304
    %v5218 = vsel %vm5216, %v936, 0
    %vm5220 = vcmask 1044480
    %vm5221 = vcmask 1045504
    %v5222 = vsel %vm5220, 4294967295, 65535
    %v5223 = vsel %vm5221, %v5222, 0
    %v5225 = vand.u32 %v4356, %v5223
    %v5228 = vand.u32 %v4357, %v5223
    %v5231 = vand.u32 %v4358, %v5223
    %v5234 = vand.u32 %v4359, %v5223
    %v5237 = vand.u32 %v4360, %v5223
    %v5240 = vand.u32 %v4361, %v5223
    %v5243 = vand.u32 %v4362, %v5223
    %v5246 = vand.u32 %v4363, %v5223
    %v5249 = vand.u32 %v4364, %v5223
    %v5252 = vand.u32 %v4365, %v5223
    %v5255 = vand.u32 %v4366, %v5223
    %v5258 = vand.u32 %v4367, %v5223
    %v5261 = vand.u32 %v4368, %v5223
    %v5264 = vand.u32 %v4369, %v5223
    %v5267 = vand.u32 %v4370, %v5223
    %v5270 = vand.u32 %v4371, %v5223
    %v5273 = vand.u32 %v4372, %v5223
    %v5276 = vand.u32 %v4373, %v5223
    %v5279 = vand.u32 %v4374, %v5223
    %v5282 = vand.u32 %v4375, %v5223
    %v5285 = vand.u32 %v4376, %v5223
    %v5288 = vand.u32 %v4377, %v5223
    %v5291 = vand.u32 %v4378, %v5223
    %v5294 = vand.u32 %v4379, %v5223
    %v5297 = vand.u32 %v4380, %v5223
    %v5300 = vand.u32 %v4381, %v5223
    %v5303 = vand.u32 %v4382, %v5223
    %v5306 = vand.u32 %v4383, %v5223
    %v5309 = vand.u32 %v4384, %v5223
    %v5312 = vand.u32 %v4385, %v5223
    %v5315 = vand.u32 %v4386, %v5223
    %v5318 = vand.u32 %v4387, %v5223
    %v5321 = vand.u32 %v4388, %v5223
    %v5324 = vand.u32 %v4389, %v5223
    %v5327 = vand.u32 %v4390, %v5223
    %v5330 = vand.u32 %v4391, %v5223
    %v5333 = vand.u32 %v4392, %v5223
    %v5336 = vand.u32 %v4393, %v5223
    %v5339 = vand.u32 %v4394, %v5223
    %v5342 = vand.u32 %v4395, %v5223
    %v5345 = vand.u32 %v4396, %v5223
    %v5348 = vand.u32 %v4397, %v5223
    %v5351 = vand.u32 %v4398, %v5223
    %5353 = vmatpush.bf16.msra.mxu0 %v3840
    %5354 = vmatpush.bf16.msra.mxu0 %v3797
    %5355 = vmatpush.bf16.msra.mxu0 %v3754
    %5356 = vmatpush.bf16.msra.mxu0 %v3711
    %5357 = vmatpush.bf16.msra.mxu0 %v3668
    %5358 = vmatpush.bf16.msra.mxu0 %v3625
    %5359 = vmatpush.bf16.msra.mxu0 %v3582
    %5360 = vmatpush.bf16.msra.mxu0 %v3539
    %5361 = vmatmul.bf16.gmra.mxu0 %v934
    %v5362 = vpop.f32.mrf.mxu0
    %v5363 = vadd.f32 0.0, %v5362
    %v5364 = vpop.f32.mrf.mxu0
    %5365 = vdwg.mxu0
    %5366 = vmatpush.bf16.msra.mxu0 %v4184
    %5367 = vmatpush.bf16.msra.mxu0 %v4141
    %5368 = vmatpush.bf16.msra.mxu0 %v4098
    %5369 = vmatpush.bf16.msra.mxu0 %v4055
    %5370 = vmatpush.bf16.msra.mxu0 %v4012
    %5371 = vmatpush.bf16.msra.mxu0 %v3969
    %5372 = vmatpush.bf16.msra.mxu0 %v3926
    %5373 = vmatpush.bf16.msra.mxu0 %v3883
    %5374 = vmatmul.bf16.gmra.mxu0 %v935
    %v5375 = vpop.f32.mrf.mxu0
    %v5376 = vadd.f32 %v5363, %v5375
    %v5377 = vpop.f32.mrf.mxu0
    %5378 = vdwg.mxu0
    %5379 = vmatpush.bf16.msra.mxu0 0
    %5380 = vmatpush.bf16.msra.mxu0 0
    %5381 = vmatpush.bf16.msra.mxu0 0
    %5382 = vmatpush.bf16.msra.mxu0 0
    %5383 = vmatpush.bf16.msra.mxu0 %v5225
    %5384 = vmatpush.bf16.msra.mxu0 %v4313
    %5385 = vmatpush.bf16.msra.mxu0 %v4270
    %5386 = vmatpush.bf16.msra.mxu0 %v4227
    %5387 = vmatmul.bf16.gmra.mxu0 %v5218
    %v5388 = vpop.f32.mrf.mxu0
    %v5389 = vadd.f32 %v5376, %v5388
    %v5390 = vpop.f32.mrf.mxu0
    %5391 = vdwg.mxu0
    %5392 = vmatpush.bf16.msra.mxu0 %v3841
    %5393 = vmatpush.bf16.msra.mxu0 %v3798
    %5394 = vmatpush.bf16.msra.mxu0 %v3755
    %5395 = vmatpush.bf16.msra.mxu0 %v3712
    %5396 = vmatpush.bf16.msra.mxu0 %v3669
    %5397 = vmatpush.bf16.msra.mxu0 %v3626
    %5398 = vmatpush.bf16.msra.mxu0 %v3583
    %5399 = vmatpush.bf16.msra.mxu0 %v3540
    %5400 = vmatmul.bf16.gmra.mxu0 %v934
    %v5401 = vpop.f32.mrf.mxu0
    %v5402 = vadd.f32 0.0, %v5401
    %v5403 = vpop.f32.mrf.mxu0
    %5404 = vdwg.mxu0
    %5405 = vmatpush.bf16.msra.mxu0 %v4185
    %5406 = vmatpush.bf16.msra.mxu0 %v4142
    %5407 = vmatpush.bf16.msra.mxu0 %v4099
    %5408 = vmatpush.bf16.msra.mxu0 %v4056
    %5409 = vmatpush.bf16.msra.mxu0 %v4013
    %5410 = vmatpush.bf16.msra.mxu0 %v3970
    %5411 = vmatpush.bf16.msra.mxu0 %v3927
    %5412 = vmatpush.bf16.msra.mxu0 %v3884
    %5413 = vmatmul.bf16.gmra.mxu0 %v935
    %v5414 = vpop.f32.mrf.mxu0
    %v5415 = vadd.f32 %v5402, %v5414
    %v5416 = vpop.f32.mrf.mxu0
    %5417 = vdwg.mxu0
    %5418 = vmatpush.bf16.msra.mxu0 0
    %5419 = vmatpush.bf16.msra.mxu0 0
    %5420 = vmatpush.bf16.msra.mxu0 0
    %5421 = vmatpush.bf16.msra.mxu0 0
    %5422 = vmatpush.bf16.msra.mxu0 %v5228
    %5423 = vmatpush.bf16.msra.mxu0 %v4314
    %5424 = vmatpush.bf16.msra.mxu0 %v4271
    %5425 = vmatpush.bf16.msra.mxu0 %v4228
    %5426 = vmatmul.bf16.gmra.mxu0 %v5218
    %v5427 = vpop.f32.mrf.mxu0
    %v5428 = vadd.f32 %v5415, %v5427
    %v5429 = vpop.f32.mrf.mxu0
    %5430 = vdwg.mxu0
    %5431 = vmatpush.bf16.msra.mxu0 %v3842
    %5432 = vmatpush.bf16.msra.mxu0 %v3799
    %5433 = vmatpush.bf16.msra.mxu0 %v3756
    %5434 = vmatpush.bf16.msra.mxu0 %v3713
    %5435 = vmatpush.bf16.msra.mxu0 %v3670
    %5436 = vmatpush.bf16.msra.mxu0 %v3627
    %5437 = vmatpush.bf16.msra.mxu0 %v3584
    %5438 = vmatpush.bf16.msra.mxu0 %v3541
    %5439 = vmatmul.bf16.gmra.mxu0 %v934
    %v5440 = vpop.f32.mrf.mxu0
    %v5441 = vadd.f32 0.0, %v5440
    %v5442 = vpop.f32.mrf.mxu0
    %5443 = vdwg.mxu0
    %5444 = vmatpush.bf16.msra.mxu0 %v4186
    %5445 = vmatpush.bf16.msra.mxu0 %v4143
    %5446 = vmatpush.bf16.msra.mxu0 %v4100
    %5447 = vmatpush.bf16.msra.mxu0 %v4057
    %5448 = vmatpush.bf16.msra.mxu0 %v4014
    %5449 = vmatpush.bf16.msra.mxu0 %v3971
    %5450 = vmatpush.bf16.msra.mxu0 %v3928
    %5451 = vmatpush.bf16.msra.mxu0 %v3885
    %5452 = vmatmul.bf16.gmra.mxu0 %v935
    %v5453 = vpop.f32.mrf.mxu0
    %v5454 = vadd.f32 %v5441, %v5453
    %v5455 = vpop.f32.mrf.mxu0
    %5456 = vdwg.mxu0
    %5457 = vmatpush.bf16.msra.mxu0 0
    %5458 = vmatpush.bf16.msra.mxu0 0
    %5459 = vmatpush.bf16.msra.mxu0 0
    %5460 = vmatpush.bf16.msra.mxu0 0
    %5461 = vmatpush.bf16.msra.mxu0 %v5231
    %5462 = vmatpush.bf16.msra.mxu0 %v4315
    %5463 = vmatpush.bf16.msra.mxu0 %v4272
    %5464 = vmatpush.bf16.msra.mxu0 %v4229
    %5465 = vmatmul.bf16.gmra.mxu0 %v5218
    %v5466 = vpop.f32.mrf.mxu0
    %v5467 = vadd.f32 %v5454, %v5466
    %v5468 = vpop.f32.mrf.mxu0
    %5469 = vdwg.mxu0
    %5470 = vmatpush.bf16.msra.mxu0 %v3843
    %5471 = vmatpush.bf16.msra.mxu0 %v3800
    %5472 = vmatpush.bf16.msra.mxu0 %v3757
    %5473 = vmatpush.bf16.msra.mxu0 %v3714
    %5474 = vmatpush.bf16.msra.mxu0 %v3671
    %5475 = vmatpush.bf16.msra.mxu0 %v3628
    %5476 = vmatpush.bf16.msra.mxu0 %v3585
    %5477 = vmatpush.bf16.msra.mxu0 %v3542
    %5478 = vmatmul.bf16.gmra.mxu0 %v934
    %v5479 = vpop.f32.mrf.mxu0
    %v5480 = vadd.f32 0.0, %v5479
    %v5481 = vpop.f32.mrf.mxu0
    %5482 = vdwg.mxu0
    %5483 = vmatpush.bf16.msra.mxu0 %v4187
    %5484 = vmatpush.bf16.msra.mxu0 %v4144
    %5485 = vmatpush.bf16.msra.mxu0 %v4101
    %5486 = vmatpush.bf16.msra.mxu0 %v4058
    %5487 = vmatpush.bf16.msra.mxu0 %v4015
    %5488 = vmatpush.bf16.msra.mxu0 %v3972
    %5489 = vmatpush.bf16.msra.mxu0 %v3929
    %5490 = vmatpush.bf16.msra.mxu0 %v3886
    %5491 = vmatmul.bf16.gmra.mxu0 %v935
    %v5492 = vpop.f32.mrf.mxu0
    %v5493 = vadd.f32 %v5480, %v5492
    %v5494 = vpop.f32.mrf.mxu0
    %5495 = vdwg.mxu0
    %5496 = vmatpush.bf16.msra.mxu0 0
    %5497 = vmatpush.bf16.msra.mxu0 0
    %5498 = vmatpush.bf16.msra.mxu0 0
    %5499 = vmatpush.bf16.msra.mxu0 0
    %5500 = vmatpush.bf16.msra.mxu0 %v5234
    %5501 = vmatpush.bf16.msra.mxu0 %v4316
    %5502 = vmatpush.bf16.msra.mxu0 %v4273
    %5503 = vmatpush.bf16.msra.mxu0 %v4230
    %5504 = vmatmul.bf16.gmra.mxu0 %v5218
    %v5505 = vpop.f32.mrf.mxu0
    %v5506 = vadd.f32 %v5493, %v5505
    %v5507 = vpop.f32.mrf.mxu0
    %5508 = vdwg.mxu0
    %5509 = vmatpush.bf16.msra.mxu0 %v3844
    %5510 = vmatpush.bf16.msra.mxu0 %v3801
    %5511 = vmatpush.bf16.msra.mxu0 %v3758
    %5512 = vmatpush.bf16.msra.mxu0 %v3715
    %5513 = vmatpush.bf16.msra.mxu0 %v3672
    %5514 = vmatpush.bf16.msra.mxu0 %v3629
    %5515 = vmatpush.bf16.msra.mxu0 %v3586
    %5516 = vmatpush.bf16.msra.mxu0 %v3543
    %5517 = vmatmul.bf16.gmra.mxu0 %v934
    %v5518 = vpop.f32.mrf.mxu0
    %v5519 = vadd.f32 0.0, %v5518
    %v5520 = vpop.f32.mrf.mxu0
    %5521 = vdwg.mxu0
    %5522 = vmatpush.bf16.msra.mxu0 %v4188
    %5523 = vmatpush.bf16.msra.mxu0 %v4145
    %5524 = vmatpush.bf16.msra.mxu0 %v4102
    %5525 = vmatpush.bf16.msra.mxu0 %v4059
    %5526 = vmatpush.bf16.msra.mxu0 %v4016
    %5527 = vmatpush.bf16.msra.mxu0 %v3973
    %5528 = vmatpush.bf16.msra.mxu0 %v3930
    %5529 = vmatpush.bf16.msra.mxu0 %v3887
    %5530 = vmatmul.bf16.gmra.mxu0 %v935
    %v5531 = vpop.f32.mrf.mxu0
    %v5532 = vadd.f32 %v5519, %v5531
    %v5533 = vpop.f32.mrf.mxu0
    %5534 = vdwg.mxu0
    %5535 = vmatpush.bf16.msra.mxu0 0
    %5536 = vmatpush.bf16.msra.mxu0 0
    %5537 = vmatpush.bf16.msra.mxu0 0
    %5538 = vmatpush.bf16.msra.mxu0 0
    %5539 = vmatpush.bf16.msra.mxu0 %v5237
    %5540 = vmatpush.bf16.msra.mxu0 %v4317
    %5541 = vmatpush.bf16.msra.mxu0 %v4274
    %5542 = vmatpush.bf16.msra.mxu0 %v4231
    %5543 = vmatmul.bf16.gmra.mxu0 %v5218
    %v5544 = vpop.f32.mrf.mxu0
    %v5545 = vadd.f32 %v5532, %v5544
    %v5546 = vpop.f32.mrf.mxu0
    %5547 = vdwg.mxu0
    %5548 = vmatpush.bf16.msra.mxu0 %v3845
    %5549 = vmatpush.bf16.msra.mxu0 %v3802
    %5550 = vmatpush.bf16.msra.mxu0 %v3759
    %5551 = vmatpush.bf16.msra.mxu0 %v3716
    %5552 = vmatpush.bf16.msra.mxu0 %v3673
    %5553 = vmatpush.bf16.msra.mxu0 %v3630
    %5554 = vmatpush.bf16.msra.mxu0 %v3587
    %5555 = vmatpush.bf16.msra.mxu0 %v3544
    %5556 = vmatmul.bf16.gmra.mxu0 %v934
    %v5557 = vpop.f32.mrf.mxu0
    %v5558 = vadd.f32 0.0, %v5557
    %v5559 = vpop.f32.mrf.mxu0
    %5560 = vdwg.mxu0
    %5561 = vmatpush.bf16.msra.mxu0 %v4189
    %5562 = vmatpush.bf16.msra.mxu0 %v4146
    %5563 = vmatpush.bf16.msra.mxu0 %v4103
    %5564 = vmatpush.bf16.msra.mxu0 %v4060
    %5565 = vmatpush.bf16.msra.mxu0 %v4017
    %5566 = vmatpush.bf16.msra.mxu0 %v3974
    %5567 = vmatpush.bf16.msra.mxu0 %v3931
    %5568 = vmatpush.bf16.msra.mxu0 %v3888
    %5569 = vmatmul.bf16.gmra.mxu0 %v935
    %v5570 = vpop.f32.mrf.mxu0
    %v5571 = vadd.f32 %v5558, %v5570
    %v5572 = vpop.f32.mrf.mxu0
    %5573 = vdwg.mxu0
    %5574 = vmatpush.bf16.msra.mxu0 0
    %5575 = vmatpush.bf16.msra.mxu0 0
    %5576 = vmatpush.bf16.msra.mxu0 0
    %5577 = vmatpush.bf16.msra.mxu0 0
    %5578 = vmatpush.bf16.msra.mxu0 %v5240
    %5579 = vmatpush.bf16.msra.mxu0 %v4318
    %5580 = vmatpush.bf16.msra.mxu0 %v4275
    %5581 = vmatpush.bf16.msra.mxu0 %v4232
    %5582 = vmatmul.bf16.gmra.mxu0 %v5218
    %v5583 = vpop.f32.mrf.mxu0
    %v5584 = vadd.f32 %v5571, %v5583
    %v5585 = vpop.f32.mrf.mxu0
    %5586 = vdwg.mxu0
    %5587 = vmatpush.bf16.msra.mxu0 %v3846
    %5588 = vmatpush.bf16.msra.mxu0 %v3803
    %5589 = vmatpush.bf16.msra.mxu0 %v3760
    %5590 = vmatpush.bf16.msra.mxu0 %v3717
    %5591 = vmatpush.bf16.msra.mxu0 %v3674
    %5592 = vmatpush.bf16.msra.mxu0 %v3631
    %5593 = vmatpush.bf16.msra.mxu0 %v3588
    %5594 = vmatpush.bf16.msra.mxu0 %v3545
    %5595 = vmatmul.bf16.gmra.mxu0 %v934
    %v5596 = vpop.f32.mrf.mxu0
    %v5597 = vadd.f32 0.0, %v5596
    %v5598 = vpop.f32.mrf.mxu0
    %5599 = vdwg.mxu0
    %5600 = vmatpush.bf16.msra.mxu0 %v4190
    %5601 = vmatpush.bf16.msra.mxu0 %v4147
    %5602 = vmatpush.bf16.msra.mxu0 %v4104
    %5603 = vmatpush.bf16.msra.mxu0 %v4061
    %5604 = vmatpush.bf16.msra.mxu0 %v4018
    %5605 = vmatpush.bf16.msra.mxu0 %v3975
    %5606 = vmatpush.bf16.msra.mxu0 %v3932
    %5607 = vmatpush.bf16.msra.mxu0 %v3889
    %5608 = vmatmul.bf16.gmra.mxu0 %v935
    %v5609 = vpop.f32.mrf.mxu0
    %v5610 = vadd.f32 %v5597, %v5609
    %v5611 = vpop.f32.mrf.mxu0
    %5612 = vdwg.mxu0
    %5613 = vmatpush.bf16.msra.mxu0 0
    %5614 = vmatpush.bf16.msra.mxu0 0
    %5615 = vmatpush.bf16.msra.mxu0 0
    %5616 = vmatpush.bf16.msra.mxu0 0
    %5617 = vmatpush.bf16.msra.mxu0 %v5243
    %5618 = vmatpush.bf16.msra.mxu0 %v4319
    %5619 = vmatpush.bf16.msra.mxu0 %v4276
    %5620 = vmatpush.bf16.msra.mxu0 %v4233
    %5621 = vmatmul.bf16.gmra.mxu0 %v5218
    %v5622 = vpop.f32.mrf.mxu0
    %v5623 = vadd.f32 %v5610, %v5622
    %v5624 = vpop.f32.mrf.mxu0
    %5625 = vdwg.mxu0
    %5626 = vmatpush.bf16.msra.mxu0 %v3847
    %5627 = vmatpush.bf16.msra.mxu0 %v3804
    %5628 = vmatpush.bf16.msra.mxu0 %v3761
    %5629 = vmatpush.bf16.msra.mxu0 %v3718
    %5630 = vmatpush.bf16.msra.mxu0 %v3675
    %5631 = vmatpush.bf16.msra.mxu0 %v3632
    %5632 = vmatpush.bf16.msra.mxu0 %v3589
    %5633 = vmatpush.bf16.msra.mxu0 %v3546
    %5634 = vmatmul.bf16.gmra.mxu0 %v934
    %v5635 = vpop.f32.mrf.mxu0
    %v5636 = vadd.f32 0.0, %v5635
    %v5637 = vpop.f32.mrf.mxu0
    %5638 = vdwg.mxu0
    %5639 = vmatpush.bf16.msra.mxu0 %v4191
    %5640 = vmatpush.bf16.msra.mxu0 %v4148
    %5641 = vmatpush.bf16.msra.mxu0 %v4105
    %5642 = vmatpush.bf16.msra.mxu0 %v4062
    %5643 = vmatpush.bf16.msra.mxu0 %v4019
    %5644 = vmatpush.bf16.msra.mxu0 %v3976
    %5645 = vmatpush.bf16.msra.mxu0 %v3933
    %5646 = vmatpush.bf16.msra.mxu0 %v3890
    %5647 = vmatmul.bf16.gmra.mxu0 %v935
    %v5648 = vpop.f32.mrf.mxu0
    %v5649 = vadd.f32 %v5636, %v5648
    %v5650 = vpop.f32.mrf.mxu0
    %5651 = vdwg.mxu0
    %5652 = vmatpush.bf16.msra.mxu0 0
    %5653 = vmatpush.bf16.msra.mxu0 0
    %5654 = vmatpush.bf16.msra.mxu0 0
    %5655 = vmatpush.bf16.msra.mxu0 0
    %5656 = vmatpush.bf16.msra.mxu0 %v5246
    %5657 = vmatpush.bf16.msra.mxu0 %v4320
    %5658 = vmatpush.bf16.msra.mxu0 %v4277
    %5659 = vmatpush.bf16.msra.mxu0 %v4234
    %5660 = vmatmul.bf16.gmra.mxu0 %v5218
    %v5661 = vpop.f32.mrf.mxu0
    %v5662 = vadd.f32 %v5649, %v5661
    %v5663 = vpop.f32.mrf.mxu0
    %5664 = vdwg.mxu0
    %5665 = vmatpush.bf16.msra.mxu0 %v3848
    %5666 = vmatpush.bf16.msra.mxu0 %v3805
    %5667 = vmatpush.bf16.msra.mxu0 %v3762
    %5668 = vmatpush.bf16.msra.mxu0 %v3719
    %5669 = vmatpush.bf16.msra.mxu0 %v3676
    %5670 = vmatpush.bf16.msra.mxu0 %v3633
    %5671 = vmatpush.bf16.msra.mxu0 %v3590
    %5672 = vmatpush.bf16.msra.mxu0 %v3547
    %5673 = vmatmul.bf16.gmra.mxu0 %v934
    %v5674 = vpop.f32.mrf.mxu0
    %v5675 = vadd.f32 0.0, %v5674
    %v5676 = vpop.f32.mrf.mxu0
    %5677 = vdwg.mxu0
    %5678 = vmatpush.bf16.msra.mxu0 %v4192
    %5679 = vmatpush.bf16.msra.mxu0 %v4149
    %5680 = vmatpush.bf16.msra.mxu0 %v4106
    %5681 = vmatpush.bf16.msra.mxu0 %v4063
    %5682 = vmatpush.bf16.msra.mxu0 %v4020
    %5683 = vmatpush.bf16.msra.mxu0 %v3977
    %5684 = vmatpush.bf16.msra.mxu0 %v3934
    %5685 = vmatpush.bf16.msra.mxu0 %v3891
    %5686 = vmatmul.bf16.gmra.mxu0 %v935
    %v5687 = vpop.f32.mrf.mxu0
    %v5688 = vadd.f32 %v5675, %v5687
    %v5689 = vpop.f32.mrf.mxu0
    %5690 = vdwg.mxu0
    %5691 = vmatpush.bf16.msra.mxu0 0
    %5692 = vmatpush.bf16.msra.mxu0 0
    %5693 = vmatpush.bf16.msra.mxu0 0
    %5694 = vmatpush.bf16.msra.mxu0 0
    %5695 = vmatpush.bf16.msra.mxu0 %v5249
    %5696 = vmatpush.bf16.msra.mxu0 %v4321
    %5697 = vmatpush.bf16.msra.mxu0 %v4278
    %5698 = vmatpush.bf16.msra.mxu0 %v4235
    %5699 = vmatmul.bf16.gmra.mxu0 %v5218
    %v5700 = vpop.f32.mrf.mxu0
    %v5701 = vadd.f32 %v5688, %v5700
    %v5702 = vpop.f32.mrf.mxu0
    %5703 = vdwg.mxu0
    %5704 = vmatpush.bf16.msra.mxu0 %v3849
    %5705 = vmatpush.bf16.msra.mxu0 %v3806
    %5706 = vmatpush.bf16.msra.mxu0 %v3763
    %5707 = vmatpush.bf16.msra.mxu0 %v3720
    %5708 = vmatpush.bf16.msra.mxu0 %v3677
    %5709 = vmatpush.bf16.msra.mxu0 %v3634
    %5710 = vmatpush.bf16.msra.mxu0 %v3591
    %5711 = vmatpush.bf16.msra.mxu0 %v3548
    %5712 = vmatmul.bf16.gmra.mxu0 %v934
    %v5713 = vpop.f32.mrf.mxu0
    %v5714 = vadd.f32 0.0, %v5713
    %v5715 = vpop.f32.mrf.mxu0
    %5716 = vdwg.mxu0
    %5717 = vmatpush.bf16.msra.mxu0 %v4193
    %5718 = vmatpush.bf16.msra.mxu0 %v4150
    %5719 = vmatpush.bf16.msra.mxu0 %v4107
    %5720 = vmatpush.bf16.msra.mxu0 %v4064
    %5721 = vmatpush.bf16.msra.mxu0 %v4021
    %5722 = vmatpush.bf16.msra.mxu0 %v3978
    %5723 = vmatpush.bf16.msra.mxu0 %v3935
    %5724 = vmatpush.bf16.msra.mxu0 %v3892
    %5725 = vmatmul.bf16.gmra.mxu0 %v935
    %v5726 = vpop.f32.mrf.mxu0
    %v5727 = vadd.f32 %v5714, %v5726
    %v5728 = vpop.f32.mrf.mxu0
    %5729 = vdwg.mxu0
    %5730 = vmatpush.bf16.msra.mxu0 0
    %5731 = vmatpush.bf16.msra.mxu0 0
    %5732 = vmatpush.bf16.msra.mxu0 0
    %5733 = vmatpush.bf16.msra.mxu0 0
    %5734 = vmatpush.bf16.msra.mxu0 %v5252
    %5735 = vmatpush.bf16.msra.mxu0 %v4322
    %5736 = vmatpush.bf16.msra.mxu0 %v4279
    %5737 = vmatpush.bf16.msra.mxu0 %v4236
    %5738 = vmatmul.bf16.gmra.mxu0 %v5218
    %v5739 = vpop.f32.mrf.mxu0
    %v5740 = vadd.f32 %v5727, %v5739
    %v5741 = vpop.f32.mrf.mxu0
    %5742 = vdwg.mxu0
    %5743 = vmatpush.bf16.msra.mxu0 %v3850
    %5744 = vmatpush.bf16.msra.mxu0 %v3807
    %5745 = vmatpush.bf16.msra.mxu0 %v3764
    %5746 = vmatpush.bf16.msra.mxu0 %v3721
    %5747 = vmatpush.bf16.msra.mxu0 %v3678
    %5748 = vmatpush.bf16.msra.mxu0 %v3635
    %5749 = vmatpush.bf16.msra.mxu0 %v3592
    %5750 = vmatpush.bf16.msra.mxu0 %v3549
    %5751 = vmatmul.bf16.gmra.mxu0 %v934
    %v5752 = vpop.f32.mrf.mxu0
    %v5753 = vadd.f32 0.0, %v5752
    %v5754 = vpop.f32.mrf.mxu0
    %5755 = vdwg.mxu0
    %5756 = vmatpush.bf16.msra.mxu0 %v4194
    %5757 = vmatpush.bf16.msra.mxu0 %v4151
    %5758 = vmatpush.bf16.msra.mxu0 %v4108
    %5759 = vmatpush.bf16.msra.mxu0 %v4065
    %5760 = vmatpush.bf16.msra.mxu0 %v4022
    %5761 = vmatpush.bf16.msra.mxu0 %v3979
    %5762 = vmatpush.bf16.msra.mxu0 %v3936
    %5763 = vmatpush.bf16.msra.mxu0 %v3893
    %5764 = vmatmul.bf16.gmra.mxu0 %v935
    %v5765 = vpop.f32.mrf.mxu0
    %v5766 = vadd.f32 %v5753, %v5765
    %v5767 = vpop.f32.mrf.mxu0
    %5768 = vdwg.mxu0
    %5769 = vmatpush.bf16.msra.mxu0 0
    %5770 = vmatpush.bf16.msra.mxu0 0
    %5771 = vmatpush.bf16.msra.mxu0 0
    %5772 = vmatpush.bf16.msra.mxu0 0
    %5773 = vmatpush.bf16.msra.mxu0 %v5255
    %5774 = vmatpush.bf16.msra.mxu0 %v4323
    %5775 = vmatpush.bf16.msra.mxu0 %v4280
    %5776 = vmatpush.bf16.msra.mxu0 %v4237
    %5777 = vmatmul.bf16.gmra.mxu0 %v5218
    %v5778 = vpop.f32.mrf.mxu0
    %v5779 = vadd.f32 %v5766, %v5778
    %v5780 = vpop.f32.mrf.mxu0
    %5781 = vdwg.mxu0
    %5782 = vmatpush.bf16.msra.mxu0 %v3851
    %5783 = vmatpush.bf16.msra.mxu0 %v3808
    %5784 = vmatpush.bf16.msra.mxu0 %v3765
    %5785 = vmatpush.bf16.msra.mxu0 %v3722
    %5786 = vmatpush.bf16.msra.mxu0 %v3679
    %5787 = vmatpush.bf16.msra.mxu0 %v3636
    %5788 = vmatpush.bf16.msra.mxu0 %v3593
    %5789 = vmatpush.bf16.msra.mxu0 %v3550
    %5790 = vmatmul.bf16.gmra.mxu0 %v934
    %v5791 = vpop.f32.mrf.mxu0
    %v5792 = vadd.f32 0.0, %v5791
    %v5793 = vpop.f32.mrf.mxu0
    %5794 = vdwg.mxu0
    %5795 = vmatpush.bf16.msra.mxu0 %v4195
    %5796 = vmatpush.bf16.msra.mxu0 %v4152
    %5797 = vmatpush.bf16.msra.mxu0 %v4109
    %5798 = vmatpush.bf16.msra.mxu0 %v4066
    %5799 = vmatpush.bf16.msra.mxu0 %v4023
    %5800 = vmatpush.bf16.msra.mxu0 %v3980
    %5801 = vmatpush.bf16.msra.mxu0 %v3937
    %5802 = vmatpush.bf16.msra.mxu0 %v3894
    %5803 = vmatmul.bf16.gmra.mxu0 %v935
    %v5804 = vpop.f32.mrf.mxu0
    %v5805 = vadd.f32 %v5792, %v5804
    %v5806 = vpop.f32.mrf.mxu0
    %5807 = vdwg.mxu0
    %5808 = vmatpush.bf16.msra.mxu0 0
    %5809 = vmatpush.bf16.msra.mxu0 0
    %5810 = vmatpush.bf16.msra.mxu0 0
    %5811 = vmatpush.bf16.msra.mxu0 0
    %5812 = vmatpush.bf16.msra.mxu0 %v5258
    %5813 = vmatpush.bf16.msra.mxu0 %v4324
    %5814 = vmatpush.bf16.msra.mxu0 %v4281
    %5815 = vmatpush.bf16.msra.mxu0 %v4238
    %5816 = vmatmul.bf16.gmra.mxu0 %v5218
    %v5817 = vpop.f32.mrf.mxu0
    %v5818 = vadd.f32 %v5805, %v5817
    %v5819 = vpop.f32.mrf.mxu0
    %5820 = vdwg.mxu0
    %5821 = vmatpush.bf16.msra.mxu0 %v3852
    %5822 = vmatpush.bf16.msra.mxu0 %v3809
    %5823 = vmatpush.bf16.msra.mxu0 %v3766
    %5824 = vmatpush.bf16.msra.mxu0 %v3723
    %5825 = vmatpush.bf16.msra.mxu0 %v3680
    %5826 = vmatpush.bf16.msra.mxu0 %v3637
    %5827 = vmatpush.bf16.msra.mxu0 %v3594
    %5828 = vmatpush.bf16.msra.mxu0 %v3551
    %5829 = vmatmul.bf16.gmra.mxu0 %v934
    %v5830 = vpop.f32.mrf.mxu0
    %v5831 = vadd.f32 0.0, %v5830
    %v5832 = vpop.f32.mrf.mxu0
    %5833 = vdwg.mxu0
    %5834 = vmatpush.bf16.msra.mxu0 %v4196
    %5835 = vmatpush.bf16.msra.mxu0 %v4153
    %5836 = vmatpush.bf16.msra.mxu0 %v4110
    %5837 = vmatpush.bf16.msra.mxu0 %v4067
    %5838 = vmatpush.bf16.msra.mxu0 %v4024
    %5839 = vmatpush.bf16.msra.mxu0 %v3981
    %5840 = vmatpush.bf16.msra.mxu0 %v3938
    %5841 = vmatpush.bf16.msra.mxu0 %v3895
    %5842 = vmatmul.bf16.gmra.mxu0 %v935
    %v5843 = vpop.f32.mrf.mxu0
    %v5844 = vadd.f32 %v5831, %v5843
    %v5845 = vpop.f32.mrf.mxu0
    %5846 = vdwg.mxu0
    %5847 = vmatpush.bf16.msra.mxu0 0
    %5848 = vmatpush.bf16.msra.mxu0 0
    %5849 = vmatpush.bf16.msra.mxu0 0
    %5850 = vmatpush.bf16.msra.mxu0 0
    %5851 = vmatpush.bf16.msra.mxu0 %v5261
    %5852 = vmatpush.bf16.msra.mxu0 %v4325
    %5853 = vmatpush.bf16.msra.mxu0 %v4282
    %5854 = vmatpush.bf16.msra.mxu0 %v4239
    %5855 = vmatmul.bf16.gmra.mxu0 %v5218
    %v5856 = vpop.f32.mrf.mxu0
    %v5857 = vadd.f32 %v5844, %v5856
    %v5858 = vpop.f32.mrf.mxu0
    %5859 = vdwg.mxu0
    %5860 = vmatpush.bf16.msra.mxu0 %v3853
    %5861 = vmatpush.bf16.msra.mxu0 %v3810
    %5862 = vmatpush.bf16.msra.mxu0 %v3767
    %5863 = vmatpush.bf16.msra.mxu0 %v3724
    %5864 = vmatpush.bf16.msra.mxu0 %v3681
    %5865 = vmatpush.bf16.msra.mxu0 %v3638
    %5866 = vmatpush.bf16.msra.mxu0 %v3595
    %5867 = vmatpush.bf16.msra.mxu0 %v3552
    %5868 = vmatmul.bf16.gmra.mxu0 %v934
    %v5869 = vpop.f32.mrf.mxu0
    %v5870 = vadd.f32 0.0, %v5869
    %v5871 = vpop.f32.mrf.mxu0
    %5872 = vdwg.mxu0
    %5873 = vmatpush.bf16.msra.mxu0 %v4197
    %5874 = vmatpush.bf16.msra.mxu0 %v4154
    %5875 = vmatpush.bf16.msra.mxu0 %v4111
    %5876 = vmatpush.bf16.msra.mxu0 %v4068
    %5877 = vmatpush.bf16.msra.mxu0 %v4025
    %5878 = vmatpush.bf16.msra.mxu0 %v3982
    %5879 = vmatpush.bf16.msra.mxu0 %v3939
    %5880 = vmatpush.bf16.msra.mxu0 %v3896
    %5881 = vmatmul.bf16.gmra.mxu0 %v935
    %v5882 = vpop.f32.mrf.mxu0
    %v5883 = vadd.f32 %v5870, %v5882
    %v5884 = vpop.f32.mrf.mxu0
    %5885 = vdwg.mxu0
    %5886 = vmatpush.bf16.msra.mxu0 0
    %5887 = vmatpush.bf16.msra.mxu0 0
    %5888 = vmatpush.bf16.msra.mxu0 0
    %5889 = vmatpush.bf16.msra.mxu0 0
    %5890 = vmatpush.bf16.msra.mxu0 %v5264
    %5891 = vmatpush.bf16.msra.mxu0 %v4326
    %5892 = vmatpush.bf16.msra.mxu0 %v4283
    %5893 = vmatpush.bf16.msra.mxu0 %v4240
    %5894 = vmatmul.bf16.gmra.mxu0 %v5218
    %v5895 = vpop.f32.mrf.mxu0
    %v5896 = vadd.f32 %v5883, %v5895
    %v5897 = vpop.f32.mrf.mxu0
    %5898 = vdwg.mxu0
    %5899 = vmatpush.bf16.msra.mxu0 %v3854
    %5900 = vmatpush.bf16.msra.mxu0 %v3811
    %5901 = vmatpush.bf16.msra.mxu0 %v3768
    %5902 = vmatpush.bf16.msra.mxu0 %v3725
    %5903 = vmatpush.bf16.msra.mxu0 %v3682
    %5904 = vmatpush.bf16.msra.mxu0 %v3639
    %5905 = vmatpush.bf16.msra.mxu0 %v3596
    %5906 = vmatpush.bf16.msra.mxu0 %v3553
    %5907 = vmatmul.bf16.gmra.mxu0 %v934
    %v5908 = vpop.f32.mrf.mxu0
    %v5909 = vadd.f32 0.0, %v5908
    %v5910 = vpop.f32.mrf.mxu0
    %5911 = vdwg.mxu0
    %5912 = vmatpush.bf16.msra.mxu0 %v4198
    %5913 = vmatpush.bf16.msra.mxu0 %v4155
    %5914 = vmatpush.bf16.msra.mxu0 %v4112
    %5915 = vmatpush.bf16.msra.mxu0 %v4069
    %5916 = vmatpush.bf16.msra.mxu0 %v4026
    %5917 = vmatpush.bf16.msra.mxu0 %v3983
    %5918 = vmatpush.bf16.msra.mxu0 %v3940
    %5919 = vmatpush.bf16.msra.mxu0 %v3897
    %5920 = vmatmul.bf16.gmra.mxu0 %v935
    %v5921 = vpop.f32.mrf.mxu0
    %v5922 = vadd.f32 %v5909, %v5921
    %v5923 = vpop.f32.mrf.mxu0
    %5924 = vdwg.mxu0
    %5925 = vmatpush.bf16.msra.mxu0 0
    %5926 = vmatpush.bf16.msra.mxu0 0
    %5927 = vmatpush.bf16.msra.mxu0 0
    %5928 = vmatpush.bf16.msra.mxu0 0
    %5929 = vmatpush.bf16.msra.mxu0 %v5267
    %5930 = vmatpush.bf16.msra.mxu0 %v4327
    %5931 = vmatpush.bf16.msra.mxu0 %v4284
    %5932 = vmatpush.bf16.msra.mxu0 %v4241
    %5933 = vmatmul.bf16.gmra.mxu0 %v5218
    %v5934 = vpop.f32.mrf.mxu0
    %v5935 = vadd.f32 %v5922, %v5934
    %v5936 = vpop.f32.mrf.mxu0
    %5937 = vdwg.mxu0
    %5938 = vmatpush.bf16.msra.mxu0 %v3855
    %5939 = vmatpush.bf16.msra.mxu0 %v3812
    %5940 = vmatpush.bf16.msra.mxu0 %v3769
    %5941 = vmatpush.bf16.msra.mxu0 %v3726
    %5942 = vmatpush.bf16.msra.mxu0 %v3683
    %5943 = vmatpush.bf16.msra.mxu0 %v3640
    %5944 = vmatpush.bf16.msra.mxu0 %v3597
    %5945 = vmatpush.bf16.msra.mxu0 %v3554
    %5946 = vmatmul.bf16.gmra.mxu0 %v934
    %v5947 = vpop.f32.mrf.mxu0
    %v5948 = vadd.f32 0.0, %v5947
    %v5949 = vpop.f32.mrf.mxu0
    %5950 = vdwg.mxu0
    %5951 = vmatpush.bf16.msra.mxu0 %v4199
    %5952 = vmatpush.bf16.msra.mxu0 %v4156
    %5953 = vmatpush.bf16.msra.mxu0 %v4113
    %5954 = vmatpush.bf16.msra.mxu0 %v4070
    %5955 = vmatpush.bf16.msra.mxu0 %v4027
    %5956 = vmatpush.bf16.msra.mxu0 %v3984
    %5957 = vmatpush.bf16.msra.mxu0 %v3941
    %5958 = vmatpush.bf16.msra.mxu0 %v3898
    %5959 = vmatmul.bf16.gmra.mxu0 %v935
    %v5960 = vpop.f32.mrf.mxu0
    %v5961 = vadd.f32 %v5948, %v5960
    %v5962 = vpop.f32.mrf.mxu0
    %5963 = vdwg.mxu0
    %5964 = vmatpush.bf16.msra.mxu0 0
    %5965 = vmatpush.bf16.msra.mxu0 0
    %5966 = vmatpush.bf16.msra.mxu0 0
    %5967 = vmatpush.bf16.msra.mxu0 0
    %5968 = vmatpush.bf16.msra.mxu0 %v5270
    %5969 = vmatpush.bf16.msra.mxu0 %v4328
    %5970 = vmatpush.bf16.msra.mxu0 %v4285
    %5971 = vmatpush.bf16.msra.mxu0 %v4242
    %5972 = vmatmul.bf16.gmra.mxu0 %v5218
    %v5973 = vpop.f32.mrf.mxu0
    %v5974 = vadd.f32 %v5961, %v5973
    %v5975 = vpop.f32.mrf.mxu0
    %5976 = vdwg.mxu0
    %5977 = vmatpush.bf16.msra.mxu0 %v3856
    %5978 = vmatpush.bf16.msra.mxu0 %v3813
    %5979 = vmatpush.bf16.msra.mxu0 %v3770
    %5980 = vmatpush.bf16.msra.mxu0 %v3727
    %5981 = vmatpush.bf16.msra.mxu0 %v3684
    %5982 = vmatpush.bf16.msra.mxu0 %v3641
    %5983 = vmatpush.bf16.msra.mxu0 %v3598
    %5984 = vmatpush.bf16.msra.mxu0 %v3555
    %5985 = vmatmul.bf16.gmra.mxu0 %v934
    %v5986 = vpop.f32.mrf.mxu0
    %v5987 = vadd.f32 0.0, %v5986
    %v5988 = vpop.f32.mrf.mxu0
    %5989 = vdwg.mxu0
    %5990 = vmatpush.bf16.msra.mxu0 %v4200
    %5991 = vmatpush.bf16.msra.mxu0 %v4157
    %5992 = vmatpush.bf16.msra.mxu0 %v4114
    %5993 = vmatpush.bf16.msra.mxu0 %v4071
    %5994 = vmatpush.bf16.msra.mxu0 %v4028
    %5995 = vmatpush.bf16.msra.mxu0 %v3985
    %5996 = vmatpush.bf16.msra.mxu0 %v3942
    %5997 = vmatpush.bf16.msra.mxu0 %v3899
    %5998 = vmatmul.bf16.gmra.mxu0 %v935
    %v5999 = vpop.f32.mrf.mxu0
    %v6000 = vadd.f32 %v5987, %v5999
    %v6001 = vpop.f32.mrf.mxu0
    %6002 = vdwg.mxu0
    %6003 = vmatpush.bf16.msra.mxu0 0
    %6004 = vmatpush.bf16.msra.mxu0 0
    %6005 = vmatpush.bf16.msra.mxu0 0
    %6006 = vmatpush.bf16.msra.mxu0 0
    %6007 = vmatpush.bf16.msra.mxu0 %v5273
    %6008 = vmatpush.bf16.msra.mxu0 %v4329
    %6009 = vmatpush.bf16.msra.mxu0 %v4286
    %6010 = vmatpush.bf16.msra.mxu0 %v4243
    %6011 = vmatmul.bf16.gmra.mxu0 %v5218
    %v6012 = vpop.f32.mrf.mxu0
    %v6013 = vadd.f32 %v6000, %v6012
    %v6014 = vpop.f32.mrf.mxu0
    %6015 = vdwg.mxu0
    %6016 = vmatpush.bf16.msra.mxu0 %v3857
    %6017 = vmatpush.bf16.msra.mxu0 %v3814
    %6018 = vmatpush.bf16.msra.mxu0 %v3771
    %6019 = vmatpush.bf16.msra.mxu0 %v3728
    %6020 = vmatpush.bf16.msra.mxu0 %v3685
    %6021 = vmatpush.bf16.msra.mxu0 %v3642
    %6022 = vmatpush.bf16.msra.mxu0 %v3599
    %6023 = vmatpush.bf16.msra.mxu0 %v3556
    %6024 = vmatmul.bf16.gmra.mxu0 %v934
    %v6025 = vpop.f32.mrf.mxu0
    %v6026 = vadd.f32 0.0, %v6025
    %v6027 = vpop.f32.mrf.mxu0
    %6028 = vdwg.mxu0
    %6029 = vmatpush.bf16.msra.mxu0 %v4201
    %6030 = vmatpush.bf16.msra.mxu0 %v4158
    %6031 = vmatpush.bf16.msra.mxu0 %v4115
    %6032 = vmatpush.bf16.msra.mxu0 %v4072
    %6033 = vmatpush.bf16.msra.mxu0 %v4029
    %6034 = vmatpush.bf16.msra.mxu0 %v3986
    %6035 = vmatpush.bf16.msra.mxu0 %v3943
    %6036 = vmatpush.bf16.msra.mxu0 %v3900
    %6037 = vmatmul.bf16.gmra.mxu0 %v935
    %v6038 = vpop.f32.mrf.mxu0
    %v6039 = vadd.f32 %v6026, %v6038
    %v6040 = vpop.f32.mrf.mxu0
    %6041 = vdwg.mxu0
    %6042 = vmatpush.bf16.msra.mxu0 0
    %6043 = vmatpush.bf16.msra.mxu0 0
    %6044 = vmatpush.bf16.msra.mxu0 0
    %6045 = vmatpush.bf16.msra.mxu0 0
    %6046 = vmatpush.bf16.msra.mxu0 %v5276
    %6047 = vmatpush.bf16.msra.mxu0 %v4330
    %6048 = vmatpush.bf16.msra.mxu0 %v4287
    %6049 = vmatpush.bf16.msra.mxu0 %v4244
    %6050 = vmatmul.bf16.gmra.mxu0 %v5218
    %v6051 = vpop.f32.mrf.mxu0
    %v6052 = vadd.f32 %v6039, %v6051
    %v6053 = vpop.f32.mrf.mxu0
    %6054 = vdwg.mxu0
    %6055 = vmatpush.bf16.msra.mxu0 %v3858
    %6056 = vmatpush.bf16.msra.mxu0 %v3815
    %6057 = vmatpush.bf16.msra.mxu0 %v3772
    %6058 = vmatpush.bf16.msra.mxu0 %v3729
    %6059 = vmatpush.bf16.msra.mxu0 %v3686
    %6060 = vmatpush.bf16.msra.mxu0 %v3643
    %6061 = vmatpush.bf16.msra.mxu0 %v3600
    %6062 = vmatpush.bf16.msra.mxu0 %v3557
    %6063 = vmatmul.bf16.gmra.mxu0 %v934
    %v6064 = vpop.f32.mrf.mxu0
    %v6065 = vadd.f32 0.0, %v6064
    %v6066 = vpop.f32.mrf.mxu0
    %6067 = vdwg.mxu0
    %6068 = vmatpush.bf16.msra.mxu0 %v4202
    %6069 = vmatpush.bf16.msra.mxu0 %v4159
    %6070 = vmatpush.bf16.msra.mxu0 %v4116
    %6071 = vmatpush.bf16.msra.mxu0 %v4073
    %6072 = vmatpush.bf16.msra.mxu0 %v4030
    %6073 = vmatpush.bf16.msra.mxu0 %v3987
    %6074 = vmatpush.bf16.msra.mxu0 %v3944
    %6075 = vmatpush.bf16.msra.mxu0 %v3901
    %6076 = vmatmul.bf16.gmra.mxu0 %v935
    %v6077 = vpop.f32.mrf.mxu0
    %v6078 = vadd.f32 %v6065, %v6077
    %v6079 = vpop.f32.mrf.mxu0
    %6080 = vdwg.mxu0
    %6081 = vmatpush.bf16.msra.mxu0 0
    %6082 = vmatpush.bf16.msra.mxu0 0
    %6083 = vmatpush.bf16.msra.mxu0 0
    %6084 = vmatpush.bf16.msra.mxu0 0
    %6085 = vmatpush.bf16.msra.mxu0 %v5279
    %6086 = vmatpush.bf16.msra.mxu0 %v4331
    %6087 = vmatpush.bf16.msra.mxu0 %v4288
    %6088 = vmatpush.bf16.msra.mxu0 %v4245
    %6089 = vmatmul.bf16.gmra.mxu0 %v5218
    %v6090 = vpop.f32.mrf.mxu0
    %v6091 = vadd.f32 %v6078, %v6090
    %v6092 = vpop.f32.mrf.mxu0
    %6093 = vdwg.mxu0
    %6094 = vmatpush.bf16.msra.mxu0 %v3859
    %6095 = vmatpush.bf16.msra.mxu0 %v3816
    %6096 = vmatpush.bf16.msra.mxu0 %v3773
    %6097 = vmatpush.bf16.msra.mxu0 %v3730
    %6098 = vmatpush.bf16.msra.mxu0 %v3687
    %6099 = vmatpush.bf16.msra.mxu0 %v3644
    %6100 = vmatpush.bf16.msra.mxu0 %v3601
    %6101 = vmatpush.bf16.msra.mxu0 %v3558
    %6102 = vmatmul.bf16.gmra.mxu0 %v934
    %v6103 = vpop.f32.mrf.mxu0
    %v6104 = vadd.f32 0.0, %v6103
    %v6105 = vpop.f32.mrf.mxu0
    %6106 = vdwg.mxu0
    %6107 = vmatpush.bf16.msra.mxu0 %v4203
    %6108 = vmatpush.bf16.msra.mxu0 %v4160
    %6109 = vmatpush.bf16.msra.mxu0 %v4117
    %6110 = vmatpush.bf16.msra.mxu0 %v4074
    %6111 = vmatpush.bf16.msra.mxu0 %v4031
    %6112 = vmatpush.bf16.msra.mxu0 %v3988
    %6113 = vmatpush.bf16.msra.mxu0 %v3945
    %6114 = vmatpush.bf16.msra.mxu0 %v3902
    %6115 = vmatmul.bf16.gmra.mxu0 %v935
    %v6116 = vpop.f32.mrf.mxu0
    %v6117 = vadd.f32 %v6104, %v6116
    %v6118 = vpop.f32.mrf.mxu0
    %6119 = vdwg.mxu0
    %6120 = vmatpush.bf16.msra.mxu0 0
    %6121 = vmatpush.bf16.msra.mxu0 0
    %6122 = vmatpush.bf16.msra.mxu0 0
    %6123 = vmatpush.bf16.msra.mxu0 0
    %6124 = vmatpush.bf16.msra.mxu0 %v5282
    %6125 = vmatpush.bf16.msra.mxu0 %v4332
    %6126 = vmatpush.bf16.msra.mxu0 %v4289
    %6127 = vmatpush.bf16.msra.mxu0 %v4246
    %6128 = vmatmul.bf16.gmra.mxu0 %v5218
    %v6129 = vpop.f32.mrf.mxu0
    %v6130 = vadd.f32 %v6117, %v6129
    %v6131 = vpop.f32.mrf.mxu0
    %6132 = vdwg.mxu0
    %6133 = vmatpush.bf16.msra.mxu0 %v3860
    %6134 = vmatpush.bf16.msra.mxu0 %v3817
    %6135 = vmatpush.bf16.msra.mxu0 %v3774
    %6136 = vmatpush.bf16.msra.mxu0 %v3731
    %6137 = vmatpush.bf16.msra.mxu0 %v3688
    %6138 = vmatpush.bf16.msra.mxu0 %v3645
    %6139 = vmatpush.bf16.msra.mxu0 %v3602
    %6140 = vmatpush.bf16.msra.mxu0 %v3559
    %6141 = vmatmul.bf16.gmra.mxu0 %v934
    %v6142 = vpop.f32.mrf.mxu0
    %v6143 = vadd.f32 0.0, %v6142
    %v6144 = vpop.f32.mrf.mxu0
    %6145 = vdwg.mxu0
    %6146 = vmatpush.bf16.msra.mxu0 %v4204
    %6147 = vmatpush.bf16.msra.mxu0 %v4161
    %6148 = vmatpush.bf16.msra.mxu0 %v4118
    %6149 = vmatpush.bf16.msra.mxu0 %v4075
    %6150 = vmatpush.bf16.msra.mxu0 %v4032
    %6151 = vmatpush.bf16.msra.mxu0 %v3989
    %6152 = vmatpush.bf16.msra.mxu0 %v3946
    %6153 = vmatpush.bf16.msra.mxu0 %v3903
    %6154 = vmatmul.bf16.gmra.mxu0 %v935
    %v6155 = vpop.f32.mrf.mxu0
    %v6156 = vadd.f32 %v6143, %v6155
    %v6157 = vpop.f32.mrf.mxu0
    %6158 = vdwg.mxu0
    %6159 = vmatpush.bf16.msra.mxu0 0
    %6160 = vmatpush.bf16.msra.mxu0 0
    %6161 = vmatpush.bf16.msra.mxu0 0
    %6162 = vmatpush.bf16.msra.mxu0 0
    %6163 = vmatpush.bf16.msra.mxu0 %v5285
    %6164 = vmatpush.bf16.msra.mxu0 %v4333
    %6165 = vmatpush.bf16.msra.mxu0 %v4290
    %6166 = vmatpush.bf16.msra.mxu0 %v4247
    %6167 = vmatmul.bf16.gmra.mxu0 %v5218
    %v6168 = vpop.f32.mrf.mxu0
    %v6169 = vadd.f32 %v6156, %v6168
    %v6170 = vpop.f32.mrf.mxu0
    %6171 = vdwg.mxu0
    %6172 = vmatpush.bf16.msra.mxu0 %v3861
    %6173 = vmatpush.bf16.msra.mxu0 %v3818
    %6174 = vmatpush.bf16.msra.mxu0 %v3775
    %6175 = vmatpush.bf16.msra.mxu0 %v3732
    %6176 = vmatpush.bf16.msra.mxu0 %v3689
    %6177 = vmatpush.bf16.msra.mxu0 %v3646
    %6178 = vmatpush.bf16.msra.mxu0 %v3603
    %6179 = vmatpush.bf16.msra.mxu0 %v3560
    %6180 = vmatmul.bf16.gmra.mxu0 %v934
    %v6181 = vpop.f32.mrf.mxu0
    %v6182 = vadd.f32 0.0, %v6181
    %v6183 = vpop.f32.mrf.mxu0
    %6184 = vdwg.mxu0
    %6185 = vmatpush.bf16.msra.mxu0 %v4205
    %6186 = vmatpush.bf16.msra.mxu0 %v4162
    %6187 = vmatpush.bf16.msra.mxu0 %v4119
    %6188 = vmatpush.bf16.msra.mxu0 %v4076
    %6189 = vmatpush.bf16.msra.mxu0 %v4033
    %6190 = vmatpush.bf16.msra.mxu0 %v3990
    %6191 = vmatpush.bf16.msra.mxu0 %v3947
    %6192 = vmatpush.bf16.msra.mxu0 %v3904
    %6193 = vmatmul.bf16.gmra.mxu0 %v935
    %v6194 = vpop.f32.mrf.mxu0
    %v6195 = vadd.f32 %v6182, %v6194
    %v6196 = vpop.f32.mrf.mxu0
    %6197 = vdwg.mxu0
    %6198 = vmatpush.bf16.msra.mxu0 0
    %6199 = vmatpush.bf16.msra.mxu0 0
    %6200 = vmatpush.bf16.msra.mxu0 0
    %6201 = vmatpush.bf16.msra.mxu0 0
    %6202 = vmatpush.bf16.msra.mxu0 %v5288
    %6203 = vmatpush.bf16.msra.mxu0 %v4334
    %6204 = vmatpush.bf16.msra.mxu0 %v4291
    %6205 = vmatpush.bf16.msra.mxu0 %v4248
    %6206 = vmatmul.bf16.gmra.mxu0 %v5218
    %v6207 = vpop.f32.mrf.mxu0
    %v6208 = vadd.f32 %v6195, %v6207
    %v6209 = vpop.f32.mrf.mxu0
    %6210 = vdwg.mxu0
    %6211 = vmatpush.bf16.msra.mxu0 %v3862
    %6212 = vmatpush.bf16.msra.mxu0 %v3819
    %6213 = vmatpush.bf16.msra.mxu0 %v3776
    %6214 = vmatpush.bf16.msra.mxu0 %v3733
    %6215 = vmatpush.bf16.msra.mxu0 %v3690
    %6216 = vmatpush.bf16.msra.mxu0 %v3647
    %6217 = vmatpush.bf16.msra.mxu0 %v3604
    %6218 = vmatpush.bf16.msra.mxu0 %v3561
    %6219 = vmatmul.bf16.gmra.mxu0 %v934
    %v6220 = vpop.f32.mrf.mxu0
    %v6221 = vadd.f32 0.0, %v6220
    %v6222 = vpop.f32.mrf.mxu0
    %6223 = vdwg.mxu0
    %6224 = vmatpush.bf16.msra.mxu0 %v4206
    %6225 = vmatpush.bf16.msra.mxu0 %v4163
    %6226 = vmatpush.bf16.msra.mxu0 %v4120
    %6227 = vmatpush.bf16.msra.mxu0 %v4077
    %6228 = vmatpush.bf16.msra.mxu0 %v4034
    %6229 = vmatpush.bf16.msra.mxu0 %v3991
    %6230 = vmatpush.bf16.msra.mxu0 %v3948
    %6231 = vmatpush.bf16.msra.mxu0 %v3905
    %6232 = vmatmul.bf16.gmra.mxu0 %v935
    %v6233 = vpop.f32.mrf.mxu0
    %v6234 = vadd.f32 %v6221, %v6233
    %v6235 = vpop.f32.mrf.mxu0
    %6236 = vdwg.mxu0
    %6237 = vmatpush.bf16.msra.mxu0 0
    %6238 = vmatpush.bf16.msra.mxu0 0
    %6239 = vmatpush.bf16.msra.mxu0 0
    %6240 = vmatpush.bf16.msra.mxu0 0
    %6241 = vmatpush.bf16.msra.mxu0 %v5291
    %6242 = vmatpush.bf16.msra.mxu0 %v4335
    %6243 = vmatpush.bf16.msra.mxu0 %v4292
    %6244 = vmatpush.bf16.msra.mxu0 %v4249
    %6245 = vmatmul.bf16.gmra.mxu0 %v5218
    %v6246 = vpop.f32.mrf.mxu0
    %v6247 = vadd.f32 %v6234, %v6246
    %v6248 = vpop.f32.mrf.mxu0
    %6249 = vdwg.mxu0
    %6250 = vmatpush.bf16.msra.mxu0 %v3863
    %6251 = vmatpush.bf16.msra.mxu0 %v3820
    %6252 = vmatpush.bf16.msra.mxu0 %v3777
    %6253 = vmatpush.bf16.msra.mxu0 %v3734
    %6254 = vmatpush.bf16.msra.mxu0 %v3691
    %6255 = vmatpush.bf16.msra.mxu0 %v3648
    %6256 = vmatpush.bf16.msra.mxu0 %v3605
    %6257 = vmatpush.bf16.msra.mxu0 %v3562
    %6258 = vmatmul.bf16.gmra.mxu0 %v934
    %v6259 = vpop.f32.mrf.mxu0
    %v6260 = vadd.f32 0.0, %v6259
    %v6261 = vpop.f32.mrf.mxu0
    %6262 = vdwg.mxu0
    %6263 = vmatpush.bf16.msra.mxu0 %v4207
    %6264 = vmatpush.bf16.msra.mxu0 %v4164
    %6265 = vmatpush.bf16.msra.mxu0 %v4121
    %6266 = vmatpush.bf16.msra.mxu0 %v4078
    %6267 = vmatpush.bf16.msra.mxu0 %v4035
    %6268 = vmatpush.bf16.msra.mxu0 %v3992
    %6269 = vmatpush.bf16.msra.mxu0 %v3949
    %6270 = vmatpush.bf16.msra.mxu0 %v3906
    %6271 = vmatmul.bf16.gmra.mxu0 %v935
    %v6272 = vpop.f32.mrf.mxu0
    %v6273 = vadd.f32 %v6260, %v6272
    %v6274 = vpop.f32.mrf.mxu0
    %6275 = vdwg.mxu0
    %6276 = vmatpush.bf16.msra.mxu0 0
    %6277 = vmatpush.bf16.msra.mxu0 0
    %6278 = vmatpush.bf16.msra.mxu0 0
    %6279 = vmatpush.bf16.msra.mxu0 0
    %6280 = vmatpush.bf16.msra.mxu0 %v5294
    %6281 = vmatpush.bf16.msra.mxu0 %v4336
    %6282 = vmatpush.bf16.msra.mxu0 %v4293
    %6283 = vmatpush.bf16.msra.mxu0 %v4250
    %6284 = vmatmul.bf16.gmra.mxu0 %v5218
    %v6285 = vpop.f32.mrf.mxu0
    %v6286 = vadd.f32 %v6273, %v6285
    %v6287 = vpop.f32.mrf.mxu0
    %6288 = vdwg.mxu0
    %6289 = vmatpush.bf16.msra.mxu0 %v3864
    %6290 = vmatpush.bf16.msra.mxu0 %v3821
    %6291 = vmatpush.bf16.msra.mxu0 %v3778
    %6292 = vmatpush.bf16.msra.mxu0 %v3735
    %6293 = vmatpush.bf16.msra.mxu0 %v3692
    %6294 = vmatpush.bf16.msra.mxu0 %v3649
    %6295 = vmatpush.bf16.msra.mxu0 %v3606
    %6296 = vmatpush.bf16.msra.mxu0 %v3563
    %6297 = vmatmul.bf16.gmra.mxu0 %v934
    %v6298 = vpop.f32.mrf.mxu0
    %v6299 = vadd.f32 0.0, %v6298
    %v6300 = vpop.f32.mrf.mxu0
    %6301 = vdwg.mxu0
    %6302 = vmatpush.bf16.msra.mxu0 %v4208
    %6303 = vmatpush.bf16.msra.mxu0 %v4165
    %6304 = vmatpush.bf16.msra.mxu0 %v4122
    %6305 = vmatpush.bf16.msra.mxu0 %v4079
    %6306 = vmatpush.bf16.msra.mxu0 %v4036
    %6307 = vmatpush.bf16.msra.mxu0 %v3993
    %6308 = vmatpush.bf16.msra.mxu0 %v3950
    %6309 = vmatpush.bf16.msra.mxu0 %v3907
    %6310 = vmatmul.bf16.gmra.mxu0 %v935
    %v6311 = vpop.f32.mrf.mxu0
    %v6312 = vadd.f32 %v6299, %v6311
    %v6313 = vpop.f32.mrf.mxu0
    %6314 = vdwg.mxu0
    %6315 = vmatpush.bf16.msra.mxu0 0
    %6316 = vmatpush.bf16.msra.mxu0 0
    %6317 = vmatpush.bf16.msra.mxu0 0
    %6318 = vmatpush.bf16.msra.mxu0 0
    %6319 = vmatpush.bf16.msra.mxu0 %v5297
    %6320 = vmatpush.bf16.msra.mxu0 %v4337
    %6321 = vmatpush.bf16.msra.mxu0 %v4294
    %6322 = vmatpush.bf16.msra.mxu0 %v4251
    %6323 = vmatmul.bf16.gmra.mxu0 %v5218
    %v6324 = vpop.f32.mrf.mxu0
    %v6325 = vadd.f32 %v6312, %v6324
    %v6326 = vpop.f32.mrf.mxu0
    %6327 = vdwg.mxu0
    %6328 = vmatpush.bf16.msra.mxu0 %v3865
    %6329 = vmatpush.bf16.msra.mxu0 %v3822
    %6330 = vmatpush.bf16.msra.mxu0 %v3779
    %6331 = vmatpush.bf16.msra.mxu0 %v3736
    %6332 = vmatpush.bf16.msra.mxu0 %v3693
    %6333 = vmatpush.bf16.msra.mxu0 %v3650
    %6334 = vmatpush.bf16.msra.mxu0 %v3607
    %6335 = vmatpush.bf16.msra.mxu0 %v3564
    %6336 = vmatmul.bf16.gmra.mxu0 %v934
    %v6337 = vpop.f32.mrf.mxu0
    %v6338 = vadd.f32 0.0, %v6337
    %v6339 = vpop.f32.mrf.mxu0
    %6340 = vdwg.mxu0
    %6341 = vmatpush.bf16.msra.mxu0 %v4209
    %6342 = vmatpush.bf16.msra.mxu0 %v4166
    %6343 = vmatpush.bf16.msra.mxu0 %v4123
    %6344 = vmatpush.bf16.msra.mxu0 %v4080
    %6345 = vmatpush.bf16.msra.mxu0 %v4037
    %6346 = vmatpush.bf16.msra.mxu0 %v3994
    %6347 = vmatpush.bf16.msra.mxu0 %v3951
    %6348 = vmatpush.bf16.msra.mxu0 %v3908
    %6349 = vmatmul.bf16.gmra.mxu0 %v935
    %v6350 = vpop.f32.mrf.mxu0
    %v6351 = vadd.f32 %v6338, %v6350
    %v6352 = vpop.f32.mrf.mxu0
    %6353 = vdwg.mxu0
    %6354 = vmatpush.bf16.msra.mxu0 0
    %6355 = vmatpush.bf16.msra.mxu0 0
    %6356 = vmatpush.bf16.msra.mxu0 0
    %6357 = vmatpush.bf16.msra.mxu0 0
    %6358 = vmatpush.bf16.msra.mxu0 %v5300
    %6359 = vmatpush.bf16.msra.mxu0 %v4338
    %6360 = vmatpush.bf16.msra.mxu0 %v4295
    %6361 = vmatpush.bf16.msra.mxu0 %v4252
    %6362 = vmatmul.bf16.gmra.mxu0 %v5218
    %v6363 = vpop.f32.mrf.mxu0
    %v6364 = vadd.f32 %v6351, %v6363
    %v6365 = vpop.f32.mrf.mxu0
    %6366 = vdwg.mxu0
    %6367 = vmatpush.bf16.msra.mxu0 %v3866
    %6368 = vmatpush.bf16.msra.mxu0 %v3823
    %6369 = vmatpush.bf16.msra.mxu0 %v3780
    %6370 = vmatpush.bf16.msra.mxu0 %v3737
    %6371 = vmatpush.bf16.msra.mxu0 %v3694
    %6372 = vmatpush.bf16.msra.mxu0 %v3651
    %6373 = vmatpush.bf16.msra.mxu0 %v3608
    %6374 = vmatpush.bf16.msra.mxu0 %v3565
    %6375 = vmatmul.bf16.gmra.mxu0 %v934
    %v6376 = vpop.f32.mrf.mxu0
    %v6377 = vadd.f32 0.0, %v6376
    %v6378 = vpop.f32.mrf.mxu0
    %6379 = vdwg.mxu0
    %6380 = vmatpush.bf16.msra.mxu0 %v4210
    %6381 = vmatpush.bf16.msra.mxu0 %v4167
    %6382 = vmatpush.bf16.msra.mxu0 %v4124
    %6383 = vmatpush.bf16.msra.mxu0 %v4081
    %6384 = vmatpush.bf16.msra.mxu0 %v4038
    %6385 = vmatpush.bf16.msra.mxu0 %v3995
    %6386 = vmatpush.bf16.msra.mxu0 %v3952
    %6387 = vmatpush.bf16.msra.mxu0 %v3909
    %6388 = vmatmul.bf16.gmra.mxu0 %v935
    %v6389 = vpop.f32.mrf.mxu0
    %v6390 = vadd.f32 %v6377, %v6389
    %v6391 = vpop.f32.mrf.mxu0
    %6392 = vdwg.mxu0
    %6393 = vmatpush.bf16.msra.mxu0 0
    %6394 = vmatpush.bf16.msra.mxu0 0
    %6395 = vmatpush.bf16.msra.mxu0 0
    %6396 = vmatpush.bf16.msra.mxu0 0
    %6397 = vmatpush.bf16.msra.mxu0 %v5303
    %6398 = vmatpush.bf16.msra.mxu0 %v4339
    %6399 = vmatpush.bf16.msra.mxu0 %v4296
    %6400 = vmatpush.bf16.msra.mxu0 %v4253
    %6401 = vmatmul.bf16.gmra.mxu0 %v5218
    %v6402 = vpop.f32.mrf.mxu0
    %v6403 = vadd.f32 %v6390, %v6402
    %v6404 = vpop.f32.mrf.mxu0
    %6405 = vdwg.mxu0
    %6406 = vmatpush.bf16.msra.mxu0 %v3867
    %6407 = vmatpush.bf16.msra.mxu0 %v3824
    %6408 = vmatpush.bf16.msra.mxu0 %v3781
    %6409 = vmatpush.bf16.msra.mxu0 %v3738
    %6410 = vmatpush.bf16.msra.mxu0 %v3695
    %6411 = vmatpush.bf16.msra.mxu0 %v3652
    %6412 = vmatpush.bf16.msra.mxu0 %v3609
    %6413 = vmatpush.bf16.msra.mxu0 %v3566
    %6414 = vmatmul.bf16.gmra.mxu0 %v934
    %v6415 = vpop.f32.mrf.mxu0
    %v6416 = vadd.f32 0.0, %v6415
    %v6417 = vpop.f32.mrf.mxu0
    %6418 = vdwg.mxu0
    %6419 = vmatpush.bf16.msra.mxu0 %v4211
    %6420 = vmatpush.bf16.msra.mxu0 %v4168
    %6421 = vmatpush.bf16.msra.mxu0 %v4125
    %6422 = vmatpush.bf16.msra.mxu0 %v4082
    %6423 = vmatpush.bf16.msra.mxu0 %v4039
    %6424 = vmatpush.bf16.msra.mxu0 %v3996
    %6425 = vmatpush.bf16.msra.mxu0 %v3953
    %6426 = vmatpush.bf16.msra.mxu0 %v3910
    %6427 = vmatmul.bf16.gmra.mxu0 %v935
    %v6428 = vpop.f32.mrf.mxu0
    %v6429 = vadd.f32 %v6416, %v6428
    %v6430 = vpop.f32.mrf.mxu0
    %6431 = vdwg.mxu0
    %6432 = vmatpush.bf16.msra.mxu0 0
    %6433 = vmatpush.bf16.msra.mxu0 0
    %6434 = vmatpush.bf16.msra.mxu0 0
    %6435 = vmatpush.bf16.msra.mxu0 0
    %6436 = vmatpush.bf16.msra.mxu0 %v5306
    %6437 = vmatpush.bf16.msra.mxu0 %v4340
    %6438 = vmatpush.bf16.msra.mxu0 %v4297
    %6439 = vmatpush.bf16.msra.mxu0 %v4254
    %6440 = vmatmul.bf16.gmra.mxu0 %v5218
    %v6441 = vpop.f32.mrf.mxu0
    %v6442 = vadd.f32 %v6429, %v6441
    %v6443 = vpop.f32.mrf.mxu0
    %6444 = vdwg.mxu0
    %6445 = vmatpush.bf16.msra.mxu0 %v3868
    %6446 = vmatpush.bf16.msra.mxu0 %v3825
    %6447 = vmatpush.bf16.msra.mxu0 %v3782
    %6448 = vmatpush.bf16.msra.mxu0 %v3739
    %6449 = vmatpush.bf16.msra.mxu0 %v3696
    %6450 = vmatpush.bf16.msra.mxu0 %v3653
    %6451 = vmatpush.bf16.msra.mxu0 %v3610
    %6452 = vmatpush.bf16.msra.mxu0 %v3567
    %6453 = vmatmul.bf16.gmra.mxu0 %v934
    %v6454 = vpop.f32.mrf.mxu0
    %v6455 = vadd.f32 0.0, %v6454
    %v6456 = vpop.f32.mrf.mxu0
    %6457 = vdwg.mxu0
    %6458 = vmatpush.bf16.msra.mxu0 %v4212
    %6459 = vmatpush.bf16.msra.mxu0 %v4169
    %6460 = vmatpush.bf16.msra.mxu0 %v4126
    %6461 = vmatpush.bf16.msra.mxu0 %v4083
    %6462 = vmatpush.bf16.msra.mxu0 %v4040
    %6463 = vmatpush.bf16.msra.mxu0 %v3997
    %6464 = vmatpush.bf16.msra.mxu0 %v3954
    %6465 = vmatpush.bf16.msra.mxu0 %v3911
    %6466 = vmatmul.bf16.gmra.mxu0 %v935
    %v6467 = vpop.f32.mrf.mxu0
    %v6468 = vadd.f32 %v6455, %v6467
    %v6469 = vpop.f32.mrf.mxu0
    %6470 = vdwg.mxu0
    %6471 = vmatpush.bf16.msra.mxu0 0
    %6472 = vmatpush.bf16.msra.mxu0 0
    %6473 = vmatpush.bf16.msra.mxu0 0
    %6474 = vmatpush.bf16.msra.mxu0 0
    %6475 = vmatpush.bf16.msra.mxu0 %v5309
    %6476 = vmatpush.bf16.msra.mxu0 %v4341
    %6477 = vmatpush.bf16.msra.mxu0 %v4298
    %6478 = vmatpush.bf16.msra.mxu0 %v4255
    %6479 = vmatmul.bf16.gmra.mxu0 %v5218
    %v6480 = vpop.f32.mrf.mxu0
    %v6481 = vadd.f32 %v6468, %v6480
    %v6482 = vpop.f32.mrf.mxu0
    %6483 = vdwg.mxu0
    %6484 = vmatpush.bf16.msra.mxu0 %v3869
    %6485 = vmatpush.bf16.msra.mxu0 %v3826
    %6486 = vmatpush.bf16.msra.mxu0 %v3783
    %6487 = vmatpush.bf16.msra.mxu0 %v3740
    %6488 = vmatpush.bf16.msra.mxu0 %v3697
    %6489 = vmatpush.bf16.msra.mxu0 %v3654
    %6490 = vmatpush.bf16.msra.mxu0 %v3611
    %6491 = vmatpush.bf16.msra.mxu0 %v3568
    %6492 = vmatmul.bf16.gmra.mxu0 %v934
    %v6493 = vpop.f32.mrf.mxu0
    %v6494 = vadd.f32 0.0, %v6493
    %v6495 = vpop.f32.mrf.mxu0
    %6496 = vdwg.mxu0
    %6497 = vmatpush.bf16.msra.mxu0 %v4213
    %6498 = vmatpush.bf16.msra.mxu0 %v4170
    %6499 = vmatpush.bf16.msra.mxu0 %v4127
    %6500 = vmatpush.bf16.msra.mxu0 %v4084
    %6501 = vmatpush.bf16.msra.mxu0 %v4041
    %6502 = vmatpush.bf16.msra.mxu0 %v3998
    %6503 = vmatpush.bf16.msra.mxu0 %v3955
    %6504 = vmatpush.bf16.msra.mxu0 %v3912
    %6505 = vmatmul.bf16.gmra.mxu0 %v935
    %v6506 = vpop.f32.mrf.mxu0
    %v6507 = vadd.f32 %v6494, %v6506
    %v6508 = vpop.f32.mrf.mxu0
    %6509 = vdwg.mxu0
    %6510 = vmatpush.bf16.msra.mxu0 0
    %6511 = vmatpush.bf16.msra.mxu0 0
    %6512 = vmatpush.bf16.msra.mxu0 0
    %6513 = vmatpush.bf16.msra.mxu0 0
    %6514 = vmatpush.bf16.msra.mxu0 %v5312
    %6515 = vmatpush.bf16.msra.mxu0 %v4342
    %6516 = vmatpush.bf16.msra.mxu0 %v4299
    %6517 = vmatpush.bf16.msra.mxu0 %v4256
    %6518 = vmatmul.bf16.gmra.mxu0 %v5218
    %v6519 = vpop.f32.mrf.mxu0
    %v6520 = vadd.f32 %v6507, %v6519
    %v6521 = vpop.f32.mrf.mxu0
    %6522 = vdwg.mxu0
    %6523 = vmatpush.bf16.msra.mxu0 %v3870
    %6524 = vmatpush.bf16.msra.mxu0 %v3827
    %6525 = vmatpush.bf16.msra.mxu0 %v3784
    %6526 = vmatpush.bf16.msra.mxu0 %v3741
    %6527 = vmatpush.bf16.msra.mxu0 %v3698
    %6528 = vmatpush.bf16.msra.mxu0 %v3655
    %6529 = vmatpush.bf16.msra.mxu0 %v3612
    %6530 = vmatpush.bf16.msra.mxu0 %v3569
    %6531 = vmatmul.bf16.gmra.mxu0 %v934
    %v6532 = vpop.f32.mrf.mxu0
    %v6533 = vadd.f32 0.0, %v6532
    %v6534 = vpop.f32.mrf.mxu0
    %6535 = vdwg.mxu0
    %6536 = vmatpush.bf16.msra.mxu0 %v4214
    %6537 = vmatpush.bf16.msra.mxu0 %v4171
    %6538 = vmatpush.bf16.msra.mxu0 %v4128
    %6539 = vmatpush.bf16.msra.mxu0 %v4085
    %6540 = vmatpush.bf16.msra.mxu0 %v4042
    %6541 = vmatpush.bf16.msra.mxu0 %v3999
    %6542 = vmatpush.bf16.msra.mxu0 %v3956
    %6543 = vmatpush.bf16.msra.mxu0 %v3913
    %6544 = vmatmul.bf16.gmra.mxu0 %v935
    %v6545 = vpop.f32.mrf.mxu0
    %v6546 = vadd.f32 %v6533, %v6545
    %v6547 = vpop.f32.mrf.mxu0
    %6548 = vdwg.mxu0
    %6549 = vmatpush.bf16.msra.mxu0 0
    %6550 = vmatpush.bf16.msra.mxu0 0
    %6551 = vmatpush.bf16.msra.mxu0 0
    %6552 = vmatpush.bf16.msra.mxu0 0
    %6553 = vmatpush.bf16.msra.mxu0 %v5315
    %6554 = vmatpush.bf16.msra.mxu0 %v4343
    %6555 = vmatpush.bf16.msra.mxu0 %v4300
    %6556 = vmatpush.bf16.msra.mxu0 %v4257
    %6557 = vmatmul.bf16.gmra.mxu0 %v5218
    %v6558 = vpop.f32.mrf.mxu0
    %v6559 = vadd.f32 %v6546, %v6558
    %v6560 = vpop.f32.mrf.mxu0
    %6561 = vdwg.mxu0
    %6562 = vmatpush.bf16.msra.mxu0 %v3871
    %6563 = vmatpush.bf16.msra.mxu0 %v3828
    %6564 = vmatpush.bf16.msra.mxu0 %v3785
    %6565 = vmatpush.bf16.msra.mxu0 %v3742
    %6566 = vmatpush.bf16.msra.mxu0 %v3699
    %6567 = vmatpush.bf16.msra.mxu0 %v3656
    %6568 = vmatpush.bf16.msra.mxu0 %v3613
    %6569 = vmatpush.bf16.msra.mxu0 %v3570
    %6570 = vmatmul.bf16.gmra.mxu0 %v934
    %v6571 = vpop.f32.mrf.mxu0
    %v6572 = vadd.f32 0.0, %v6571
    %v6573 = vpop.f32.mrf.mxu0
    %6574 = vdwg.mxu0
    %6575 = vmatpush.bf16.msra.mxu0 %v4215
    %6576 = vmatpush.bf16.msra.mxu0 %v4172
    %6577 = vmatpush.bf16.msra.mxu0 %v4129
    %6578 = vmatpush.bf16.msra.mxu0 %v4086
    %6579 = vmatpush.bf16.msra.mxu0 %v4043
    %6580 = vmatpush.bf16.msra.mxu0 %v4000
    %6581 = vmatpush.bf16.msra.mxu0 %v3957
    %6582 = vmatpush.bf16.msra.mxu0 %v3914
    %6583 = vmatmul.bf16.gmra.mxu0 %v935
    %v6584 = vpop.f32.mrf.mxu0
    %v6585 = vadd.f32 %v6572, %v6584
    %v6586 = vpop.f32.mrf.mxu0
    %6587 = vdwg.mxu0
    %6588 = vmatpush.bf16.msra.mxu0 0
    %6589 = vmatpush.bf16.msra.mxu0 0
    %6590 = vmatpush.bf16.msra.mxu0 0
    %6591 = vmatpush.bf16.msra.mxu0 0
    %6592 = vmatpush.bf16.msra.mxu0 %v5318
    %6593 = vmatpush.bf16.msra.mxu0 %v4344
    %6594 = vmatpush.bf16.msra.mxu0 %v4301
    %6595 = vmatpush.bf16.msra.mxu0 %v4258
    %6596 = vmatmul.bf16.gmra.mxu0 %v5218
    %v6597 = vpop.f32.mrf.mxu0
    %v6598 = vadd.f32 %v6585, %v6597
    %v6599 = vpop.f32.mrf.mxu0
    %6600 = vdwg.mxu0
    %6601 = vmatpush.bf16.msra.mxu0 %v3872
    %6602 = vmatpush.bf16.msra.mxu0 %v3829
    %6603 = vmatpush.bf16.msra.mxu0 %v3786
    %6604 = vmatpush.bf16.msra.mxu0 %v3743
    %6605 = vmatpush.bf16.msra.mxu0 %v3700
    %6606 = vmatpush.bf16.msra.mxu0 %v3657
    %6607 = vmatpush.bf16.msra.mxu0 %v3614
    %6608 = vmatpush.bf16.msra.mxu0 %v3571
    %6609 = vmatmul.bf16.gmra.mxu0 %v934
    %v6610 = vpop.f32.mrf.mxu0
    %v6611 = vadd.f32 0.0, %v6610
    %v6612 = vpop.f32.mrf.mxu0
    %6613 = vdwg.mxu0
    %6614 = vmatpush.bf16.msra.mxu0 %v4216
    %6615 = vmatpush.bf16.msra.mxu0 %v4173
    %6616 = vmatpush.bf16.msra.mxu0 %v4130
    %6617 = vmatpush.bf16.msra.mxu0 %v4087
    %6618 = vmatpush.bf16.msra.mxu0 %v4044
    %6619 = vmatpush.bf16.msra.mxu0 %v4001
    %6620 = vmatpush.bf16.msra.mxu0 %v3958
    %6621 = vmatpush.bf16.msra.mxu0 %v3915
    %6622 = vmatmul.bf16.gmra.mxu0 %v935
    %v6623 = vpop.f32.mrf.mxu0
    %v6624 = vadd.f32 %v6611, %v6623
    %v6625 = vpop.f32.mrf.mxu0
    %6626 = vdwg.mxu0
    %6627 = vmatpush.bf16.msra.mxu0 0
    %6628 = vmatpush.bf16.msra.mxu0 0
    %6629 = vmatpush.bf16.msra.mxu0 0
    %6630 = vmatpush.bf16.msra.mxu0 0
    %6631 = vmatpush.bf16.msra.mxu0 %v5321
    %6632 = vmatpush.bf16.msra.mxu0 %v4345
    %6633 = vmatpush.bf16.msra.mxu0 %v4302
    %6634 = vmatpush.bf16.msra.mxu0 %v4259
    %6635 = vmatmul.bf16.gmra.mxu0 %v5218
    %v6636 = vpop.f32.mrf.mxu0
    %v6637 = vadd.f32 %v6624, %v6636
    %v6638 = vpop.f32.mrf.mxu0
    %6639 = vdwg.mxu0
    %6640 = vmatpush.bf16.msra.mxu0 %v3873
    %6641 = vmatpush.bf16.msra.mxu0 %v3830
    %6642 = vmatpush.bf16.msra.mxu0 %v3787
    %6643 = vmatpush.bf16.msra.mxu0 %v3744
    %6644 = vmatpush.bf16.msra.mxu0 %v3701
    %6645 = vmatpush.bf16.msra.mxu0 %v3658
    %6646 = vmatpush.bf16.msra.mxu0 %v3615
    %6647 = vmatpush.bf16.msra.mxu0 %v3572
    %6648 = vmatmul.bf16.gmra.mxu0 %v934
    %v6649 = vpop.f32.mrf.mxu0
    %v6650 = vadd.f32 0.0, %v6649
    %v6651 = vpop.f32.mrf.mxu0
    %6652 = vdwg.mxu0
    %6653 = vmatpush.bf16.msra.mxu0 %v4217
    %6654 = vmatpush.bf16.msra.mxu0 %v4174
    %6655 = vmatpush.bf16.msra.mxu0 %v4131
    %6656 = vmatpush.bf16.msra.mxu0 %v4088
    %6657 = vmatpush.bf16.msra.mxu0 %v4045
    %6658 = vmatpush.bf16.msra.mxu0 %v4002
    %6659 = vmatpush.bf16.msra.mxu0 %v3959
    %6660 = vmatpush.bf16.msra.mxu0 %v3916
    %6661 = vmatmul.bf16.gmra.mxu0 %v935
    %v6662 = vpop.f32.mrf.mxu0
    %v6663 = vadd.f32 %v6650, %v6662
    %v6664 = vpop.f32.mrf.mxu0
    %6665 = vdwg.mxu0
    %6666 = vmatpush.bf16.msra.mxu0 0
    %6667 = vmatpush.bf16.msra.mxu0 0
    %6668 = vmatpush.bf16.msra.mxu0 0
    %6669 = vmatpush.bf16.msra.mxu0 0
    %6670 = vmatpush.bf16.msra.mxu0 %v5324
    %6671 = vmatpush.bf16.msra.mxu0 %v4346
    %6672 = vmatpush.bf16.msra.mxu0 %v4303
    %6673 = vmatpush.bf16.msra.mxu0 %v4260
    %6674 = vmatmul.bf16.gmra.mxu0 %v5218
    %v6675 = vpop.f32.mrf.mxu0
    %v6676 = vadd.f32 %v6663, %v6675
    %v6677 = vpop.f32.mrf.mxu0
    %6678 = vdwg.mxu0
    %6679 = vmatpush.bf16.msra.mxu0 %v3874
    %6680 = vmatpush.bf16.msra.mxu0 %v3831
    %6681 = vmatpush.bf16.msra.mxu0 %v3788
    %6682 = vmatpush.bf16.msra.mxu0 %v3745
    %6683 = vmatpush.bf16.msra.mxu0 %v3702
    %6684 = vmatpush.bf16.msra.mxu0 %v3659
    %6685 = vmatpush.bf16.msra.mxu0 %v3616
    %6686 = vmatpush.bf16.msra.mxu0 %v3573
    %6687 = vmatmul.bf16.gmra.mxu0 %v934
    %v6688 = vpop.f32.mrf.mxu0
    %v6689 = vadd.f32 0.0, %v6688
    %v6690 = vpop.f32.mrf.mxu0
    %6691 = vdwg.mxu0
    %6692 = vmatpush.bf16.msra.mxu0 %v4218
    %6693 = vmatpush.bf16.msra.mxu0 %v4175
    %6694 = vmatpush.bf16.msra.mxu0 %v4132
    %6695 = vmatpush.bf16.msra.mxu0 %v4089
    %6696 = vmatpush.bf16.msra.mxu0 %v4046
    %6697 = vmatpush.bf16.msra.mxu0 %v4003
    %6698 = vmatpush.bf16.msra.mxu0 %v3960
    %6699 = vmatpush.bf16.msra.mxu0 %v3917
    %6700 = vmatmul.bf16.gmra.mxu0 %v935
    %v6701 = vpop.f32.mrf.mxu0
    %v6702 = vadd.f32 %v6689, %v6701
    %v6703 = vpop.f32.mrf.mxu0
    %6704 = vdwg.mxu0
    %6705 = vmatpush.bf16.msra.mxu0 0
    %6706 = vmatpush.bf16.msra.mxu0 0
    %6707 = vmatpush.bf16.msra.mxu0 0
    %6708 = vmatpush.bf16.msra.mxu0 0
    %6709 = vmatpush.bf16.msra.mxu0 %v5327
    %6710 = vmatpush.bf16.msra.mxu0 %v4347
    %6711 = vmatpush.bf16.msra.mxu0 %v4304
    %6712 = vmatpush.bf16.msra.mxu0 %v4261
    %6713 = vmatmul.bf16.gmra.mxu0 %v5218
    %v6714 = vpop.f32.mrf.mxu0
    %v6715 = vadd.f32 %v6702, %v6714
    %v6716 = vpop.f32.mrf.mxu0
    %6717 = vdwg.mxu0
    %6718 = vmatpush.bf16.msra.mxu0 %v3875
    %6719 = vmatpush.bf16.msra.mxu0 %v3832
    %6720 = vmatpush.bf16.msra.mxu0 %v3789
    %6721 = vmatpush.bf16.msra.mxu0 %v3746
    %6722 = vmatpush.bf16.msra.mxu0 %v3703
    %6723 = vmatpush.bf16.msra.mxu0 %v3660
    %6724 = vmatpush.bf16.msra.mxu0 %v3617
    %6725 = vmatpush.bf16.msra.mxu0 %v3574
    %6726 = vmatmul.bf16.gmra.mxu0 %v934
    %v6727 = vpop.f32.mrf.mxu0
    %v6728 = vadd.f32 0.0, %v6727
    %v6729 = vpop.f32.mrf.mxu0
    %6730 = vdwg.mxu0
    %6731 = vmatpush.bf16.msra.mxu0 %v4219
    %6732 = vmatpush.bf16.msra.mxu0 %v4176
    %6733 = vmatpush.bf16.msra.mxu0 %v4133
    %6734 = vmatpush.bf16.msra.mxu0 %v4090
    %6735 = vmatpush.bf16.msra.mxu0 %v4047
    %6736 = vmatpush.bf16.msra.mxu0 %v4004
    %6737 = vmatpush.bf16.msra.mxu0 %v3961
    %6738 = vmatpush.bf16.msra.mxu0 %v3918
    %6739 = vmatmul.bf16.gmra.mxu0 %v935
    %v6740 = vpop.f32.mrf.mxu0
    %v6741 = vadd.f32 %v6728, %v6740
    %v6742 = vpop.f32.mrf.mxu0
    %6743 = vdwg.mxu0
    %6744 = vmatpush.bf16.msra.mxu0 0
    %6745 = vmatpush.bf16.msra.mxu0 0
    %6746 = vmatpush.bf16.msra.mxu0 0
    %6747 = vmatpush.bf16.msra.mxu0 0
    %6748 = vmatpush.bf16.msra.mxu0 %v5330
    %6749 = vmatpush.bf16.msra.mxu0 %v4348
    %6750 = vmatpush.bf16.msra.mxu0 %v4305
    %6751 = vmatpush.bf16.msra.mxu0 %v4262
    %6752 = vmatmul.bf16.gmra.mxu0 %v5218
    %v6753 = vpop.f32.mrf.mxu0
    %v6754 = vadd.f32 %v6741, %v6753
    %v6755 = vpop.f32.mrf.mxu0
    %6756 = vdwg.mxu0
    %6757 = vmatpush.bf16.msra.mxu0 %v3876
    %6758 = vmatpush.bf16.msra.mxu0 %v3833
    %6759 = vmatpush.bf16.msra.mxu0 %v3790
    %6760 = vmatpush.bf16.msra.mxu0 %v3747
    %6761 = vmatpush.bf16.msra.mxu0 %v3704
    %6762 = vmatpush.bf16.msra.mxu0 %v3661
    %6763 = vmatpush.bf16.msra.mxu0 %v3618
    %6764 = vmatpush.bf16.msra.mxu0 %v3575
    %6765 = vmatmul.bf16.gmra.mxu0 %v934
    %v6766 = vpop.f32.mrf.mxu0
    %v6767 = vadd.f32 0.0, %v6766
    %v6768 = vpop.f32.mrf.mxu0
    %6769 = vdwg.mxu0
    %6770 = vmatpush.bf16.msra.mxu0 %v4220
    %6771 = vmatpush.bf16.msra.mxu0 %v4177
    %6772 = vmatpush.bf16.msra.mxu0 %v4134
    %6773 = vmatpush.bf16.msra.mxu0 %v4091
    %6774 = vmatpush.bf16.msra.mxu0 %v4048
    %6775 = vmatpush.bf16.msra.mxu0 %v4005
    %6776 = vmatpush.bf16.msra.mxu0 %v3962
    %6777 = vmatpush.bf16.msra.mxu0 %v3919
    %6778 = vmatmul.bf16.gmra.mxu0 %v935
    %v6779 = vpop.f32.mrf.mxu0
    %v6780 = vadd.f32 %v6767, %v6779
    %v6781 = vpop.f32.mrf.mxu0
    %6782 = vdwg.mxu0
    %6783 = vmatpush.bf16.msra.mxu0 0
    %6784 = vmatpush.bf16.msra.mxu0 0
    %6785 = vmatpush.bf16.msra.mxu0 0
    %6786 = vmatpush.bf16.msra.mxu0 0
    %6787 = vmatpush.bf16.msra.mxu0 %v5333
    %6788 = vmatpush.bf16.msra.mxu0 %v4349
    %6789 = vmatpush.bf16.msra.mxu0 %v4306
    %6790 = vmatpush.bf16.msra.mxu0 %v4263
    %6791 = vmatmul.bf16.gmra.mxu0 %v5218
    %v6792 = vpop.f32.mrf.mxu0
    %v6793 = vadd.f32 %v6780, %v6792
    %v6794 = vpop.f32.mrf.mxu0
    %6795 = vdwg.mxu0
    %6796 = vmatpush.bf16.msra.mxu0 %v3877
    %6797 = vmatpush.bf16.msra.mxu0 %v3834
    %6798 = vmatpush.bf16.msra.mxu0 %v3791
    %6799 = vmatpush.bf16.msra.mxu0 %v3748
    %6800 = vmatpush.bf16.msra.mxu0 %v3705
    %6801 = vmatpush.bf16.msra.mxu0 %v3662
    %6802 = vmatpush.bf16.msra.mxu0 %v3619
    %6803 = vmatpush.bf16.msra.mxu0 %v3576
    %6804 = vmatmul.bf16.gmra.mxu0 %v934
    %v6805 = vpop.f32.mrf.mxu0
    %v6806 = vadd.f32 0.0, %v6805
    %v6807 = vpop.f32.mrf.mxu0
    %6808 = vdwg.mxu0
    %6809 = vmatpush.bf16.msra.mxu0 %v4221
    %6810 = vmatpush.bf16.msra.mxu0 %v4178
    %6811 = vmatpush.bf16.msra.mxu0 %v4135
    %6812 = vmatpush.bf16.msra.mxu0 %v4092
    %6813 = vmatpush.bf16.msra.mxu0 %v4049
    %6814 = vmatpush.bf16.msra.mxu0 %v4006
    %6815 = vmatpush.bf16.msra.mxu0 %v3963
    %6816 = vmatpush.bf16.msra.mxu0 %v3920
    %6817 = vmatmul.bf16.gmra.mxu0 %v935
    %v6818 = vpop.f32.mrf.mxu0
    %v6819 = vadd.f32 %v6806, %v6818
    %v6820 = vpop.f32.mrf.mxu0
    %6821 = vdwg.mxu0
    %6822 = vmatpush.bf16.msra.mxu0 0
    %6823 = vmatpush.bf16.msra.mxu0 0
    %6824 = vmatpush.bf16.msra.mxu0 0
    %6825 = vmatpush.bf16.msra.mxu0 0
    %6826 = vmatpush.bf16.msra.mxu0 %v5336
    %6827 = vmatpush.bf16.msra.mxu0 %v4350
    %6828 = vmatpush.bf16.msra.mxu0 %v4307
    %6829 = vmatpush.bf16.msra.mxu0 %v4264
    %6830 = vmatmul.bf16.gmra.mxu0 %v5218
    %v6831 = vpop.f32.mrf.mxu0
    %v6832 = vadd.f32 %v6819, %v6831
    %v6833 = vpop.f32.mrf.mxu0
    %6834 = vdwg.mxu0
    %6835 = vmatpush.bf16.msra.mxu0 %v3878
    %6836 = vmatpush.bf16.msra.mxu0 %v3835
    %6837 = vmatpush.bf16.msra.mxu0 %v3792
    %6838 = vmatpush.bf16.msra.mxu0 %v3749
    %6839 = vmatpush.bf16.msra.mxu0 %v3706
    %6840 = vmatpush.bf16.msra.mxu0 %v3663
    %6841 = vmatpush.bf16.msra.mxu0 %v3620
    %6842 = vmatpush.bf16.msra.mxu0 %v3577
    %6843 = vmatmul.bf16.gmra.mxu0 %v934
    %v6844 = vpop.f32.mrf.mxu0
    %v6845 = vadd.f32 0.0, %v6844
    %v6846 = vpop.f32.mrf.mxu0
    %6847 = vdwg.mxu0
    %6848 = vmatpush.bf16.msra.mxu0 %v4222
    %6849 = vmatpush.bf16.msra.mxu0 %v4179
    %6850 = vmatpush.bf16.msra.mxu0 %v4136
    %6851 = vmatpush.bf16.msra.mxu0 %v4093
    %6852 = vmatpush.bf16.msra.mxu0 %v4050
    %6853 = vmatpush.bf16.msra.mxu0 %v4007
    %6854 = vmatpush.bf16.msra.mxu0 %v3964
    %6855 = vmatpush.bf16.msra.mxu0 %v3921
    %6856 = vmatmul.bf16.gmra.mxu0 %v935
    %v6857 = vpop.f32.mrf.mxu0
    %v6858 = vadd.f32 %v6845, %v6857
    %v6859 = vpop.f32.mrf.mxu0
    %6860 = vdwg.mxu0
    %6861 = vmatpush.bf16.msra.mxu0 0
    %6862 = vmatpush.bf16.msra.mxu0 0
    %6863 = vmatpush.bf16.msra.mxu0 0
    %6864 = vmatpush.bf16.msra.mxu0 0
    %6865 = vmatpush.bf16.msra.mxu0 %v5339
    %6866 = vmatpush.bf16.msra.mxu0 %v4351
    %6867 = vmatpush.bf16.msra.mxu0 %v4308
    %6868 = vmatpush.bf16.msra.mxu0 %v4265
    %6869 = vmatmul.bf16.gmra.mxu0 %v5218
    %v6870 = vpop.f32.mrf.mxu0
    %v6871 = vadd.f32 %v6858, %v6870
    %v6872 = vpop.f32.mrf.mxu0
    %6873 = vdwg.mxu0
    %6874 = vmatpush.bf16.msra.mxu0 %v3879
    %6875 = vmatpush.bf16.msra.mxu0 %v3836
    %6876 = vmatpush.bf16.msra.mxu0 %v3793
    %6877 = vmatpush.bf16.msra.mxu0 %v3750
    %6878 = vmatpush.bf16.msra.mxu0 %v3707
    %6879 = vmatpush.bf16.msra.mxu0 %v3664
    %6880 = vmatpush.bf16.msra.mxu0 %v3621
    %6881 = vmatpush.bf16.msra.mxu0 %v3578
    %6882 = vmatmul.bf16.gmra.mxu0 %v934
    %v6883 = vpop.f32.mrf.mxu0
    %v6884 = vadd.f32 0.0, %v6883
    %v6885 = vpop.f32.mrf.mxu0
    %6886 = vdwg.mxu0
    %6887 = vmatpush.bf16.msra.mxu0 %v4223
    %6888 = vmatpush.bf16.msra.mxu0 %v4180
    %6889 = vmatpush.bf16.msra.mxu0 %v4137
    %6890 = vmatpush.bf16.msra.mxu0 %v4094
    %6891 = vmatpush.bf16.msra.mxu0 %v4051
    %6892 = vmatpush.bf16.msra.mxu0 %v4008
    %6893 = vmatpush.bf16.msra.mxu0 %v3965
    %6894 = vmatpush.bf16.msra.mxu0 %v3922
    %6895 = vmatmul.bf16.gmra.mxu0 %v935
    %v6896 = vpop.f32.mrf.mxu0
    %v6897 = vadd.f32 %v6884, %v6896
    %v6898 = vpop.f32.mrf.mxu0
    %6899 = vdwg.mxu0
    %6900 = vmatpush.bf16.msra.mxu0 0
    %6901 = vmatpush.bf16.msra.mxu0 0
    %6902 = vmatpush.bf16.msra.mxu0 0
    %6903 = vmatpush.bf16.msra.mxu0 0
    %6904 = vmatpush.bf16.msra.mxu0 %v5342
    %6905 = vmatpush.bf16.msra.mxu0 %v4352
    %6906 = vmatpush.bf16.msra.mxu0 %v4309
    %6907 = vmatpush.bf16.msra.mxu0 %v4266
    %6908 = vmatmul.bf16.gmra.mxu0 %v5218
    %v6909 = vpop.f32.mrf.mxu0
    %v6910 = vadd.f32 %v6897, %v6909
    %v6911 = vpop.f32.mrf.mxu0
    %6912 = vdwg.mxu0
    %6913 = vmatpush.bf16.msra.mxu0 %v3880
    %6914 = vmatpush.bf16.msra.mxu0 %v3837
    %6915 = vmatpush.bf16.msra.mxu0 %v3794
    %6916 = vmatpush.bf16.msra.mxu0 %v3751
    %6917 = vmatpush.bf16.msra.mxu0 %v3708
    %6918 = vmatpush.bf16.msra.mxu0 %v3665
    %6919 = vmatpush.bf16.msra.mxu0 %v3622
    %6920 = vmatpush.bf16.msra.mxu0 %v3579
    %6921 = vmatmul.bf16.gmra.mxu0 %v934
    %v6922 = vpop.f32.mrf.mxu0
    %v6923 = vadd.f32 0.0, %v6922
    %v6924 = vpop.f32.mrf.mxu0
    %6925 = vdwg.mxu0
    %6926 = vmatpush.bf16.msra.mxu0 %v4224
    %6927 = vmatpush.bf16.msra.mxu0 %v4181
    %6928 = vmatpush.bf16.msra.mxu0 %v4138
    %6929 = vmatpush.bf16.msra.mxu0 %v4095
    %6930 = vmatpush.bf16.msra.mxu0 %v4052
    %6931 = vmatpush.bf16.msra.mxu0 %v4009
    %6932 = vmatpush.bf16.msra.mxu0 %v3966
    %6933 = vmatpush.bf16.msra.mxu0 %v3923
    %6934 = vmatmul.bf16.gmra.mxu0 %v935
    %v6935 = vpop.f32.mrf.mxu0
    %v6936 = vadd.f32 %v6923, %v6935
    %v6937 = vpop.f32.mrf.mxu0
    %6938 = vdwg.mxu0
    %6939 = vmatpush.bf16.msra.mxu0 0
    %6940 = vmatpush.bf16.msra.mxu0 0
    %6941 = vmatpush.bf16.msra.mxu0 0
    %6942 = vmatpush.bf16.msra.mxu0 0
    %6943 = vmatpush.bf16.msra.mxu0 %v5345
    %6944 = vmatpush.bf16.msra.mxu0 %v4353
    %6945 = vmatpush.bf16.msra.mxu0 %v4310
    %6946 = vmatpush.bf16.msra.mxu0 %v4267
    %6947 = vmatmul.bf16.gmra.mxu0 %v5218
    %v6948 = vpop.f32.mrf.mxu0
    %v6949 = vadd.f32 %v6936, %v6948
    %v6950 = vpop.f32.mrf.mxu0
    %6951 = vdwg.mxu0
    %6952 = vmatpush.bf16.msra.mxu0 %v3881
    %6953 = vmatpush.bf16.msra.mxu0 %v3838
    %6954 = vmatpush.bf16.msra.mxu0 %v3795
    %6955 = vmatpush.bf16.msra.mxu0 %v3752
    %6956 = vmatpush.bf16.msra.mxu0 %v3709
    %6957 = vmatpush.bf16.msra.mxu0 %v3666
    %6958 = vmatpush.bf16.msra.mxu0 %v3623
    %6959 = vmatpush.bf16.msra.mxu0 %v3580
    %6960 = vmatmul.bf16.gmra.mxu0 %v934
    %v6961 = vpop.f32.mrf.mxu0
    %v6962 = vadd.f32 0.0, %v6961
    %v6963 = vpop.f32.mrf.mxu0
    %6964 = vdwg.mxu0
    %6965 = vmatpush.bf16.msra.mxu0 %v4225
    %6966 = vmatpush.bf16.msra.mxu0 %v4182
    %6967 = vmatpush.bf16.msra.mxu0 %v4139
    %6968 = vmatpush.bf16.msra.mxu0 %v4096
    %6969 = vmatpush.bf16.msra.mxu0 %v4053
    %6970 = vmatpush.bf16.msra.mxu0 %v4010
    %6971 = vmatpush.bf16.msra.mxu0 %v3967
    %6972 = vmatpush.bf16.msra.mxu0 %v3924
    %6973 = vmatmul.bf16.gmra.mxu0 %v935
    %v6974 = vpop.f32.mrf.mxu0
    %v6975 = vadd.f32 %v6962, %v6974
    %v6976 = vpop.f32.mrf.mxu0
    %6977 = vdwg.mxu0
    %6978 = vmatpush.bf16.msra.mxu0 0
    %6979 = vmatpush.bf16.msra.mxu0 0
    %6980 = vmatpush.bf16.msra.mxu0 0
    %6981 = vmatpush.bf16.msra.mxu0 0
    %6982 = vmatpush.bf16.msra.mxu0 %v5348
    %6983 = vmatpush.bf16.msra.mxu0 %v4354
    %6984 = vmatpush.bf16.msra.mxu0 %v4311
    %6985 = vmatpush.bf16.msra.mxu0 %v4268
    %6986 = vmatmul.bf16.gmra.mxu0 %v5218
    %v6987 = vpop.f32.mrf.mxu0
    %v6988 = vadd.f32 %v6975, %v6987
    %v6989 = vpop.f32.mrf.mxu0
    %6990 = vdwg.mxu0
    %6991 = vmatpush.bf16.msra.mxu0 %v3882
    %6992 = vmatpush.bf16.msra.mxu0 %v3839
    %6993 = vmatpush.bf16.msra.mxu0 %v3796
    %6994 = vmatpush.bf16.msra.mxu0 %v3753
    %6995 = vmatpush.bf16.msra.mxu0 %v3710
    %6996 = vmatpush.bf16.msra.mxu0 %v3667
    %6997 = vmatpush.bf16.msra.mxu0 %v3624
    %6998 = vmatpush.bf16.msra.mxu0 %v3581
    %6999 = vmatmul.bf16.gmra.mxu0 %v934
    %v7000 = vpop.f32.mrf.mxu0
    %v7001 = vadd.f32 0.0, %v7000
    %v7002 = vpop.f32.mrf.mxu0
    %7003 = vdwg.mxu0
    %7004 = vmatpush.bf16.msra.mxu0 %v4226
    %7005 = vmatpush.bf16.msra.mxu0 %v4183
    %7006 = vmatpush.bf16.msra.mxu0 %v4140
    %7007 = vmatpush.bf16.msra.mxu0 %v4097
    %7008 = vmatpush.bf16.msra.mxu0 %v4054
    %7009 = vmatpush.bf16.msra.mxu0 %v4011
    %7010 = vmatpush.bf16.msra.mxu0 %v3968
    %7011 = vmatpush.bf16.msra.mxu0 %v3925
    %7012 = vmatmul.bf16.gmra.mxu0 %v935
    %v7013 = vpop.f32.mrf.mxu0
    %v7014 = vadd.f32 %v7001, %v7013
    %v7015 = vpop.f32.mrf.mxu0
    %7016 = vdwg.mxu0
    %7017 = vmatpush.bf16.msra.mxu0 0
    %7018 = vmatpush.bf16.msra.mxu0 0
    %7019 = vmatpush.bf16.msra.mxu0 0
    %7020 = vmatpush.bf16.msra.mxu0 0
    %7021 = vmatpush.bf16.msra.mxu0 %v5351
    %7022 = vmatpush.bf16.msra.mxu0 %v4355
    %7023 = vmatpush.bf16.msra.mxu0 %v4312
    %7024 = vmatpush.bf16.msra.mxu0 %v4269
    %7025 = vmatmul.bf16.gmra.mxu0 %v5218
    %v7026 = vpop.f32.mrf.mxu0
    %v7027 = vadd.f32 %v7014, %v7026
    %v7028 = vpop.f32.mrf.mxu0
    %7029 = vdwg.mxu0
    %v7030 = vld [vmem:[#allocation4] sm:$0xff]
    %v7031 = vld [vmem:[#allocation4 + $0x8] sm:$0xff]
    %v7032 = vld [vmem:[#allocation4 + $0x10] sm:$0xff]
    %v7033 = vld [vmem:[#allocation4 + $0x18] sm:$0xff]
    %v7034 = vld [vmem:[#allocation4 + $0x20] sm:$0xff]
    %v7035 = vld [vmem:[#allocation4 + $0x28] sm:$0x1]
    %v7042 = vperm.slane %v7030, 0
    %v7043 = vperm.slane %v7030, 1
    %v7044 = vperm.slane %v7030, 2
    %v7045 = vperm.slane %v7030, 3
    %v7046 = vperm.slane %v7030, 4
    %v7047 = vperm.slane %v7030, 5
    %v7048 = vperm.slane %v7030, 6
    %v7049 = vperm.slane %v7030, 7
    %v7050 = vperm.slane %v7031, 0
    %v7051 = vperm.slane %v7031, 1
    %v7052 = vperm.slane %v7031, 2
    %v7053 = vperm.slane %v7031, 3
    %v7054 = vperm.slane %v7031, 4
    %v7055 = vperm.slane %v7031, 5
    %v7056 = vperm.slane %v7031, 6
    %v7057 = vperm.slane %v7031, 7
    %v7058 = vperm.slane %v7032, 0
    %v7059 = vperm.slane %v7032, 1
    %v7060 = vperm.slane %v7032, 2
    %v7061 = vperm.slane %v7032, 3
    %v7062 = vperm.slane %v7032, 4
    %v7063 = vperm.slane %v7032, 5
    %v7064 = vperm.slane %v7032, 6
    %v7065 = vperm.slane %v7032, 7
    %v7066 = vperm.slane %v7033, 0
    %v7067 = vperm.slane %v7033, 1
    %v7068 = vperm.slane %v7033, 2
    %v7069 = vperm.slane %v7033, 3
    %v7070 = vperm.slane %v7033, 4
    %v7071 = vperm.slane %v7033, 5
    %v7072 = vperm.slane %v7033, 6
    %v7073 = vperm.slane %v7033, 7
    %v7074 = vperm.slane %v7034, 0
    %v7075 = vperm.slane %v7034, 1
    %v7076 = vperm.slane %v7034, 2
    %v7077 = vperm.slane %v7034, 3
    %v7078 = vperm.slane %v7034, 4
    %v7079 = vperm.slane %v7034, 5
    %v7080 = vperm.slane %v7034, 6
    %v7081 = vperm.slane %v7034, 7
    %v7082 = vperm.slane %v7035, 0
    %v7124 = vadd.f32 %v5389, %v7042
    %v7125 = vadd.f32 %v5428, %v7043
    %v7126 = vadd.f32 %v5467, %v7044
    %v7127 = vadd.f32 %v5506, %v7045
    %v7128 = vadd.f32 %v5545, %v7046
    %v7129 = vadd.f32 %v5584, %v7047
    %v7130 = vadd.f32 %v5623, %v7048
    %v7131 = vadd.f32 %v5662, %v7049
    %v7132 = vadd.f32 %v5701, %v7050
    %v7133 = vadd.f32 %v5740, %v7051
    %v7134 = vadd.f32 %v5779, %v7052
    %v7135 = vadd.f32 %v5818, %v7053
    %v7136 = vadd.f32 %v5857, %v7054
    %v7137 = vadd.f32 %v5896, %v7055
    %v7138 = vadd.f32 %v5935, %v7056
    %v7139 = vadd.f32 %v5974, %v7057
    %v7140 = vadd.f32 %v6013, %v7058
    %v7141 = vadd.f32 %v6052, %v7059
    %v7142 = vadd.f32 %v6091, %v7060
    %v7143 = vadd.f32 %v6130, %v7061
    %v7144 = vadd.f32 %v6169, %v7062
    %v7145 = vadd.f32 %v6208, %v7063
    %v7146 = vadd.f32 %v6247, %v7064
    %v7147 = vadd.f32 %v6286, %v7065
    %v7148 = vadd.f32 %v6325, %v7066
    %v7149 = vadd.f32 %v6364, %v7067
    %v7150 = vadd.f32 %v6403, %v7068
    %v7151 = vadd.f32 %v6442, %v7069
    %v7152 = vadd.f32 %v6481, %v7070
    %v7153 = vadd.f32 %v6520, %v7071
    %v7154 = vadd.f32 %v6559, %v7072
    %v7155 = vadd.f32 %v6598, %v7073
    %v7156 = vadd.f32 %v6637, %v7074
    %v7157 = vadd.f32 %v6676, %v7075
    %v7158 = vadd.f32 %v6715, %v7076
    %v7159 = vadd.f32 %v6754, %v7077
    %v7160 = vadd.f32 %v6793, %v7078
    %v7161 = vadd.f32 %v6832, %v7079
    %v7162 = vadd.f32 %v6871, %v7080
    %v7163 = vadd.f32 %v6910, %v7081
    %v7164 = vadd.f32 %v6949, %v7082
    %v7165 = vpack.c.bf16 %v7125, %v7124
    %v7166 = vpack.c.bf16 %v7127, %v7126
    %v7167 = vpack.c.bf16 %v7129, %v7128
    %v7168 = vpack.c.bf16 %v7131, %v7130
    %v7169 = vpack.c.bf16 %v7133, %v7132
    %v7170 = vpack.c.bf16 %v7135, %v7134
    %v7171 = vpack.c.bf16 %v7137, %v7136
    %v7172 = vpack.c.bf16 %v7139, %v7138
    %v7173 = vpack.c.bf16 %v7141, %v7140
    %v7174 = vpack.c.bf16 %v7143, %v7142
    %v7175 = vpack.c.bf16 %v7145, %v7144
    %v7176 = vpack.c.bf16 %v7147, %v7146
    %v7177 = vpack.c.bf16 %v7149, %v7148
    %v7178 = vpack.c.bf16 %v7151, %v7150
    %v7179 = vpack.c.bf16 %v7153, %v7152
    %v7180 = vpack.c.bf16 %v7155, %v7154
    %v7181 = vpack.c.bf16 %v7157, %v7156
    %v7182 = vpack.c.bf16 %v7159, %v7158
    %v7183 = vpack.c.bf16 %v7161, %v7160
    %v7184 = vpack.c.bf16 %v7163, %v7162
    %v7185 = vpack.c.bf16 %v7164, %v7164
    %7186 = vst [vmem:[%s3] sm:$0xff] %v7165
    %7187 = vst [vmem:[%s3 + $0x8] sm:$0xff] %v7166
    %7188 = vst [vmem:[%s3 + $0x10] sm:$0xff] %v7167
    %7189 = vst [vmem:[%s3 + $0x18] sm:$0xff] %v7168
    %7190 = vst [vmem:[%s3 + $0x20] sm:$0xff] %v7169
    %7191 = vst [vmem:[%s3 + $0x28] sm:$0xff] %v7170
    %7192 = vst [vmem:[%s3 + $0x30] sm:$0xff] %v7171
    %7193 = vst [vmem:[%s3 + $0x38] sm:$0xff] %v7172
    %7194 = vst [vmem:[%s3 + $0x40] sm:$0xff] %v7173
    %7195 = vst [vmem:[%s3 + $0x48] sm:$0xff] %v7174
    %7196 = vst [vmem:[%s3 + $0x50] sm:$0xff] %v7175
    %7197 = vst [vmem:[%s3 + $0x58] sm:$0xff] %v7176
    %7198 = vst [vmem:[%s3 + $0x60] sm:$0xff] %v7177
    %7199 = vst [vmem:[%s3 + $0x68] sm:$0xff] %v7178
    %7200 = vst [vmem:[%s3 + $0x70] sm:$0xff] %v7179
    %7201 = vst [vmem:[%s3 + $0x78] sm:$0xff] %v7180
    %7202 = vst [vmem:[%s3 + $0x80] sm:$0xff] %v7181
    %7203 = vst [vmem:[%s3 + $0x88] sm:$0xff] %v7182
    %7204 = vst [vmem:[%s3 + $0x90] sm:$0xff] %v7183
    %7205 = vst [vmem:[%s3 + $0x98] sm:$0xff] %v7184
    %7206 = vst [vmem:[%s3 + $0xa0] sm:$0xf] %v7185
    %7207 = vst [vmem:[%s4] sm:$0xff] %v6988
    %vm7208 = vcmask 56320
    %7209 = vst.msk [vmem:[%s4 + $0x8] sm:$0xff] %vm7208, %v7027
    // Predicated region
    $region22: #{vae_forward.2} parent=1 // pred_check
      _
    $region23: #{vae_forward.2} parent=1 // pred_check_branch
      %7211 = sbr.rel (0) target = $region25
    $region24: #{vae_forward.2} parent=1 // pred_region
      _
    $region25: #{vae_forward.2} parent=1 // pred_fallthru
      _
    // Predicated region
    $region26: #{vae_forward.2} parent=1 // pred_check
      _
    $region27: #{vae_forward.2} parent=1 // pred_check_branch
      %7213 = sbr.rel (0) target = $region29
    $region28: #{vae_forward.2} parent=1 // pred_region
      _
    $region29: #{vae_forward.2} parent=1 // pred_fallthru
      _
    // Predicated region
    $region30: #{vae_forward.2} parent=1 // pred_check
      _
    $region31: #{vae_forward.2} parent=1 // pred_check_branch
      %7215 = sbr.rel (0) target = $region33
    $region32: #{vae_forward.2} parent=1 // pred_region
      _
    $region33: #{vae_forward.2} parent=1 // pred_fallthru
      _
    // Predicated region
    $region34: #{vae_forward.2} parent=1 // pred_check
      _
    $region35: #{vae_forward.2} parent=1 // pred_check_branch
      %7217 = sbr.rel (0) target = $region37
    $region36: #{vae_forward.2} parent=1 // pred_region
      _
    $region37: #{vae_forward.2} parent=1 // pred_fallthru
      _
    %7218 = vsyncpa [#allocation3], 1
    %7219 = vsyncpa [#allocation5], 1

</llo_original>
